<compile_context>
chip_gen: v5e
topology: v5e:2x2
jax: 0.10.0
libtpu: 0.0.40
codegen_flags: <defaults>
</compile_context>

<pallas_src>
import jax
import jax.numpy as jnp
import numpy as np
from jax.experimental import pallas as pl
from jax.experimental.pallas import tpu as pltpu

LANES = 128  # padded channel / feature width (lane axis)


# ---------------------------------------------------------------------------
# Fully fused Net kernel: conv1+ReLU+pool -> conv2+ReLU+pool -> fc1/fc2/fc3
# One image per grid step; everything between stages stays in VMEM / vregs.
# ---------------------------------------------------------------------------
def _net_kernel(xp_ref,                 # (1, 784, 128) conv1 patch rows (i,j,c packed in lanes)
                w1_ref, b1_ref,         # (128,128), (1,128)
                w2_ref, b2_ref,         # (25,128,128), (1,128)
                wf1_ref, bf1_ref,       # (25,128,128), (1,128)
                wf2_ref, bf2_ref,       # (128,128), (1,128)
                wf3_ref, bf3_ref,       # (128,128), (1,128)
                o_ref,                  # (1, 1, 128) padded logits
                p1_ref):                # VMEM scratch (200,128): pooled stage-1 activations
    f32 = jnp.float32

    # ---- Stage 1: conv1 (K-packed patches) + bias + ReLU + 2x2 max-pool ----
    # 28x28 conv output processed in 7 chunks of 4 output rows; the matmul
    # result, bias/ReLU and pooling never leave vregs; only the pooled
    # (2,14,128) block per chunk is stored to the VMEM scratch.
    for k in range(7):
        rows = 4 * 28                                             # 112 patch rows
        xpc = xp_ref[0, pl.ds(k * rows, rows), :]                 # (112,128)
        h = jnp.dot(xpc, w1_ref[...], preferred_element_type=f32)
        h = jnp.maximum(h + b1_ref[...], 0.0)                     # bias + ReLU
        a = h.reshape(rows // 2, 2, 128)
        cm = jnp.maximum(a[:, 0, :], a[:, 1, :])                  # (56,128) rows = ohl*14+wp
        pr = cm.reshape(2, 28, 128)
        pooled = jnp.maximum(pr[:, :14, :], pr[:, 14:, :])        # (2,14,128)
        p1_ref[pl.ds(k * 28, 28), :] = pooled.reshape(28, 128)
    # Rows 196..199 only feed shift-trick garbage columns (cropped below);
    # keep them finite/deterministic.
    p1_ref[pl.ds(196, 4), :] = jnp.zeros((4, 128), f32)

    # ---- Stage 2: conv2 via 25 shifted-view taps, functional vreg accumulation ----
    # Accumulator is (140,128) f32 (~18 vregs): no VMEM read-modify-write per tap.
    acc = None
    for t in range(25):
        i, j = divmod(t, 5)
        patch = p1_ref[pl.ds(i * 14 + j, 140), :]                 # (140,128)
        part = jnp.dot(patch, w2_ref[t], preferred_element_type=f32)
        acc = part if acc is None else acc + part
    h2 = jnp.maximum(acc + b2_ref[...], 0.0)                      # (140,128), rows = oh*14+ow

    # 2x2 max-pool on the 10x14 slab; columns >= 10 are shift-trick garbage and
    # are cropped BEFORE any max, so they never merge with valid data.
    a2 = h2.reshape(70, 2, 128)
    cm2 = jnp.maximum(a2[:, 0, :], a2[:, 1, :])                   # (70,128) rows = oh*7+wp
    cm2 = cm2.reshape(10, 7, 128)[:, :5, :]                       # crop garbage cols
    pr2 = cm2.reshape(5, 10, 128)
    p2 = jnp.maximum(pr2[:, :5, :], pr2[:, 5:, :]).reshape(25, 128)   # (25,128) rows = h*5+w

    # ---- FC stack: fc1 (25 positional K-blocks) -> ReLU -> fc2 -> ReLU -> fc3 ----
    # fc1 contracts over (position, channel) without any lane-merge reshape:
    # one (1,128)x(128,128) block per pooled position.
    h = bf1_ref[...]                                              # (1,128)
    for p in range(25):
        h = h + jnp.dot(p2[p:p + 1, :], wf1_ref[p], preferred_element_type=f32)
    h = jnp.maximum(h, 0.0)
    h = jnp.maximum(jnp.dot(h, wf2_ref[...], preferred_element_type=f32)
                    + bf2_ref[...], 0.0)
    out = jnp.dot(h, wf3_ref[...], preferred_element_type=f32) + bf3_ref[...]
    o_ref[...] = out.reshape(1, 1, 128)


# ---------------------------------------------------------------------------
# Constant-side weight reordering / padding (weights only - free)
# ---------------------------------------------------------------------------
def _conv1_weight(w1):                      # (6,3,5,5) -> (128,128), K = (i*5+j)*3 + c
    w = jnp.transpose(w1, (2, 3, 1, 0)).reshape(75, 6)
    return jnp.pad(w, ((0, LANES - 75), (0, LANES - 6))).astype(jnp.float32)


def _conv2_weight(w2):                      # (16,6,5,5) -> (25,128,128), [tap, c_in, c_out]
    w = jnp.transpose(w2, (2, 3, 1, 0)).reshape(25, 6, 16)
    return jnp.pad(w, ((0, 0), (0, LANES - 6), (0, LANES - 16))).astype(jnp.float32)


def _fc1_weight(wf1):                       # (120,400) -> (25,128,128), [p, c, o]
    O = wf1.shape[0]
    w = jnp.transpose(wf1.reshape(O, 16, 25), (2, 1, 0))          # (25,16,120)
    return jnp.pad(w, ((0, 0), (0, LANES - 16), (0, LANES - O))).astype(jnp.float32)


def _fc_weight(wf):                         # (out,in) -> (128,128)
    O, I = wf.shape
    return jnp.pad(wf.T, ((0, LANES - I), (0, LANES - O))).astype(jnp.float32)


def _pad_bias(b):
    return jnp.pad(b, (0, LANES - b.shape[0])).reshape(1, LANES).astype(jnp.float32)


# ---------------------------------------------------------------------------
# Full Net forward: one fused pallas_call over the batch
# ---------------------------------------------------------------------------
def net_forward(x_nchw, params):
    w1, b1, w2, b2, wf1, bf1, wf2, bf2, wf3, bf3 = params
    N = x_nchw.shape[0]                                           # (N, 3, 32, 32)

    # conv1 patches (K-packing): (N, 784, 75) -> lane-pad to 128.
    xs = jnp.transpose(x_nchw, (0, 2, 3, 1)).astype(jnp.float32)  # (N,32,32,3)
    pats = [xs[:, i:i + 28, j:j + 28, :] for i in range(5) for j in range(5)]
    xp = jnp.stack(pats, axis=3).reshape(N, 784, 75)              # lane = (i*5+j)*3 + c
    xp = jnp.pad(xp, ((0, 0), (0, 0), (0, LANES - 75)))

    # Weight reordering / padding (tiny constants).
    w1r, b1r = _conv1_weight(w1), _pad_bias(b1)
    w2r, b2r = _conv2_weight(w2), _pad_bias(b2)
    wf1r, bf1r = _fc1_weight(wf1), _pad_bias(bf1)
    wf2r, bf2r = _fc_weight(wf2), _pad_bias(bf2)
    wf3r, bf3r = _fc_weight(wf3), _pad_bias(bf3)

    flops = 2 * N * (784 * 128 * 128 + 25 * 140 * 128 * 128
                     + 25 * 128 * 128 + 2 * 128 * 128)
    bytes_accessed = int(4 * (xp.size + w1r.size + w2r.size + wf1r.size
                              + wf2r.size + wf3r.size + 5 * 128 + N * 128))

    const2 = lambda n: (0, 0)
    const3 = lambda n: (0, 0, 0)
    out = pl.pallas_call(
        _net_kernel,
        out_shape=jax.ShapeDtypeStruct((N, 1, LANES), jnp.float32),
        grid=(N,),
        in_specs=[
            pl.BlockSpec((1, 784, LANES), lambda n: (n, 0, 0)),
            pl.BlockSpec((LANES, LANES), const2),
            pl.BlockSpec((1, LANES), const2),
            pl.BlockSpec((25, LANES, LANES), const3),
            pl.BlockSpec((1, LANES), const2),
            pl.BlockSpec((25, LANES, LANES), const3),
            pl.BlockSpec((1, LANES), const2),
            pl.BlockSpec((LANES, LANES), const2),
            pl.BlockSpec((1, LANES), const2),
            pl.BlockSpec((LANES, LANES), const2),
            pl.BlockSpec((1, LANES), const2),
        ],
        out_specs=pl.BlockSpec((1, 1, LANES), lambda n: (n, 0, 0)),
        scratch_shapes=[pltpu.VMEM((200, LANES), jnp.float32)],
        compiler_params=pltpu.CompilerParams(
            dimension_semantics=("parallel",),
            vmem_limit_bytes=32 * 1024 * 1024),
        cost_estimate=pl.CostEstimate(flops=flops, transcendentals=0,
                                      bytes_accessed=bytes_accessed),
    )(xp, w1r, b1r, w2r, b2r, wf1r, bf1r, wf2r, bf2r, wf3r, bf3r)

    return out.reshape(N, LANES)[:, :10]


# ---------------------------------------------------------------------------
# Deterministic parameter init (PyTorch shapes, uniform(-1/sqrt(fan_in), ..))
# ---------------------------------------------------------------------------
def init_params(key):
    def uni(k, shape, fan_in):
        bound = 1.0 / np.sqrt(fan_in)
        return jax.random.uniform(k, shape, jnp.float32, -bound, bound)

    ks = jax.random.split(key, 10)
    w1 = uni(ks[0], (6, 3, 5, 5), 3 * 25)
    b1 = uni(ks[1], (6,), 3 * 25)
    w2 = uni(ks[2], (16, 6, 5, 5), 6 * 25)
    b2 = uni(ks[3], (16,), 6 * 25)
    wf1 = uni(ks[4], (120, 400), 400)
    bf1 = uni(ks[5], (120,), 400)
    wf2 = uni(ks[6], (84, 120), 120)
    bf2 = uni(ks[7], (84,), 120)
    wf3 = uni(ks[8], (10, 84), 84)
    bf3 = uni(ks[9], (10,), 84)
    return (w1, b1, w2, b2, wf1, bf1, wf2, bf2, wf3, bf3)


# Pure-JAX reference (matches PyTorch semantics) for a correctness check.
def reference_forward(x, params):
    w1, b1, w2, b2, wf1, bf1, wf2, bf2, wf3, bf3 = params

    def conv(x, w, b):
        y = jax.lax.conv_general_dilated(
            x, w, window_strides=(1, 1), padding='VALID',
            dimension_numbers=('NCHW', 'OIHW', 'NCHW'))
        return y + b[None, :, None, None]

    def pool(x):
        return jax.lax.reduce_window(x, -jnp.inf, jax.lax.max,
                                     (1, 1, 2, 2), (1, 1, 2, 2), 'VALID')

    y = pool(jax.nn.relu(conv(x, w1, b1)))
    y = pool(jax.nn.relu(conv(y, w2, b2)))
    y = y.reshape(y.shape[0], -1)
    y = jax.nn.relu(y @ wf1.T + bf1)
    y = jax.nn.relu(y @ wf2.T + bf2)
    return y @ wf3.T + bf3


if __name__ == "__main__":
    key = jax.random.PRNGKey(0)
    pkey, xkey = jax.random.split(key)
    params = init_params(pkey)
    x = jax.random.normal(xkey, (2, 3, 32, 32), jnp.float32)   # NCHW like PyTorch

    fwd = jax.jit(net_forward)
    out = jax.block_until_ready(fwd(x, params))
    assert out.shape == (2, 10)

    ref = reference_forward(x, params)
    np.testing.assert_allclose(np.asarray(out), np.asarray(ref),
                               atol=2e-3, rtol=2e-3)
    print("KERNEL_OK")
</pallas_src>

<mosaic_0001>
module attributes {stable_mosaic.version = 11 : i64} {
  func.func @_net_kernel(%arg0: i32, %arg1: memref<1x784x128xf32, #tpu.memory_space<vmem>>, %arg2: memref<128x128xf32, #tpu.memory_space<vmem>>, %arg3: memref<1x128xf32, #tpu.memory_space<vmem>>, %arg4: memref<25x128x128xf32, #tpu.memory_space<vmem>>, %arg5: memref<1x128xf32, #tpu.memory_space<vmem>>, %arg6: memref<25x128x128xf32, #tpu.memory_space<vmem>>, %arg7: memref<1x128xf32, #tpu.memory_space<vmem>>, %arg8: memref<128x128xf32, #tpu.memory_space<vmem>>, %arg9: memref<1x128xf32, #tpu.memory_space<vmem>>, %arg10: memref<128x128xf32, #tpu.memory_space<vmem>>, %arg11: memref<1x128xf32, #tpu.memory_space<vmem>>, %arg12: memref<1x1x128xf32, #tpu.memory_space<vmem>>, %arg13: memref<200x128xf32, #tpu.memory_space<vmem>>) attributes {dimension_semantics = [#tpu.dimension_semantics<parallel>], iteration_bounds = array<i64: 2>, scalar_prefetch = 0 : i64, scratch_operands = 1 : i64, tpu.core_type = #tpu.core_type<tc>, window_params = [{transform_indices = @transform_0, window_bounds = array<i64: 1, 784, 128>}, {pipeline_mode = #tpu.pipeline_mode<synchronous>, transform_indices = @transform_1, window_bounds = array<i64: 128, 128>}, {pipeline_mode = #tpu.pipeline_mode<synchronous>, transform_indices = @transform_2, window_bounds = array<i64: 1, 128>}, {pipeline_mode = #tpu.pipeline_mode<synchronous>, transform_indices = @transform_3, window_bounds = array<i64: 25, 128, 128>}, {pipeline_mode = #tpu.pipeline_mode<synchronous>, transform_indices = @transform_4, window_bounds = array<i64: 1, 128>}, {pipeline_mode = #tpu.pipeline_mode<synchronous>, transform_indices = @transform_5, window_bounds = array<i64: 25, 128, 128>}, {pipeline_mode = #tpu.pipeline_mode<synchronous>, transform_indices = @transform_6, window_bounds = array<i64: 1, 128>}, {pipeline_mode = #tpu.pipeline_mode<synchronous>, transform_indices = @transform_7, window_bounds = array<i64: 128, 128>}, {pipeline_mode = #tpu.pipeline_mode<synchronous>, transform_indices = @transform_8, window_bounds = array<i64: 1, 128>}, {pipeline_mode = #tpu.pipeline_mode<synchronous>, transform_indices = @transform_9, window_bounds = array<i64: 128, 128>}, {pipeline_mode = #tpu.pipeline_mode<synchronous>, transform_indices = @transform_10, window_bounds = array<i64: 1, 128>}, {transform_indices = @transform_11, window_bounds = array<i64: 1, 1, 128>}]} {
    %c0 = arith.constant 0 : index
    %c0_0 = arith.constant 0 : index
    %c0_1 = arith.constant 0 : index
    %0 = vector.load %arg1[%c0, %c0_0, %c0_1] : memref<1x784x128xf32, #tpu.memory_space<vmem>>, vector<1x112x128xf32>
    %1 = vector.shape_cast %0 : vector<1x112x128xf32> to vector<112x128xf32>
    %c0_2 = arith.constant 0 : index
    %c0_3 = arith.constant 0 : index
    %2 = vector.load %arg2[%c0_2, %c0_3] : memref<128x128xf32, #tpu.memory_space<vmem>>, vector<128x128xf32>
    %cst = arith.constant dense<0.000000e+00> : vector<112x128xf32>
    %3 = tpu.matmul %1, %2, %cst {dimension_numbers = #tpu.dot_dimension_numbers<[1], [0], [0], [1], [0, 0, 1, 1], [], []>} : vector<112x128xf32>, vector<128x128xf32>, vector<112x128xf32> -> vector<112x128xf32>
    %c0_4 = arith.constant 0 : index
    %c0_5 = arith.constant 0 : index
    %4 = vector.load %arg3[%c0_4, %c0_5] : memref<1x128xf32, #tpu.memory_space<vmem>>, vector<1x128xf32>
    %5 = vector.broadcast %4 : vector<1x128xf32> to vector<112x128xf32>
    %6 = arith.addf %3, %5 : vector<112x128xf32>
    %cst_6 = arith.constant 0.000000e+00 : f32
    %7 = vector.broadcast %cst_6 : f32 to vector<112x128xf32>
    %8 = arith.maximumf %6, %7 : vector<112x128xf32>
    %9 = vector.shape_cast %8 : vector<112x128xf32> to vector<56x2x128xf32>
    %10 = vector.extract_strided_slice %9 {offsets = [0, 0, 0], sizes = [56, 1, 128], strides = [1, 1, 1]} : vector<56x2x128xf32> to vector<56x1x128xf32>
    %11 = vector.shape_cast %10 : vector<56x1x128xf32> to vector<56x128xf32>
    %12 = vector.extract_strided_slice %9 {offsets = [0, 1, 0], sizes = [56, 1, 128], strides = [1, 1, 1]} : vector<56x2x128xf32> to vector<56x1x128xf32>
    %13 = vector.shape_cast %12 : vector<56x1x128xf32> to vector<56x128xf32>
    %14 = arith.maximumf %11, %13 : vector<56x128xf32>
    %15 = vector.shape_cast %14 : vector<56x128xf32> to vector<2x28x128xf32>
    %16 = vector.extract_strided_slice %15 {offsets = [0, 0, 0], sizes = [2, 14, 128], strides = [1, 1, 1]} : vector<2x28x128xf32> to vector<2x14x128xf32>
    %17 = vector.extract_strided_slice %15 {offsets = [0, 14, 0], sizes = [2, 14, 128], strides = [1, 1, 1]} : vector<2x28x128xf32> to vector<2x14x128xf32>
    %18 = arith.maximumf %16, %17 : vector<2x14x128xf32>
    %19 = vector.shape_cast %18 : vector<2x14x128xf32> to vector<28x128xf32>
    %c0_7 = arith.constant 0 : index
    %c0_8 = arith.constant 0 : index
    %20 = vector.load %arg13[%c0_7, %c0_8] : memref<200x128xf32, #tpu.memory_space<vmem>>, vector<28x128xf32>
    tpu.vector_store %arg13[%c0_7, %c0_8], %19 {strides = array<i32>} : memref<200x128xf32, #tpu.memory_space<vmem>>, vector<28x128xf32>,
    %c0_9 = arith.constant 0 : index
    %c112 = arith.constant 112 : index
    %c0_10 = arith.constant 0 : index
    %21 = vector.load %arg1[%c0_9, %c112, %c0_10] : memref<1x784x128xf32, #tpu.memory_space<vmem>>, vector<1x112x128xf32>
    %22 = vector.shape_cast %21 : vector<1x112x128xf32> to vector<112x128xf32>
    %c0_11 = arith.constant 0 : index
    %c0_12 = arith.constant 0 : index
    %23 = vector.load %arg2[%c0_11, %c0_12] : memref<128x128xf32, #tpu.memory_space<vmem>>, vector<128x128xf32>
    %cst_13 = arith.constant dense<0.000000e+00> : vector<112x128xf32>
    %24 = tpu.matmul %22, %23, %cst_13 {dimension_numbers = #tpu.dot_dimension_numbers<[1], [0], [0], [1], [0, 0, 1, 1], [], []>} : vector<112x128xf32>, vector<128x128xf32>, vector<112x128xf32> -> vector<112x128xf32>
    %c0_14 = arith.constant 0 : index
    %c0_15 = arith.constant 0 : index
    %25 = vector.load %arg3[%c0_14, %c0_15] : memref<1x128xf32, #tpu.memory_space<vmem>>, vector<1x128xf32>
    %26 = vector.broadcast %25 : vector<1x128xf32> to vector<112x128xf32>
    %27 = arith.addf %24, %26 : vector<112x128xf32>
    %cst_16 = arith.constant 0.000000e+00 : f32
    %28 = vector.broadcast %cst_16 : f32 to vector<112x128xf32>
    %29 = arith.maximumf %27, %28 : vector<112x128xf32>
    %30 = vector.shape_cast %29 : vector<112x128xf32> to vector<56x2x128xf32>
    %31 = vector.extract_strided_slice %30 {offsets = [0, 0, 0], sizes = [56, 1, 128], strides = [1, 1, 1]} : vector<56x2x128xf32> to vector<56x1x128xf32>
    %32 = vector.shape_cast %31 : vector<56x1x128xf32> to vector<56x128xf32>
    %33 = vector.extract_strided_slice %30 {offsets = [0, 1, 0], sizes = [56, 1, 128], strides = [1, 1, 1]} : vector<56x2x128xf32> to vector<56x1x128xf32>
    %34 = vector.shape_cast %33 : vector<56x1x128xf32> to vector<56x128xf32>
    %35 = arith.maximumf %32, %34 : vector<56x128xf32>
    %36 = vector.shape_cast %35 : vector<56x128xf32> to vector<2x28x128xf32>
    %37 = vector.extract_strided_slice %36 {offsets = [0, 0, 0], sizes = [2, 14, 128], strides = [1, 1, 1]} : vector<2x28x128xf32> to vector<2x14x128xf32>
    %38 = vector.extract_strided_slice %36 {offsets = [0, 14, 0], sizes = [2, 14, 128], strides = [1, 1, 1]} : vector<2x28x128xf32> to vector<2x14x128xf32>
    %39 = arith.maximumf %37, %38 : vector<2x14x128xf32>
    %40 = vector.shape_cast %39 : vector<2x14x128xf32> to vector<28x128xf32>
    %c28 = arith.constant 28 : index
    %c0_17 = arith.constant 0 : index
    %41 = vector.load %arg13[%c28, %c0_17] : memref<200x128xf32, #tpu.memory_space<vmem>>, vector<28x128xf32>
    tpu.vector_store %arg13[%c28, %c0_17], %40 {strides = array<i32>} : memref<200x128xf32, #tpu.memory_space<vmem>>, vector<28x128xf32>,
    %c0_18 = arith.constant 0 : index
    %c224 = arith.constant 224 : index
    %c0_19 = arith.constant 0 : index
    %42 = vector.load %arg1[%c0_18, %c224, %c0_19] : memref<1x784x128xf32, #tpu.memory_space<vmem>>, vector<1x112x128xf32>
    %43 = vector.shape_cast %42 : vector<1x112x128xf32> to vector<112x128xf32>
    %c0_20 = arith.constant 0 : index
    %c0_21 = arith.constant 0 : index
    %44 = vector.load %arg2[%c0_20, %c0_21] : memref<128x128xf32, #tpu.memory_space<vmem>>, vector<128x128xf32>
    %cst_22 = arith.constant dense<0.000000e+00> : vector<112x128xf32>
    %45 = tpu.matmul %43, %44, %cst_22 {dimension_numbers = #tpu.dot_dimension_numbers<[1], [0], [0], [1], [0, 0, 1, 1], [], []>} : vector<112x128xf32>, vector<128x128xf32>, vector<112x128xf32> -> vector<112x128xf32>
    %c0_23 = arith.constant 0 : index
    %c0_24 = arith.constant 0 : index
    %46 = vector.load %arg3[%c0_23, %c0_24] : memref<1x128xf32, #tpu.memory_space<vmem>>, vector<1x128xf32>
    %47 = vector.broadcast %46 : vector<1x128xf32> to vector<112x128xf32>
    %48 = arith.addf %45, %47 : vector<112x128xf32>
    %cst_25 = arith.constant 0.000000e+00 : f32
    %49 = vector.broadcast %cst_25 : f32 to vector<112x128xf32>
    %50 = arith.maximumf %48, %49 : vector<112x128xf32>
    %51 = vector.shape_cast %50 : vector<112x128xf32> to vector<56x2x128xf32>
    %52 = vector.extract_strided_slice %51 {offsets = [0, 0, 0], sizes = [56, 1, 128], strides = [1, 1, 1]} : vector<56x2x128xf32> to vector<56x1x128xf32>
    %53 = vector.shape_cast %52 : vector<56x1x128xf32> to vector<56x128xf32>
    %54 = vector.extract_strided_slice %51 {offsets = [0, 1, 0], sizes = [56, 1, 128], strides = [1, 1, 1]} : vector<56x2x128xf32> to vector<56x1x128xf32>
    %55 = vector.shape_cast %54 : vector<56x1x128xf32> to vector<56x128xf32>
    %56 = arith.maximumf %53, %55 : vector<56x128xf32>
    %57 = vector.shape_cast %56 : vector<56x128xf32> to vector<2x28x128xf32>
    %58 = vector.extract_strided_slice %57 {offsets = [0, 0, 0], sizes = [2, 14, 128], strides = [1, 1, 1]} : vector<2x28x128xf32> to vector<2x14x128xf32>
    %59 = vector.extract_strided_slice %57 {offsets = [0, 14, 0], sizes = [2, 14, 128], strides = [1, 1, 1]} : vector<2x28x128xf32> to vector<2x14x128xf32>
    %60 = arith.maximumf %58, %59 : vector<2x14x128xf32>
    %61 = vector.shape_cast %60 : vector<2x14x128xf32> to vector<28x128xf32>
    %c56 = arith.constant 56 : index
    %c0_26 = arith.constant 0 : index
    %62 = vector.load %arg13[%c56, %c0_26] : memref<200x128xf32, #tpu.memory_space<vmem>>, vector<28x128xf32>
    tpu.vector_store %arg13[%c56, %c0_26], %61 {strides = array<i32>} : memref<200x128xf32, #tpu.memory_space<vmem>>, vector<28x128xf32>,
    %c0_27 = arith.constant 0 : index
    %c336 = arith.constant 336 : index
    %c0_28 = arith.constant 0 : index
    %63 = vector.load %arg1[%c0_27, %c336, %c0_28] : memref<1x784x128xf32, #tpu.memory_space<vmem>>, vector<1x112x128xf32>
    %64 = vector.shape_cast %63 : vector<1x112x128xf32> to vector<112x128xf32>
    %c0_29 = arith.constant 0 : index
    %c0_30 = arith.constant 0 : index
    %65 = vector.load %arg2[%c0_29, %c0_30] : memref<128x128xf32, #tpu.memory_space<vmem>>, vector<128x128xf32>
    %cst_31 = arith.constant dense<0.000000e+00> : vector<112x128xf32>
    %66 = tpu.matmul %64, %65, %cst_31 {dimension_numbers = #tpu.dot_dimension_numbers<[1], [0], [0], [1], [0, 0, 1, 1], [], []>} : vector<112x128xf32>, vector<128x128xf32>, vector<112x128xf32> -> vector<112x128xf32>
    %c0_32 = arith.constant 0 : index
    %c0_33 = arith.constant 0 : index
    %67 = vector.load %arg3[%c0_32, %c0_33] : memref<1x128xf32, #tpu.memory_space<vmem>>, vector<1x128xf32>
    %68 = vector.broadcast %67 : vector<1x128xf32> to vector<112x128xf32>
    %69 = arith.addf %66, %68 : vector<112x128xf32>
    %cst_34 = arith.constant 0.000000e+00 : f32
    %70 = vector.broadcast %cst_34 : f32 to vector<112x128xf32>
    %71 = arith.maximumf %69, %70 : vector<112x128xf32>
    %72 = vector.shape_cast %71 : vector<112x128xf32> to vector<56x2x128xf32>
    %73 = vector.extract_strided_slice %72 {offsets = [0, 0, 0], sizes = [56, 1, 128], strides = [1, 1, 1]} : vector<56x2x128xf32> to vector<56x1x128xf32>
    %74 = vector.shape_cast %73 : vector<56x1x128xf32> to vector<56x128xf32>
    %75 = vector.extract_strided_slice %72 {offsets = [0, 1, 0], sizes = [56, 1, 128], strides = [1, 1, 1]} : vector<56x2x128xf32> to vector<56x1x128xf32>
    %76 = vector.shape_cast %75 : vector<56x1x128xf32> to vector<56x128xf32>
    %77 = arith.maximumf %74, %76 : vector<56x128xf32>
    %78 = vector.shape_cast %77 : vector<56x128xf32> to vector<2x28x128xf32>
    %79 = vector.extract_strided_slice %78 {offsets = [0, 0, 0], sizes = [2, 14, 128], strides = [1, 1, 1]} : vector<2x28x128xf32> to vector<2x14x128xf32>
    %80 = vector.extract_strided_slice %78 {offsets = [0, 14, 0], sizes = [2, 14, 128], strides = [1, 1, 1]} : vector<2x28x128xf32> to vector<2x14x128xf32>
    %81 = arith.maximumf %79, %80 : vector<2x14x128xf32>
    %82 = vector.shape_cast %81 : vector<2x14x128xf32> to vector<28x128xf32>
    %c84 = arith.constant 84 : index
    %c0_35 = arith.constant 0 : index
    %83 = vector.load %arg13[%c84, %c0_35] : memref<200x128xf32, #tpu.memory_space<vmem>>, vector<28x128xf32>
    tpu.vector_store %arg13[%c84, %c0_35], %82 {strides = array<i32>} : memref<200x128xf32, #tpu.memory_space<vmem>>, vector<28x128xf32>,
    %c0_36 = arith.constant 0 : index
    %c448 = arith.constant 448 : index
    %c0_37 = arith.constant 0 : index
    %84 = vector.load %arg1[%c0_36, %c448, %c0_37] : memref<1x784x128xf32, #tpu.memory_space<vmem>>, vector<1x112x128xf32>
    %85 = vector.shape_cast %84 : vector<1x112x128xf32> to vector<112x128xf32>
    %c0_38 = arith.constant 0 : index
    %c0_39 = arith.constant 0 : index
    %86 = vector.load %arg2[%c0_38, %c0_39] : memref<128x128xf32, #tpu.memory_space<vmem>>, vector<128x128xf32>
    %cst_40 = arith.constant dense<0.000000e+00> : vector<112x128xf32>
    %87 = tpu.matmul %85, %86, %cst_40 {dimension_numbers = #tpu.dot_dimension_numbers<[1], [0], [0], [1], [0, 0, 1, 1], [], []>} : vector<112x128xf32>, vector<128x128xf32>, vector<112x128xf32> -> vector<112x128xf32>
    %c0_41 = arith.constant 0 : index
    %c0_42 = arith.constant 0 : index
    %88 = vector.load %arg3[%c0_41, %c0_42] : memref<1x128xf32, #tpu.memory_space<vmem>>, vector<1x128xf32>
    %89 = vector.broadcast %88 : vector<1x128xf32> to vector<112x128xf32>
    %90 = arith.addf %87, %89 : vector<112x128xf32>
    %cst_43 = arith.constant 0.000000e+00 : f32
    %91 = vector.broadcast %cst_43 : f32 to vector<112x128xf32>
    %92 = arith.maximumf %90, %91 : vector<112x128xf32>
    %93 = vector.shape_cast %92 : vector<112x128xf32> to vector<56x2x128xf32>
    %94 = vector.extract_strided_slice %93 {offsets = [0, 0, 0], sizes = [56, 1, 128], strides = [1, 1, 1]} : vector<56x2x128xf32> to vector<56x1x128xf32>
    %95 = vector.shape_cast %94 : vector<56x1x128xf32> to vector<56x128xf32>
    %96 = vector.extract_strided_slice %93 {offsets = [0, 1, 0], sizes = [56, 1, 128], strides = [1, 1, 1]} : vector<56x2x128xf32> to vector<56x1x128xf32>
    %97 = vector.shape_cast %96 : vector<56x1x128xf32> to vector<56x128xf32>
    %98 = arith.maximumf %95, %97 : vector<56x128xf32>
    %99 = vector.shape_cast %98 : vector<56x128xf32> to vector<2x28x128xf32>
    %100 = vector.extract_strided_slice %99 {offsets = [0, 0, 0], sizes = [2, 14, 128], strides = [1, 1, 1]} : vector<2x28x128xf32> to vector<2x14x128xf32>
    %101 = vector.extract_strided_slice %99 {offsets = [0, 14, 0], sizes = [2, 14, 128], strides = [1, 1, 1]} : vector<2x28x128xf32> to vector<2x14x128xf32>
    %102 = arith.maximumf %100, %101 : vector<2x14x128xf32>
    %103 = vector.shape_cast %102 : vector<2x14x128xf32> to vector<28x128xf32>
    %c112_44 = arith.constant 112 : index
    %c0_45 = arith.constant 0 : index
    %104 = vector.load %arg13[%c112_44, %c0_45] : memref<200x128xf32, #tpu.memory_space<vmem>>, vector<28x128xf32>
    tpu.vector_store %arg13[%c112_44, %c0_45], %103 {strides = array<i32>} : memref<200x128xf32, #tpu.memory_space<vmem>>, vector<28x128xf32>,
    %c0_46 = arith.constant 0 : index
    %c560 = arith.constant 560 : index
    %c0_47 = arith.constant 0 : index
    %105 = vector.load %arg1[%c0_46, %c560, %c0_47] : memref<1x784x128xf32, #tpu.memory_space<vmem>>, vector<1x112x128xf32>
    %106 = vector.shape_cast %105 : vector<1x112x128xf32> to vector<112x128xf32>
    %c0_48 = arith.constant 0 : index
    %c0_49 = arith.constant 0 : index
    %107 = vector.load %arg2[%c0_48, %c0_49] : memref<128x128xf32, #tpu.memory_space<vmem>>, vector<128x128xf32>
    %cst_50 = arith.constant dense<0.000000e+00> : vector<112x128xf32>
    %108 = tpu.matmul %106, %107, %cst_50 {dimension_numbers = #tpu.dot_dimension_numbers<[1], [0], [0], [1], [0, 0, 1, 1], [], []>} : vector<112x128xf32>, vector<128x128xf32>, vector<112x128xf32> -> vector<112x128xf32>
    %c0_51 = arith.constant 0 : index
    %c0_52 = arith.constant 0 : index
    %109 = vector.load %arg3[%c0_51, %c0_52] : memref<1x128xf32, #tpu.memory_space<vmem>>, vector<1x128xf32>
    %110 = vector.broadcast %109 : vector<1x128xf32> to vector<112x128xf32>
    %111 = arith.addf %108, %110 : vector<112x128xf32>
    %cst_53 = arith.constant 0.000000e+00 : f32
    %112 = vector.broadcast %cst_53 : f32 to vector<112x128xf32>
    %113 = arith.maximumf %111, %112 : vector<112x128xf32>
    %114 = vector.shape_cast %113 : vector<112x128xf32> to vector<56x2x128xf32>
    %115 = vector.extract_strided_slice %114 {offsets = [0, 0, 0], sizes = [56, 1, 128], strides = [1, 1, 1]} : vector<56x2x128xf32> to vector<56x1x128xf32>
    %116 = vector.shape_cast %115 : vector<56x1x128xf32> to vector<56x128xf32>
    %117 = vector.extract_strided_slice %114 {offsets = [0, 1, 0], sizes = [56, 1, 128], strides = [1, 1, 1]} : vector<56x2x128xf32> to vector<56x1x128xf32>
    %118 = vector.shape_cast %117 : vector<56x1x128xf32> to vector<56x128xf32>
    %119 = arith.maximumf %116, %118 : vector<56x128xf32>
    %120 = vector.shape_cast %119 : vector<56x128xf32> to vector<2x28x128xf32>
    %121 = vector.extract_strided_slice %120 {offsets = [0, 0, 0], sizes = [2, 14, 128], strides = [1, 1, 1]} : vector<2x28x128xf32> to vector<2x14x128xf32>
    %122 = vector.extract_strided_slice %120 {offsets = [0, 14, 0], sizes = [2, 14, 128], strides = [1, 1, 1]} : vector<2x28x128xf32> to vector<2x14x128xf32>
    %123 = arith.maximumf %121, %122 : vector<2x14x128xf32>
    %124 = vector.shape_cast %123 : vector<2x14x128xf32> to vector<28x128xf32>
    %c140 = arith.constant 140 : index
    %c0_54 = arith.constant 0 : index
    %125 = vector.load %arg13[%c140, %c0_54] : memref<200x128xf32, #tpu.memory_space<vmem>>, vector<28x128xf32>
    tpu.vector_store %arg13[%c140, %c0_54], %124 {strides = array<i32>} : memref<200x128xf32, #tpu.memory_space<vmem>>, vector<28x128xf32>,
    %c0_55 = arith.constant 0 : index
    %c672 = arith.constant 672 : index
    %c0_56 = arith.constant 0 : index
    %126 = vector.load %arg1[%c0_55, %c672, %c0_56] : memref<1x784x128xf32, #tpu.memory_space<vmem>>, vector<1x112x128xf32>
    %127 = vector.shape_cast %126 : vector<1x112x128xf32> to vector<112x128xf32>
    %c0_57 = arith.constant 0 : index
    %c0_58 = arith.constant 0 : index
    %128 = vector.load %arg2[%c0_57, %c0_58] : memref<128x128xf32, #tpu.memory_space<vmem>>, vector<128x128xf32>
    %cst_59 = arith.constant dense<0.000000e+00> : vector<112x128xf32>
    %129 = tpu.matmul %127, %128, %cst_59 {dimension_numbers = #tpu.dot_dimension_numbers<[1], [0], [0], [1], [0, 0, 1, 1], [], []>} : vector<112x128xf32>, vector<128x128xf32>, vector<112x128xf32> -> vector<112x128xf32>
    %c0_60 = arith.constant 0 : index
    %c0_61 = arith.constant 0 : index
    %130 = vector.load %arg3[%c0_60, %c0_61] : memref<1x128xf32, #tpu.memory_space<vmem>>, vector<1x128xf32>
    %131 = vector.broadcast %130 : vector<1x128xf32> to vector<112x128xf32>
    %132 = arith.addf %129, %131 : vector<112x128xf32>
    %cst_62 = arith.constant 0.000000e+00 : f32
    %133 = vector.broadcast %cst_62 : f32 to vector<112x128xf32>
    %134 = arith.maximumf %132, %133 : vector<112x128xf32>
    %135 = vector.shape_cast %134 : vector<112x128xf32> to vector<56x2x128xf32>
    %136 = vector.extract_strided_slice %135 {offsets = [0, 0, 0], sizes = [56, 1, 128], strides = [1, 1, 1]} : vector<56x2x128xf32> to vector<56x1x128xf32>
    %137 = vector.shape_cast %136 : vector<56x1x128xf32> to vector<56x128xf32>
    %138 = vector.extract_strided_slice %135 {offsets = [0, 1, 0], sizes = [56, 1, 128], strides = [1, 1, 1]} : vector<56x2x128xf32> to vector<56x1x128xf32>
    %139 = vector.shape_cast %138 : vector<56x1x128xf32> to vector<56x128xf32>
    %140 = arith.maximumf %137, %139 : vector<56x128xf32>
    %141 = vector.shape_cast %140 : vector<56x128xf32> to vector<2x28x128xf32>
    %142 = vector.extract_strided_slice %141 {offsets = [0, 0, 0], sizes = [2, 14, 128], strides = [1, 1, 1]} : vector<2x28x128xf32> to vector<2x14x128xf32>
    %143 = vector.extract_strided_slice %141 {offsets = [0, 14, 0], sizes = [2, 14, 128], strides = [1, 1, 1]} : vector<2x28x128xf32> to vector<2x14x128xf32>
    %144 = arith.maximumf %142, %143 : vector<2x14x128xf32>
    %145 = vector.shape_cast %144 : vector<2x14x128xf32> to vector<28x128xf32>
    %c168 = arith.constant 168 : index
    %c0_63 = arith.constant 0 : index
    %146 = vector.load %arg13[%c168, %c0_63] : memref<200x128xf32, #tpu.memory_space<vmem>>, vector<28x128xf32>
    tpu.vector_store %arg13[%c168, %c0_63], %145 {strides = array<i32>} : memref<200x128xf32, #tpu.memory_space<vmem>>, vector<28x128xf32>,
    %cst_64 = arith.constant 0.000000e+00 : f32
    %147 = vector.broadcast %cst_64 : f32 to vector<4x128xf32>
    %c196 = arith.constant 196 : index
    %c0_65 = arith.constant 0 : index
    %148 = vector.load %arg13[%c196, %c0_65] : memref<200x128xf32, #tpu.memory_space<vmem>>, vector<4x128xf32>
    tpu.vector_store %arg13[%c196, %c0_65], %147 {strides = array<i32>} : memref<200x128xf32, #tpu.memory_space<vmem>>, vector<4x128xf32>,
    %c0_66 = arith.constant 0 : index
    %c0_67 = arith.constant 0 : index
    %149 = vector.load %arg13[%c0_66, %c0_67] : memref<200x128xf32, #tpu.memory_space<vmem>>, vector<140x128xf32>
    %c0_68 = arith.constant 0 : index
    %c0_69 = arith.constant 0 : index
    %c0_70 = arith.constant 0 : index
    %150 = vector.load %arg4[%c0_68, %c0_69, %c0_70] : memref<25x128x128xf32, #tpu.memory_space<vmem>>, vector<1x128x128xf32>
    %151 = vector.shape_cast %150 : vector<1x128x128xf32> to vector<128x128xf32>
    %cst_71 = arith.constant dense<0.000000e+00> : vector<140x128xf32>
    %152 = tpu.matmul %149, %151, %cst_71 {dimension_numbers = #tpu.dot_dimension_numbers<[1], [0], [0], [1], [0, 0, 1, 1], [], []>} : vector<140x128xf32>, vector<128x128xf32>, vector<140x128xf32> -> vector<140x128xf32>
    %c1 = arith.constant 1 : index
    %c0_72 = arith.constant 0 : index
    %153 = vector.load %arg13[%c1, %c0_72] : memref<200x128xf32, #tpu.memory_space<vmem>>, vector<140x128xf32>
    %c1_73 = arith.constant 1 : index
    %c0_74 = arith.constant 0 : index
    %c0_75 = arith.constant 0 : index
    %154 = vector.load %arg4[%c1_73, %c0_74, %c0_75] : memref<25x128x128xf32, #tpu.memory_space<vmem>>, vector<1x128x128xf32>
    %155 = vector.shape_cast %154 : vector<1x128x128xf32> to vector<128x128xf32>
    %cst_76 = arith.constant dense<0.000000e+00> : vector<140x128xf32>
    %156 = tpu.matmul %153, %155, %cst_76 {dimension_numbers = #tpu.dot_dimension_numbers<[1], [0], [0], [1], [0, 0, 1, 1], [], []>} : vector<140x128xf32>, vector<128x128xf32>, vector<140x128xf32> -> vector<140x128xf32>
    %157 = arith.addf %152, %156 : vector<140x128xf32>
    %c2 = arith.constant 2 : index
    %c0_77 = arith.constant 0 : index
    %158 = vector.load %arg13[%c2, %c0_77] : memref<200x128xf32, #tpu.memory_space<vmem>>, vector<140x128xf32>
    %c2_78 = arith.constant 2 : index
    %c0_79 = arith.constant 0 : index
    %c0_80 = arith.constant 0 : index
    %159 = vector.load %arg4[%c2_78, %c0_79, %c0_80] : memref<25x128x128xf32, #tpu.memory_space<vmem>>, vector<1x128x128xf32>
    %160 = vector.shape_cast %159 : vector<1x128x128xf32> to vector<128x128xf32>
    %cst_81 = arith.constant dense<0.000000e+00> : vector<140x128xf32>
    %161 = tpu.matmul %158, %160, %cst_81 {dimension_numbers = #tpu.dot_dimension_numbers<[1], [0], [0], [1], [0, 0, 1, 1], [], []>} : vector<140x128xf32>, vector<128x128xf32>, vector<140x128xf32> -> vector<140x128xf32>
    %162 = arith.addf %157, %161 : vector<140x128xf32>
    %c3 = arith.constant 3 : index
    %c0_82 = arith.constant 0 : index
    %163 = vector.load %arg13[%c3, %c0_82] : memref<200x128xf32, #tpu.memory_space<vmem>>, vector<140x128xf32>
    %c3_83 = arith.constant 3 : index
    %c0_84 = arith.constant 0 : index
    %c0_85 = arith.constant 0 : index
    %164 = vector.load %arg4[%c3_83, %c0_84, %c0_85] : memref<25x128x128xf32, #tpu.memory_space<vmem>>, vector<1x128x128xf32>
    %165 = vector.shape_cast %164 : vector<1x128x128xf32> to vector<128x128xf32>
    %cst_86 = arith.constant dense<0.000000e+00> : vector<140x128xf32>
    %166 = tpu.matmul %163, %165, %cst_86 {dimension_numbers = #tpu.dot_dimension_numbers<[1], [0], [0], [1], [0, 0, 1, 1], [], []>} : vector<140x128xf32>, vector<128x128xf32>, vector<140x128xf32> -> vector<140x128xf32>
    %167 = arith.addf %162, %166 : vector<140x128xf32>
    %c4 = arith.constant 4 : index
    %c0_87 = arith.constant 0 : index
    %168 = vector.load %arg13[%c4, %c0_87] : memref<200x128xf32, #tpu.memory_space<vmem>>, vector<140x128xf32>
    %c4_88 = arith.constant 4 : index
    %c0_89 = arith.constant 0 : index
    %c0_90 = arith.constant 0 : index
    %169 = vector.load %arg4[%c4_88, %c0_89, %c0_90] : memref<25x128x128xf32, #tpu.memory_space<vmem>>, vector<1x128x128xf32>
    %170 = vector.shape_cast %169 : vector<1x128x128xf32> to vector<128x128xf32>
    %cst_91 = arith.constant dense<0.000000e+00> : vector<140x128xf32>
    %171 = tpu.matmul %168, %170, %cst_91 {dimension_numbers = #tpu.dot_dimension_numbers<[1], [0], [0], [1], [0, 0, 1, 1], [], []>} : vector<140x128xf32>, vector<128x128xf32>, vector<140x128xf32> -> vector<140x128xf32>
    %172 = arith.addf %167, %171 : vector<140x128xf32>
    %c14 = arith.constant 14 : index
    %c0_92 = arith.constant 0 : index
    %173 = vector.load %arg13[%c14, %c0_92] : memref<200x128xf32, #tpu.memory_space<vmem>>, vector<140x128xf32>
    %c5 = arith.constant 5 : index
    %c0_93 = arith.constant 0 : index
    %c0_94 = arith.constant 0 : index
    %174 = vector.load %arg4[%c5, %c0_93, %c0_94] : memref<25x128x128xf32, #tpu.memory_space<vmem>>, vector<1x128x128xf32>
    %175 = vector.shape_cast %174 : vector<1x128x128xf32> to vector<128x128xf32>
    %cst_95 = arith.constant dense<0.000000e+00> : vector<140x128xf32>
    %176 = tpu.matmul %173, %175, %cst_95 {dimension_numbers = #tpu.dot_dimension_numbers<[1], [0], [0], [1], [0, 0, 1, 1], [], []>} : vector<140x128xf32>, vector<128x128xf32>, vector<140x128xf32> -> vector<140x128xf32>
    %177 = arith.addf %172, %176 : vector<140x128xf32>
    %c15 = arith.constant 15 : index
    %c0_96 = arith.constant 0 : index
    %178 = vector.load %arg13[%c15, %c0_96] : memref<200x128xf32, #tpu.memory_space<vmem>>, vector<140x128xf32>
    %c6 = arith.constant 6 : index
    %c0_97 = arith.constant 0 : index
    %c0_98 = arith.constant 0 : index
    %179 = vector.load %arg4[%c6, %c0_97, %c0_98] : memref<25x128x128xf32, #tpu.memory_space<vmem>>, vector<1x128x128xf32>
    %180 = vector.shape_cast %179 : vector<1x128x128xf32> to vector<128x128xf32>
    %cst_99 = arith.constant dense<0.000000e+00> : vector<140x128xf32>
    %181 = tpu.matmul %178, %180, %cst_99 {dimension_numbers = #tpu.dot_dimension_numbers<[1], [0], [0], [1], [0, 0, 1, 1], [], []>} : vector<140x128xf32>, vector<128x128xf32>, vector<140x128xf32> -> vector<140x128xf32>
    %182 = arith.addf %177, %181 : vector<140x128xf32>
    %c16 = arith.constant 16 : index
    %c0_100 = arith.constant 0 : index
    %183 = vector.load %arg13[%c16, %c0_100] : memref<200x128xf32, #tpu.memory_space<vmem>>, vector<140x128xf32>
    %c7 = arith.constant 7 : index
    %c0_101 = arith.constant 0 : index
    %c0_102 = arith.constant 0 : index
    %184 = vector.load %arg4[%c7, %c0_101, %c0_102] : memref<25x128x128xf32, #tpu.memory_space<vmem>>, vector<1x128x128xf32>
    %185 = vector.shape_cast %184 : vector<1x128x128xf32> to vector<128x128xf32>
    %cst_103 = arith.constant dense<0.000000e+00> : vector<140x128xf32>
    %186 = tpu.matmul %183, %185, %cst_103 {dimension_numbers = #tpu.dot_dimension_numbers<[1], [0], [0], [1], [0, 0, 1, 1], [], []>} : vector<140x128xf32>, vector<128x128xf32>, vector<140x128xf32> -> vector<140x128xf32>
    %187 = arith.addf %182, %186 : vector<140x128xf32>
    %c17 = arith.constant 17 : index
    %c0_104 = arith.constant 0 : index
    %188 = vector.load %arg13[%c17, %c0_104] : memref<200x128xf32, #tpu.memory_space<vmem>>, vector<140x128xf32>
    %c8 = arith.constant 8 : index
    %c0_105 = arith.constant 0 : index
    %c0_106 = arith.constant 0 : index
    %189 = vector.load %arg4[%c8, %c0_105, %c0_106] : memref<25x128x128xf32, #tpu.memory_space<vmem>>, vector<1x128x128xf32>
    %190 = vector.shape_cast %189 : vector<1x128x128xf32> to vector<128x128xf32>
    %cst_107 = arith.constant dense<0.000000e+00> : vector<140x128xf32>
    %191 = tpu.matmul %188, %190, %cst_107 {dimension_numbers = #tpu.dot_dimension_numbers<[1], [0], [0], [1], [0, 0, 1, 1], [], []>} : vector<140x128xf32>, vector<128x128xf32>, vector<140x128xf32> -> vector<140x128xf32>
    %192 = arith.addf %187, %191 : vector<140x128xf32>
    %c18 = arith.constant 18 : index
    %c0_108 = arith.constant 0 : index
    %193 = vector.load %arg13[%c18, %c0_108] : memref<200x128xf32, #tpu.memory_space<vmem>>, vector<140x128xf32>
    %c9 = arith.constant 9 : index
    %c0_109 = arith.constant 0 : index
    %c0_110 = arith.constant 0 : index
    %194 = vector.load %arg4[%c9, %c0_109, %c0_110] : memref<25x128x128xf32, #tpu.memory_space<vmem>>, vector<1x128x128xf32>
    %195 = vector.shape_cast %194 : vector<1x128x128xf32> to vector<128x128xf32>
    %cst_111 = arith.constant dense<0.000000e+00> : vector<140x128xf32>
    %196 = tpu.matmul %193, %195, %cst_111 {dimension_numbers = #tpu.dot_dimension_numbers<[1], [0], [0], [1], [0, 0, 1, 1], [], []>} : vector<140x128xf32>, vector<128x128xf32>, vector<140x128xf32> -> vector<140x128xf32>
    %197 = arith.addf %192, %196 : vector<140x128xf32>
    %c28_112 = arith.constant 28 : index
    %c0_113 = arith.constant 0 : index
    %198 = vector.load %arg13[%c28_112, %c0_113] : memref<200x128xf32, #tpu.memory_space<vmem>>, vector<140x128xf32>
    %c10 = arith.constant 10 : index
    %c0_114 = arith.constant 0 : index
    %c0_115 = arith.constant 0 : index
    %199 = vector.load %arg4[%c10, %c0_114, %c0_115] : memref<25x128x128xf32, #tpu.memory_space<vmem>>, vector<1x128x128xf32>
    %200 = vector.shape_cast %199 : vector<1x128x128xf32> to vector<128x128xf32>
    %cst_116 = arith.constant dense<0.000000e+00> : vector<140x128xf32>
    %201 = tpu.matmul %198, %200, %cst_116 {dimension_numbers = #tpu.dot_dimension_numbers<[1], [0], [0], [1], [0, 0, 1, 1], [], []>} : vector<140x128xf32>, vector<128x128xf32>, vector<140x128xf32> -> vector<140x128xf32>
    %202 = arith.addf %197, %201 : vector<140x128xf32>
    %c29 = arith.constant 29 : index
    %c0_117 = arith.constant 0 : index
    %203 = vector.load %arg13[%c29, %c0_117] : memref<200x128xf32, #tpu.memory_space<vmem>>, vector<140x128xf32>
    %c11 = arith.constant 11 : index
    %c0_118 = arith.constant 0 : index
    %c0_119 = arith.constant 0 : index
    %204 = vector.load %arg4[%c11, %c0_118, %c0_119] : memref<25x128x128xf32, #tpu.memory_space<vmem>>, vector<1x128x128xf32>
    %205 = vector.shape_cast %204 : vector<1x128x128xf32> to vector<128x128xf32>
    %cst_120 = arith.constant dense<0.000000e+00> : vector<140x128xf32>
    %206 = tpu.matmul %203, %205, %cst_120 {dimension_numbers = #tpu.dot_dimension_numbers<[1], [0], [0], [1], [0, 0, 1, 1], [], []>} : vector<140x128xf32>, vector<128x128xf32>, vector<140x128xf32> -> vector<140x128xf32>
    %207 = arith.addf %202, %206 : vector<140x128xf32>
    %c30 = arith.constant 30 : index
    %c0_121 = arith.constant 0 : index
    %208 = vector.load %arg13[%c30, %c0_121] : memref<200x128xf32, #tpu.memory_space<vmem>>, vector<140x128xf32>
    %c12 = arith.constant 12 : index
    %c0_122 = arith.constant 0 : index
    %c0_123 = arith.constant 0 : index
    %209 = vector.load %arg4[%c12, %c0_122, %c0_123] : memref<25x128x128xf32, #tpu.memory_space<vmem>>, vector<1x128x128xf32>
    %210 = vector.shape_cast %209 : vector<1x128x128xf32> to vector<128x128xf32>
    %cst_124 = arith.constant dense<0.000000e+00> : vector<140x128xf32>
    %211 = tpu.matmul %208, %210, %cst_124 {dimension_numbers = #tpu.dot_dimension_numbers<[1], [0], [0], [1], [0, 0, 1, 1], [], []>} : vector<140x128xf32>, vector<128x128xf32>, vector<140x128xf32> -> vector<140x128xf32>
    %212 = arith.addf %207, %211 : vector<140x128xf32>
    %c31 = arith.constant 31 : index
    %c0_125 = arith.constant 0 : index
    %213 = vector.load %arg13[%c31, %c0_125] : memref<200x128xf32, #tpu.memory_space<vmem>>, vector<140x128xf32>
    %c13 = arith.constant 13 : index
    %c0_126 = arith.constant 0 : index
    %c0_127 = arith.constant 0 : index
    %214 = vector.load %arg4[%c13, %c0_126, %c0_127] : memref<25x128x128xf32, #tpu.memory_space<vmem>>, vector<1x128x128xf32>
    %215 = vector.shape_cast %214 : vector<1x128x128xf32> to vector<128x128xf32>
    %cst_128 = arith.constant dense<0.000000e+00> : vector<140x128xf32>
    %216 = tpu.matmul %213, %215, %cst_128 {dimension_numbers = #tpu.dot_dimension_numbers<[1], [0], [0], [1], [0, 0, 1, 1], [], []>} : vector<140x128xf32>, vector<128x128xf32>, vector<140x128xf32> -> vector<140x128xf32>
    %217 = arith.addf %212, %216 : vector<140x128xf32>
    %c32 = arith.constant 32 : index
    %c0_129 = arith.constant 0 : index
    %218 = vector.load %arg13[%c32, %c0_129] : memref<200x128xf32, #tpu.memory_space<vmem>>, vector<140x128xf32>
    %c14_130 = arith.constant 14 : index
    %c0_131 = arith.constant 0 : index
    %c0_132 = arith.constant 0 : index
    %219 = vector.load %arg4[%c14_130, %c0_131, %c0_132] : memref<25x128x128xf32, #tpu.memory_space<vmem>>, vector<1x128x128xf32>
    %220 = vector.shape_cast %219 : vector<1x128x128xf32> to vector<128x128xf32>
    %cst_133 = arith.constant dense<0.000000e+00> : vector<140x128xf32>
    %221 = tpu.matmul %218, %220, %cst_133 {dimension_numbers = #tpu.dot_dimension_numbers<[1], [0], [0], [1], [0, 0, 1, 1], [], []>} : vector<140x128xf32>, vector<128x128xf32>, vector<140x128xf32> -> vector<140x128xf32>
    %222 = arith.addf %217, %221 : vector<140x128xf32>
    %c42 = arith.constant 42 : index
    %c0_134 = arith.constant 0 : index
    %223 = vector.load %arg13[%c42, %c0_134] : memref<200x128xf32, #tpu.memory_space<vmem>>, vector<140x128xf32>
    %c15_135 = arith.constant 15 : index
    %c0_136 = arith.constant 0 : index
    %c0_137 = arith.constant 0 : index
    %224 = vector.load %arg4[%c15_135, %c0_136, %c0_137] : memref<25x128x128xf32, #tpu.memory_space<vmem>>, vector<1x128x128xf32>
    %225 = vector.shape_cast %224 : vector<1x128x128xf32> to vector<128x128xf32>
    %cst_138 = arith.constant dense<0.000000e+00> : vector<140x128xf32>
    %226 = tpu.matmul %223, %225, %cst_138 {dimension_numbers = #tpu.dot_dimension_numbers<[1], [0], [0], [1], [0, 0, 1, 1], [], []>} : vector<140x128xf32>, vector<128x128xf32>, vector<140x128xf32> -> vector<140x128xf32>
    %227 = arith.addf %222, %226 : vector<140x128xf32>
    %c43 = arith.constant 43 : index
    %c0_139 = arith.constant 0 : index
    %228 = vector.load %arg13[%c43, %c0_139] : memref<200x128xf32, #tpu.memory_space<vmem>>, vector<140x128xf32>
    %c16_140 = arith.constant 16 : index
    %c0_141 = arith.constant 0 : index
    %c0_142 = arith.constant 0 : index
    %229 = vector.load %arg4[%c16_140, %c0_141, %c0_142] : memref<25x128x128xf32, #tpu.memory_space<vmem>>, vector<1x128x128xf32>
    %230 = vector.shape_cast %229 : vector<1x128x128xf32> to vector<128x128xf32>
    %cst_143 = arith.constant dense<0.000000e+00> : vector<140x128xf32>
    %231 = tpu.matmul %228, %230, %cst_143 {dimension_numbers = #tpu.dot_dimension_numbers<[1], [0], [0], [1], [0, 0, 1, 1], [], []>} : vector<140x128xf32>, vector<128x128xf32>, vector<140x128xf32> -> vector<140x128xf32>
    %232 = arith.addf %227, %231 : vector<140x128xf32>
    %c44 = arith.constant 44 : index
    %c0_144 = arith.constant 0 : index
    %233 = vector.load %arg13[%c44, %c0_144] : memref<200x128xf32, #tpu.memory_space<vmem>>, vector<140x128xf32>
    %c17_145 = arith.constant 17 : index
    %c0_146 = arith.constant 0 : index
    %c0_147 = arith.constant 0 : index
    %234 = vector.load %arg4[%c17_145, %c0_146, %c0_147] : memref<25x128x128xf32, #tpu.memory_space<vmem>>, vector<1x128x128xf32>
    %235 = vector.shape_cast %234 : vector<1x128x128xf32> to vector<128x128xf32>
    %cst_148 = arith.constant dense<0.000000e+00> : vector<140x128xf32>
    %236 = tpu.matmul %233, %235, %cst_148 {dimension_numbers = #tpu.dot_dimension_numbers<[1], [0], [0], [1], [0, 0, 1, 1], [], []>} : vector<140x128xf32>, vector<128x128xf32>, vector<140x128xf32> -> vector<140x128xf32>
    %237 = arith.addf %232, %236 : vector<140x128xf32>
    %c45 = arith.constant 45 : index
    %c0_149 = arith.constant 0 : index
    %238 = vector.load %arg13[%c45, %c0_149] : memref<200x128xf32, #tpu.memory_space<vmem>>, vector<140x128xf32>
    %c18_150 = arith.constant 18 : index
    %c0_151 = arith.constant 0 : index
    %c0_152 = arith.constant 0 : index
    %239 = vector.load %arg4[%c18_150, %c0_151, %c0_152] : memref<25x128x128xf32, #tpu.memory_space<vmem>>, vector<1x128x128xf32>
    %240 = vector.shape_cast %239 : vector<1x128x128xf32> to vector<128x128xf32>
    %cst_153 = arith.constant dense<0.000000e+00> : vector<140x128xf32>
    %241 = tpu.matmul %238, %240, %cst_153 {dimension_numbers = #tpu.dot_dimension_numbers<[1], [0], [0], [1], [0, 0, 1, 1], [], []>} : vector<140x128xf32>, vector<128x128xf32>, vector<140x128xf32> -> vector<140x128xf32>
    %242 = arith.addf %237, %241 : vector<140x128xf32>
    %c46 = arith.constant 46 : index
    %c0_154 = arith.constant 0 : index
    %243 = vector.load %arg13[%c46, %c0_154] : memref<200x128xf32, #tpu.memory_space<vmem>>, vector<140x128xf32>
    %c19 = arith.constant 19 : index
    %c0_155 = arith.constant 0 : index
    %c0_156 = arith.constant 0 : index
    %244 = vector.load %arg4[%c19, %c0_155, %c0_156] : memref<25x128x128xf32, #tpu.memory_space<vmem>>, vector<1x128x128xf32>
    %245 = vector.shape_cast %244 : vector<1x128x128xf32> to vector<128x128xf32>
    %cst_157 = arith.constant dense<0.000000e+00> : vector<140x128xf32>
    %246 = tpu.matmul %243, %245, %cst_157 {dimension_numbers = #tpu.dot_dimension_numbers<[1], [0], [0], [1], [0, 0, 1, 1], [], []>} : vector<140x128xf32>, vector<128x128xf32>, vector<140x128xf32> -> vector<140x128xf32>
    %247 = arith.addf %242, %246 : vector<140x128xf32>
    %c56_158 = arith.constant 56 : index
    %c0_159 = arith.constant 0 : index
    %248 = vector.load %arg13[%c56_158, %c0_159] : memref<200x128xf32, #tpu.memory_space<vmem>>, vector<140x128xf32>
    %c20 = arith.constant 20 : index
    %c0_160 = arith.constant 0 : index
    %c0_161 = arith.constant 0 : index
    %249 = vector.load %arg4[%c20, %c0_160, %c0_161] : memref<25x128x128xf32, #tpu.memory_space<vmem>>, vector<1x128x128xf32>
    %250 = vector.shape_cast %249 : vector<1x128x128xf32> to vector<128x128xf32>
    %cst_162 = arith.constant dense<0.000000e+00> : vector<140x128xf32>
    %251 = tpu.matmul %248, %250, %cst_162 {dimension_numbers = #tpu.dot_dimension_numbers<[1], [0], [0], [1], [0, 0, 1, 1], [], []>} : vector<140x128xf32>, vector<128x128xf32>, vector<140x128xf32> -> vector<140x128xf32>
    %252 = arith.addf %247, %251 : vector<140x128xf32>
    %c57 = arith.constant 57 : index
    %c0_163 = arith.constant 0 : index
    %253 = vector.load %arg13[%c57, %c0_163] : memref<200x128xf32, #tpu.memory_space<vmem>>, vector<140x128xf32>
    %c21 = arith.constant 21 : index
    %c0_164 = arith.constant 0 : index
    %c0_165 = arith.constant 0 : index
    %254 = vector.load %arg4[%c21, %c0_164, %c0_165] : memref<25x128x128xf32, #tpu.memory_space<vmem>>, vector<1x128x128xf32>
    %255 = vector.shape_cast %254 : vector<1x128x128xf32> to vector<128x128xf32>
    %cst_166 = arith.constant dense<0.000000e+00> : vector<140x128xf32>
    %256 = tpu.matmul %253, %255, %cst_166 {dimension_numbers = #tpu.dot_dimension_numbers<[1], [0], [0], [1], [0, 0, 1, 1], [], []>} : vector<140x128xf32>, vector<128x128xf32>, vector<140x128xf32> -> vector<140x128xf32>
    %257 = arith.addf %252, %256 : vector<140x128xf32>
    %c58 = arith.constant 58 : index
    %c0_167 = arith.constant 0 : index
    %258 = vector.load %arg13[%c58, %c0_167] : memref<200x128xf32, #tpu.memory_space<vmem>>, vector<140x128xf32>
    %c22 = arith.constant 22 : index
    %c0_168 = arith.constant 0 : index
    %c0_169 = arith.constant 0 : index
    %259 = vector.load %arg4[%c22, %c0_168, %c0_169] : memref<25x128x128xf32, #tpu.memory_space<vmem>>, vector<1x128x128xf32>
    %260 = vector.shape_cast %259 : vector<1x128x128xf32> to vector<128x128xf32>
    %cst_170 = arith.constant dense<0.000000e+00> : vector<140x128xf32>
    %261 = tpu.matmul %258, %260, %cst_170 {dimension_numbers = #tpu.dot_dimension_numbers<[1], [0], [0], [1], [0, 0, 1, 1], [], []>} : vector<140x128xf32>, vector<128x128xf32>, vector<140x128xf32> -> vector<140x128xf32>
    %262 = arith.addf %257, %261 : vector<140x128xf32>
    %c59 = arith.constant 59 : index
    %c0_171 = arith.constant 0 : index
    %263 = vector.load %arg13[%c59, %c0_171] : memref<200x128xf32, #tpu.memory_space<vmem>>, vector<140x128xf32>
    %c23 = arith.constant 23 : index
    %c0_172 = arith.constant 0 : index
    %c0_173 = arith.constant 0 : index
    %264 = vector.load %arg4[%c23, %c0_172, %c0_173] : memref<25x128x128xf32, #tpu.memory_space<vmem>>, vector<1x128x128xf32>
    %265 = vector.shape_cast %264 : vector<1x128x128xf32> to vector<128x128xf32>
    %cst_174 = arith.constant dense<0.000000e+00> : vector<140x128xf32>
    %266 = tpu.matmul %263, %265, %cst_174 {dimension_numbers = #tpu.dot_dimension_numbers<[1], [0], [0], [1], [0, 0, 1, 1], [], []>} : vector<140x128xf32>, vector<128x128xf32>, vector<140x128xf32> -> vector<140x128xf32>
    %267 = arith.addf %262, %266 : vector<140x128xf32>
    %c60 = arith.constant 60 : index
    %c0_175 = arith.constant 0 : index
    %268 = vector.load %arg13[%c60, %c0_175] : memref<200x128xf32, #tpu.memory_space<vmem>>, vector<140x128xf32>
    %c24 = arith.constant 24 : index
    %c0_176 = arith.constant 0 : index
    %c0_177 = arith.constant 0 : index
    %269 = vector.load %arg4[%c24, %c0_176, %c0_177] : memref<25x128x128xf32, #tpu.memory_space<vmem>>, vector<1x128x128xf32>
    %270 = vector.shape_cast %269 : vector<1x128x128xf32> to vector<128x128xf32>
    %cst_178 = arith.constant dense<0.000000e+00> : vector<140x128xf32>
    %271 = tpu.matmul %268, %270, %cst_178 {dimension_numbers = #tpu.dot_dimension_numbers<[1], [0], [0], [1], [0, 0, 1, 1], [], []>} : vector<140x128xf32>, vector<128x128xf32>, vector<140x128xf32> -> vector<140x128xf32>
    %272 = arith.addf %267, %271 : vector<140x128xf32>
    %c0_179 = arith.constant 0 : index
    %c0_180 = arith.constant 0 : index
    %273 = vector.load %arg5[%c0_179, %c0_180] : memref<1x128xf32, #tpu.memory_space<vmem>>, vector<1x128xf32>
    %274 = vector.broadcast %273 : vector<1x128xf32> to vector<140x128xf32>
    %275 = arith.addf %272, %274 : vector<140x128xf32>
    %cst_181 = arith.constant 0.000000e+00 : f32
    %276 = vector.broadcast %cst_181 : f32 to vector<140x128xf32>
    %277 = arith.maximumf %275, %276 : vector<140x128xf32>
    %278 = vector.shape_cast %277 : vector<140x128xf32> to vector<70x2x128xf32>
    %279 = vector.extract_strided_slice %278 {offsets = [0, 0, 0], sizes = [70, 1, 128], strides = [1, 1, 1]} : vector<70x2x128xf32> to vector<70x1x128xf32>
    %280 = vector.shape_cast %279 : vector<70x1x128xf32> to vector<70x128xf32>
    %281 = vector.extract_strided_slice %278 {offsets = [0, 1, 0], sizes = [70, 1, 128], strides = [1, 1, 1]} : vector<70x2x128xf32> to vector<70x1x128xf32>
    %282 = vector.shape_cast %281 : vector<70x1x128xf32> to vector<70x128xf32>
    %283 = arith.maximumf %280, %282 : vector<70x128xf32>
    %284 = vector.shape_cast %283 : vector<70x128xf32> to vector<10x7x128xf32>
    %285 = vector.extract_strided_slice %284 {offsets = [0, 0, 0], sizes = [10, 5, 128], strides = [1, 1, 1]} : vector<10x7x128xf32> to vector<10x5x128xf32>
    %286 = vector.shape_cast %285 : vector<10x5x128xf32> to vector<5x10x128xf32>
    %287 = vector.extract_strided_slice %286 {offsets = [0, 0, 0], sizes = [5, 5, 128], strides = [1, 1, 1]} : vector<5x10x128xf32> to vector<5x5x128xf32>
    %288 = vector.extract_strided_slice %286 {offsets = [0, 5, 0], sizes = [5, 5, 128], strides = [1, 1, 1]} : vector<5x10x128xf32> to vector<5x5x128xf32>
    %289 = arith.maximumf %287, %288 : vector<5x5x128xf32>
    %290 = vector.shape_cast %289 : vector<5x5x128xf32> to vector<25x128xf32>
    %c0_182 = arith.constant 0 : index
    %c0_183 = arith.constant 0 : index
    %291 = vector.load %arg7[%c0_182, %c0_183] : memref<1x128xf32, #tpu.memory_space<vmem>>, vector<1x128xf32>
    %292 = vector.extract_strided_slice %290 {offsets = [0, 0], sizes = [1, 128], strides = [1, 1]} : vector<25x128xf32> to vector<1x128xf32>
    %c0_184 = arith.constant 0 : index
    %c0_185 = arith.constant 0 : index
    %c0_186 = arith.constant 0 : index
    %293 = vector.load %arg6[%c0_184, %c0_185, %c0_186] : memref<25x128x128xf32, #tpu.memory_space<vmem>>, vector<1x128x128xf32>
    %294 = vector.shape_cast %293 : vector<1x128x128xf32> to vector<128x128xf32>
    %cst_187 = arith.constant dense<0.000000e+00> : vector<1x128xf32>
    %295 = tpu.matmul %292, %294, %cst_187 {dimension_numbers = #tpu.dot_dimension_numbers<[1], [0], [0], [1], [0, 0, 1, 1], [], []>} : vector<1x128xf32>, vector<128x128xf32>, vector<1x128xf32> -> vector<1x128xf32>
    %296 = arith.addf %291, %295 : vector<1x128xf32>
    %297 = vector.extract_strided_slice %290 {offsets = [1, 0], sizes = [1, 128], strides = [1, 1]} : vector<25x128xf32> to vector<1x128xf32>
    %c1_188 = arith.constant 1 : index
    %c0_189 = arith.constant 0 : index
    %c0_190 = arith.constant 0 : index
    %298 = vector.load %arg6[%c1_188, %c0_189, %c0_190] : memref<25x128x128xf32, #tpu.memory_space<vmem>>, vector<1x128x128xf32>
    %299 = vector.shape_cast %298 : vector<1x128x128xf32> to vector<128x128xf32>
    %cst_191 = arith.constant dense<0.000000e+00> : vector<1x128xf32>
    %300 = tpu.matmul %297, %299, %cst_191 {dimension_numbers = #tpu.dot_dimension_numbers<[1], [0], [0], [1], [0, 0, 1, 1], [], []>} : vector<1x128xf32>, vector<128x128xf32>, vector<1x128xf32> -> vector<1x128xf32>
    %301 = arith.addf %296, %300 : vector<1x128xf32>
    %302 = vector.extract_strided_slice %290 {offsets = [2, 0], sizes = [1, 128], strides = [1, 1]} : vector<25x128xf32> to vector<1x128xf32>
    %c2_192 = arith.constant 2 : index
    %c0_193 = arith.constant 0 : index
    %c0_194 = arith.constant 0 : index
    %303 = vector.load %arg6[%c2_192, %c0_193, %c0_194] : memref<25x128x128xf32, #tpu.memory_space<vmem>>, vector<1x128x128xf32>
    %304 = vector.shape_cast %303 : vector<1x128x128xf32> to vector<128x128xf32>
    %cst_195 = arith.constant dense<0.000000e+00> : vector<1x128xf32>
    %305 = tpu.matmul %302, %304, %cst_195 {dimension_numbers = #tpu.dot_dimension_numbers<[1], [0], [0], [1], [0, 0, 1, 1], [], []>} : vector<1x128xf32>, vector<128x128xf32>, vector<1x128xf32> -> vector<1x128xf32>
    %306 = arith.addf %301, %305 : vector<1x128xf32>
    %307 = vector.extract_strided_slice %290 {offsets = [3, 0], sizes = [1, 128], strides = [1, 1]} : vector<25x128xf32> to vector<1x128xf32>
    %c3_196 = arith.constant 3 : index
    %c0_197 = arith.constant 0 : index
    %c0_198 = arith.constant 0 : index
    %308 = vector.load %arg6[%c3_196, %c0_197, %c0_198] : memref<25x128x128xf32, #tpu.memory_space<vmem>>, vector<1x128x128xf32>
    %309 = vector.shape_cast %308 : vector<1x128x128xf32> to vector<128x128xf32>
    %cst_199 = arith.constant dense<0.000000e+00> : vector<1x128xf32>
    %310 = tpu.matmul %307, %309, %cst_199 {dimension_numbers = #tpu.dot_dimension_numbers<[1], [0], [0], [1], [0, 0, 1, 1], [], []>} : vector<1x128xf32>, vector<128x128xf32>, vector<1x128xf32> -> vector<1x128xf32>
    %311 = arith.addf %306, %310 : vector<1x128xf32>
    %312 = vector.extract_strided_slice %290 {offsets = [4, 0], sizes = [1, 128], strides = [1, 1]} : vector<25x128xf32> to vector<1x128xf32>
    %c4_200 = arith.constant 4 : index
    %c0_201 = arith.constant 0 : index
    %c0_202 = arith.constant 0 : index
    %313 = vector.load %arg6[%c4_200, %c0_201, %c0_202] : memref<25x128x128xf32, #tpu.memory_space<vmem>>, vector<1x128x128xf32>
    %314 = vector.shape_cast %313 : vector<1x128x128xf32> to vector<128x128xf32>
    %cst_203 = arith.constant dense<0.000000e+00> : vector<1x128xf32>
    %315 = tpu.matmul %312, %314, %cst_203 {dimension_numbers = #tpu.dot_dimension_numbers<[1], [0], [0], [1], [0, 0, 1, 1], [], []>} : vector<1x128xf32>, vector<128x128xf32>, vector<1x128xf32> -> vector<1x128xf32>
    %316 = arith.addf %311, %315 : vector<1x128xf32>
    %317 = vector.extract_strided_slice %290 {offsets = [5, 0], sizes = [1, 128], strides = [1, 1]} : vector<25x128xf32> to vector<1x128xf32>
    %c5_204 = arith.constant 5 : index
    %c0_205 = arith.constant 0 : index
    %c0_206 = arith.constant 0 : index
    %318 = vector.load %arg6[%c5_204, %c0_205, %c0_206] : memref<25x128x128xf32, #tpu.memory_space<vmem>>, vector<1x128x128xf32>
    %319 = vector.shape_cast %318 : vector<1x128x128xf32> to vector<128x128xf32>
    %cst_207 = arith.constant dense<0.000000e+00> : vector<1x128xf32>
    %320 = tpu.matmul %317, %319, %cst_207 {dimension_numbers = #tpu.dot_dimension_numbers<[1], [0], [0], [1], [0, 0, 1, 1], [], []>} : vector<1x128xf32>, vector<128x128xf32>, vector<1x128xf32> -> vector<1x128xf32>
    %321 = arith.addf %316, %320 : vector<1x128xf32>
    %322 = vector.extract_strided_slice %290 {offsets = [6, 0], sizes = [1, 128], strides = [1, 1]} : vector<25x128xf32> to vector<1x128xf32>
    %c6_208 = arith.constant 6 : index
    %c0_209 = arith.constant 0 : index
    %c0_210 = arith.constant 0 : index
    %323 = vector.load %arg6[%c6_208, %c0_209, %c0_210] : memref<25x128x128xf32, #tpu.memory_space<vmem>>, vector<1x128x128xf32>
    %324 = vector.shape_cast %323 : vector<1x128x128xf32> to vector<128x128xf32>
    %cst_211 = arith.constant dense<0.000000e+00> : vector<1x128xf32>
    %325 = tpu.matmul %322, %324, %cst_211 {dimension_numbers = #tpu.dot_dimension_numbers<[1], [0], [0], [1], [0, 0, 1, 1], [], []>} : vector<1x128xf32>, vector<128x128xf32>, vector<1x128xf32> -> vector<1x128xf32>
    %326 = arith.addf %321, %325 : vector<1x128xf32>
    %327 = vector.extract_strided_slice %290 {offsets = [7, 0], sizes = [1, 128], strides = [1, 1]} : vector<25x128xf32> to vector<1x128xf32>
    %c7_212 = arith.constant 7 : index
    %c0_213 = arith.constant 0 : index
    %c0_214 = arith.constant 0 : index
    %328 = vector.load %arg6[%c7_212, %c0_213, %c0_214] : memref<25x128x128xf32, #tpu.memory_space<vmem>>, vector<1x128x128xf32>
    %329 = vector.shape_cast %328 : vector<1x128x128xf32> to vector<128x128xf32>
    %cst_215 = arith.constant dense<0.000000e+00> : vector<1x128xf32>
    %330 = tpu.matmul %327, %329, %cst_215 {dimension_numbers = #tpu.dot_dimension_numbers<[1], [0], [0], [1], [0, 0, 1, 1], [], []>} : vector<1x128xf32>, vector<128x128xf32>, vector<1x128xf32> -> vector<1x128xf32>
    %331 = arith.addf %326, %330 : vector<1x128xf32>
    %332 = vector.extract_strided_slice %290 {offsets = [8, 0], sizes = [1, 128], strides = [1, 1]} : vector<25x128xf32> to vector<1x128xf32>
    %c8_216 = arith.constant 8 : index
    %c0_217 = arith.constant 0 : index
    %c0_218 = arith.constant 0 : index
    %333 = vector.load %arg6[%c8_216, %c0_217, %c0_218] : memref<25x128x128xf32, #tpu.memory_space<vmem>>, vector<1x128x128xf32>
    %334 = vector.shape_cast %333 : vector<1x128x128xf32> to vector<128x128xf32>
    %cst_219 = arith.constant dense<0.000000e+00> : vector<1x128xf32>
    %335 = tpu.matmul %332, %334, %cst_219 {dimension_numbers = #tpu.dot_dimension_numbers<[1], [0], [0], [1], [0, 0, 1, 1], [], []>} : vector<1x128xf32>, vector<128x128xf32>, vector<1x128xf32> -> vector<1x128xf32>
    %336 = arith.addf %331, %335 : vector<1x128xf32>
    %337 = vector.extract_strided_slice %290 {offsets = [9, 0], sizes = [1, 128], strides = [1, 1]} : vector<25x128xf32> to vector<1x128xf32>
    %c9_220 = arith.constant 9 : index
    %c0_221 = arith.constant 0 : index
    %c0_222 = arith.constant 0 : index
    %338 = vector.load %arg6[%c9_220, %c0_221, %c0_222] : memref<25x128x128xf32, #tpu.memory_space<vmem>>, vector<1x128x128xf32>
    %339 = vector.shape_cast %338 : vector<1x128x128xf32> to vector<128x128xf32>
    %cst_223 = arith.constant dense<0.000000e+00> : vector<1x128xf32>
    %340 = tpu.matmul %337, %339, %cst_223 {dimension_numbers = #tpu.dot_dimension_numbers<[1], [0], [0], [1], [0, 0, 1, 1], [], []>} : vector<1x128xf32>, vector<128x128xf32>, vector<1x128xf32> -> vector<1x128xf32>
    %341 = arith.addf %336, %340 : vector<1x128xf32>
    %342 = vector.extract_strided_slice %290 {offsets = [10, 0], sizes = [1, 128], strides = [1, 1]} : vector<25x128xf32> to vector<1x128xf32>
    %c10_224 = arith.constant 10 : index
    %c0_225 = arith.constant 0 : index
    %c0_226 = arith.constant 0 : index
    %343 = vector.load %arg6[%c10_224, %c0_225, %c0_226] : memref<25x128x128xf32, #tpu.memory_space<vmem>>, vector<1x128x128xf32>
    %344 = vector.shape_cast %343 : vector<1x128x128xf32> to vector<128x128xf32>
    %cst_227 = arith.constant dense<0.000000e+00> : vector<1x128xf32>
    %345 = tpu.matmul %342, %344, %cst_227 {dimension_numbers = #tpu.dot_dimension_numbers<[1], [0], [0], [1], [0, 0, 1, 1], [], []>} : vector<1x128xf32>, vector<128x128xf32>, vector<1x128xf32> -> vector<1x128xf32>
    %346 = arith.addf %341, %345 : vector<1x128xf32>
    %347 = vector.extract_strided_slice %290 {offsets = [11, 0], sizes = [1, 128], strides = [1, 1]} : vector<25x128xf32> to vector<1x128xf32>
    %c11_228 = arith.constant 11 : index
    %c0_229 = arith.constant 0 : index
    %c0_230 = arith.constant 0 : index
    %348 = vector.load %arg6[%c11_228, %c0_229, %c0_230] : memref<25x128x128xf32, #tpu.memory_space<vmem>>, vector<1x128x128xf32>
    %349 = vector.shape_cast %348 : vector<1x128x128xf32> to vector<128x128xf32>
    %cst_231 = arith.constant dense<0.000000e+00> : vector<1x128xf32>
    %350 = tpu.matmul %347, %349, %cst_231 {dimension_numbers = #tpu.dot_dimension_numbers<[1], [0], [0], [1], [0, 0, 1, 1], [], []>} : vector<1x128xf32>, vector<128x128xf32>, vector<1x128xf32> -> vector<1x128xf32>
    %351 = arith.addf %346, %350 : vector<1x128xf32>
    %352 = vector.extract_strided_slice %290 {offsets = [12, 0], sizes = [1, 128], strides = [1, 1]} : vector<25x128xf32> to vector<1x128xf32>
    %c12_232 = arith.constant 12 : index
    %c0_233 = arith.constant 0 : index
    %c0_234 = arith.constant 0 : index
    %353 = vector.load %arg6[%c12_232, %c0_233, %c0_234] : memref<25x128x128xf32, #tpu.memory_space<vmem>>, vector<1x128x128xf32>
    %354 = vector.shape_cast %353 : vector<1x128x128xf32> to vector<128x128xf32>
    %cst_235 = arith.constant dense<0.000000e+00> : vector<1x128xf32>
    %355 = tpu.matmul %352, %354, %cst_235 {dimension_numbers = #tpu.dot_dimension_numbers<[1], [0], [0], [1], [0, 0, 1, 1], [], []>} : vector<1x128xf32>, vector<128x128xf32>, vector<1x128xf32> -> vector<1x128xf32>
    %356 = arith.addf %351, %355 : vector<1x128xf32>
    %357 = vector.extract_strided_slice %290 {offsets = [13, 0], sizes = [1, 128], strides = [1, 1]} : vector<25x128xf32> to vector<1x128xf32>
    %c13_236 = arith.constant 13 : index
    %c0_237 = arith.constant 0 : index
    %c0_238 = arith.constant 0 : index
    %358 = vector.load %arg6[%c13_236, %c0_237, %c0_238] : memref<25x128x128xf32, #tpu.memory_space<vmem>>, vector<1x128x128xf32>
    %359 = vector.shape_cast %358 : vector<1x128x128xf32> to vector<128x128xf32>
    %cst_239 = arith.constant dense<0.000000e+00> : vector<1x128xf32>
    %360 = tpu.matmul %357, %359, %cst_239 {dimension_numbers = #tpu.dot_dimension_numbers<[1], [0], [0], [1], [0, 0, 1, 1], [], []>} : vector<1x128xf32>, vector<128x128xf32>, vector<1x128xf32> -> vector<1x128xf32>
    %361 = arith.addf %356, %360 : vector<1x128xf32>
    %362 = vector.extract_strided_slice %290 {offsets = [14, 0], sizes = [1, 128], strides = [1, 1]} : vector<25x128xf32> to vector<1x128xf32>
    %c14_240 = arith.constant 14 : index
    %c0_241 = arith.constant 0 : index
    %c0_242 = arith.constant 0 : index
    %363 = vector.load %arg6[%c14_240, %c0_241, %c0_242] : memref<25x128x128xf32, #tpu.memory_space<vmem>>, vector<1x128x128xf32>
    %364 = vector.shape_cast %363 : vector<1x128x128xf32> to vector<128x128xf32>
    %cst_243 = arith.constant dense<0.000000e+00> : vector<1x128xf32>
    %365 = tpu.matmul %362, %364, %cst_243 {dimension_numbers = #tpu.dot_dimension_numbers<[1], [0], [0], [1], [0, 0, 1, 1], [], []>} : vector<1x128xf32>, vector<128x128xf32>, vector<1x128xf32> -> vector<1x128xf32>
    %366 = arith.addf %361, %365 : vector<1x128xf32>
    %367 = vector.extract_strided_slice %290 {offsets = [15, 0], sizes = [1, 128], strides = [1, 1]} : vector<25x128xf32> to vector<1x128xf32>
    %c15_244 = arith.constant 15 : index
    %c0_245 = arith.constant 0 : index
    %c0_246 = arith.constant 0 : index
    %368 = vector.load %arg6[%c15_244, %c0_245, %c0_246] : memref<25x128x128xf32, #tpu.memory_space<vmem>>, vector<1x128x128xf32>
    %369 = vector.shape_cast %368 : vector<1x128x128xf32> to vector<128x128xf32>
    %cst_247 = arith.constant dense<0.000000e+00> : vector<1x128xf32>
    %370 = tpu.matmul %367, %369, %cst_247 {dimension_numbers = #tpu.dot_dimension_numbers<[1], [0], [0], [1], [0, 0, 1, 1], [], []>} : vector<1x128xf32>, vector<128x128xf32>, vector<1x128xf32> -> vector<1x128xf32>
    %371 = arith.addf %366, %370 : vector<1x128xf32>
    %372 = vector.extract_strided_slice %290 {offsets = [16, 0], sizes = [1, 128], strides = [1, 1]} : vector<25x128xf32> to vector<1x128xf32>
    %c16_248 = arith.constant 16 : index
    %c0_249 = arith.constant 0 : index
    %c0_250 = arith.constant 0 : index
    %373 = vector.load %arg6[%c16_248, %c0_249, %c0_250] : memref<25x128x128xf32, #tpu.memory_space<vmem>>, vector<1x128x128xf32>
    %374 = vector.shape_cast %373 : vector<1x128x128xf32> to vector<128x128xf32>
    %cst_251 = arith.constant dense<0.000000e+00> : vector<1x128xf32>
    %375 = tpu.matmul %372, %374, %cst_251 {dimension_numbers = #tpu.dot_dimension_numbers<[1], [0], [0], [1], [0, 0, 1, 1], [], []>} : vector<1x128xf32>, vector<128x128xf32>, vector<1x128xf32> -> vector<1x128xf32>
    %376 = arith.addf %371, %375 : vector<1x128xf32>
    %377 = vector.extract_strided_slice %290 {offsets = [17, 0], sizes = [1, 128], strides = [1, 1]} : vector<25x128xf32> to vector<1x128xf32>
    %c17_252 = arith.constant 17 : index
    %c0_253 = arith.constant 0 : index
    %c0_254 = arith.constant 0 : index
    %378 = vector.load %arg6[%c17_252, %c0_253, %c0_254] : memref<25x128x128xf32, #tpu.memory_space<vmem>>, vector<1x128x128xf32>
    %379 = vector.shape_cast %378 : vector<1x128x128xf32> to vector<128x128xf32>
    %cst_255 = arith.constant dense<0.000000e+00> : vector<1x128xf32>
    %380 = tpu.matmul %377, %379, %cst_255 {dimension_numbers = #tpu.dot_dimension_numbers<[1], [0], [0], [1], [0, 0, 1, 1], [], []>} : vector<1x128xf32>, vector<128x128xf32>, vector<1x128xf32> -> vector<1x128xf32>
    %381 = arith.addf %376, %380 : vector<1x128xf32>
    %382 = vector.extract_strided_slice %290 {offsets = [18, 0], sizes = [1, 128], strides = [1, 1]} : vector<25x128xf32> to vector<1x128xf32>
    %c18_256 = arith.constant 18 : index
    %c0_257 = arith.constant 0 : index
    %c0_258 = arith.constant 0 : index
    %383 = vector.load %arg6[%c18_256, %c0_257, %c0_258] : memref<25x128x128xf32, #tpu.memory_space<vmem>>, vector<1x128x128xf32>
    %384 = vector.shape_cast %383 : vector<1x128x128xf32> to vector<128x128xf32>
    %cst_259 = arith.constant dense<0.000000e+00> : vector<1x128xf32>
    %385 = tpu.matmul %382, %384, %cst_259 {dimension_numbers = #tpu.dot_dimension_numbers<[1], [0], [0], [1], [0, 0, 1, 1], [], []>} : vector<1x128xf32>, vector<128x128xf32>, vector<1x128xf32> -> vector<1x128xf32>
    %386 = arith.addf %381, %385 : vector<1x128xf32>
    %387 = vector.extract_strided_slice %290 {offsets = [19, 0], sizes = [1, 128], strides = [1, 1]} : vector<25x128xf32> to vector<1x128xf32>
    %c19_260 = arith.constant 19 : index
    %c0_261 = arith.constant 0 : index
    %c0_262 = arith.constant 0 : index
    %388 = vector.load %arg6[%c19_260, %c0_261, %c0_262] : memref<25x128x128xf32, #tpu.memory_space<vmem>>, vector<1x128x128xf32>
    %389 = vector.shape_cast %388 : vector<1x128x128xf32> to vector<128x128xf32>
    %cst_263 = arith.constant dense<0.000000e+00> : vector<1x128xf32>
    %390 = tpu.matmul %387, %389, %cst_263 {dimension_numbers = #tpu.dot_dimension_numbers<[1], [0], [0], [1], [0, 0, 1, 1], [], []>} : vector<1x128xf32>, vector<128x128xf32>, vector<1x128xf32> -> vector<1x128xf32>
    %391 = arith.addf %386, %390 : vector<1x128xf32>
    %392 = vector.extract_strided_slice %290 {offsets = [20, 0], sizes = [1, 128], strides = [1, 1]} : vector<25x128xf32> to vector<1x128xf32>
    %c20_264 = arith.constant 20 : index
    %c0_265 = arith.constant 0 : index
    %c0_266 = arith.constant 0 : index
    %393 = vector.load %arg6[%c20_264, %c0_265, %c0_266] : memref<25x128x128xf32, #tpu.memory_space<vmem>>, vector<1x128x128xf32>
    %394 = vector.shape_cast %393 : vector<1x128x128xf32> to vector<128x128xf32>
    %cst_267 = arith.constant dense<0.000000e+00> : vector<1x128xf32>
    %395 = tpu.matmul %392, %394, %cst_267 {dimension_numbers = #tpu.dot_dimension_numbers<[1], [0], [0], [1], [0, 0, 1, 1], [], []>} : vector<1x128xf32>, vector<128x128xf32>, vector<1x128xf32> -> vector<1x128xf32>
    %396 = arith.addf %391, %395 : vector<1x128xf32>
    %397 = vector.extract_strided_slice %290 {offsets = [21, 0], sizes = [1, 128], strides = [1, 1]} : vector<25x128xf32> to vector<1x128xf32>
    %c21_268 = arith.constant 21 : index
    %c0_269 = arith.constant 0 : index
    %c0_270 = arith.constant 0 : index
    %398 = vector.load %arg6[%c21_268, %c0_269, %c0_270] : memref<25x128x128xf32, #tpu.memory_space<vmem>>, vector<1x128x128xf32>
    %399 = vector.shape_cast %398 : vector<1x128x128xf32> to vector<128x128xf32>
    %cst_271 = arith.constant dense<0.000000e+00> : vector<1x128xf32>
    %400 = tpu.matmul %397, %399, %cst_271 {dimension_numbers = #tpu.dot_dimension_numbers<[1], [0], [0], [1], [0, 0, 1, 1], [], []>} : vector<1x128xf32>, vector<128x128xf32>, vector<1x128xf32> -> vector<1x128xf32>
    %401 = arith.addf %396, %400 : vector<1x128xf32>
    %402 = vector.extract_strided_slice %290 {offsets = [22, 0], sizes = [1, 128], strides = [1, 1]} : vector<25x128xf32> to vector<1x128xf32>
    %c22_272 = arith.constant 22 : index
    %c0_273 = arith.constant 0 : index
    %c0_274 = arith.constant 0 : index
    %403 = vector.load %arg6[%c22_272, %c0_273, %c0_274] : memref<25x128x128xf32, #tpu.memory_space<vmem>>, vector<1x128x128xf32>
    %404 = vector.shape_cast %403 : vector<1x128x128xf32> to vector<128x128xf32>
    %cst_275 = arith.constant dense<0.000000e+00> : vector<1x128xf32>
    %405 = tpu.matmul %402, %404, %cst_275 {dimension_numbers = #tpu.dot_dimension_numbers<[1], [0], [0], [1], [0, 0, 1, 1], [], []>} : vector<1x128xf32>, vector<128x128xf32>, vector<1x128xf32> -> vector<1x128xf32>
    %406 = arith.addf %401, %405 : vector<1x128xf32>
    %407 = vector.extract_strided_slice %290 {offsets = [23, 0], sizes = [1, 128], strides = [1, 1]} : vector<25x128xf32> to vector<1x128xf32>
    %c23_276 = arith.constant 23 : index
    %c0_277 = arith.constant 0 : index
    %c0_278 = arith.constant 0 : index
    %408 = vector.load %arg6[%c23_276, %c0_277, %c0_278] : memref<25x128x128xf32, #tpu.memory_space<vmem>>, vector<1x128x128xf32>
    %409 = vector.shape_cast %408 : vector<1x128x128xf32> to vector<128x128xf32>
    %cst_279 = arith.constant dense<0.000000e+00> : vector<1x128xf32>
    %410 = tpu.matmul %407, %409, %cst_279 {dimension_numbers = #tpu.dot_dimension_numbers<[1], [0], [0], [1], [0, 0, 1, 1], [], []>} : vector<1x128xf32>, vector<128x128xf32>, vector<1x128xf32> -> vector<1x128xf32>
    %411 = arith.addf %406, %410 : vector<1x128xf32>
    %412 = vector.extract_strided_slice %290 {offsets = [24, 0], sizes = [1, 128], strides = [1, 1]} : vector<25x128xf32> to vector<1x128xf32>
    %c24_280 = arith.constant 24 : index
    %c0_281 = arith.constant 0 : index
    %c0_282 = arith.constant 0 : index
    %413 = vector.load %arg6[%c24_280, %c0_281, %c0_282] : memref<25x128x128xf32, #tpu.memory_space<vmem>>, vector<1x128x128xf32>
    %414 = vector.shape_cast %413 : vector<1x128x128xf32> to vector<128x128xf32>
    %cst_283 = arith.constant dense<0.000000e+00> : vector<1x128xf32>
    %415 = tpu.matmul %412, %414, %cst_283 {dimension_numbers = #tpu.dot_dimension_numbers<[1], [0], [0], [1], [0, 0, 1, 1], [], []>} : vector<1x128xf32>, vector<128x128xf32>, vector<1x128xf32> -> vector<1x128xf32>
    %416 = arith.addf %411, %415 : vector<1x128xf32>
    %cst_284 = arith.constant 0.000000e+00 : f32
    %417 = vector.broadcast %cst_284 : f32 to vector<1x128xf32>
    %418 = arith.maximumf %416, %417 : vector<1x128xf32>
    %c0_285 = arith.constant 0 : index
    %c0_286 = arith.constant 0 : index
    %419 = vector.load %arg8[%c0_285, %c0_286] : memref<128x128xf32, #tpu.memory_space<vmem>>, vector<128x128xf32>
    %cst_287 = arith.constant dense<0.000000e+00> : vector<1x128xf32>
    %420 = tpu.matmul %418, %419, %cst_287 {dimension_numbers = #tpu.dot_dimension_numbers<[1], [0], [0], [1], [0, 0, 1, 1], [], []>} : vector<1x128xf32>, vector<128x128xf32>, vector<1x128xf32> -> vector<1x128xf32>
    %c0_288 = arith.constant 0 : index
    %c0_289 = arith.constant 0 : index
    %421 = vector.load %arg9[%c0_288, %c0_289] : memref<1x128xf32, #tpu.memory_space<vmem>>, vector<1x128xf32>
    %422 = arith.addf %420, %421 : vector<1x128xf32>
    %cst_290 = arith.constant 0.000000e+00 : f32
    %423 = vector.broadcast %cst_290 : f32 to vector<1x128xf32>
    %424 = arith.maximumf %422, %423 : vector<1x128xf32>
    %c0_291 = arith.constant 0 : index
    %c0_292 = arith.constant 0 : index
    %425 = vector.load %arg10[%c0_291, %c0_292] : memref<128x128xf32, #tpu.memory_space<vmem>>, vector<128x128xf32>
    %cst_293 = arith.constant dense<0.000000e+00> : vector<1x128xf32>
    %426 = tpu.matmul %424, %425, %cst_293 {dimension_numbers = #tpu.dot_dimension_numbers<[1], [0], [0], [1], [0, 0, 1, 1], [], []>} : vector<1x128xf32>, vector<128x128xf32>, vector<1x128xf32> -> vector<1x128xf32>
    %c0_294 = arith.constant 0 : index
    %c0_295 = arith.constant 0 : index
    %427 = vector.load %arg11[%c0_294, %c0_295] : memref<1x128xf32, #tpu.memory_space<vmem>>, vector<1x128xf32>
    %428 = arith.addf %426, %427 : vector<1x128xf32>
    %429 = vector.shape_cast %428 : vector<1x128xf32> to vector<1x1x128xf32>
    %c0_296 = arith.constant 0 : index
    %c0_297 = arith.constant 0 : index
    %c0_298 = arith.constant 0 : index
    %430 = vector.load %arg12[%c0_296, %c0_297, %c0_298] : memref<1x1x128xf32, #tpu.memory_space<vmem>>, vector<1x1x128xf32>
    tpu.vector_store %arg12[%c0_296, %c0_297, %c0_298], %429 {strides = array<i32>} : memref<1x1x128xf32, #tpu.memory_space<vmem>>, vector<1x1x128xf32>,
    return
  }
  func.func @transform_0(%arg0: i32) -> (i32, i32, i32) {
    %c0_i32 = arith.constant 0 : i32
    %c0_i32_0 = arith.constant 0 : i32
    %c0_i32_1 = arith.constant 0 : i32
    return %arg0, %c0_i32, %c0_i32_0 : i32, i32, i32
  }
  func.func @transform_1(%arg0: i32) -> (i32, i32) {
    %c0_i32 = arith.constant 0 : i32
    %c0_i32_0 = arith.constant 0 : i32
    %c0_i32_1 = arith.constant 0 : i32
    return %c0_i32, %c0_i32_0 : i32, i32
  }
  func.func @transform_2(%arg0: i32) -> (i32, i32) {
    %c0_i32 = arith.constant 0 : i32
    %c0_i32_0 = arith.constant 0 : i32
    %c0_i32_1 = arith.constant 0 : i32
    return %c0_i32, %c0_i32_0 : i32, i32
  }
  func.func @transform_3(%arg0: i32) -> (i32, i32, i32) {
    %c0_i32 = arith.constant 0 : i32
    %c0_i32_0 = arith.constant 0 : i32
    %c0_i32_1 = arith.constant 0 : i32
    %c0_i32_2 = arith.constant 0 : i32
    return %c0_i32, %c0_i32_0, %c0_i32_1 : i32, i32, i32
  }
  func.func @transform_4(%arg0: i32) -> (i32, i32) {
    %c0_i32 = arith.constant 0 : i32
    %c0_i32_0 = arith.constant 0 : i32
    %c0_i32_1 = arith.constant 0 : i32
    return %c0_i32, %c0_i32_0 : i32, i32
  }
  func.func @transform_5(%arg0: i32) -> (i32, i32, i32) {
    %c0_i32 = arith.constant 0 : i32
    %c0_i32_0 = arith.constant 0 : i32
    %c0_i32_1 = arith.constant 0 : i32
    %c0_i32_2 = arith.constant 0 : i32
    return %c0_i32, %c0_i32_0, %c0_i32_1 : i32, i32, i32
  }
  func.func @transform_6(%arg0: i32) -> (i32, i32) {
    %c0_i32 = arith.constant 0 : i32
    %c0_i32_0 = arith.constant 0 : i32
    %c0_i32_1 = arith.constant 0 : i32
    return %c0_i32, %c0_i32_0 : i32, i32
  }
  func.func @transform_7(%arg0: i32) -> (i32, i32) {
    %c0_i32 = arith.constant 0 : i32
    %c0_i32_0 = arith.constant 0 : i32
    %c0_i32_1 = arith.constant 0 : i32
    return %c0_i32, %c0_i32_0 : i32, i32
  }
  func.func @transform_8(%arg0: i32) -> (i32, i32) {
    %c0_i32 = arith.constant 0 : i32
    %c0_i32_0 = arith.constant 0 : i32
    %c0_i32_1 = arith.constant 0 : i32
    return %c0_i32, %c0_i32_0 : i32, i32
  }
  func.func @transform_9(%arg0: i32) -> (i32, i32) {
    %c0_i32 = arith.constant 0 : i32
    %c0_i32_0 = arith.constant 0 : i32
    %c0_i32_1 = arith.constant 0 : i32
    return %c0_i32, %c0_i32_0 : i32, i32
  }
  func.func @transform_10(%arg0: i32) -> (i32, i32) {
    %c0_i32 = arith.constant 0 : i32
    %c0_i32_0 = arith.constant 0 : i32
    %c0_i32_1 = arith.constant 0 : i32
    return %c0_i32, %c0_i32_0 : i32, i32
  }
  func.func @transform_11(%arg0: i32) -> (i32, i32, i32) {
    %c0_i32 = arith.constant 0 : i32
    %c0_i32_0 = arith.constant 0 : i32
    %c0_i32_1 = arith.constant 0 : i32
    return %arg0, %c0_i32, %c0_i32_0 : i32, i32, i32
  }
}

</mosaic_0001>

<llo_original>
// kernel: net_forward.1
$region0: #{net_forward.1}
  #allocation0 [shape = 'u32[]', space=smem, size = 0x4, offset = 0x4, fixed_abs, tag = 'smem constant byte address 0x4 - core index']
  #allocation1 [shape = 'u32[72,128]{1,0:T(1,128)}', space=vmem, size = 0x9000, scoped, tag = 'internal scratch']
  #allocation2 [shape = 'f32[200,128]{1,0:T(8,128)}', space=vmem, size = 0x19000, scoped, tag = 'scratch operand']
  %s0 = inlined_call_operand.vmem [shape: f32[2,784,128], index: 0, kind: input, shape index: {}]
  %s1 = inlined_call_operand.vmem [shape: f32[128,128], index: 1, kind: input, shape index: {}]
  %s2 = inlined_call_operand.vmem [shape: f32[1,128], index: 2, kind: input, shape index: {}]
  %s3 = inlined_call_operand.vmem [shape: f32[25,128,128], index: 3, kind: input, shape index: {}]
  %s4 = inlined_call_operand.vmem [shape: f32[1,128], index: 4, kind: input, shape index: {}]
  %s5 = inlined_call_operand.vmem [shape: f32[25,128,128], index: 5, kind: input, shape index: {}]
  %s6 = inlined_call_operand.vmem [shape: f32[1,128], index: 6, kind: input, shape index: {}]
  %s7 = inlined_call_operand.vmem [shape: f32[128,128], index: 7, kind: input, shape index: {}]
  %s8 = inlined_call_operand.vmem [shape: f32[1,128], index: 8, kind: input, shape index: {}]
  %s9 = inlined_call_operand.vmem [shape: f32[128,128], index: 9, kind: input, shape index: {}]
  %s10 = inlined_call_operand.vmem [shape: f32[1,128], index: 10, kind: input, shape index: {}]
  %s11 = inlined_call_operand.hbm [shape: f32[2,1,128], index: 11, kind: output, shape index: {}]
  %s12 = sld [smem:[#allocation0]]
  $region77: #{net_forward.1} parent=0
    _
  %s14 = ssub.s32 1, %s12
  %s15 = scalar_select 0, %s14, %s12
  $region1: #{net_forward.1} parent=0
    #allocation3 [shape = 'u8[1024]{0}', space=vmem, size = 0x400, scoped, tag = 'output window, operand 0']
    #allocation4 [shape = 's32[2]{0}', space=sflag, size = 0x8, scoped, tag = 'scoped memory for net_forward.1']
    %16 = vsyncpa [#allocation4], 0
    %s17 = scalar_lea.sflag [#allocation4], 1
    %18 = vsyncpa %s17, 0
    loop: start=0, step=1, limit=4
    $region2: #{net_forward.1} parent=1 // loop_pre_header
      _
    $region3: #{net_forward.1} parent=1 // loop_header
      %s20 = sphi 0, %s24
      %p21 = scmp.ge.s32.totalorder %s20, 4
      %s30 = sphi 0, %s32
      %s33 = sphi 0, %s30
      %s34 = sphi 0, %s33
      %s50 = sphi 0, %s34
      %s54 = sphi 0, %s54
      %s56 = sphi 0, %s54
      %s57 = sphi 0, %s56
      %s71 = sphi 0, %s57
      %s75 = sphi 0, %s75
      %s77 = sphi 0, %s75
      %s78 = sphi 0, %s77
      %s92 = sphi 0, %s78
      %s96 = sphi 0, %s96
      %s98 = sphi 0, %s96
      %s99 = sphi 0, %s98
      %s113 = sphi 0, %s99
      %s117 = sphi 0, %s117
      %s119 = sphi 0, %s117
      %s120 = sphi 0, %s119
      %s134 = sphi 0, %s120
      %s138 = sphi 0, %s138
      %s140 = sphi 0, %s138
      %s141 = sphi 0, %s140
      %s155 = sphi 0, %s141
      %s159 = sphi 0, %s159
      %s161 = sphi 0, %s159
      %s162 = sphi 0, %s161
      %s176 = sphi 0, %s162
      %s180 = sphi 0, %s180
      %s182 = sphi 0, %s180
      %s183 = sphi 0, %s182
      %s197 = sphi 0, %s183
      %s201 = sphi 0, %s201
      %s203 = sphi 0, %s201
      %s204 = sphi 0, %s203
      %s218 = sphi 0, %s204
      %s222 = sphi 0, %s222
      %s224 = sphi 0, %s222
      %s225 = sphi 0, %s224
      %s239 = sphi 0, %s225
      %s243 = sphi 0, %s243
      %s245 = sphi 0, %s243
      %s246 = sphi 0, %s245
      %s260 = sphi 0, %s246
      %s266 = sphi 0, %s268
      %s269 = sphi 0, %s266
      %s270 = sphi 0, %s269
      %s286 = sphi 0, %s270
    $region4: #{net_forward.1} parent=1 // loop_header_branch
      %23 = sbr.rel (%p21) target = $region8
    $region5: #{net_forward.1} parent=1 // loop_body
      %s25 = ssub.s32 %s20, 1
      %s26 = ssub.s32 %s20, 2
      %s27 = sadd.s32 %s20, 1
      %s28 = ssub.s32 %s20, %s27
      %p29 = scmp.eq.s32.totalorder %s28, 0
      %s31 = sadd.s32 %s30, 1
      %s32 = scalar_select %p29, %s30, %s31
      %p35 = pneg %p29
      %p36 = scmp.eq.s32.totalorder %s20, 1
      %p37 = por %p35, %p36
      %p38 = scmp.ne.s32.totalorder %s30, %s33
      %p39 = scmp.eq.s32.totalorder %s20, 0
      %p40 = por %p38, %p39
      %p41 = scmp.ne.s32.totalorder %s30, %s33
      %p42 = scmp.eq.s32.totalorder %s25, 1
      %p43 = por %p41, %p42
      %p44 = scmp.ne.s32.totalorder %s33, %s34
      %p45 = scmp.eq.s32.totalorder %s25, 0
      %p46 = por %p44, %p45
      %p47 = scmp.ne.s32.totalorder %s33, %s34
      %p48 = scmp.eq.s32.totalorder %s26, 1
      %p49 = por %p47, %p48
      %p51 = scmp.ne.s32.totalorder %s34, %s50
      %p52 = scmp.eq.s32.totalorder %s26, 0
      %p53 = por %p51, %p52
      %s55 = sadd.s32 %s54, 1
      %p58 = scmp.eq.s32.totalorder %s20, 1
      %p59 = scmp.ne.s32.totalorder %s54, %s56
      %p60 = scmp.eq.s32.totalorder %s20, 0
      %p61 = por %p59, %p60
      %p62 = scmp.ne.s32.totalorder %s54, %s56
      %p63 = scmp.eq.s32.totalorder %s25, 1
      %p64 = por %p62, %p63
      %p65 = scmp.ne.s32.totalorder %s56, %s57
      %p66 = scmp.eq.s32.totalorder %s25, 0
      %p67 = por %p65, %p66
      %p68 = scmp.ne.s32.totalorder %s56, %s57
      %p69 = scmp.eq.s32.totalorder %s26, 1
      %p70 = por %p68, %p69
      %p72 = scmp.ne.s32.totalorder %s57, %s71
      %p73 = scmp.eq.s32.totalorder %s26, 0
      %p74 = por %p72, %p73
      %s76 = sadd.s32 %s75, 1
      %p79 = scmp.eq.s32.totalorder %s20, 1
      %p80 = scmp.ne.s32.totalorder %s75, %s77
      %p81 = scmp.eq.s32.totalorder %s20, 0
      %p82 = por %p80, %p81
      %p83 = scmp.ne.s32.totalorder %s75, %s77
      %p84 = scmp.eq.s32.totalorder %s25, 1
      %p85 = por %p83, %p84
      %p86 = scmp.ne.s32.totalorder %s77, %s78
      %p87 = scmp.eq.s32.totalorder %s25, 0
      %p88 = por %p86, %p87
      %p89 = scmp.ne.s32.totalorder %s77, %s78
      %p90 = scmp.eq.s32.totalorder %s26, 1
      %p91 = por %p89, %p90
      %p93 = scmp.ne.s32.totalorder %s78, %s92
      %p94 = scmp.eq.s32.totalorder %s26, 0
      %p95 = por %p93, %p94
      %s97 = sadd.s32 %s96, 1
      %p100 = scmp.eq.s32.totalorder %s20, 1
      %p101 = scmp.ne.s32.totalorder %s96, %s98
      %p102 = scmp.eq.s32.totalorder %s20, 0
      %p103 = por %p101, %p102
      %p104 = scmp.ne.s32.totalorder %s96, %s98
      %p105 = scmp.eq.s32.totalorder %s25, 1
      %p106 = por %p104, %p105
      %p107 = scmp.ne.s32.totalorder %s98, %s99
      %p108 = scmp.eq.s32.totalorder %s25, 0
      %p109 = por %p107, %p108
      %p110 = scmp.ne.s32.totalorder %s98, %s99
      %p111 = scmp.eq.s32.totalorder %s26, 1
      %p112 = por %p110, %p111
      %p114 = scmp.ne.s32.totalorder %s99, %s113
      %p115 = scmp.eq.s32.totalorder %s26, 0
      %p116 = por %p114, %p115
      %s118 = sadd.s32 %s117, 1
      %p121 = scmp.eq.s32.totalorder %s20, 1
      %p122 = scmp.ne.s32.totalorder %s117, %s119
      %p123 = scmp.eq.s32.totalorder %s20, 0
      %p124 = por %p122, %p123
      %p125 = scmp.ne.s32.totalorder %s117, %s119
      %p126 = scmp.eq.s32.totalorder %s25, 1
      %p127 = por %p125, %p126
      %p128 = scmp.ne.s32.totalorder %s119, %s120
      %p129 = scmp.eq.s32.totalorder %s25, 0
      %p130 = por %p128, %p129
      %p131 = scmp.ne.s32.totalorder %s119, %s120
      %p132 = scmp.eq.s32.totalorder %s26, 1
      %p133 = por %p131, %p132
      %p135 = scmp.ne.s32.totalorder %s120, %s134
      %p136 = scmp.eq.s32.totalorder %s26, 0
      %p137 = por %p135, %p136
      %s139 = sadd.s32 %s138, 1
      %p142 = scmp.eq.s32.totalorder %s20, 1
      %p143 = scmp.ne.s32.totalorder %s138, %s140
      %p144 = scmp.eq.s32.totalorder %s20, 0
      %p145 = por %p143, %p144
      %p146 = scmp.ne.s32.totalorder %s138, %s140
      %p147 = scmp.eq.s32.totalorder %s25, 1
      %p148 = por %p146, %p147
      %p149 = scmp.ne.s32.totalorder %s140, %s141
      %p150 = scmp.eq.s32.totalorder %s25, 0
      %p151 = por %p149, %p150
      %p152 = scmp.ne.s32.totalorder %s140, %s141
      %p153 = scmp.eq.s32.totalorder %s26, 1
      %p154 = por %p152, %p153
      %p156 = scmp.ne.s32.totalorder %s141, %s155
      %p157 = scmp.eq.s32.totalorder %s26, 0
      %p158 = por %p156, %p157
      %s160 = sadd.s32 %s159, 1
      %p163 = scmp.eq.s32.totalorder %s20, 1
      %p164 = scmp.ne.s32.totalorder %s159, %s161
      %p165 = scmp.eq.s32.totalorder %s20, 0
      %p166 = por %p164, %p165
      %p167 = scmp.ne.s32.totalorder %s159, %s161
      %p168 = scmp.eq.s32.totalorder %s25, 1
      %p169 = por %p167, %p168
      %p170 = scmp.ne.s32.totalorder %s161, %s162
      %p171 = scmp.eq.s32.totalorder %s25, 0
      %p172 = por %p170, %p171
      %p173 = scmp.ne.s32.totalorder %s161, %s162
      %p174 = scmp.eq.s32.totalorder %s26, 1
      %p175 = por %p173, %p174
      %p177 = scmp.ne.s32.totalorder %s162, %s176
      %p178 = scmp.eq.s32.totalorder %s26, 0
      %p179 = por %p177, %p178
      %s181 = sadd.s32 %s180, 1
      %p184 = scmp.eq.s32.totalorder %s20, 1
      %p185 = scmp.ne.s32.totalorder %s180, %s182
      %p186 = scmp.eq.s32.totalorder %s20, 0
      %p187 = por %p185, %p186
      %p188 = scmp.ne.s32.totalorder %s180, %s182
      %p189 = scmp.eq.s32.totalorder %s25, 1
      %p190 = por %p188, %p189
      %p191 = scmp.ne.s32.totalorder %s182, %s183
      %p192 = scmp.eq.s32.totalorder %s25, 0
      %p193 = por %p191, %p192
      %p194 = scmp.ne.s32.totalorder %s182, %s183
      %p195 = scmp.eq.s32.totalorder %s26, 1
      %p196 = por %p194, %p195
      %p198 = scmp.ne.s32.totalorder %s183, %s197
      %p199 = scmp.eq.s32.totalorder %s26, 0
      %p200 = por %p198, %p199
      %s202 = sadd.s32 %s201, 1
      %p205 = scmp.eq.s32.totalorder %s20, 1
      %p206 = scmp.ne.s32.totalorder %s201, %s203
      %p207 = scmp.eq.s32.totalorder %s20, 0
      %p208 = por %p206, %p207
      %p209 = scmp.ne.s32.totalorder %s201, %s203
      %p210 = scmp.eq.s32.totalorder %s25, 1
      %p211 = por %p209, %p210
      %p212 = scmp.ne.s32.totalorder %s203, %s204
      %p213 = scmp.eq.s32.totalorder %s25, 0
      %p214 = por %p212, %p213
      %p215 = scmp.ne.s32.totalorder %s203, %s204
      %p216 = scmp.eq.s32.totalorder %s26, 1
      %p217 = por %p215, %p216
      %p219 = scmp.ne.s32.totalorder %s204, %s218
      %p220 = scmp.eq.s32.totalorder %s26, 0
      %p221 = por %p219, %p220
      %s223 = sadd.s32 %s222, 1
      %p226 = scmp.eq.s32.totalorder %s20, 1
      %p227 = scmp.ne.s32.totalorder %s222, %s224
      %p228 = scmp.eq.s32.totalorder %s20, 0
      %p229 = por %p227, %p228
      %p230 = scmp.ne.s32.totalorder %s222, %s224
      %p231 = scmp.eq.s32.totalorder %s25, 1
      %p232 = por %p230, %p231
      %p233 = scmp.ne.s32.totalorder %s224, %s225
      %p234 = scmp.eq.s32.totalorder %s25, 0
      %p235 = por %p233, %p234
      %p236 = scmp.ne.s32.totalorder %s224, %s225
      %p237 = scmp.eq.s32.totalorder %s26, 1
      %p238 = por %p236, %p237
      %p240 = scmp.ne.s32.totalorder %s225, %s239
      %p241 = scmp.eq.s32.totalorder %s26, 0
      %p242 = por %p240, %p241
      %s244 = sadd.s32 %s243, 1
      %p247 = scmp.eq.s32.totalorder %s20, 1
      %p248 = scmp.ne.s32.totalorder %s243, %s245
      %p249 = scmp.eq.s32.totalorder %s20, 0
      %p250 = por %p248, %p249
      %p251 = scmp.ne.s32.totalorder %s243, %s245
      %p252 = scmp.eq.s32.totalorder %s25, 1
      %p253 = por %p251, %p252
      %p254 = scmp.ne.s32.totalorder %s245, %s246
      %p255 = scmp.eq.s32.totalorder %s25, 0
      %p256 = por %p254, %p255
      %p257 = scmp.ne.s32.totalorder %s245, %s246
      %p258 = scmp.eq.s32.totalorder %s26, 1
      %p259 = por %p257, %p258
      %p261 = scmp.ne.s32.totalorder %s246, %s260
      %p262 = scmp.eq.s32.totalorder %s26, 0
      %p263 = por %p261, %p262
      %s264 = ssub.s32 %s20, %s27
      %p265 = scmp.eq.s32.totalorder %s264, 0
      %s267 = sadd.s32 %s266, 1
      %s268 = scalar_select %p265, %s266, %s267
      %p271 = pneg %p265
      %p272 = scmp.eq.s32.totalorder %s20, 1
      %p273 = por %p271, %p272
      %p274 = scmp.ne.s32.totalorder %s266, %s269
      %p275 = scmp.eq.s32.totalorder %s20, 0
      %p276 = por %p274, %p275
      %p277 = scmp.ne.s32.totalorder %s266, %s269
      %p278 = scmp.eq.s32.totalorder %s25, 1
      %p279 = por %p277, %p278
      %p280 = scmp.ne.s32.totalorder %s269, %s270
      %p281 = scmp.eq.s32.totalorder %s25, 0
      %p282 = por %p280, %p281
      %p283 = scmp.ne.s32.totalorder %s269, %s270
      %p284 = scmp.eq.s32.totalorder %s26, 1
      %p285 = por %p283, %p284
      %p287 = scmp.ne.s32.totalorder %s270, %s286
      %p288 = scmp.eq.s32.totalorder %s26, 0
      %p289 = por %p287, %p288
      %p290 = scmp.le.s32.totalorder 1, %s20
      %p291 = scmp.lt.s32.totalorder %s20, 3
      %p292 = pnand %p290, %p291
      %p293 = pneg %p292
      // Predicated region
      $region9: #{net_forward.1} parent=5 // pred_check
        _
      $region10: #{net_forward.1} parent=5 // pred_check_branch
        %295 = sbr.rel (%p292) target = $region12
      $region11: #{net_forward.1} parent=5 // pred_region
        %s296 = ssub.s32 %s20, 1
        // Predicated region
        $region13: #{net_forward.1} parent=11 // pred_check
          %p297 = pneg %p67
        $region14: #{net_forward.1} parent=11 // pred_check_branch
          %299 = sbr.rel (%p297) target = $region16
        $region15: #{net_forward.1} parent=11 // pred_region
          _
        $region16: #{net_forward.1} parent=11 // pred_fallthru
          _
        // Predicated region
        $region17: #{net_forward.1} parent=11 // pred_check
          %p300 = pneg %p88
        $region18: #{net_forward.1} parent=11 // pred_check_branch
          %302 = sbr.rel (%p300) target = $region20
        $region19: #{net_forward.1} parent=11 // pred_region
          _
        $region20: #{net_forward.1} parent=11 // pred_fallthru
          _
        // Predicated region
        $region21: #{net_forward.1} parent=11 // pred_check
          %p303 = pneg %p109
        $region22: #{net_forward.1} parent=11 // pred_check_branch
          %305 = sbr.rel (%p303) target = $region24
        $region23: #{net_forward.1} parent=11 // pred_region
          _
        $region24: #{net_forward.1} parent=11 // pred_fallthru
          _
        // Predicated region
        $region25: #{net_forward.1} parent=11 // pred_check
          %p306 = pneg %p130
        $region26: #{net_forward.1} parent=11 // pred_check_branch
          %308 = sbr.rel (%p306) target = $region28
        $region27: #{net_forward.1} parent=11 // pred_region
          _
        $region28: #{net_forward.1} parent=11 // pred_fallthru
          _
        // Predicated region
        $region29: #{net_forward.1} parent=11 // pred_check
          %p309 = pneg %p151
        $region30: #{net_forward.1} parent=11 // pred_check_branch
          %311 = sbr.rel (%p309) target = $region32
        $region31: #{net_forward.1} parent=11 // pred_region
          _
        $region32: #{net_forward.1} parent=11 // pred_fallthru
          _
        // Predicated region
        $region33: #{net_forward.1} parent=11 // pred_check
          %p312 = pneg %p172
        $region34: #{net_forward.1} parent=11 // pred_check_branch
          %314 = sbr.rel (%p312) target = $region36
        $region35: #{net_forward.1} parent=11 // pred_region
          _
        $region36: #{net_forward.1} parent=11 // pred_fallthru
          _
        // Predicated region
        $region37: #{net_forward.1} parent=11 // pred_check
          %p315 = pneg %p193
        $region38: #{net_forward.1} parent=11 // pred_check_branch
          %317 = sbr.rel (%p315) target = $region40
        $region39: #{net_forward.1} parent=11 // pred_region
          _
        $region40: #{net_forward.1} parent=11 // pred_fallthru
          _
        // Predicated region
        $region41: #{net_forward.1} parent=11 // pred_check
          %p318 = pneg %p214
        $region42: #{net_forward.1} parent=11 // pred_check_branch
          %320 = sbr.rel (%p318) target = $region44
        $region43: #{net_forward.1} parent=11 // pred_region
          _
        $region44: #{net_forward.1} parent=11 // pred_fallthru
          _
        // Predicated region
        $region45: #{net_forward.1} parent=11 // pred_check
          %p321 = pneg %p235
        $region46: #{net_forward.1} parent=11 // pred_check_branch
          %323 = sbr.rel (%p321) target = $region48
        $region47: #{net_forward.1} parent=11 // pred_region
          _
        $region48: #{net_forward.1} parent=11 // pred_fallthru
          _
        // Predicated region
        $region49: #{net_forward.1} parent=11 // pred_check
          %p324 = pneg %p256
        $region50: #{net_forward.1} parent=11 // pred_check_branch
          %326 = sbr.rel (%p324) target = $region52
        $region51: #{net_forward.1} parent=11 // pred_region
          _
        $region52: #{net_forward.1} parent=11 // pred_fallthru
          _
      $region12: #{net_forward.1} parent=5 // pred_fallthru
        _
      %p327 = scmp.lt.s32.totalorder %s20, 2
      // Predicated region
      $region53: #{net_forward.1} parent=5 // pred_check
        %p328 = pneg %p327
      $region54: #{net_forward.1} parent=5 // pred_check_branch
        %330 = sbr.rel (%p328) target = $region56
      $region55: #{net_forward.1} parent=5 // pred_region
        // Predicated region
        $region57: #{net_forward.1} parent=55 // pred_check
          %p331 = pneg %p40
        $region58: #{net_forward.1} parent=55 // pred_check_branch
          %333 = sbr.rel (%p331) target = $region60
        $region59: #{net_forward.1} parent=55 // pred_region
          %p334 = scmp.lt.s32.totalorder %s20, 1
          %s335 = scalar_select %p334, %s20, 1
          %s336 = smul.addr %s335, 98
          %s337 = smul.addr %s336, 8
          %s338 = scalar_lea.vmem %s0, %s337
        $region60: #{net_forward.1} parent=55 // pred_fallthru
          _
      $region56: #{net_forward.1} parent=5 // pred_fallthru
        _
      %p339 = scmp.le.s32.totalorder 1, %s20
      %p340 = scmp.lt.s32.totalorder %s20, 3
      %p341 = pnand %p339, %p340
      %p342 = pneg %p341
      // Predicated region
      $region61: #{net_forward.1} parent=5 // pred_check
        _
      $region62: #{net_forward.1} parent=5 // pred_check_branch
        %344 = sbr.rel (%p341) target = $region64
      $region63: #{net_forward.1} parent=5 // pred_region
        %s345 = ssub.s32 %s20, 1
        %p346 = scmp.lt.s32.totalorder %s25, 1
        %s347 = scalar_select %p346, %s25, 1
        %s348 = smul.addr %s347, 98
        %s349 = smul.addr %s348, 8
        %s350 = scalar_lea.vmem %s0, %s349
        %p351 = pneg %p46
        %p352 = pneg %p43
        %p353 = pneg %p67
        %p354 = pneg %p64
        %p355 = pneg %p88
        %p356 = pneg %p85
        %p357 = pneg %p109
        %p358 = pneg %p106
        %p359 = pneg %p130
        %p360 = pneg %p127
        %p361 = pneg %p151
        %p362 = pneg %p148
        %p363 = pneg %p172
        %p364 = pneg %p169
        %p365 = pneg %p193
        %p366 = pneg %p190
        %p367 = pneg %p214
        %p368 = pneg %p211
        %p369 = pneg %p235
        %p370 = pneg %p232
        %p371 = pneg %p256
        %p372 = pneg %p253
        %p373 = pneg %p282
        %p374 = pneg %p279
        %s375 = sand.u32 %s269, 1
        %s376 = scalar_lea.sflag [#allocation4], %s375
        %s377 = sand.u32 %s269, 1
        %s378 = scalar_lea.vmem [#allocation3], %s377
        %p379 = scmp.lt.s32.totalorder %s25, 1
        %s380 = scalar_select %p379, %s25, 1
        %s381 = smul.addr %s380, 98
        %s382 = smul.addr %s381, 8
        %s383 = scalar_lea.vmem %s0, %s382
        %v384 = vld [vmem:[%s383] sm:$0xff]
        %v385 = vld [vmem:[%s383 + $0x8] sm:$0xff]
        %v386 = vld [vmem:[%s383 + $0x10] sm:$0xff]
        %v387 = vld [vmem:[%s383 + $0x18] sm:$0xff]
        %v388 = vld [vmem:[%s383 + $0x20] sm:$0xff]
        %v389 = vld [vmem:[%s383 + $0x28] sm:$0xff]
        %v390 = vld [vmem:[%s383 + $0x30] sm:$0xff]
        %v391 = vld [vmem:[%s383 + $0x38] sm:$0xff]
        %v392 = vld [vmem:[%s383 + $0x40] sm:$0xff]
        %v393 = vld [vmem:[%s383 + $0x48] sm:$0xff]
        %v394 = vld [vmem:[%s383 + $0x50] sm:$0xff]
        %v395 = vld [vmem:[%s383 + $0x58] sm:$0xff]
        %v396 = vld [vmem:[%s383 + $0x60] sm:$0xff]
        %v397 = vld [vmem:[%s383 + $0x68] sm:$0xff]
        %v398 = vld [vmem:[%s1] sm:$0xff]
        %v399 = vld [vmem:[%s1 + $0x8] sm:$0xff]
        %v400 = vld [vmem:[%s1 + $0x10] sm:$0xff]
        %v401 = vld [vmem:[%s1 + $0x18] sm:$0xff]
        %v402 = vld [vmem:[%s1 + $0x20] sm:$0xff]
        %v403 = vld [vmem:[%s1 + $0x28] sm:$0xff]
        %v404 = vld [vmem:[%s1 + $0x30] sm:$0xff]
        %v405 = vld [vmem:[%s1 + $0x38] sm:$0xff]
        %v406 = vld [vmem:[%s1 + $0x40] sm:$0xff]
        %v407 = vld [vmem:[%s1 + $0x48] sm:$0xff]
        %v408 = vld [vmem:[%s1 + $0x50] sm:$0xff]
        %v409 = vld [vmem:[%s1 + $0x58] sm:$0xff]
        %v410 = vld [vmem:[%s1 + $0x60] sm:$0xff]
        %v411 = vld [vmem:[%s1 + $0x68] sm:$0xff]
        %v412 = vld [vmem:[%s1 + $0x70] sm:$0xff]
        %v413 = vld [vmem:[%s1 + $0x78] sm:$0xff]
        %v414 = vld [vmem:[%s2] sm:$0x1]
        %v416 = vperm.slane %v414, 0
        %418 = vmatpush.msra.mxu0 %v413
        %419 = vmatpush.msra.mxu0 %v412
        %420 = vmatpush.msra.mxu0 %v411
        %421 = vmatpush.msra.mxu0 %v410
        %422 = vmatpush.msra.mxu0 %v409
        %423 = vmatpush.msra.mxu0 %v408
        %424 = vmatpush.msra.mxu0 %v407
        %425 = vmatpush.msra.mxu0 %v406
        %426 = vmatpush.msra.mxu0 %v405
        %427 = vmatpush.msra.mxu0 %v404
        %428 = vmatpush.msra.mxu0 %v403
        %429 = vmatpush.msra.mxu0 %v402
        %430 = vmatpush.msra.mxu0 %v401
        %431 = vmatpush.msra.mxu0 %v400
        %432 = vmatpush.msra.mxu0 %v399
        %433 = vmatpush.msra.mxu0 %v398
        %434 = vmatmul.f32.gmra.mxu0 %v384
        %v435 = vpop.f32.mrf.mxu0
        %v436 = vadd.f32 %v416, %v435
        %437 = vmatmul.f32.gmra.mxu0 %v385
        %v438 = vpop.f32.mrf.mxu0
        %v439 = vadd.f32 %v416, %v438
        %440 = vmatmul.f32.gmra.mxu0 %v386
        %v441 = vpop.f32.mrf.mxu0
        %v442 = vadd.f32 %v416, %v441
        %443 = vmatmul.f32.gmra.mxu0 %v387
        %v444 = vpop.f32.mrf.mxu0
        %v445 = vadd.f32 %v416, %v444
        %446 = vmatmul.f32.gmra.mxu0 %v388
        %v447 = vpop.f32.mrf.mxu0
        %v448 = vadd.f32 %v416, %v447
        %449 = vmatmul.f32.gmra.mxu0 %v389
        %v450 = vpop.f32.mrf.mxu0
        %v451 = vadd.f32 %v416, %v450
        %452 = vmatmul.f32.gmra.mxu0 %v390
        %v453 = vpop.f32.mrf.mxu0
        %v454 = vadd.f32 %v416, %v453
        %455 = vmatmul.f32.gmra.mxu0 %v391
        %v456 = vpop.f32.mrf.mxu0
        %v457 = vadd.f32 %v416, %v456
        %458 = vmatmul.f32.gmra.mxu0 %v392
        %v459 = vpop.f32.mrf.mxu0
        %v460 = vadd.f32 %v416, %v459
        %461 = vmatmul.f32.gmra.mxu0 %v393
        %v462 = vpop.f32.mrf.mxu0
        %v463 = vadd.f32 %v416, %v462
        %464 = vmatmul.f32.gmra.mxu0 %v394
        %v465 = vpop.f32.mrf.mxu0
        %v466 = vadd.f32 %v416, %v465
        %467 = vmatmul.f32.gmra.mxu0 %v395
        %v468 = vpop.f32.mrf.mxu0
        %v469 = vadd.f32 %v416, %v468
        %470 = vmatmul.f32.gmra.mxu0 %v396
        %v471 = vpop.f32.mrf.mxu0
        %v472 = vadd.f32 %v416, %v471
        %473 = vmatmul.f32.gmra.mxu0 %v397
        %v474 = vpop.f32.mrf.mxu0
        %v475 = vadd.f32 %v416, %v474
        %476 = vdwg.mxu0
        %v477 = vmax.f32 %v436, 0.0
        %v478 = vmax.f32 %v439, 0.0
        %v479 = vmax.f32 %v442, 0.0
        %v480 = vmax.f32 %v445, 0.0
        %v481 = vmax.f32 %v448, 0.0
        %v482 = vmax.f32 %v451, 0.0
        %v483 = vmax.f32 %v454, 0.0
        %v484 = vmax.f32 %v457, 0.0
        %v485 = vmax.f32 %v460, 0.0
        %v486 = vmax.f32 %v463, 0.0
        %v487 = vmax.f32 %v466, 0.0
        %v488 = vmax.f32 %v469, 0.0
        %v489 = vmax.f32 %v472, 0.0
        %v490 = vmax.f32 %v475, 0.0
        %v505 = vrot.slane %v477, 2
        %v506 = vrot.slane %v477, 4
        %v507 = vrot.slane %v477, 6
        %v508 = vrot.slane %v478, 2
        %v509 = vrot.slane %v478, 4
        %v510 = vrot.slane %v478, 6
        %v511 = vrot.slane %v479, 2
        %v512 = vrot.slane %v479, 4
        %v513 = vrot.slane %v479, 6
        %v514 = vrot.slane %v480, 2
        %v515 = vrot.slane %v480, 4
        %v516 = vrot.slane %v480, 6
        %v517 = vrot.slane %v481, 2
        %v518 = vrot.slane %v481, 4
        %v519 = vrot.slane %v481, 6
        %v520 = vrot.slane %v482, 2
        %v521 = vrot.slane %v482, 4
        %v522 = vrot.slane %v482, 6
        %v523 = vrot.slane %v483, 2
        %v524 = vrot.slane %v483, 4
        %v525 = vrot.slane %v483, 6
        %v526 = vrot.slane %v484, 2
        %v527 = vrot.slane %v484, 4
        %v528 = vrot.slane %v484, 6
        %v529 = vrot.slane %v485, 2
        %v530 = vrot.slane %v485, 4
        %v531 = vrot.slane %v485, 6
        %v532 = vrot.slane %v486, 2
        %v533 = vrot.slane %v486, 4
        %v534 = vrot.slane %v486, 6
        %v535 = vrot.slane %v487, 2
        %v536 = vrot.slane %v487, 4
        %v537 = vrot.slane %v487, 6
        %v538 = vrot.slane %v488, 2
        %v539 = vrot.slane %v488, 4
        %v540 = vrot.slane %v488, 6
        %v541 = vrot.slane %v489, 2
        %v542 = vrot.slane %v489, 4
        %v543 = vrot.slane %v489, 6
        %v544 = vrot.slane %v490, 2
        %v545 = vrot.slane %v490, 4
        %v546 = vrot.slane %v490, 6
        %v589 = vrot.slane %v477, 7
        %v590 = vrot.slane %v589, 2
        %v591 = vrot.slane %v505, 7
        %v592 = vrot.slane %v591, 2
        %v593 = vrot.slane %v506, 7
        %v594 = vrot.slane %v593, 2
        %v595 = vrot.slane %v507, 7
        %v596 = vrot.slane %v595, 2
        %v597 = vrot.slane %v478, 7
        %v598 = vrot.slane %v597, 2
        %v599 = vrot.slane %v508, 7
        %v600 = vrot.slane %v599, 2
        %v601 = vrot.slane %v509, 7
        %v602 = vrot.slane %v601, 2
        %v603 = vrot.slane %v510, 7
        %v604 = vrot.slane %v603, 2
        %v605 = vrot.slane %v479, 7
        %v606 = vrot.slane %v605, 2
        %v607 = vrot.slane %v511, 7
        %v608 = vrot.slane %v607, 2
        %v609 = vrot.slane %v512, 7
        %v610 = vrot.slane %v609, 2
        %v611 = vrot.slane %v513, 7
        %v612 = vrot.slane %v611, 2
        %v613 = vrot.slane %v480, 7
        %v614 = vrot.slane %v613, 2
        %v615 = vrot.slane %v514, 7
        %v616 = vrot.slane %v615, 2
        %v617 = vrot.slane %v515, 7
        %v618 = vrot.slane %v617, 2
        %v619 = vrot.slane %v516, 7
        %v620 = vrot.slane %v619, 2
        %v621 = vrot.slane %v481, 7
        %v622 = vrot.slane %v621, 2
        %v623 = vrot.slane %v517, 7
        %v624 = vrot.slane %v623, 2
        %v625 = vrot.slane %v518, 7
        %v626 = vrot.slane %v625, 2
        %v627 = vrot.slane %v519, 7
        %v628 = vrot.slane %v627, 2
        %v629 = vrot.slane %v482, 7
        %v630 = vrot.slane %v629, 2
        %v631 = vrot.slane %v520, 7
        %v632 = vrot.slane %v631, 2
        %v633 = vrot.slane %v521, 7
        %v634 = vrot.slane %v633, 2
        %v635 = vrot.slane %v522, 7
        %v636 = vrot.slane %v635, 2
        %v637 = vrot.slane %v483, 7
        %v638 = vrot.slane %v637, 2
        %v639 = vrot.slane %v523, 7
        %v640 = vrot.slane %v639, 2
        %v641 = vrot.slane %v524, 7
        %v642 = vrot.slane %v641, 2
        %v643 = vrot.slane %v525, 7
        %v644 = vrot.slane %v643, 2
        %v645 = vrot.slane %v484, 7
        %v646 = vrot.slane %v645, 2
        %v647 = vrot.slane %v526, 7
        %v648 = vrot.slane %v647, 2
        %v649 = vrot.slane %v527, 7
        %v650 = vrot.slane %v649, 2
        %v651 = vrot.slane %v528, 7
        %v652 = vrot.slane %v651, 2
        %v653 = vrot.slane %v485, 7
        %v654 = vrot.slane %v653, 2
        %v655 = vrot.slane %v529, 7
        %v656 = vrot.slane %v655, 2
        %v657 = vrot.slane %v530, 7
        %v658 = vrot.slane %v657, 2
        %v659 = vrot.slane %v531, 7
        %v660 = vrot.slane %v659, 2
        %v661 = vrot.slane %v486, 7
        %v662 = vrot.slane %v661, 2
        %v663 = vrot.slane %v532, 7
        %v664 = vrot.slane %v663, 2
        %v665 = vrot.slane %v533, 7
        %v666 = vrot.slane %v665, 2
        %v667 = vrot.slane %v534, 7
        %v668 = vrot.slane %v667, 2
        %v669 = vrot.slane %v487, 7
        %v670 = vrot.slane %v669, 2
        %v671 = vrot.slane %v535, 7
        %v672 = vrot.slane %v671, 2
        %v673 = vrot.slane %v536, 7
        %v674 = vrot.slane %v673, 2
        %v675 = vrot.slane %v537, 7
        %v676 = vrot.slane %v675, 2
        %v677 = vrot.slane %v488, 7
        %v678 = vrot.slane %v677, 2
        %v679 = vrot.slane %v538, 7
        %v680 = vrot.slane %v679, 2
        %v681 = vrot.slane %v539, 7
        %v682 = vrot.slane %v681, 2
        %v683 = vrot.slane %v540, 7
        %v684 = vrot.slane %v683, 2
        %v685 = vrot.slane %v489, 7
        %v686 = vrot.slane %v685, 2
        %v687 = vrot.slane %v541, 7
        %v688 = vrot.slane %v687, 2
        %v689 = vrot.slane %v542, 7
        %v690 = vrot.slane %v689, 2
        %v691 = vrot.slane %v543, 7
        %v692 = vrot.slane %v691, 2
        %v693 = vrot.slane %v490, 7
        %v694 = vrot.slane %v693, 2
        %v695 = vrot.slane %v544, 7
        %v696 = vrot.slane %v695, 2
        %v697 = vrot.slane %v545, 7
        %v698 = vrot.slane %v697, 2
        %v699 = vrot.slane %v546, 7
        %v700 = vrot.slane %v699, 2
        %v757 = vmax.f32 %v477, %v590
        %v758 = vmax.f32 %v505, %v592
        %v759 = vmax.f32 %v506, %v594
        %v760 = vmax.f32 %v507, %v596
        %v761 = vmax.f32 %v478, %v598
        %v762 = vmax.f32 %v508, %v600
        %v763 = vmax.f32 %v509, %v602
        %v764 = vmax.f32 %v510, %v604
        %v765 = vmax.f32 %v479, %v606
        %v766 = vmax.f32 %v511, %v608
        %v767 = vmax.f32 %v512, %v610
        %v768 = vmax.f32 %v513, %v612
        %v769 = vmax.f32 %v480, %v614
        %v770 = vmax.f32 %v514, %v616
        %v771 = vmax.f32 %v515, %v618
        %v772 = vmax.f32 %v516, %v620
        %v773 = vmax.f32 %v481, %v622
        %v774 = vmax.f32 %v517, %v624
        %v775 = vmax.f32 %v518, %v626
        %v776 = vmax.f32 %v519, %v628
        %v777 = vmax.f32 %v482, %v630
        %v778 = vmax.f32 %v520, %v632
        %v779 = vmax.f32 %v521, %v634
        %v780 = vmax.f32 %v522, %v636
        %v781 = vmax.f32 %v483, %v638
        %v782 = vmax.f32 %v523, %v640
        %v783 = vmax.f32 %v524, %v642
        %v784 = vmax.f32 %v525, %v644
        %v785 = vmax.f32 %v484, %v646
        %v786 = vmax.f32 %v526, %v648
        %v787 = vmax.f32 %v527, %v650
        %v788 = vmax.f32 %v528, %v652
        %v789 = vmax.f32 %v485, %v654
        %v790 = vmax.f32 %v529, %v656
        %v791 = vmax.f32 %v530, %v658
        %v792 = vmax.f32 %v531, %v660
        %v793 = vmax.f32 %v486, %v662
        %v794 = vmax.f32 %v532, %v664
        %v795 = vmax.f32 %v533, %v666
        %v796 = vmax.f32 %v534, %v668
        %v797 = vmax.f32 %v487, %v670
        %v798 = vmax.f32 %v535, %v672
        %v799 = vmax.f32 %v536, %v674
        %v800 = vmax.f32 %v537, %v676
        %v801 = vmax.f32 %v488, %v678
        %v802 = vmax.f32 %v538, %v680
        %v803 = vmax.f32 %v539, %v682
        %v804 = vmax.f32 %v540, %v684
        %v805 = vmax.f32 %v489, %v686
        %v806 = vmax.f32 %v541, %v688
        %v807 = vmax.f32 %v542, %v690
        %v808 = vmax.f32 %v543, %v692
        %v809 = vmax.f32 %v490, %v694
        %v810 = vmax.f32 %v544, %v696
        %v811 = vmax.f32 %v545, %v698
        %v812 = vmax.f32 %v546, %v700
        %v813 = vmax.f32 %v757, %v771
        %v814 = vmax.f32 %v758, %v772
        %v815 = vmax.f32 %v759, %v773
        %v816 = vmax.f32 %v760, %v774
        %v817 = vmax.f32 %v761, %v775
        %v818 = vmax.f32 %v762, %v776
        %v819 = vmax.f32 %v763, %v777
        %v820 = vmax.f32 %v764, %v778
        %v821 = vmax.f32 %v765, %v779
        %v822 = vmax.f32 %v766, %v780
        %v823 = vmax.f32 %v767, %v781
        %v824 = vmax.f32 %v768, %v782
        %v825 = vmax.f32 %v769, %v783
        %v826 = vmax.f32 %v770, %v784
        %v827 = vmax.f32 %v785, %v799
        %v828 = vmax.f32 %v786, %v800
        %v829 = vmax.f32 %v787, %v801
        %v830 = vmax.f32 %v788, %v802
        %v831 = vmax.f32 %v789, %v803
        %v832 = vmax.f32 %v790, %v804
        %v833 = vmax.f32 %v791, %v805
        %v834 = vmax.f32 %v792, %v806
        %v835 = vmax.f32 %v793, %v807
        %v836 = vmax.f32 %v794, %v808
        %v837 = vmax.f32 %v795, %v809
        %v838 = vmax.f32 %v796, %v810
        %v839 = vmax.f32 %v797, %v811
        %v840 = vmax.f32 %v798, %v812
        %v869 = vperm.slane %v813, 0
        %v870 = vperm.slane %v814, 0
        %v871 = vperm.slane %v815, 0
        %v872 = vperm.slane %v816, 0
        %v873 = vperm.slane %v817, 0
        %v874 = vperm.slane %v818, 0
        %v875 = vperm.slane %v819, 0
        %v876 = vperm.slane %v820, 0
        %v877 = vperm.slane %v821, 0
        %v878 = vperm.slane %v822, 0
        %v879 = vperm.slane %v823, 0
        %v880 = vperm.slane %v824, 0
        %v881 = vperm.slane %v825, 0
        %v882 = vperm.slane %v826, 0
        %v883 = vperm.slane %v827, 0
        %v884 = vperm.slane %v828, 0
        %v885 = vperm.slane %v829, 0
        %v886 = vperm.slane %v830, 0
        %v887 = vperm.slane %v831, 0
        %v888 = vperm.slane %v832, 0
        %v889 = vperm.slane %v833, 0
        %v890 = vperm.slane %v834, 0
        %v891 = vperm.slane %v835, 0
        %v892 = vperm.slane %v836, 0
        %v893 = vperm.slane %v837, 0
        %v894 = vperm.slane %v838, 0
        %v895 = vperm.slane %v839, 0
        %v896 = vperm.slane %v840, 0
        %vm897 = vcmask 1041409
        %v898 = vsel %vm897, %v870, %v869
        %vm899 = vcmask 1042434
        %v900 = vsel %vm899, %v871, %v898
        %vm901 = vcmask 1043459
        %v902 = vsel %vm901, %v872, %v900
        %vm903 = vcmask 1044484
        %v904 = vsel %vm903, %v873, %v902
        %vm905 = vcmask 1045509
        %v906 = vsel %vm905, %v874, %v904
        %vm907 = vcmask 1046534
        %v908 = vsel %vm907, %v875, %v906
        %vm909 = vcmask 1047559
        %v910 = vsel %vm909, %v876, %v908
        %v911 = vsel %vm897, %v878, %v877
        %v912 = vsel %vm899, %v879, %v911
        %v913 = vsel %vm901, %v880, %v912
        %v914 = vsel %vm903, %v881, %v913
        %v915 = vsel %vm905, %v882, %v914
        %v916 = vsel %vm907, %v883, %v915
        %v917 = vsel %vm909, %v884, %v916
        %v918 = vsel %vm897, %v886, %v885
        %v919 = vsel %vm899, %v887, %v918
        %v920 = vsel %vm901, %v888, %v919
        %v921 = vsel %vm903, %v889, %v920
        %v922 = vsel %vm905, %v890, %v921
        %v923 = vsel %vm907, %v891, %v922
        %v924 = vsel %vm909, %v892, %v923
        %v925 = vsel %vm897, %v894, %v893
        %v926 = vsel %vm899, %v895, %v925
        %v927 = vsel %vm901, %v896, %v926
        %932 = vst [vmem:[#allocation2] sm:$0xff] %v910
        %933 = vst [vmem:[#allocation2 + $0x8] sm:$0xff] %v917
        %934 = vst [vmem:[#allocation2 + $0x10] sm:$0xff] %v924
        %935 = vst [vmem:[#allocation2 + $0x18] sm:$0xf] %v927
        %v936 = vld [vmem:[%s383 + $0x70] sm:$0xff]
        %v937 = vld [vmem:[%s383 + $0x78] sm:$0xff]
        %v938 = vld [vmem:[%s383 + $0x80] sm:$0xff]
        %v939 = vld [vmem:[%s383 + $0x88] sm:$0xff]
        %v940 = vld [vmem:[%s383 + $0x90] sm:$0xff]
        %v941 = vld [vmem:[%s383 + $0x98] sm:$0xff]
        %v942 = vld [vmem:[%s383 + $0xa0] sm:$0xff]
        %v943 = vld [vmem:[%s383 + $0xa8] sm:$0xff]
        %v944 = vld [vmem:[%s383 + $0xb0] sm:$0xff]
        %v945 = vld [vmem:[%s383 + $0xb8] sm:$0xff]
        %v946 = vld [vmem:[%s383 + $0xc0] sm:$0xff]
        %v947 = vld [vmem:[%s383 + $0xc8] sm:$0xff]
        %v948 = vld [vmem:[%s383 + $0xd0] sm:$0xff]
        %v949 = vld [vmem:[%s383 + $0xd8] sm:$0xff]
        %v950 = vld [vmem:[%s1] sm:$0xff]
        %v951 = vld [vmem:[%s1 + $0x8] sm:$0xff]
        %v952 = vld [vmem:[%s1 + $0x10] sm:$0xff]
        %v953 = vld [vmem:[%s1 + $0x18] sm:$0xff]
        %v954 = vld [vmem:[%s1 + $0x20] sm:$0xff]
        %v955 = vld [vmem:[%s1 + $0x28] sm:$0xff]
        %v956 = vld [vmem:[%s1 + $0x30] sm:$0xff]
        %v957 = vld [vmem:[%s1 + $0x38] sm:$0xff]
        %v958 = vld [vmem:[%s1 + $0x40] sm:$0xff]
        %v959 = vld [vmem:[%s1 + $0x48] sm:$0xff]
        %v960 = vld [vmem:[%s1 + $0x50] sm:$0xff]
        %v961 = vld [vmem:[%s1 + $0x58] sm:$0xff]
        %v962 = vld [vmem:[%s1 + $0x60] sm:$0xff]
        %v963 = vld [vmem:[%s1 + $0x68] sm:$0xff]
        %v964 = vld [vmem:[%s1 + $0x70] sm:$0xff]
        %v965 = vld [vmem:[%s1 + $0x78] sm:$0xff]
        %v966 = vld [vmem:[%s2] sm:$0x1]
        %v968 = vperm.slane %v966, 0
        %970 = vmatpush.msra.mxu0 %v965
        %971 = vmatpush.msra.mxu0 %v964
        %972 = vmatpush.msra.mxu0 %v963
        %973 = vmatpush.msra.mxu0 %v962
        %974 = vmatpush.msra.mxu0 %v961
        %975 = vmatpush.msra.mxu0 %v960
        %976 = vmatpush.msra.mxu0 %v959
        %977 = vmatpush.msra.mxu0 %v958
        %978 = vmatpush.msra.mxu0 %v957
        %979 = vmatpush.msra.mxu0 %v956
        %980 = vmatpush.msra.mxu0 %v955
        %981 = vmatpush.msra.mxu0 %v954
        %982 = vmatpush.msra.mxu0 %v953
        %983 = vmatpush.msra.mxu0 %v952
        %984 = vmatpush.msra.mxu0 %v951
        %985 = vmatpush.msra.mxu0 %v950
        %986 = vmatmul.f32.gmra.mxu0 %v936
        %v987 = vpop.f32.mrf.mxu0
        %v988 = vadd.f32 %v968, %v987
        %989 = vmatmul.f32.gmra.mxu0 %v937
        %v990 = vpop.f32.mrf.mxu0
        %v991 = vadd.f32 %v968, %v990
        %992 = vmatmul.f32.gmra.mxu0 %v938
        %v993 = vpop.f32.mrf.mxu0
        %v994 = vadd.f32 %v968, %v993
        %995 = vmatmul.f32.gmra.mxu0 %v939
        %v996 = vpop.f32.mrf.mxu0
        %v997 = vadd.f32 %v968, %v996
        %998 = vmatmul.f32.gmra.mxu0 %v940
        %v999 = vpop.f32.mrf.mxu0
        %v1000 = vadd.f32 %v968, %v999
        %1001 = vmatmul.f32.gmra.mxu0 %v941
        %v1002 = vpop.f32.mrf.mxu0
        %v1003 = vadd.f32 %v968, %v1002
        %1004 = vmatmul.f32.gmra.mxu0 %v942
        %v1005 = vpop.f32.mrf.mxu0
        %v1006 = vadd.f32 %v968, %v1005
        %1007 = vmatmul.f32.gmra.mxu0 %v943
        %v1008 = vpop.f32.mrf.mxu0
        %v1009 = vadd.f32 %v968, %v1008
        %1010 = vmatmul.f32.gmra.mxu0 %v944
        %v1011 = vpop.f32.mrf.mxu0
        %v1012 = vadd.f32 %v968, %v1011
        %1013 = vmatmul.f32.gmra.mxu0 %v945
        %v1014 = vpop.f32.mrf.mxu0
        %v1015 = vadd.f32 %v968, %v1014
        %1016 = vmatmul.f32.gmra.mxu0 %v946
        %v1017 = vpop.f32.mrf.mxu0
        %v1018 = vadd.f32 %v968, %v1017
        %1019 = vmatmul.f32.gmra.mxu0 %v947
        %v1020 = vpop.f32.mrf.mxu0
        %v1021 = vadd.f32 %v968, %v1020
        %1022 = vmatmul.f32.gmra.mxu0 %v948
        %v1023 = vpop.f32.mrf.mxu0
        %v1024 = vadd.f32 %v968, %v1023
        %1025 = vmatmul.f32.gmra.mxu0 %v949
        %v1026 = vpop.f32.mrf.mxu0
        %v1027 = vadd.f32 %v968, %v1026
        %1028 = vdwg.mxu0
        %v1029 = vmax.f32 %v988, 0.0
        %v1030 = vmax.f32 %v991, 0.0
        %v1031 = vmax.f32 %v994, 0.0
        %v1032 = vmax.f32 %v997, 0.0
        %v1033 = vmax.f32 %v1000, 0.0
        %v1034 = vmax.f32 %v1003, 0.0
        %v1035 = vmax.f32 %v1006, 0.0
        %v1036 = vmax.f32 %v1009, 0.0
        %v1037 = vmax.f32 %v1012, 0.0
        %v1038 = vmax.f32 %v1015, 0.0
        %v1039 = vmax.f32 %v1018, 0.0
        %v1040 = vmax.f32 %v1021, 0.0
        %v1041 = vmax.f32 %v1024, 0.0
        %v1042 = vmax.f32 %v1027, 0.0
        %v1057 = vrot.slane %v1029, 2
        %v1058 = vrot.slane %v1029, 4
        %v1059 = vrot.slane %v1029, 6
        %v1060 = vrot.slane %v1030, 2
        %v1061 = vrot.slane %v1030, 4
        %v1062 = vrot.slane %v1030, 6
        %v1063 = vrot.slane %v1031, 2
        %v1064 = vrot.slane %v1031, 4
        %v1065 = vrot.slane %v1031, 6
        %v1066 = vrot.slane %v1032, 2
        %v1067 = vrot.slane %v1032, 4
        %v1068 = vrot.slane %v1032, 6
        %v1069 = vrot.slane %v1033, 2
        %v1070 = vrot.slane %v1033, 4
        %v1071 = vrot.slane %v1033, 6
        %v1072 = vrot.slane %v1034, 2
        %v1073 = vrot.slane %v1034, 4
        %v1074 = vrot.slane %v1034, 6
        %v1075 = vrot.slane %v1035, 2
        %v1076 = vrot.slane %v1035, 4
        %v1077 = vrot.slane %v1035, 6
        %v1078 = vrot.slane %v1036, 2
        %v1079 = vrot.slane %v1036, 4
        %v1080 = vrot.slane %v1036, 6
        %v1081 = vrot.slane %v1037, 2
        %v1082 = vrot.slane %v1037, 4
        %v1083 = vrot.slane %v1037, 6
        %v1084 = vrot.slane %v1038, 2
        %v1085 = vrot.slane %v1038, 4
        %v1086 = vrot.slane %v1038, 6
        %v1087 = vrot.slane %v1039, 2
        %v1088 = vrot.slane %v1039, 4
        %v1089 = vrot.slane %v1039, 6
        %v1090 = vrot.slane %v1040, 2
        %v1091 = vrot.slane %v1040, 4
        %v1092 = vrot.slane %v1040, 6
        %v1093 = vrot.slane %v1041, 2
        %v1094 = vrot.slane %v1041, 4
        %v1095 = vrot.slane %v1041, 6
        %v1096 = vrot.slane %v1042, 2
        %v1097 = vrot.slane %v1042, 4
        %v1098 = vrot.slane %v1042, 6
        %v1141 = vrot.slane %v1029, 7
        %v1142 = vrot.slane %v1141, 2
        %v1143 = vrot.slane %v1057, 7
        %v1144 = vrot.slane %v1143, 2
        %v1145 = vrot.slane %v1058, 7
        %v1146 = vrot.slane %v1145, 2
        %v1147 = vrot.slane %v1059, 7
        %v1148 = vrot.slane %v1147, 2
        %v1149 = vrot.slane %v1030, 7
        %v1150 = vrot.slane %v1149, 2
        %v1151 = vrot.slane %v1060, 7
        %v1152 = vrot.slane %v1151, 2
        %v1153 = vrot.slane %v1061, 7
        %v1154 = vrot.slane %v1153, 2
        %v1155 = vrot.slane %v1062, 7
        %v1156 = vrot.slane %v1155, 2
        %v1157 = vrot.slane %v1031, 7
        %v1158 = vrot.slane %v1157, 2
        %v1159 = vrot.slane %v1063, 7
        %v1160 = vrot.slane %v1159, 2
        %v1161 = vrot.slane %v1064, 7
        %v1162 = vrot.slane %v1161, 2
        %v1163 = vrot.slane %v1065, 7
        %v1164 = vrot.slane %v1163, 2
        %v1165 = vrot.slane %v1032, 7
        %v1166 = vrot.slane %v1165, 2
        %v1167 = vrot.slane %v1066, 7
        %v1168 = vrot.slane %v1167, 2
        %v1169 = vrot.slane %v1067, 7
        %v1170 = vrot.slane %v1169, 2
        %v1171 = vrot.slane %v1068, 7
        %v1172 = vrot.slane %v1171, 2
        %v1173 = vrot.slane %v1033, 7
        %v1174 = vrot.slane %v1173, 2
        %v1175 = vrot.slane %v1069, 7
        %v1176 = vrot.slane %v1175, 2
        %v1177 = vrot.slane %v1070, 7
        %v1178 = vrot.slane %v1177, 2
        %v1179 = vrot.slane %v1071, 7
        %v1180 = vrot.slane %v1179, 2
        %v1181 = vrot.slane %v1034, 7
        %v1182 = vrot.slane %v1181, 2
        %v1183 = vrot.slane %v1072, 7
        %v1184 = vrot.slane %v1183, 2
        %v1185 = vrot.slane %v1073, 7
        %v1186 = vrot.slane %v1185, 2
        %v1187 = vrot.slane %v1074, 7
        %v1188 = vrot.slane %v1187, 2
        %v1189 = vrot.slane %v1035, 7
        %v1190 = vrot.slane %v1189, 2
        %v1191 = vrot.slane %v1075, 7
        %v1192 = vrot.slane %v1191, 2
        %v1193 = vrot.slane %v1076, 7
        %v1194 = vrot.slane %v1193, 2
        %v1195 = vrot.slane %v1077, 7
        %v1196 = vrot.slane %v1195, 2
        %v1197 = vrot.slane %v1036, 7
        %v1198 = vrot.slane %v1197, 2
        %v1199 = vrot.slane %v1078, 7
        %v1200 = vrot.slane %v1199, 2
        %v1201 = vrot.slane %v1079, 7
        %v1202 = vrot.slane %v1201, 2
        %v1203 = vrot.slane %v1080, 7
        %v1204 = vrot.slane %v1203, 2
        %v1205 = vrot.slane %v1037, 7
        %v1206 = vrot.slane %v1205, 2
        %v1207 = vrot.slane %v1081, 7
        %v1208 = vrot.slane %v1207, 2
        %v1209 = vrot.slane %v1082, 7
        %v1210 = vrot.slane %v1209, 2
        %v1211 = vrot.slane %v1083, 7
        %v1212 = vrot.slane %v1211, 2
        %v1213 = vrot.slane %v1038, 7
        %v1214 = vrot.slane %v1213, 2
        %v1215 = vrot.slane %v1084, 7
        %v1216 = vrot.slane %v1215, 2
        %v1217 = vrot.slane %v1085, 7
        %v1218 = vrot.slane %v1217, 2
        %v1219 = vrot.slane %v1086, 7
        %v1220 = vrot.slane %v1219, 2
        %v1221 = vrot.slane %v1039, 7
        %v1222 = vrot.slane %v1221, 2
        %v1223 = vrot.slane %v1087, 7
        %v1224 = vrot.slane %v1223, 2
        %v1225 = vrot.slane %v1088, 7
        %v1226 = vrot.slane %v1225, 2
        %v1227 = vrot.slane %v1089, 7
        %v1228 = vrot.slane %v1227, 2
        %v1229 = vrot.slane %v1040, 7
        %v1230 = vrot.slane %v1229, 2
        %v1231 = vrot.slane %v1090, 7
        %v1232 = vrot.slane %v1231, 2
        %v1233 = vrot.slane %v1091, 7
        %v1234 = vrot.slane %v1233, 2
        %v1235 = vrot.slane %v1092, 7
        %v1236 = vrot.slane %v1235, 2
        %v1237 = vrot.slane %v1041, 7
        %v1238 = vrot.slane %v1237, 2
        %v1239 = vrot.slane %v1093, 7
        %v1240 = vrot.slane %v1239, 2
        %v1241 = vrot.slane %v1094, 7
        %v1242 = vrot.slane %v1241, 2
        %v1243 = vrot.slane %v1095, 7
        %v1244 = vrot.slane %v1243, 2
        %v1245 = vrot.slane %v1042, 7
        %v1246 = vrot.slane %v1245, 2
        %v1247 = vrot.slane %v1096, 7
        %v1248 = vrot.slane %v1247, 2
        %v1249 = vrot.slane %v1097, 7
        %v1250 = vrot.slane %v1249, 2
        %v1251 = vrot.slane %v1098, 7
        %v1252 = vrot.slane %v1251, 2
        %v1309 = vmax.f32 %v1029, %v1142
        %v1310 = vmax.f32 %v1057, %v1144
        %v1311 = vmax.f32 %v1058, %v1146
        %v1312 = vmax.f32 %v1059, %v1148
        %v1313 = vmax.f32 %v1030, %v1150
        %v1314 = vmax.f32 %v1060, %v1152
        %v1315 = vmax.f32 %v1061, %v1154
        %v1316 = vmax.f32 %v1062, %v1156
        %v1317 = vmax.f32 %v1031, %v1158
        %v1318 = vmax.f32 %v1063, %v1160
        %v1319 = vmax.f32 %v1064, %v1162
        %v1320 = vmax.f32 %v1065, %v1164
        %v1321 = vmax.f32 %v1032, %v1166
        %v1322 = vmax.f32 %v1066, %v1168
        %v1323 = vmax.f32 %v1067, %v1170
        %v1324 = vmax.f32 %v1068, %v1172
        %v1325 = vmax.f32 %v1033, %v1174
        %v1326 = vmax.f32 %v1069, %v1176
        %v1327 = vmax.f32 %v1070, %v1178
        %v1328 = vmax.f32 %v1071, %v1180
        %v1329 = vmax.f32 %v1034, %v1182
        %v1330 = vmax.f32 %v1072, %v1184
        %v1331 = vmax.f32 %v1073, %v1186
        %v1332 = vmax.f32 %v1074, %v1188
        %v1333 = vmax.f32 %v1035, %v1190
        %v1334 = vmax.f32 %v1075, %v1192
        %v1335 = vmax.f32 %v1076, %v1194
        %v1336 = vmax.f32 %v1077, %v1196
        %v1337 = vmax.f32 %v1036, %v1198
        %v1338 = vmax.f32 %v1078, %v1200
        %v1339 = vmax.f32 %v1079, %v1202
        %v1340 = vmax.f32 %v1080, %v1204
        %v1341 = vmax.f32 %v1037, %v1206
        %v1342 = vmax.f32 %v1081, %v1208
        %v1343 = vmax.f32 %v1082, %v1210
        %v1344 = vmax.f32 %v1083, %v1212
        %v1345 = vmax.f32 %v1038, %v1214
        %v1346 = vmax.f32 %v1084, %v1216
        %v1347 = vmax.f32 %v1085, %v1218
        %v1348 = vmax.f32 %v1086, %v1220
        %v1349 = vmax.f32 %v1039, %v1222
        %v1350 = vmax.f32 %v1087, %v1224
        %v1351 = vmax.f32 %v1088, %v1226
        %v1352 = vmax.f32 %v1089, %v1228
        %v1353 = vmax.f32 %v1040, %v1230
        %v1354 = vmax.f32 %v1090, %v1232
        %v1355 = vmax.f32 %v1091, %v1234
        %v1356 = vmax.f32 %v1092, %v1236
        %v1357 = vmax.f32 %v1041, %v1238
        %v1358 = vmax.f32 %v1093, %v1240
        %v1359 = vmax.f32 %v1094, %v1242
        %v1360 = vmax.f32 %v1095, %v1244
        %v1361 = vmax.f32 %v1042, %v1246
        %v1362 = vmax.f32 %v1096, %v1248
        %v1363 = vmax.f32 %v1097, %v1250
        %v1364 = vmax.f32 %v1098, %v1252
        %v1365 = vmax.f32 %v1309, %v1323
        %v1366 = vmax.f32 %v1310, %v1324
        %v1367 = vmax.f32 %v1311, %v1325
        %v1368 = vmax.f32 %v1312, %v1326
        %v1369 = vmax.f32 %v1313, %v1327
        %v1370 = vmax.f32 %v1314, %v1328
        %v1371 = vmax.f32 %v1315, %v1329
        %v1372 = vmax.f32 %v1316, %v1330
        %v1373 = vmax.f32 %v1317, %v1331
        %v1374 = vmax.f32 %v1318, %v1332
        %v1375 = vmax.f32 %v1319, %v1333
        %v1376 = vmax.f32 %v1320, %v1334
        %v1377 = vmax.f32 %v1321, %v1335
        %v1378 = vmax.f32 %v1322, %v1336
        %v1379 = vmax.f32 %v1337, %v1351
        %v1380 = vmax.f32 %v1338, %v1352
        %v1381 = vmax.f32 %v1339, %v1353
        %v1382 = vmax.f32 %v1340, %v1354
        %v1383 = vmax.f32 %v1341, %v1355
        %v1384 = vmax.f32 %v1342, %v1356
        %v1385 = vmax.f32 %v1343, %v1357
        %v1386 = vmax.f32 %v1344, %v1358
        %v1387 = vmax.f32 %v1345, %v1359
        %v1388 = vmax.f32 %v1346, %v1360
        %v1389 = vmax.f32 %v1347, %v1361
        %v1390 = vmax.f32 %v1348, %v1362
        %v1391 = vmax.f32 %v1349, %v1363
        %v1392 = vmax.f32 %v1350, %v1364
        %v1421 = vperm.slane %v1365, 0
        %v1422 = vperm.slane %v1366, 0
        %v1423 = vperm.slane %v1367, 0
        %v1424 = vperm.slane %v1368, 0
        %v1425 = vperm.slane %v1369, 0
        %v1426 = vperm.slane %v1370, 0
        %v1427 = vperm.slane %v1371, 0
        %v1428 = vperm.slane %v1372, 0
        %v1429 = vperm.slane %v1373, 0
        %v1430 = vperm.slane %v1374, 0
        %v1431 = vperm.slane %v1375, 0
        %v1432 = vperm.slane %v1376, 0
        %v1433 = vperm.slane %v1377, 0
        %v1434 = vperm.slane %v1378, 0
        %v1435 = vperm.slane %v1379, 0
        %v1436 = vperm.slane %v1380, 0
        %v1437 = vperm.slane %v1381, 0
        %v1438 = vperm.slane %v1382, 0
        %v1439 = vperm.slane %v1383, 0
        %v1440 = vperm.slane %v1384, 0
        %v1441 = vperm.slane %v1385, 0
        %v1442 = vperm.slane %v1386, 0
        %v1443 = vperm.slane %v1387, 0
        %v1444 = vperm.slane %v1388, 0
        %v1445 = vperm.slane %v1389, 0
        %v1446 = vperm.slane %v1390, 0
        %v1447 = vperm.slane %v1391, 0
        %v1448 = vperm.slane %v1392, 0
        %v1449 = vsel %vm897, %v1422, %v1421
        %v1450 = vsel %vm899, %v1423, %v1449
        %v1451 = vsel %vm901, %v1424, %v1450
        %v1452 = vsel %vm903, %v1425, %v1451
        %v1453 = vsel %vm905, %v1426, %v1452
        %v1454 = vsel %vm907, %v1427, %v1453
        %v1455 = vsel %vm909, %v1428, %v1454
        %v1456 = vsel %vm897, %v1430, %v1429
        %v1457 = vsel %vm899, %v1431, %v1456
        %v1458 = vsel %vm901, %v1432, %v1457
        %v1459 = vsel %vm903, %v1433, %v1458
        %v1460 = vsel %vm905, %v1434, %v1459
        %v1461 = vsel %vm907, %v1435, %v1460
        %v1462 = vsel %vm909, %v1436, %v1461
        %v1463 = vsel %vm897, %v1438, %v1437
        %v1464 = vsel %vm899, %v1439, %v1463
        %v1465 = vsel %vm901, %v1440, %v1464
        %v1466 = vsel %vm903, %v1441, %v1465
        %v1467 = vsel %vm905, %v1442, %v1466
        %v1468 = vsel %vm907, %v1443, %v1467
        %v1469 = vsel %vm909, %v1444, %v1468
        %v1470 = vsel %vm897, %v1446, %v1445
        %v1471 = vsel %vm899, %v1447, %v1470
        %v1472 = vsel %vm901, %v1448, %v1471
        %1477 = vst [vmem:[#allocation2 + $0x1c] sm:$0xff] %v1455
        %1478 = vst [vmem:[#allocation2 + $0x24] sm:$0xff] %v1462
        %1479 = vst [vmem:[#allocation2 + $0x2c] sm:$0xff] %v1469
        %1480 = vst [vmem:[#allocation2 + $0x34] sm:$0xf] %v1472
        %v1481 = vld [vmem:[%s383 + $0xe0] sm:$0xff]
        %v1482 = vld [vmem:[%s383 + $0xe8] sm:$0xff]
        %v1483 = vld [vmem:[%s383 + $0xf0] sm:$0xff]
        %v1484 = vld [vmem:[%s383 + $0xf8] sm:$0xff]
        %v1485 = vld [vmem:[%s383 + $0x100] sm:$0xff]
        %v1486 = vld [vmem:[%s383 + $0x108] sm:$0xff]
        %v1487 = vld [vmem:[%s383 + $0x110] sm:$0xff]
        %v1488 = vld [vmem:[%s383 + $0x118] sm:$0xff]
        %v1489 = vld [vmem:[%s383 + $0x120] sm:$0xff]
        %v1490 = vld [vmem:[%s383 + $0x128] sm:$0xff]
        %v1491 = vld [vmem:[%s383 + $0x130] sm:$0xff]
        %v1492 = vld [vmem:[%s383 + $0x138] sm:$0xff]
        %v1493 = vld [vmem:[%s383 + $0x140] sm:$0xff]
        %v1494 = vld [vmem:[%s383 + $0x148] sm:$0xff]
        %v1495 = vld [vmem:[%s1] sm:$0xff]
        %v1496 = vld [vmem:[%s1 + $0x8] sm:$0xff]
        %v1497 = vld [vmem:[%s1 + $0x10] sm:$0xff]
        %v1498 = vld [vmem:[%s1 + $0x18] sm:$0xff]
        %v1499 = vld [vmem:[%s1 + $0x20] sm:$0xff]
        %v1500 = vld [vmem:[%s1 + $0x28] sm:$0xff]
        %v1501 = vld [vmem:[%s1 + $0x30] sm:$0xff]
        %v1502 = vld [vmem:[%s1 + $0x38] sm:$0xff]
        %v1503 = vld [vmem:[%s1 + $0x40] sm:$0xff]
        %v1504 = vld [vmem:[%s1 + $0x48] sm:$0xff]
        %v1505 = vld [vmem:[%s1 + $0x50] sm:$0xff]
        %v1506 = vld [vmem:[%s1 + $0x58] sm:$0xff]
        %v1507 = vld [vmem:[%s1 + $0x60] sm:$0xff]
        %v1508 = vld [vmem:[%s1 + $0x68] sm:$0xff]
        %v1509 = vld [vmem:[%s1 + $0x70] sm:$0xff]
        %v1510 = vld [vmem:[%s1 + $0x78] sm:$0xff]
        %v1511 = vld [vmem:[%s2] sm:$0x1]
        %v1513 = vperm.slane %v1511, 0
        %1515 = vmatpush.msra.mxu0 %v1510
        %1516 = vmatpush.msra.mxu0 %v1509
        %1517 = vmatpush.msra.mxu0 %v1508
        %1518 = vmatpush.msra.mxu0 %v1507
        %1519 = vmatpush.msra.mxu0 %v1506
        %1520 = vmatpush.msra.mxu0 %v1505
        %1521 = vmatpush.msra.mxu0 %v1504
        %1522 = vmatpush.msra.mxu0 %v1503
        %1523 = vmatpush.msra.mxu0 %v1502
        %1524 = vmatpush.msra.mxu0 %v1501
        %1525 = vmatpush.msra.mxu0 %v1500
        %1526 = vmatpush.msra.mxu0 %v1499
        %1527 = vmatpush.msra.mxu0 %v1498
        %1528 = vmatpush.msra.mxu0 %v1497
        %1529 = vmatpush.msra.mxu0 %v1496
        %1530 = vmatpush.msra.mxu0 %v1495
        %1531 = vmatmul.f32.gmra.mxu0 %v1481
        %v1532 = vpop.f32.mrf.mxu0
        %v1533 = vadd.f32 %v1513, %v1532
        %1534 = vmatmul.f32.gmra.mxu0 %v1482
        %v1535 = vpop.f32.mrf.mxu0
        %v1536 = vadd.f32 %v1513, %v1535
        %1537 = vmatmul.f32.gmra.mxu0 %v1483
        %v1538 = vpop.f32.mrf.mxu0
        %v1539 = vadd.f32 %v1513, %v1538
        %1540 = vmatmul.f32.gmra.mxu0 %v1484
        %v1541 = vpop.f32.mrf.mxu0
        %v1542 = vadd.f32 %v1513, %v1541
        %1543 = vmatmul.f32.gmra.mxu0 %v1485
        %v1544 = vpop.f32.mrf.mxu0
        %v1545 = vadd.f32 %v1513, %v1544
        %1546 = vmatmul.f32.gmra.mxu0 %v1486
        %v1547 = vpop.f32.mrf.mxu0
        %v1548 = vadd.f32 %v1513, %v1547
        %1549 = vmatmul.f32.gmra.mxu0 %v1487
        %v1550 = vpop.f32.mrf.mxu0
        %v1551 = vadd.f32 %v1513, %v1550
        %1552 = vmatmul.f32.gmra.mxu0 %v1488
        %v1553 = vpop.f32.mrf.mxu0
        %v1554 = vadd.f32 %v1513, %v1553
        %1555 = vmatmul.f32.gmra.mxu0 %v1489
        %v1556 = vpop.f32.mrf.mxu0
        %v1557 = vadd.f32 %v1513, %v1556
        %1558 = vmatmul.f32.gmra.mxu0 %v1490
        %v1559 = vpop.f32.mrf.mxu0
        %v1560 = vadd.f32 %v1513, %v1559
        %1561 = vmatmul.f32.gmra.mxu0 %v1491
        %v1562 = vpop.f32.mrf.mxu0
        %v1563 = vadd.f32 %v1513, %v1562
        %1564 = vmatmul.f32.gmra.mxu0 %v1492
        %v1565 = vpop.f32.mrf.mxu0
        %v1566 = vadd.f32 %v1513, %v1565
        %1567 = vmatmul.f32.gmra.mxu0 %v1493
        %v1568 = vpop.f32.mrf.mxu0
        %v1569 = vadd.f32 %v1513, %v1568
        %1570 = vmatmul.f32.gmra.mxu0 %v1494
        %v1571 = vpop.f32.mrf.mxu0
        %v1572 = vadd.f32 %v1513, %v1571
        %1573 = vdwg.mxu0
        %v1574 = vmax.f32 %v1533, 0.0
        %v1575 = vmax.f32 %v1536, 0.0
        %v1576 = vmax.f32 %v1539, 0.0
        %v1577 = vmax.f32 %v1542, 0.0
        %v1578 = vmax.f32 %v1545, 0.0
        %v1579 = vmax.f32 %v1548, 0.0
        %v1580 = vmax.f32 %v1551, 0.0
        %v1581 = vmax.f32 %v1554, 0.0
        %v1582 = vmax.f32 %v1557, 0.0
        %v1583 = vmax.f32 %v1560, 0.0
        %v1584 = vmax.f32 %v1563, 0.0
        %v1585 = vmax.f32 %v1566, 0.0
        %v1586 = vmax.f32 %v1569, 0.0
        %v1587 = vmax.f32 %v1572, 0.0
        %v1602 = vrot.slane %v1574, 2
        %v1603 = vrot.slane %v1574, 4
        %v1604 = vrot.slane %v1574, 6
        %v1605 = vrot.slane %v1575, 2
        %v1606 = vrot.slane %v1575, 4
        %v1607 = vrot.slane %v1575, 6
        %v1608 = vrot.slane %v1576, 2
        %v1609 = vrot.slane %v1576, 4
        %v1610 = vrot.slane %v1576, 6
        %v1611 = vrot.slane %v1577, 2
        %v1612 = vrot.slane %v1577, 4
        %v1613 = vrot.slane %v1577, 6
        %v1614 = vrot.slane %v1578, 2
        %v1615 = vrot.slane %v1578, 4
        %v1616 = vrot.slane %v1578, 6
        %v1617 = vrot.slane %v1579, 2
        %v1618 = vrot.slane %v1579, 4
        %v1619 = vrot.slane %v1579, 6
        %v1620 = vrot.slane %v1580, 2
        %v1621 = vrot.slane %v1580, 4
        %v1622 = vrot.slane %v1580, 6
        %v1623 = vrot.slane %v1581, 2
        %v1624 = vrot.slane %v1581, 4
        %v1625 = vrot.slane %v1581, 6
        %v1626 = vrot.slane %v1582, 2
        %v1627 = vrot.slane %v1582, 4
        %v1628 = vrot.slane %v1582, 6
        %v1629 = vrot.slane %v1583, 2
        %v1630 = vrot.slane %v1583, 4
        %v1631 = vrot.slane %v1583, 6
        %v1632 = vrot.slane %v1584, 2
        %v1633 = vrot.slane %v1584, 4
        %v1634 = vrot.slane %v1584, 6
        %v1635 = vrot.slane %v1585, 2
        %v1636 = vrot.slane %v1585, 4
        %v1637 = vrot.slane %v1585, 6
        %v1638 = vrot.slane %v1586, 2
        %v1639 = vrot.slane %v1586, 4
        %v1640 = vrot.slane %v1586, 6
        %v1641 = vrot.slane %v1587, 2
        %v1642 = vrot.slane %v1587, 4
        %v1643 = vrot.slane %v1587, 6
        %v1686 = vrot.slane %v1574, 7
        %v1687 = vrot.slane %v1686, 2
        %v1688 = vrot.slane %v1602, 7
        %v1689 = vrot.slane %v1688, 2
        %v1690 = vrot.slane %v1603, 7
        %v1691 = vrot.slane %v1690, 2
        %v1692 = vrot.slane %v1604, 7
        %v1693 = vrot.slane %v1692, 2
        %v1694 = vrot.slane %v1575, 7
        %v1695 = vrot.slane %v1694, 2
        %v1696 = vrot.slane %v1605, 7
        %v1697 = vrot.slane %v1696, 2
        %v1698 = vrot.slane %v1606, 7
        %v1699 = vrot.slane %v1698, 2
        %v1700 = vrot.slane %v1607, 7
        %v1701 = vrot.slane %v1700, 2
        %v1702 = vrot.slane %v1576, 7
        %v1703 = vrot.slane %v1702, 2
        %v1704 = vrot.slane %v1608, 7
        %v1705 = vrot.slane %v1704, 2
        %v1706 = vrot.slane %v1609, 7
        %v1707 = vrot.slane %v1706, 2
        %v1708 = vrot.slane %v1610, 7
        %v1709 = vrot.slane %v1708, 2
        %v1710 = vrot.slane %v1577, 7
        %v1711 = vrot.slane %v1710, 2
        %v1712 = vrot.slane %v1611, 7
        %v1713 = vrot.slane %v1712, 2
        %v1714 = vrot.slane %v1612, 7
        %v1715 = vrot.slane %v1714, 2
        %v1716 = vrot.slane %v1613, 7
        %v1717 = vrot.slane %v1716, 2
        %v1718 = vrot.slane %v1578, 7
        %v1719 = vrot.slane %v1718, 2
        %v1720 = vrot.slane %v1614, 7
        %v1721 = vrot.slane %v1720, 2
        %v1722 = vrot.slane %v1615, 7
        %v1723 = vrot.slane %v1722, 2
        %v1724 = vrot.slane %v1616, 7
        %v1725 = vrot.slane %v1724, 2
        %v1726 = vrot.slane %v1579, 7
        %v1727 = vrot.slane %v1726, 2
        %v1728 = vrot.slane %v1617, 7
        %v1729 = vrot.slane %v1728, 2
        %v1730 = vrot.slane %v1618, 7
        %v1731 = vrot.slane %v1730, 2
        %v1732 = vrot.slane %v1619, 7
        %v1733 = vrot.slane %v1732, 2
        %v1734 = vrot.slane %v1580, 7
        %v1735 = vrot.slane %v1734, 2
        %v1736 = vrot.slane %v1620, 7
        %v1737 = vrot.slane %v1736, 2
        %v1738 = vrot.slane %v1621, 7
        %v1739 = vrot.slane %v1738, 2
        %v1740 = vrot.slane %v1622, 7
        %v1741 = vrot.slane %v1740, 2
        %v1742 = vrot.slane %v1581, 7
        %v1743 = vrot.slane %v1742, 2
        %v1744 = vrot.slane %v1623, 7
        %v1745 = vrot.slane %v1744, 2
        %v1746 = vrot.slane %v1624, 7
        %v1747 = vrot.slane %v1746, 2
        %v1748 = vrot.slane %v1625, 7
        %v1749 = vrot.slane %v1748, 2
        %v1750 = vrot.slane %v1582, 7
        %v1751 = vrot.slane %v1750, 2
        %v1752 = vrot.slane %v1626, 7
        %v1753 = vrot.slane %v1752, 2
        %v1754 = vrot.slane %v1627, 7
        %v1755 = vrot.slane %v1754, 2
        %v1756 = vrot.slane %v1628, 7
        %v1757 = vrot.slane %v1756, 2
        %v1758 = vrot.slane %v1583, 7
        %v1759 = vrot.slane %v1758, 2
        %v1760 = vrot.slane %v1629, 7
        %v1761 = vrot.slane %v1760, 2
        %v1762 = vrot.slane %v1630, 7
        %v1763 = vrot.slane %v1762, 2
        %v1764 = vrot.slane %v1631, 7
        %v1765 = vrot.slane %v1764, 2
        %v1766 = vrot.slane %v1584, 7
        %v1767 = vrot.slane %v1766, 2
        %v1768 = vrot.slane %v1632, 7
        %v1769 = vrot.slane %v1768, 2
        %v1770 = vrot.slane %v1633, 7
        %v1771 = vrot.slane %v1770, 2
        %v1772 = vrot.slane %v1634, 7
        %v1773 = vrot.slane %v1772, 2
        %v1774 = vrot.slane %v1585, 7
        %v1775 = vrot.slane %v1774, 2
        %v1776 = vrot.slane %v1635, 7
        %v1777 = vrot.slane %v1776, 2
        %v1778 = vrot.slane %v1636, 7
        %v1779 = vrot.slane %v1778, 2
        %v1780 = vrot.slane %v1637, 7
        %v1781 = vrot.slane %v1780, 2
        %v1782 = vrot.slane %v1586, 7
        %v1783 = vrot.slane %v1782, 2
        %v1784 = vrot.slane %v1638, 7
        %v1785 = vrot.slane %v1784, 2
        %v1786 = vrot.slane %v1639, 7
        %v1787 = vrot.slane %v1786, 2
        %v1788 = vrot.slane %v1640, 7
        %v1789 = vrot.slane %v1788, 2
        %v1790 = vrot.slane %v1587, 7
        %v1791 = vrot.slane %v1790, 2
        %v1792 = vrot.slane %v1641, 7
        %v1793 = vrot.slane %v1792, 2
        %v1794 = vrot.slane %v1642, 7
        %v1795 = vrot.slane %v1794, 2
        %v1796 = vrot.slane %v1643, 7
        %v1797 = vrot.slane %v1796, 2
        %v1854 = vmax.f32 %v1574, %v1687
        %v1855 = vmax.f32 %v1602, %v1689
        %v1856 = vmax.f32 %v1603, %v1691
        %v1857 = vmax.f32 %v1604, %v1693
        %v1858 = vmax.f32 %v1575, %v1695
        %v1859 = vmax.f32 %v1605, %v1697
        %v1860 = vmax.f32 %v1606, %v1699
        %v1861 = vmax.f32 %v1607, %v1701
        %v1862 = vmax.f32 %v1576, %v1703
        %v1863 = vmax.f32 %v1608, %v1705
        %v1864 = vmax.f32 %v1609, %v1707
        %v1865 = vmax.f32 %v1610, %v1709
        %v1866 = vmax.f32 %v1577, %v1711
        %v1867 = vmax.f32 %v1611, %v1713
        %v1868 = vmax.f32 %v1612, %v1715
        %v1869 = vmax.f32 %v1613, %v1717
        %v1870 = vmax.f32 %v1578, %v1719
        %v1871 = vmax.f32 %v1614, %v1721
        %v1872 = vmax.f32 %v1615, %v1723
        %v1873 = vmax.f32 %v1616, %v1725
        %v1874 = vmax.f32 %v1579, %v1727
        %v1875 = vmax.f32 %v1617, %v1729
        %v1876 = vmax.f32 %v1618, %v1731
        %v1877 = vmax.f32 %v1619, %v1733
        %v1878 = vmax.f32 %v1580, %v1735
        %v1879 = vmax.f32 %v1620, %v1737
        %v1880 = vmax.f32 %v1621, %v1739
        %v1881 = vmax.f32 %v1622, %v1741
        %v1882 = vmax.f32 %v1581, %v1743
        %v1883 = vmax.f32 %v1623, %v1745
        %v1884 = vmax.f32 %v1624, %v1747
        %v1885 = vmax.f32 %v1625, %v1749
        %v1886 = vmax.f32 %v1582, %v1751
        %v1887 = vmax.f32 %v1626, %v1753
        %v1888 = vmax.f32 %v1627, %v1755
        %v1889 = vmax.f32 %v1628, %v1757
        %v1890 = vmax.f32 %v1583, %v1759
        %v1891 = vmax.f32 %v1629, %v1761
        %v1892 = vmax.f32 %v1630, %v1763
        %v1893 = vmax.f32 %v1631, %v1765
        %v1894 = vmax.f32 %v1584, %v1767
        %v1895 = vmax.f32 %v1632, %v1769
        %v1896 = vmax.f32 %v1633, %v1771
        %v1897 = vmax.f32 %v1634, %v1773
        %v1898 = vmax.f32 %v1585, %v1775
        %v1899 = vmax.f32 %v1635, %v1777
        %v1900 = vmax.f32 %v1636, %v1779
        %v1901 = vmax.f32 %v1637, %v1781
        %v1902 = vmax.f32 %v1586, %v1783
        %v1903 = vmax.f32 %v1638, %v1785
        %v1904 = vmax.f32 %v1639, %v1787
        %v1905 = vmax.f32 %v1640, %v1789
        %v1906 = vmax.f32 %v1587, %v1791
        %v1907 = vmax.f32 %v1641, %v1793
        %v1908 = vmax.f32 %v1642, %v1795
        %v1909 = vmax.f32 %v1643, %v1797
        %v1910 = vmax.f32 %v1854, %v1868
        %v1911 = vmax.f32 %v1855, %v1869
        %v1912 = vmax.f32 %v1856, %v1870
        %v1913 = vmax.f32 %v1857, %v1871
        %v1914 = vmax.f32 %v1858, %v1872
        %v1915 = vmax.f32 %v1859, %v1873
        %v1916 = vmax.f32 %v1860, %v1874
        %v1917 = vmax.f32 %v1861, %v1875
        %v1918 = vmax.f32 %v1862, %v1876
        %v1919 = vmax.f32 %v1863, %v1877
        %v1920 = vmax.f32 %v1864, %v1878
        %v1921 = vmax.f32 %v1865, %v1879
        %v1922 = vmax.f32 %v1866, %v1880
        %v1923 = vmax.f32 %v1867, %v1881
        %v1924 = vmax.f32 %v1882, %v1896
        %v1925 = vmax.f32 %v1883, %v1897
        %v1926 = vmax.f32 %v1884, %v1898
        %v1927 = vmax.f32 %v1885, %v1899
        %v1928 = vmax.f32 %v1886, %v1900
        %v1929 = vmax.f32 %v1887, %v1901
        %v1930 = vmax.f32 %v1888, %v1902
        %v1931 = vmax.f32 %v1889, %v1903
        %v1932 = vmax.f32 %v1890, %v1904
        %v1933 = vmax.f32 %v1891, %v1905
        %v1934 = vmax.f32 %v1892, %v1906
        %v1935 = vmax.f32 %v1893, %v1907
        %v1936 = vmax.f32 %v1894, %v1908
        %v1937 = vmax.f32 %v1895, %v1909
        %v1966 = vperm.slane %v1910, 0
        %v1967 = vperm.slane %v1911, 0
        %v1968 = vperm.slane %v1912, 0
        %v1969 = vperm.slane %v1913, 0
        %v1970 = vperm.slane %v1914, 0
        %v1971 = vperm.slane %v1915, 0
        %v1972 = vperm.slane %v1916, 0
        %v1973 = vperm.slane %v1917, 0
        %v1974 = vperm.slane %v1918, 0
        %v1975 = vperm.slane %v1919, 0
        %v1976 = vperm.slane %v1920, 0
        %v1977 = vperm.slane %v1921, 0
        %v1978 = vperm.slane %v1922, 0
        %v1979 = vperm.slane %v1923, 0
        %v1980 = vperm.slane %v1924, 0
        %v1981 = vperm.slane %v1925, 0
        %v1982 = vperm.slane %v1926, 0
        %v1983 = vperm.slane %v1927, 0
        %v1984 = vperm.slane %v1928, 0
        %v1985 = vperm.slane %v1929, 0
        %v1986 = vperm.slane %v1930, 0
        %v1987 = vperm.slane %v1931, 0
        %v1988 = vperm.slane %v1932, 0
        %v1989 = vperm.slane %v1933, 0
        %v1990 = vperm.slane %v1934, 0
        %v1991 = vperm.slane %v1935, 0
        %v1992 = vperm.slane %v1936, 0
        %v1993 = vperm.slane %v1937, 0
        %v1994 = vsel %vm897, %v1967, %v1966
        %v1995 = vsel %vm899, %v1968, %v1994
        %v1996 = vsel %vm901, %v1969, %v1995
        %v1997 = vsel %vm903, %v1970, %v1996
        %v1998 = vsel %vm905, %v1971, %v1997
        %v1999 = vsel %vm907, %v1972, %v1998
        %v2000 = vsel %vm909, %v1973, %v1999
        %v2001 = vsel %vm897, %v1975, %v1974
        %v2002 = vsel %vm899, %v1976, %v2001
        %v2003 = vsel %vm901, %v1977, %v2002
        %v2004 = vsel %vm903, %v1978, %v2003
        %v2005 = vsel %vm905, %v1979, %v2004
        %v2006 = vsel %vm907, %v1980, %v2005
        %v2007 = vsel %vm909, %v1981, %v2006
        %v2008 = vsel %vm897, %v1983, %v1982
        %v2009 = vsel %vm899, %v1984, %v2008
        %v2010 = vsel %vm901, %v1985, %v2009
        %v2011 = vsel %vm903, %v1986, %v2010
        %v2012 = vsel %vm905, %v1987, %v2011
        %v2013 = vsel %vm907, %v1988, %v2012
        %v2014 = vsel %vm909, %v1989, %v2013
        %v2015 = vsel %vm897, %v1991, %v1990
        %v2016 = vsel %vm899, %v1992, %v2015
        %v2017 = vsel %vm901, %v1993, %v2016
        %2022 = vst [vmem:[#allocation2 + $0x38] sm:$0xff] %v2000
        %2023 = vst [vmem:[#allocation2 + $0x40] sm:$0xff] %v2007
        %2024 = vst [vmem:[#allocation2 + $0x48] sm:$0xff] %v2014
        %2025 = vst [vmem:[#allocation2 + $0x50] sm:$0xf] %v2017
        %v2026 = vld [vmem:[%s383 + $0x150] sm:$0xff]
        %v2027 = vld [vmem:[%s383 + $0x158] sm:$0xff]
        %v2028 = vld [vmem:[%s383 + $0x160] sm:$0xff]
        %v2029 = vld [vmem:[%s383 + $0x168] sm:$0xff]
        %v2030 = vld [vmem:[%s383 + $0x170] sm:$0xff]
        %v2031 = vld [vmem:[%s383 + $0x178] sm:$0xff]
        %v2032 = vld [vmem:[%s383 + $0x180] sm:$0xff]
        %v2033 = vld [vmem:[%s383 + $0x188] sm:$0xff]
        %v2034 = vld [vmem:[%s383 + $0x190] sm:$0xff]
        %v2035 = vld [vmem:[%s383 + $0x198] sm:$0xff]
        %v2036 = vld [vmem:[%s383 + $0x1a0] sm:$0xff]
        %v2037 = vld [vmem:[%s383 + $0x1a8] sm:$0xff]
        %v2038 = vld [vmem:[%s383 + $0x1b0] sm:$0xff]
        %v2039 = vld [vmem:[%s383 + $0x1b8] sm:$0xff]
        %v2040 = vld [vmem:[%s1] sm:$0xff]
        %v2041 = vld [vmem:[%s1 + $0x8] sm:$0xff]
        %v2042 = vld [vmem:[%s1 + $0x10] sm:$0xff]
        %v2043 = vld [vmem:[%s1 + $0x18] sm:$0xff]
        %v2044 = vld [vmem:[%s1 + $0x20] sm:$0xff]
        %v2045 = vld [vmem:[%s1 + $0x28] sm:$0xff]
        %v2046 = vld [vmem:[%s1 + $0x30] sm:$0xff]
        %v2047 = vld [vmem:[%s1 + $0x38] sm:$0xff]
        %v2048 = vld [vmem:[%s1 + $0x40] sm:$0xff]
        %v2049 = vld [vmem:[%s1 + $0x48] sm:$0xff]
        %v2050 = vld [vmem:[%s1 + $0x50] sm:$0xff]
        %v2051 = vld [vmem:[%s1 + $0x58] sm:$0xff]
        %v2052 = vld [vmem:[%s1 + $0x60] sm:$0xff]
        %v2053 = vld [vmem:[%s1 + $0x68] sm:$0xff]
        %v2054 = vld [vmem:[%s1 + $0x70] sm:$0xff]
        %v2055 = vld [vmem:[%s1 + $0x78] sm:$0xff]
        %v2056 = vld [vmem:[%s2] sm:$0x1]
        %v2058 = vperm.slane %v2056, 0
        %2060 = vmatpush.msra.mxu0 %v2055
        %2061 = vmatpush.msra.mxu0 %v2054
        %2062 = vmatpush.msra.mxu0 %v2053
        %2063 = vmatpush.msra.mxu0 %v2052
        %2064 = vmatpush.msra.mxu0 %v2051
        %2065 = vmatpush.msra.mxu0 %v2050
        %2066 = vmatpush.msra.mxu0 %v2049
        %2067 = vmatpush.msra.mxu0 %v2048
        %2068 = vmatpush.msra.mxu0 %v2047
        %2069 = vmatpush.msra.mxu0 %v2046
        %2070 = vmatpush.msra.mxu0 %v2045
        %2071 = vmatpush.msra.mxu0 %v2044
        %2072 = vmatpush.msra.mxu0 %v2043
        %2073 = vmatpush.msra.mxu0 %v2042
        %2074 = vmatpush.msra.mxu0 %v2041
        %2075 = vmatpush.msra.mxu0 %v2040
        %2076 = vmatmul.f32.gmra.mxu0 %v2026
        %v2077 = vpop.f32.mrf.mxu0
        %v2078 = vadd.f32 %v2058, %v2077
        %2079 = vmatmul.f32.gmra.mxu0 %v2027
        %v2080 = vpop.f32.mrf.mxu0
        %v2081 = vadd.f32 %v2058, %v2080
        %2082 = vmatmul.f32.gmra.mxu0 %v2028
        %v2083 = vpop.f32.mrf.mxu0
        %v2084 = vadd.f32 %v2058, %v2083
        %2085 = vmatmul.f32.gmra.mxu0 %v2029
        %v2086 = vpop.f32.mrf.mxu0
        %v2087 = vadd.f32 %v2058, %v2086
        %2088 = vmatmul.f32.gmra.mxu0 %v2030
        %v2089 = vpop.f32.mrf.mxu0
        %v2090 = vadd.f32 %v2058, %v2089
        %2091 = vmatmul.f32.gmra.mxu0 %v2031
        %v2092 = vpop.f32.mrf.mxu0
        %v2093 = vadd.f32 %v2058, %v2092
        %2094 = vmatmul.f32.gmra.mxu0 %v2032
        %v2095 = vpop.f32.mrf.mxu0
        %v2096 = vadd.f32 %v2058, %v2095
        %2097 = vmatmul.f32.gmra.mxu0 %v2033
        %v2098 = vpop.f32.mrf.mxu0
        %v2099 = vadd.f32 %v2058, %v2098
        %2100 = vmatmul.f32.gmra.mxu0 %v2034
        %v2101 = vpop.f32.mrf.mxu0
        %v2102 = vadd.f32 %v2058, %v2101
        %2103 = vmatmul.f32.gmra.mxu0 %v2035
        %v2104 = vpop.f32.mrf.mxu0
        %v2105 = vadd.f32 %v2058, %v2104
        %2106 = vmatmul.f32.gmra.mxu0 %v2036
        %v2107 = vpop.f32.mrf.mxu0
        %v2108 = vadd.f32 %v2058, %v2107
        %2109 = vmatmul.f32.gmra.mxu0 %v2037
        %v2110 = vpop.f32.mrf.mxu0
        %v2111 = vadd.f32 %v2058, %v2110
        %2112 = vmatmul.f32.gmra.mxu0 %v2038
        %v2113 = vpop.f32.mrf.mxu0
        %v2114 = vadd.f32 %v2058, %v2113
        %2115 = vmatmul.f32.gmra.mxu0 %v2039
        %v2116 = vpop.f32.mrf.mxu0
        %v2117 = vadd.f32 %v2058, %v2116
        %2118 = vdwg.mxu0
        %v2119 = vmax.f32 %v2078, 0.0
        %v2120 = vmax.f32 %v2081, 0.0
        %v2121 = vmax.f32 %v2084, 0.0
        %v2122 = vmax.f32 %v2087, 0.0
        %v2123 = vmax.f32 %v2090, 0.0
        %v2124 = vmax.f32 %v2093, 0.0
        %v2125 = vmax.f32 %v2096, 0.0
        %v2126 = vmax.f32 %v2099, 0.0
        %v2127 = vmax.f32 %v2102, 0.0
        %v2128 = vmax.f32 %v2105, 0.0
        %v2129 = vmax.f32 %v2108, 0.0
        %v2130 = vmax.f32 %v2111, 0.0
        %v2131 = vmax.f32 %v2114, 0.0
        %v2132 = vmax.f32 %v2117, 0.0
        %v2147 = vrot.slane %v2119, 2
        %v2148 = vrot.slane %v2119, 4
        %v2149 = vrot.slane %v2119, 6
        %v2150 = vrot.slane %v2120, 2
        %v2151 = vrot.slane %v2120, 4
        %v2152 = vrot.slane %v2120, 6
        %v2153 = vrot.slane %v2121, 2
        %v2154 = vrot.slane %v2121, 4
        %v2155 = vrot.slane %v2121, 6
        %v2156 = vrot.slane %v2122, 2
        %v2157 = vrot.slane %v2122, 4
        %v2158 = vrot.slane %v2122, 6
        %v2159 = vrot.slane %v2123, 2
        %v2160 = vrot.slane %v2123, 4
        %v2161 = vrot.slane %v2123, 6
        %v2162 = vrot.slane %v2124, 2
        %v2163 = vrot.slane %v2124, 4
        %v2164 = vrot.slane %v2124, 6
        %v2165 = vrot.slane %v2125, 2
        %v2166 = vrot.slane %v2125, 4
        %v2167 = vrot.slane %v2125, 6
        %v2168 = vrot.slane %v2126, 2
        %v2169 = vrot.slane %v2126, 4
        %v2170 = vrot.slane %v2126, 6
        %v2171 = vrot.slane %v2127, 2
        %v2172 = vrot.slane %v2127, 4
        %v2173 = vrot.slane %v2127, 6
        %v2174 = vrot.slane %v2128, 2
        %v2175 = vrot.slane %v2128, 4
        %v2176 = vrot.slane %v2128, 6
        %v2177 = vrot.slane %v2129, 2
        %v2178 = vrot.slane %v2129, 4
        %v2179 = vrot.slane %v2129, 6
        %v2180 = vrot.slane %v2130, 2
        %v2181 = vrot.slane %v2130, 4
        %v2182 = vrot.slane %v2130, 6
        %v2183 = vrot.slane %v2131, 2
        %v2184 = vrot.slane %v2131, 4
        %v2185 = vrot.slane %v2131, 6
        %v2186 = vrot.slane %v2132, 2
        %v2187 = vrot.slane %v2132, 4
        %v2188 = vrot.slane %v2132, 6
        %v2231 = vrot.slane %v2119, 7
        %v2232 = vrot.slane %v2231, 2
        %v2233 = vrot.slane %v2147, 7
        %v2234 = vrot.slane %v2233, 2
        %v2235 = vrot.slane %v2148, 7
        %v2236 = vrot.slane %v2235, 2
        %v2237 = vrot.slane %v2149, 7
        %v2238 = vrot.slane %v2237, 2
        %v2239 = vrot.slane %v2120, 7
        %v2240 = vrot.slane %v2239, 2
        %v2241 = vrot.slane %v2150, 7
        %v2242 = vrot.slane %v2241, 2
        %v2243 = vrot.slane %v2151, 7
        %v2244 = vrot.slane %v2243, 2
        %v2245 = vrot.slane %v2152, 7
        %v2246 = vrot.slane %v2245, 2
        %v2247 = vrot.slane %v2121, 7
        %v2248 = vrot.slane %v2247, 2
        %v2249 = vrot.slane %v2153, 7
        %v2250 = vrot.slane %v2249, 2
        %v2251 = vrot.slane %v2154, 7
        %v2252 = vrot.slane %v2251, 2
        %v2253 = vrot.slane %v2155, 7
        %v2254 = vrot.slane %v2253, 2
        %v2255 = vrot.slane %v2122, 7
        %v2256 = vrot.slane %v2255, 2
        %v2257 = vrot.slane %v2156, 7
        %v2258 = vrot.slane %v2257, 2
        %v2259 = vrot.slane %v2157, 7
        %v2260 = vrot.slane %v2259, 2
        %v2261 = vrot.slane %v2158, 7
        %v2262 = vrot.slane %v2261, 2
        %v2263 = vrot.slane %v2123, 7
        %v2264 = vrot.slane %v2263, 2
        %v2265 = vrot.slane %v2159, 7
        %v2266 = vrot.slane %v2265, 2
        %v2267 = vrot.slane %v2160, 7
        %v2268 = vrot.slane %v2267, 2
        %v2269 = vrot.slane %v2161, 7
        %v2270 = vrot.slane %v2269, 2
        %v2271 = vrot.slane %v2124, 7
        %v2272 = vrot.slane %v2271, 2
        %v2273 = vrot.slane %v2162, 7
        %v2274 = vrot.slane %v2273, 2
        %v2275 = vrot.slane %v2163, 7
        %v2276 = vrot.slane %v2275, 2
        %v2277 = vrot.slane %v2164, 7
        %v2278 = vrot.slane %v2277, 2
        %v2279 = vrot.slane %v2125, 7
        %v2280 = vrot.slane %v2279, 2
        %v2281 = vrot.slane %v2165, 7
        %v2282 = vrot.slane %v2281, 2
        %v2283 = vrot.slane %v2166, 7
        %v2284 = vrot.slane %v2283, 2
        %v2285 = vrot.slane %v2167, 7
        %v2286 = vrot.slane %v2285, 2
        %v2287 = vrot.slane %v2126, 7
        %v2288 = vrot.slane %v2287, 2
        %v2289 = vrot.slane %v2168, 7
        %v2290 = vrot.slane %v2289, 2
        %v2291 = vrot.slane %v2169, 7
        %v2292 = vrot.slane %v2291, 2
        %v2293 = vrot.slane %v2170, 7
        %v2294 = vrot.slane %v2293, 2
        %v2295 = vrot.slane %v2127, 7
        %v2296 = vrot.slane %v2295, 2
        %v2297 = vrot.slane %v2171, 7
        %v2298 = vrot.slane %v2297, 2
        %v2299 = vrot.slane %v2172, 7
        %v2300 = vrot.slane %v2299, 2
        %v2301 = vrot.slane %v2173, 7
        %v2302 = vrot.slane %v2301, 2
        %v2303 = vrot.slane %v2128, 7
        %v2304 = vrot.slane %v2303, 2
        %v2305 = vrot.slane %v2174, 7
        %v2306 = vrot.slane %v2305, 2
        %v2307 = vrot.slane %v2175, 7
        %v2308 = vrot.slane %v2307, 2
        %v2309 = vrot.slane %v2176, 7
        %v2310 = vrot.slane %v2309, 2
        %v2311 = vrot.slane %v2129, 7
        %v2312 = vrot.slane %v2311, 2
        %v2313 = vrot.slane %v2177, 7
        %v2314 = vrot.slane %v2313, 2
        %v2315 = vrot.slane %v2178, 7
        %v2316 = vrot.slane %v2315, 2
        %v2317 = vrot.slane %v2179, 7
        %v2318 = vrot.slane %v2317, 2
        %v2319 = vrot.slane %v2130, 7
        %v2320 = vrot.slane %v2319, 2
        %v2321 = vrot.slane %v2180, 7
        %v2322 = vrot.slane %v2321, 2
        %v2323 = vrot.slane %v2181, 7
        %v2324 = vrot.slane %v2323, 2
        %v2325 = vrot.slane %v2182, 7
        %v2326 = vrot.slane %v2325, 2
        %v2327 = vrot.slane %v2131, 7
        %v2328 = vrot.slane %v2327, 2
        %v2329 = vrot.slane %v2183, 7
        %v2330 = vrot.slane %v2329, 2
        %v2331 = vrot.slane %v2184, 7
        %v2332 = vrot.slane %v2331, 2
        %v2333 = vrot.slane %v2185, 7
        %v2334 = vrot.slane %v2333, 2
        %v2335 = vrot.slane %v2132, 7
        %v2336 = vrot.slane %v2335, 2
        %v2337 = vrot.slane %v2186, 7
        %v2338 = vrot.slane %v2337, 2
        %v2339 = vrot.slane %v2187, 7
        %v2340 = vrot.slane %v2339, 2
        %v2341 = vrot.slane %v2188, 7
        %v2342 = vrot.slane %v2341, 2
        %v2399 = vmax.f32 %v2119, %v2232
        %v2400 = vmax.f32 %v2147, %v2234
        %v2401 = vmax.f32 %v2148, %v2236
        %v2402 = vmax.f32 %v2149, %v2238
        %v2403 = vmax.f32 %v2120, %v2240
        %v2404 = vmax.f32 %v2150, %v2242
        %v2405 = vmax.f32 %v2151, %v2244
        %v2406 = vmax.f32 %v2152, %v2246
        %v2407 = vmax.f32 %v2121, %v2248
        %v2408 = vmax.f32 %v2153, %v2250
        %v2409 = vmax.f32 %v2154, %v2252
        %v2410 = vmax.f32 %v2155, %v2254
        %v2411 = vmax.f32 %v2122, %v2256
        %v2412 = vmax.f32 %v2156, %v2258
        %v2413 = vmax.f32 %v2157, %v2260
        %v2414 = vmax.f32 %v2158, %v2262
        %v2415 = vmax.f32 %v2123, %v2264
        %v2416 = vmax.f32 %v2159, %v2266
        %v2417 = vmax.f32 %v2160, %v2268
        %v2418 = vmax.f32 %v2161, %v2270
        %v2419 = vmax.f32 %v2124, %v2272
        %v2420 = vmax.f32 %v2162, %v2274
        %v2421 = vmax.f32 %v2163, %v2276
        %v2422 = vmax.f32 %v2164, %v2278
        %v2423 = vmax.f32 %v2125, %v2280
        %v2424 = vmax.f32 %v2165, %v2282
        %v2425 = vmax.f32 %v2166, %v2284
        %v2426 = vmax.f32 %v2167, %v2286
        %v2427 = vmax.f32 %v2126, %v2288
        %v2428 = vmax.f32 %v2168, %v2290
        %v2429 = vmax.f32 %v2169, %v2292
        %v2430 = vmax.f32 %v2170, %v2294
        %v2431 = vmax.f32 %v2127, %v2296
        %v2432 = vmax.f32 %v2171, %v2298
        %v2433 = vmax.f32 %v2172, %v2300
        %v2434 = vmax.f32 %v2173, %v2302
        %v2435 = vmax.f32 %v2128, %v2304
        %v2436 = vmax.f32 %v2174, %v2306
        %v2437 = vmax.f32 %v2175, %v2308
        %v2438 = vmax.f32 %v2176, %v2310
        %v2439 = vmax.f32 %v2129, %v2312
        %v2440 = vmax.f32 %v2177, %v2314
        %v2441 = vmax.f32 %v2178, %v2316
        %v2442 = vmax.f32 %v2179, %v2318
        %v2443 = vmax.f32 %v2130, %v2320
        %v2444 = vmax.f32 %v2180, %v2322
        %v2445 = vmax.f32 %v2181, %v2324
        %v2446 = vmax.f32 %v2182, %v2326
        %v2447 = vmax.f32 %v2131, %v2328
        %v2448 = vmax.f32 %v2183, %v2330
        %v2449 = vmax.f32 %v2184, %v2332
        %v2450 = vmax.f32 %v2185, %v2334
        %v2451 = vmax.f32 %v2132, %v2336
        %v2452 = vmax.f32 %v2186, %v2338
        %v2453 = vmax.f32 %v2187, %v2340
        %v2454 = vmax.f32 %v2188, %v2342
        %v2455 = vmax.f32 %v2399, %v2413
        %v2456 = vmax.f32 %v2400, %v2414
        %v2457 = vmax.f32 %v2401, %v2415
        %v2458 = vmax.f32 %v2402, %v2416
        %v2459 = vmax.f32 %v2403, %v2417
        %v2460 = vmax.f32 %v2404, %v2418
        %v2461 = vmax.f32 %v2405, %v2419
        %v2462 = vmax.f32 %v2406, %v2420
        %v2463 = vmax.f32 %v2407, %v2421
        %v2464 = vmax.f32 %v2408, %v2422
        %v2465 = vmax.f32 %v2409, %v2423
        %v2466 = vmax.f32 %v2410, %v2424
        %v2467 = vmax.f32 %v2411, %v2425
        %v2468 = vmax.f32 %v2412, %v2426
        %v2469 = vmax.f32 %v2427, %v2441
        %v2470 = vmax.f32 %v2428, %v2442
        %v2471 = vmax.f32 %v2429, %v2443
        %v2472 = vmax.f32 %v2430, %v2444
        %v2473 = vmax.f32 %v2431, %v2445
        %v2474 = vmax.f32 %v2432, %v2446
        %v2475 = vmax.f32 %v2433, %v2447
        %v2476 = vmax.f32 %v2434, %v2448
        %v2477 = vmax.f32 %v2435, %v2449
        %v2478 = vmax.f32 %v2436, %v2450
        %v2479 = vmax.f32 %v2437, %v2451
        %v2480 = vmax.f32 %v2438, %v2452
        %v2481 = vmax.f32 %v2439, %v2453
        %v2482 = vmax.f32 %v2440, %v2454
        %v2511 = vperm.slane %v2455, 0
        %v2512 = vperm.slane %v2456, 0
        %v2513 = vperm.slane %v2457, 0
        %v2514 = vperm.slane %v2458, 0
        %v2515 = vperm.slane %v2459, 0
        %v2516 = vperm.slane %v2460, 0
        %v2517 = vperm.slane %v2461, 0
        %v2518 = vperm.slane %v2462, 0
        %v2519 = vperm.slane %v2463, 0
        %v2520 = vperm.slane %v2464, 0
        %v2521 = vperm.slane %v2465, 0
        %v2522 = vperm.slane %v2466, 0
        %v2523 = vperm.slane %v2467, 0
        %v2524 = vperm.slane %v2468, 0
        %v2525 = vperm.slane %v2469, 0
        %v2526 = vperm.slane %v2470, 0
        %v2527 = vperm.slane %v2471, 0
        %v2528 = vperm.slane %v2472, 0
        %v2529 = vperm.slane %v2473, 0
        %v2530 = vperm.slane %v2474, 0
        %v2531 = vperm.slane %v2475, 0
        %v2532 = vperm.slane %v2476, 0
        %v2533 = vperm.slane %v2477, 0
        %v2534 = vperm.slane %v2478, 0
        %v2535 = vperm.slane %v2479, 0
        %v2536 = vperm.slane %v2480, 0
        %v2537 = vperm.slane %v2481, 0
        %v2538 = vperm.slane %v2482, 0
        %v2539 = vsel %vm897, %v2512, %v2511
        %v2540 = vsel %vm899, %v2513, %v2539
        %v2541 = vsel %vm901, %v2514, %v2540
        %v2542 = vsel %vm903, %v2515, %v2541
        %v2543 = vsel %vm905, %v2516, %v2542
        %v2544 = vsel %vm907, %v2517, %v2543
        %v2545 = vsel %vm909, %v2518, %v2544
        %v2546 = vsel %vm897, %v2520, %v2519
        %v2547 = vsel %vm899, %v2521, %v2546
        %v2548 = vsel %vm901, %v2522, %v2547
        %v2549 = vsel %vm903, %v2523, %v2548
        %v2550 = vsel %vm905, %v2524, %v2549
        %v2551 = vsel %vm907, %v2525, %v2550
        %v2552 = vsel %vm909, %v2526, %v2551
        %v2553 = vsel %vm897, %v2528, %v2527
        %v2554 = vsel %vm899, %v2529, %v2553
        %v2555 = vsel %vm901, %v2530, %v2554
        %v2556 = vsel %vm903, %v2531, %v2555
        %v2557 = vsel %vm905, %v2532, %v2556
        %v2558 = vsel %vm907, %v2533, %v2557
        %v2559 = vsel %vm909, %v2534, %v2558
        %v2560 = vsel %vm897, %v2536, %v2535
        %v2561 = vsel %vm899, %v2537, %v2560
        %v2562 = vsel %vm901, %v2538, %v2561
        %2567 = vst [vmem:[#allocation2 + $0x54] sm:$0xff] %v2545
        %2568 = vst [vmem:[#allocation2 + $0x5c] sm:$0xff] %v2552
        %2569 = vst [vmem:[#allocation2 + $0x64] sm:$0xff] %v2559
        %2570 = vst [vmem:[#allocation2 + $0x6c] sm:$0xf] %v2562
        %v2571 = vld [vmem:[%s383 + $0x1c0] sm:$0xff]
        %v2572 = vld [vmem:[%s383 + $0x1c8] sm:$0xff]
        %v2573 = vld [vmem:[%s383 + $0x1d0] sm:$0xff]
        %v2574 = vld [vmem:[%s383 + $0x1d8] sm:$0xff]
        %v2575 = vld [vmem:[%s383 + $0x1e0] sm:$0xff]
        %v2576 = vld [vmem:[%s383 + $0x1e8] sm:$0xff]
        %v2577 = vld [vmem:[%s383 + $0x1f0] sm:$0xff]
        %v2578 = vld [vmem:[%s383 + $0x1f8] sm:$0xff]
        %v2579 = vld [vmem:[%s383 + $0x200] sm:$0xff]
        %v2580 = vld [vmem:[%s383 + $0x208] sm:$0xff]
        %v2581 = vld [vmem:[%s383 + $0x210] sm:$0xff]
        %v2582 = vld [vmem:[%s383 + $0x218] sm:$0xff]
        %v2583 = vld [vmem:[%s383 + $0x220] sm:$0xff]
        %v2584 = vld [vmem:[%s383 + $0x228] sm:$0xff]
        %v2585 = vld [vmem:[%s1] sm:$0xff]
        %v2586 = vld [vmem:[%s1 + $0x8] sm:$0xff]
        %v2587 = vld [vmem:[%s1 + $0x10] sm:$0xff]
        %v2588 = vld [vmem:[%s1 + $0x18] sm:$0xff]
        %v2589 = vld [vmem:[%s1 + $0x20] sm:$0xff]
        %v2590 = vld [vmem:[%s1 + $0x28] sm:$0xff]
        %v2591 = vld [vmem:[%s1 + $0x30] sm:$0xff]
        %v2592 = vld [vmem:[%s1 + $0x38] sm:$0xff]
        %v2593 = vld [vmem:[%s1 + $0x40] sm:$0xff]
        %v2594 = vld [vmem:[%s1 + $0x48] sm:$0xff]
        %v2595 = vld [vmem:[%s1 + $0x50] sm:$0xff]
        %v2596 = vld [vmem:[%s1 + $0x58] sm:$0xff]
        %v2597 = vld [vmem:[%s1 + $0x60] sm:$0xff]
        %v2598 = vld [vmem:[%s1 + $0x68] sm:$0xff]
        %v2599 = vld [vmem:[%s1 + $0x70] sm:$0xff]
        %v2600 = vld [vmem:[%s1 + $0x78] sm:$0xff]
        %v2601 = vld [vmem:[%s2] sm:$0x1]
        %v2603 = vperm.slane %v2601, 0
        %2605 = vmatpush.msra.mxu0 %v2600
        %2606 = vmatpush.msra.mxu0 %v2599
        %2607 = vmatpush.msra.mxu0 %v2598
        %2608 = vmatpush.msra.mxu0 %v2597
        %2609 = vmatpush.msra.mxu0 %v2596
        %2610 = vmatpush.msra.mxu0 %v2595
        %2611 = vmatpush.msra.mxu0 %v2594
        %2612 = vmatpush.msra.mxu0 %v2593
        %2613 = vmatpush.msra.mxu0 %v2592
        %2614 = vmatpush.msra.mxu0 %v2591
        %2615 = vmatpush.msra.mxu0 %v2590
        %2616 = vmatpush.msra.mxu0 %v2589
        %2617 = vmatpush.msra.mxu0 %v2588
        %2618 = vmatpush.msra.mxu0 %v2587
        %2619 = vmatpush.msra.mxu0 %v2586
        %2620 = vmatpush.msra.mxu0 %v2585
        %2621 = vmatmul.f32.gmra.mxu0 %v2571
        %v2622 = vpop.f32.mrf.mxu0
        %v2623 = vadd.f32 %v2603, %v2622
        %2624 = vmatmul.f32.gmra.mxu0 %v2572
        %v2625 = vpop.f32.mrf.mxu0
        %v2626 = vadd.f32 %v2603, %v2625
        %2627 = vmatmul.f32.gmra.mxu0 %v2573
        %v2628 = vpop.f32.mrf.mxu0
        %v2629 = vadd.f32 %v2603, %v2628
        %2630 = vmatmul.f32.gmra.mxu0 %v2574
        %v2631 = vpop.f32.mrf.mxu0
        %v2632 = vadd.f32 %v2603, %v2631
        %2633 = vmatmul.f32.gmra.mxu0 %v2575
        %v2634 = vpop.f32.mrf.mxu0
        %v2635 = vadd.f32 %v2603, %v2634
        %2636 = vmatmul.f32.gmra.mxu0 %v2576
        %v2637 = vpop.f32.mrf.mxu0
        %v2638 = vadd.f32 %v2603, %v2637
        %2639 = vmatmul.f32.gmra.mxu0 %v2577
        %v2640 = vpop.f32.mrf.mxu0
        %v2641 = vadd.f32 %v2603, %v2640
        %2642 = vmatmul.f32.gmra.mxu0 %v2578
        %v2643 = vpop.f32.mrf.mxu0
        %v2644 = vadd.f32 %v2603, %v2643
        %2645 = vmatmul.f32.gmra.mxu0 %v2579
        %v2646 = vpop.f32.mrf.mxu0
        %v2647 = vadd.f32 %v2603, %v2646
        %2648 = vmatmul.f32.gmra.mxu0 %v2580
        %v2649 = vpop.f32.mrf.mxu0
        %v2650 = vadd.f32 %v2603, %v2649
        %2651 = vmatmul.f32.gmra.mxu0 %v2581
        %v2652 = vpop.f32.mrf.mxu0
        %v2653 = vadd.f32 %v2603, %v2652
        %2654 = vmatmul.f32.gmra.mxu0 %v2582
        %v2655 = vpop.f32.mrf.mxu0
        %v2656 = vadd.f32 %v2603, %v2655
        %2657 = vmatmul.f32.gmra.mxu0 %v2583
        %v2658 = vpop.f32.mrf.mxu0
        %v2659 = vadd.f32 %v2603, %v2658
        %2660 = vmatmul.f32.gmra.mxu0 %v2584
        %v2661 = vpop.f32.mrf.mxu0
        %v2662 = vadd.f32 %v2603, %v2661
        %2663 = vdwg.mxu0
        %v2664 = vmax.f32 %v2623, 0.0
        %v2665 = vmax.f32 %v2626, 0.0
        %v2666 = vmax.f32 %v2629, 0.0
        %v2667 = vmax.f32 %v2632, 0.0
        %v2668 = vmax.f32 %v2635, 0.0
        %v2669 = vmax.f32 %v2638, 0.0
        %v2670 = vmax.f32 %v2641, 0.0
        %v2671 = vmax.f32 %v2644, 0.0
        %v2672 = vmax.f32 %v2647, 0.0
        %v2673 = vmax.f32 %v2650, 0.0
        %v2674 = vmax.f32 %v2653, 0.0
        %v2675 = vmax.f32 %v2656, 0.0
        %v2676 = vmax.f32 %v2659, 0.0
        %v2677 = vmax.f32 %v2662, 0.0
        %v2692 = vrot.slane %v2664, 2
        %v2693 = vrot.slane %v2664, 4
        %v2694 = vrot.slane %v2664, 6
        %v2695 = vrot.slane %v2665, 2
        %v2696 = vrot.slane %v2665, 4
        %v2697 = vrot.slane %v2665, 6
        %v2698 = vrot.slane %v2666, 2
        %v2699 = vrot.slane %v2666, 4
        %v2700 = vrot.slane %v2666, 6
        %v2701 = vrot.slane %v2667, 2
        %v2702 = vrot.slane %v2667, 4
        %v2703 = vrot.slane %v2667, 6
        %v2704 = vrot.slane %v2668, 2
        %v2705 = vrot.slane %v2668, 4
        %v2706 = vrot.slane %v2668, 6
        %v2707 = vrot.slane %v2669, 2
        %v2708 = vrot.slane %v2669, 4
        %v2709 = vrot.slane %v2669, 6
        %v2710 = vrot.slane %v2670, 2
        %v2711 = vrot.slane %v2670, 4
        %v2712 = vrot.slane %v2670, 6
        %v2713 = vrot.slane %v2671, 2
        %v2714 = vrot.slane %v2671, 4
        %v2715 = vrot.slane %v2671, 6
        %v2716 = vrot.slane %v2672, 2
        %v2717 = vrot.slane %v2672, 4
        %v2718 = vrot.slane %v2672, 6
        %v2719 = vrot.slane %v2673, 2
        %v2720 = vrot.slane %v2673, 4
        %v2721 = vrot.slane %v2673, 6
        %v2722 = vrot.slane %v2674, 2
        %v2723 = vrot.slane %v2674, 4
        %v2724 = vrot.slane %v2674, 6
        %v2725 = vrot.slane %v2675, 2
        %v2726 = vrot.slane %v2675, 4
        %v2727 = vrot.slane %v2675, 6
        %v2728 = vrot.slane %v2676, 2
        %v2729 = vrot.slane %v2676, 4
        %v2730 = vrot.slane %v2676, 6
        %v2731 = vrot.slane %v2677, 2
        %v2732 = vrot.slane %v2677, 4
        %v2733 = vrot.slane %v2677, 6
        %v2776 = vrot.slane %v2664, 7
        %v2777 = vrot.slane %v2776, 2
        %v2778 = vrot.slane %v2692, 7
        %v2779 = vrot.slane %v2778, 2
        %v2780 = vrot.slane %v2693, 7
        %v2781 = vrot.slane %v2780, 2
        %v2782 = vrot.slane %v2694, 7
        %v2783 = vrot.slane %v2782, 2
        %v2784 = vrot.slane %v2665, 7
        %v2785 = vrot.slane %v2784, 2
        %v2786 = vrot.slane %v2695, 7
        %v2787 = vrot.slane %v2786, 2
        %v2788 = vrot.slane %v2696, 7
        %v2789 = vrot.slane %v2788, 2
        %v2790 = vrot.slane %v2697, 7
        %v2791 = vrot.slane %v2790, 2
        %v2792 = vrot.slane %v2666, 7
        %v2793 = vrot.slane %v2792, 2
        %v2794 = vrot.slane %v2698, 7
        %v2795 = vrot.slane %v2794, 2
        %v2796 = vrot.slane %v2699, 7
        %v2797 = vrot.slane %v2796, 2
        %v2798 = vrot.slane %v2700, 7
        %v2799 = vrot.slane %v2798, 2
        %v2800 = vrot.slane %v2667, 7
        %v2801 = vrot.slane %v2800, 2
        %v2802 = vrot.slane %v2701, 7
        %v2803 = vrot.slane %v2802, 2
        %v2804 = vrot.slane %v2702, 7
        %v2805 = vrot.slane %v2804, 2
        %v2806 = vrot.slane %v2703, 7
        %v2807 = vrot.slane %v2806, 2
        %v2808 = vrot.slane %v2668, 7
        %v2809 = vrot.slane %v2808, 2
        %v2810 = vrot.slane %v2704, 7
        %v2811 = vrot.slane %v2810, 2
        %v2812 = vrot.slane %v2705, 7
        %v2813 = vrot.slane %v2812, 2
        %v2814 = vrot.slane %v2706, 7
        %v2815 = vrot.slane %v2814, 2
        %v2816 = vrot.slane %v2669, 7
        %v2817 = vrot.slane %v2816, 2
        %v2818 = vrot.slane %v2707, 7
        %v2819 = vrot.slane %v2818, 2
        %v2820 = vrot.slane %v2708, 7
        %v2821 = vrot.slane %v2820, 2
        %v2822 = vrot.slane %v2709, 7
        %v2823 = vrot.slane %v2822, 2
        %v2824 = vrot.slane %v2670, 7
        %v2825 = vrot.slane %v2824, 2
        %v2826 = vrot.slane %v2710, 7
        %v2827 = vrot.slane %v2826, 2
        %v2828 = vrot.slane %v2711, 7
        %v2829 = vrot.slane %v2828, 2
        %v2830 = vrot.slane %v2712, 7
        %v2831 = vrot.slane %v2830, 2
        %v2832 = vrot.slane %v2671, 7
        %v2833 = vrot.slane %v2832, 2
        %v2834 = vrot.slane %v2713, 7
        %v2835 = vrot.slane %v2834, 2
        %v2836 = vrot.slane %v2714, 7
        %v2837 = vrot.slane %v2836, 2
        %v2838 = vrot.slane %v2715, 7
        %v2839 = vrot.slane %v2838, 2
        %v2840 = vrot.slane %v2672, 7
        %v2841 = vrot.slane %v2840, 2
        %v2842 = vrot.slane %v2716, 7
        %v2843 = vrot.slane %v2842, 2
        %v2844 = vrot.slane %v2717, 7
        %v2845 = vrot.slane %v2844, 2
        %v2846 = vrot.slane %v2718, 7
        %v2847 = vrot.slane %v2846, 2
        %v2848 = vrot.slane %v2673, 7
        %v2849 = vrot.slane %v2848, 2
        %v2850 = vrot.slane %v2719, 7
        %v2851 = vrot.slane %v2850, 2
        %v2852 = vrot.slane %v2720, 7
        %v2853 = vrot.slane %v2852, 2
        %v2854 = vrot.slane %v2721, 7
        %v2855 = vrot.slane %v2854, 2
        %v2856 = vrot.slane %v2674, 7
        %v2857 = vrot.slane %v2856, 2
        %v2858 = vrot.slane %v2722, 7
        %v2859 = vrot.slane %v2858, 2
        %v2860 = vrot.slane %v2723, 7
        %v2861 = vrot.slane %v2860, 2
        %v2862 = vrot.slane %v2724, 7
        %v2863 = vrot.slane %v2862, 2
        %v2864 = vrot.slane %v2675, 7
        %v2865 = vrot.slane %v2864, 2
        %v2866 = vrot.slane %v2725, 7
        %v2867 = vrot.slane %v2866, 2
        %v2868 = vrot.slane %v2726, 7
        %v2869 = vrot.slane %v2868, 2
        %v2870 = vrot.slane %v2727, 7
        %v2871 = vrot.slane %v2870, 2
        %v2872 = vrot.slane %v2676, 7
        %v2873 = vrot.slane %v2872, 2
        %v2874 = vrot.slane %v2728, 7
        %v2875 = vrot.slane %v2874, 2
        %v2876 = vrot.slane %v2729, 7
        %v2877 = vrot.slane %v2876, 2
        %v2878 = vrot.slane %v2730, 7
        %v2879 = vrot.slane %v2878, 2
        %v2880 = vrot.slane %v2677, 7
        %v2881 = vrot.slane %v2880, 2
        %v2882 = vrot.slane %v2731, 7
        %v2883 = vrot.slane %v2882, 2
        %v2884 = vrot.slane %v2732, 7
        %v2885 = vrot.slane %v2884, 2
        %v2886 = vrot.slane %v2733, 7
        %v2887 = vrot.slane %v2886, 2
        %v2944 = vmax.f32 %v2664, %v2777
        %v2945 = vmax.f32 %v2692, %v2779
        %v2946 = vmax.f32 %v2693, %v2781
        %v2947 = vmax.f32 %v2694, %v2783
        %v2948 = vmax.f32 %v2665, %v2785
        %v2949 = vmax.f32 %v2695, %v2787
        %v2950 = vmax.f32 %v2696, %v2789
        %v2951 = vmax.f32 %v2697, %v2791
        %v2952 = vmax.f32 %v2666, %v2793
        %v2953 = vmax.f32 %v2698, %v2795
        %v2954 = vmax.f32 %v2699, %v2797
        %v2955 = vmax.f32 %v2700, %v2799
        %v2956 = vmax.f32 %v2667, %v2801
        %v2957 = vmax.f32 %v2701, %v2803
        %v2958 = vmax.f32 %v2702, %v2805
        %v2959 = vmax.f32 %v2703, %v2807
        %v2960 = vmax.f32 %v2668, %v2809
        %v2961 = vmax.f32 %v2704, %v2811
        %v2962 = vmax.f32 %v2705, %v2813
        %v2963 = vmax.f32 %v2706, %v2815
        %v2964 = vmax.f32 %v2669, %v2817
        %v2965 = vmax.f32 %v2707, %v2819
        %v2966 = vmax.f32 %v2708, %v2821
        %v2967 = vmax.f32 %v2709, %v2823
        %v2968 = vmax.f32 %v2670, %v2825
        %v2969 = vmax.f32 %v2710, %v2827
        %v2970 = vmax.f32 %v2711, %v2829
        %v2971 = vmax.f32 %v2712, %v2831
        %v2972 = vmax.f32 %v2671, %v2833
        %v2973 = vmax.f32 %v2713, %v2835
        %v2974 = vmax.f32 %v2714, %v2837
        %v2975 = vmax.f32 %v2715, %v2839
        %v2976 = vmax.f32 %v2672, %v2841
        %v2977 = vmax.f32 %v2716, %v2843
        %v2978 = vmax.f32 %v2717, %v2845
        %v2979 = vmax.f32 %v2718, %v2847
        %v2980 = vmax.f32 %v2673, %v2849
        %v2981 = vmax.f32 %v2719, %v2851
        %v2982 = vmax.f32 %v2720, %v2853
        %v2983 = vmax.f32 %v2721, %v2855
        %v2984 = vmax.f32 %v2674, %v2857
        %v2985 = vmax.f32 %v2722, %v2859
        %v2986 = vmax.f32 %v2723, %v2861
        %v2987 = vmax.f32 %v2724, %v2863
        %v2988 = vmax.f32 %v2675, %v2865
        %v2989 = vmax.f32 %v2725, %v2867
        %v2990 = vmax.f32 %v2726, %v2869
        %v2991 = vmax.f32 %v2727, %v2871
        %v2992 = vmax.f32 %v2676, %v2873
        %v2993 = vmax.f32 %v2728, %v2875
        %v2994 = vmax.f32 %v2729, %v2877
        %v2995 = vmax.f32 %v2730, %v2879
        %v2996 = vmax.f32 %v2677, %v2881
        %v2997 = vmax.f32 %v2731, %v2883
        %v2998 = vmax.f32 %v2732, %v2885
        %v2999 = vmax.f32 %v2733, %v2887
        %v3000 = vmax.f32 %v2944, %v2958
        %v3001 = vmax.f32 %v2945, %v2959
        %v3002 = vmax.f32 %v2946, %v2960
        %v3003 = vmax.f32 %v2947, %v2961
        %v3004 = vmax.f32 %v2948, %v2962
        %v3005 = vmax.f32 %v2949, %v2963
        %v3006 = vmax.f32 %v2950, %v2964
        %v3007 = vmax.f32 %v2951, %v2965
        %v3008 = vmax.f32 %v2952, %v2966
        %v3009 = vmax.f32 %v2953, %v2967
        %v3010 = vmax.f32 %v2954, %v2968
        %v3011 = vmax.f32 %v2955, %v2969
        %v3012 = vmax.f32 %v2956, %v2970
        %v3013 = vmax.f32 %v2957, %v2971
        %v3014 = vmax.f32 %v2972, %v2986
        %v3015 = vmax.f32 %v2973, %v2987
        %v3016 = vmax.f32 %v2974, %v2988
        %v3017 = vmax.f32 %v2975, %v2989
        %v3018 = vmax.f32 %v2976, %v2990
        %v3019 = vmax.f32 %v2977, %v2991
        %v3020 = vmax.f32 %v2978, %v2992
        %v3021 = vmax.f32 %v2979, %v2993
        %v3022 = vmax.f32 %v2980, %v2994
        %v3023 = vmax.f32 %v2981, %v2995
        %v3024 = vmax.f32 %v2982, %v2996
        %v3025 = vmax.f32 %v2983, %v2997
        %v3026 = vmax.f32 %v2984, %v2998
        %v3027 = vmax.f32 %v2985, %v2999
        %v3056 = vperm.slane %v3000, 0
        %v3057 = vperm.slane %v3001, 0
        %v3058 = vperm.slane %v3002, 0
        %v3059 = vperm.slane %v3003, 0
        %v3060 = vperm.slane %v3004, 0
        %v3061 = vperm.slane %v3005, 0
        %v3062 = vperm.slane %v3006, 0
        %v3063 = vperm.slane %v3007, 0
        %v3064 = vperm.slane %v3008, 0
        %v3065 = vperm.slane %v3009, 0
        %v3066 = vperm.slane %v3010, 0
        %v3067 = vperm.slane %v3011, 0
        %v3068 = vperm.slane %v3012, 0
        %v3069 = vperm.slane %v3013, 0
        %v3070 = vperm.slane %v3014, 0
        %v3071 = vperm.slane %v3015, 0
        %v3072 = vperm.slane %v3016, 0
        %v3073 = vperm.slane %v3017, 0
        %v3074 = vperm.slane %v3018, 0
        %v3075 = vperm.slane %v3019, 0
        %v3076 = vperm.slane %v3020, 0
        %v3077 = vperm.slane %v3021, 0
        %v3078 = vperm.slane %v3022, 0
        %v3079 = vperm.slane %v3023, 0
        %v3080 = vperm.slane %v3024, 0
        %v3081 = vperm.slane %v3025, 0
        %v3082 = vperm.slane %v3026, 0
        %v3083 = vperm.slane %v3027, 0
        %v3084 = vsel %vm897, %v3057, %v3056
        %v3085 = vsel %vm899, %v3058, %v3084
        %v3086 = vsel %vm901, %v3059, %v3085
        %v3087 = vsel %vm903, %v3060, %v3086
        %v3088 = vsel %vm905, %v3061, %v3087
        %v3089 = vsel %vm907, %v3062, %v3088
        %v3090 = vsel %vm909, %v3063, %v3089
        %v3091 = vsel %vm897, %v3065, %v3064
        %v3092 = vsel %vm899, %v3066, %v3091
        %v3093 = vsel %vm901, %v3067, %v3092
        %v3094 = vsel %vm903, %v3068, %v3093
        %v3095 = vsel %vm905, %v3069, %v3094
        %v3096 = vsel %vm907, %v3070, %v3095
        %v3097 = vsel %vm909, %v3071, %v3096
        %v3098 = vsel %vm897, %v3073, %v3072
        %v3099 = vsel %vm899, %v3074, %v3098
        %v3100 = vsel %vm901, %v3075, %v3099
        %v3101 = vsel %vm903, %v3076, %v3100
        %v3102 = vsel %vm905, %v3077, %v3101
        %v3103 = vsel %vm907, %v3078, %v3102
        %v3104 = vsel %vm909, %v3079, %v3103
        %v3105 = vsel %vm897, %v3081, %v3080
        %v3106 = vsel %vm899, %v3082, %v3105
        %v3107 = vsel %vm901, %v3083, %v3106
        %3112 = vst [vmem:[#allocation2 + $0x70] sm:$0xff] %v3090
        %3113 = vst [vmem:[#allocation2 + $0x78] sm:$0xff] %v3097
        %3114 = vst [vmem:[#allocation2 + $0x80] sm:$0xff] %v3104
        %3115 = vst [vmem:[#allocation2 + $0x88] sm:$0xf] %v3107
        %v3116 = vld [vmem:[%s383 + $0x230] sm:$0xff]
        %v3117 = vld [vmem:[%s383 + $0x238] sm:$0xff]
        %v3118 = vld [vmem:[%s383 + $0x240] sm:$0xff]
        %v3119 = vld [vmem:[%s383 + $0x248] sm:$0xff]
        %v3120 = vld [vmem:[%s383 + $0x250] sm:$0xff]
        %v3121 = vld [vmem:[%s383 + $0x258] sm:$0xff]
        %v3122 = vld [vmem:[%s383 + $0x260] sm:$0xff]
        %v3123 = vld [vmem:[%s383 + $0x268] sm:$0xff]
        %v3124 = vld [vmem:[%s383 + $0x270] sm:$0xff]
        %v3125 = vld [vmem:[%s383 + $0x278] sm:$0xff]
        %v3126 = vld [vmem:[%s383 + $0x280] sm:$0xff]
        %v3127 = vld [vmem:[%s383 + $0x288] sm:$0xff]
        %v3128 = vld [vmem:[%s383 + $0x290] sm:$0xff]
        %v3129 = vld [vmem:[%s383 + $0x298] sm:$0xff]
        %v3130 = vld [vmem:[%s1] sm:$0xff]
        %v3131 = vld [vmem:[%s1 + $0x8] sm:$0xff]
        %v3132 = vld [vmem:[%s1 + $0x10] sm:$0xff]
        %v3133 = vld [vmem:[%s1 + $0x18] sm:$0xff]
        %v3134 = vld [vmem:[%s1 + $0x20] sm:$0xff]
        %v3135 = vld [vmem:[%s1 + $0x28] sm:$0xff]
        %v3136 = vld [vmem:[%s1 + $0x30] sm:$0xff]
        %v3137 = vld [vmem:[%s1 + $0x38] sm:$0xff]
        %v3138 = vld [vmem:[%s1 + $0x40] sm:$0xff]
        %v3139 = vld [vmem:[%s1 + $0x48] sm:$0xff]
        %v3140 = vld [vmem:[%s1 + $0x50] sm:$0xff]
        %v3141 = vld [vmem:[%s1 + $0x58] sm:$0xff]
        %v3142 = vld [vmem:[%s1 + $0x60] sm:$0xff]
        %v3143 = vld [vmem:[%s1 + $0x68] sm:$0xff]
        %v3144 = vld [vmem:[%s1 + $0x70] sm:$0xff]
        %v3145 = vld [vmem:[%s1 + $0x78] sm:$0xff]
        %v3146 = vld [vmem:[%s2] sm:$0x1]
        %v3148 = vperm.slane %v3146, 0
        %3150 = vmatpush.msra.mxu0 %v3145
        %3151 = vmatpush.msra.mxu0 %v3144
        %3152 = vmatpush.msra.mxu0 %v3143
        %3153 = vmatpush.msra.mxu0 %v3142
        %3154 = vmatpush.msra.mxu0 %v3141
        %3155 = vmatpush.msra.mxu0 %v3140
        %3156 = vmatpush.msra.mxu0 %v3139
        %3157 = vmatpush.msra.mxu0 %v3138
        %3158 = vmatpush.msra.mxu0 %v3137
        %3159 = vmatpush.msra.mxu0 %v3136
        %3160 = vmatpush.msra.mxu0 %v3135
        %3161 = vmatpush.msra.mxu0 %v3134
        %3162 = vmatpush.msra.mxu0 %v3133
        %3163 = vmatpush.msra.mxu0 %v3132
        %3164 = vmatpush.msra.mxu0 %v3131
        %3165 = vmatpush.msra.mxu0 %v3130
        %3166 = vmatmul.f32.gmra.mxu0 %v3116
        %v3167 = vpop.f32.mrf.mxu0
        %v3168 = vadd.f32 %v3148, %v3167
        %3169 = vmatmul.f32.gmra.mxu0 %v3117
        %v3170 = vpop.f32.mrf.mxu0
        %v3171 = vadd.f32 %v3148, %v3170
        %3172 = vmatmul.f32.gmra.mxu0 %v3118
        %v3173 = vpop.f32.mrf.mxu0
        %v3174 = vadd.f32 %v3148, %v3173
        %3175 = vmatmul.f32.gmra.mxu0 %v3119
        %v3176 = vpop.f32.mrf.mxu0
        %v3177 = vadd.f32 %v3148, %v3176
        %3178 = vmatmul.f32.gmra.mxu0 %v3120
        %v3179 = vpop.f32.mrf.mxu0
        %v3180 = vadd.f32 %v3148, %v3179
        %3181 = vmatmul.f32.gmra.mxu0 %v3121
        %v3182 = vpop.f32.mrf.mxu0
        %v3183 = vadd.f32 %v3148, %v3182
        %3184 = vmatmul.f32.gmra.mxu0 %v3122
        %v3185 = vpop.f32.mrf.mxu0
        %v3186 = vadd.f32 %v3148, %v3185
        %3187 = vmatmul.f32.gmra.mxu0 %v3123
        %v3188 = vpop.f32.mrf.mxu0
        %v3189 = vadd.f32 %v3148, %v3188
        %3190 = vmatmul.f32.gmra.mxu0 %v3124
        %v3191 = vpop.f32.mrf.mxu0
        %v3192 = vadd.f32 %v3148, %v3191
        %3193 = vmatmul.f32.gmra.mxu0 %v3125
        %v3194 = vpop.f32.mrf.mxu0
        %v3195 = vadd.f32 %v3148, %v3194
        %3196 = vmatmul.f32.gmra.mxu0 %v3126
        %v3197 = vpop.f32.mrf.mxu0
        %v3198 = vadd.f32 %v3148, %v3197
        %3199 = vmatmul.f32.gmra.mxu0 %v3127
        %v3200 = vpop.f32.mrf.mxu0
        %v3201 = vadd.f32 %v3148, %v3200
        %3202 = vmatmul.f32.gmra.mxu0 %v3128
        %v3203 = vpop.f32.mrf.mxu0
        %v3204 = vadd.f32 %v3148, %v3203
        %3205 = vmatmul.f32.gmra.mxu0 %v3129
        %v3206 = vpop.f32.mrf.mxu0
        %v3207 = vadd.f32 %v3148, %v3206
        %3208 = vdwg.mxu0
        %v3209 = vmax.f32 %v3168, 0.0
        %v3210 = vmax.f32 %v3171, 0.0
        %v3211 = vmax.f32 %v3174, 0.0
        %v3212 = vmax.f32 %v3177, 0.0
        %v3213 = vmax.f32 %v3180, 0.0
        %v3214 = vmax.f32 %v3183, 0.0
        %v3215 = vmax.f32 %v3186, 0.0
        %v3216 = vmax.f32 %v3189, 0.0
        %v3217 = vmax.f32 %v3192, 0.0
        %v3218 = vmax.f32 %v3195, 0.0
        %v3219 = vmax.f32 %v3198, 0.0
        %v3220 = vmax.f32 %v3201, 0.0
        %v3221 = vmax.f32 %v3204, 0.0
        %v3222 = vmax.f32 %v3207, 0.0
        %v3237 = vrot.slane %v3209, 2
        %v3238 = vrot.slane %v3209, 4
        %v3239 = vrot.slane %v3209, 6
        %v3240 = vrot.slane %v3210, 2
        %v3241 = vrot.slane %v3210, 4
        %v3242 = vrot.slane %v3210, 6
        %v3243 = vrot.slane %v3211, 2
        %v3244 = vrot.slane %v3211, 4
        %v3245 = vrot.slane %v3211, 6
        %v3246 = vrot.slane %v3212, 2
        %v3247 = vrot.slane %v3212, 4
        %v3248 = vrot.slane %v3212, 6
        %v3249 = vrot.slane %v3213, 2
        %v3250 = vrot.slane %v3213, 4
        %v3251 = vrot.slane %v3213, 6
        %v3252 = vrot.slane %v3214, 2
        %v3253 = vrot.slane %v3214, 4
        %v3254 = vrot.slane %v3214, 6
        %v3255 = vrot.slane %v3215, 2
        %v3256 = vrot.slane %v3215, 4
        %v3257 = vrot.slane %v3215, 6
        %v3258 = vrot.slane %v3216, 2
        %v3259 = vrot.slane %v3216, 4
        %v3260 = vrot.slane %v3216, 6
        %v3261 = vrot.slane %v3217, 2
        %v3262 = vrot.slane %v3217, 4
        %v3263 = vrot.slane %v3217, 6
        %v3264 = vrot.slane %v3218, 2
        %v3265 = vrot.slane %v3218, 4
        %v3266 = vrot.slane %v3218, 6
        %v3267 = vrot.slane %v3219, 2
        %v3268 = vrot.slane %v3219, 4
        %v3269 = vrot.slane %v3219, 6
        %v3270 = vrot.slane %v3220, 2
        %v3271 = vrot.slane %v3220, 4
        %v3272 = vrot.slane %v3220, 6
        %v3273 = vrot.slane %v3221, 2
        %v3274 = vrot.slane %v3221, 4
        %v3275 = vrot.slane %v3221, 6
        %v3276 = vrot.slane %v3222, 2
        %v3277 = vrot.slane %v3222, 4
        %v3278 = vrot.slane %v3222, 6
        %v3321 = vrot.slane %v3209, 7
        %v3322 = vrot.slane %v3321, 2
        %v3323 = vrot.slane %v3237, 7
        %v3324 = vrot.slane %v3323, 2
        %v3325 = vrot.slane %v3238, 7
        %v3326 = vrot.slane %v3325, 2
        %v3327 = vrot.slane %v3239, 7
        %v3328 = vrot.slane %v3327, 2
        %v3329 = vrot.slane %v3210, 7
        %v3330 = vrot.slane %v3329, 2
        %v3331 = vrot.slane %v3240, 7
        %v3332 = vrot.slane %v3331, 2
        %v3333 = vrot.slane %v3241, 7
        %v3334 = vrot.slane %v3333, 2
        %v3335 = vrot.slane %v3242, 7
        %v3336 = vrot.slane %v3335, 2
        %v3337 = vrot.slane %v3211, 7
        %v3338 = vrot.slane %v3337, 2
        %v3339 = vrot.slane %v3243, 7
        %v3340 = vrot.slane %v3339, 2
        %v3341 = vrot.slane %v3244, 7
        %v3342 = vrot.slane %v3341, 2
        %v3343 = vrot.slane %v3245, 7
        %v3344 = vrot.slane %v3343, 2
        %v3345 = vrot.slane %v3212, 7
        %v3346 = vrot.slane %v3345, 2
        %v3347 = vrot.slane %v3246, 7
        %v3348 = vrot.slane %v3347, 2
        %v3349 = vrot.slane %v3247, 7
        %v3350 = vrot.slane %v3349, 2
        %v3351 = vrot.slane %v3248, 7
        %v3352 = vrot.slane %v3351, 2
        %v3353 = vrot.slane %v3213, 7
        %v3354 = vrot.slane %v3353, 2
        %v3355 = vrot.slane %v3249, 7
        %v3356 = vrot.slane %v3355, 2
        %v3357 = vrot.slane %v3250, 7
        %v3358 = vrot.slane %v3357, 2
        %v3359 = vrot.slane %v3251, 7
        %v3360 = vrot.slane %v3359, 2
        %v3361 = vrot.slane %v3214, 7
        %v3362 = vrot.slane %v3361, 2
        %v3363 = vrot.slane %v3252, 7
        %v3364 = vrot.slane %v3363, 2
        %v3365 = vrot.slane %v3253, 7
        %v3366 = vrot.slane %v3365, 2
        %v3367 = vrot.slane %v3254, 7
        %v3368 = vrot.slane %v3367, 2
        %v3369 = vrot.slane %v3215, 7
        %v3370 = vrot.slane %v3369, 2
        %v3371 = vrot.slane %v3255, 7
        %v3372 = vrot.slane %v3371, 2
        %v3373 = vrot.slane %v3256, 7
        %v3374 = vrot.slane %v3373, 2
        %v3375 = vrot.slane %v3257, 7
        %v3376 = vrot.slane %v3375, 2
        %v3377 = vrot.slane %v3216, 7
        %v3378 = vrot.slane %v3377, 2
        %v3379 = vrot.slane %v3258, 7
        %v3380 = vrot.slane %v3379, 2
        %v3381 = vrot.slane %v3259, 7
        %v3382 = vrot.slane %v3381, 2
        %v3383 = vrot.slane %v3260, 7
        %v3384 = vrot.slane %v3383, 2
        %v3385 = vrot.slane %v3217, 7
        %v3386 = vrot.slane %v3385, 2
        %v3387 = vrot.slane %v3261, 7
        %v3388 = vrot.slane %v3387, 2
        %v3389 = vrot.slane %v3262, 7
        %v3390 = vrot.slane %v3389, 2
        %v3391 = vrot.slane %v3263, 7
        %v3392 = vrot.slane %v3391, 2
        %v3393 = vrot.slane %v3218, 7
        %v3394 = vrot.slane %v3393, 2
        %v3395 = vrot.slane %v3264, 7
        %v3396 = vrot.slane %v3395, 2
        %v3397 = vrot.slane %v3265, 7
        %v3398 = vrot.slane %v3397, 2
        %v3399 = vrot.slane %v3266, 7
        %v3400 = vrot.slane %v3399, 2
        %v3401 = vrot.slane %v3219, 7
        %v3402 = vrot.slane %v3401, 2
        %v3403 = vrot.slane %v3267, 7
        %v3404 = vrot.slane %v3403, 2
        %v3405 = vrot.slane %v3268, 7
        %v3406 = vrot.slane %v3405, 2
        %v3407 = vrot.slane %v3269, 7
        %v3408 = vrot.slane %v3407, 2
        %v3409 = vrot.slane %v3220, 7
        %v3410 = vrot.slane %v3409, 2
        %v3411 = vrot.slane %v3270, 7
        %v3412 = vrot.slane %v3411, 2
        %v3413 = vrot.slane %v3271, 7
        %v3414 = vrot.slane %v3413, 2
        %v3415 = vrot.slane %v3272, 7
        %v3416 = vrot.slane %v3415, 2
        %v3417 = vrot.slane %v3221, 7
        %v3418 = vrot.slane %v3417, 2
        %v3419 = vrot.slane %v3273, 7
        %v3420 = vrot.slane %v3419, 2
        %v3421 = vrot.slane %v3274, 7
        %v3422 = vrot.slane %v3421, 2
        %v3423 = vrot.slane %v3275, 7
        %v3424 = vrot.slane %v3423, 2
        %v3425 = vrot.slane %v3222, 7
        %v3426 = vrot.slane %v3425, 2
        %v3427 = vrot.slane %v3276, 7
        %v3428 = vrot.slane %v3427, 2
        %v3429 = vrot.slane %v3277, 7
        %v3430 = vrot.slane %v3429, 2
        %v3431 = vrot.slane %v3278, 7
        %v3432 = vrot.slane %v3431, 2
        %v3489 = vmax.f32 %v3209, %v3322
        %v3490 = vmax.f32 %v3237, %v3324
        %v3491 = vmax.f32 %v3238, %v3326
        %v3492 = vmax.f32 %v3239, %v3328
        %v3493 = vmax.f32 %v3210, %v3330
        %v3494 = vmax.f32 %v3240, %v3332
        %v3495 = vmax.f32 %v3241, %v3334
        %v3496 = vmax.f32 %v3242, %v3336
        %v3497 = vmax.f32 %v3211, %v3338
        %v3498 = vmax.f32 %v3243, %v3340
        %v3499 = vmax.f32 %v3244, %v3342
        %v3500 = vmax.f32 %v3245, %v3344
        %v3501 = vmax.f32 %v3212, %v3346
        %v3502 = vmax.f32 %v3246, %v3348
        %v3503 = vmax.f32 %v3247, %v3350
        %v3504 = vmax.f32 %v3248, %v3352
        %v3505 = vmax.f32 %v3213, %v3354
        %v3506 = vmax.f32 %v3249, %v3356
        %v3507 = vmax.f32 %v3250, %v3358
        %v3508 = vmax.f32 %v3251, %v3360
        %v3509 = vmax.f32 %v3214, %v3362
        %v3510 = vmax.f32 %v3252, %v3364
        %v3511 = vmax.f32 %v3253, %v3366
        %v3512 = vmax.f32 %v3254, %v3368
        %v3513 = vmax.f32 %v3215, %v3370
        %v3514 = vmax.f32 %v3255, %v3372
        %v3515 = vmax.f32 %v3256, %v3374
        %v3516 = vmax.f32 %v3257, %v3376
        %v3517 = vmax.f32 %v3216, %v3378
        %v3518 = vmax.f32 %v3258, %v3380
        %v3519 = vmax.f32 %v3259, %v3382
        %v3520 = vmax.f32 %v3260, %v3384
        %v3521 = vmax.f32 %v3217, %v3386
        %v3522 = vmax.f32 %v3261, %v3388
        %v3523 = vmax.f32 %v3262, %v3390
        %v3524 = vmax.f32 %v3263, %v3392
        %v3525 = vmax.f32 %v3218, %v3394
        %v3526 = vmax.f32 %v3264, %v3396
        %v3527 = vmax.f32 %v3265, %v3398
        %v3528 = vmax.f32 %v3266, %v3400
        %v3529 = vmax.f32 %v3219, %v3402
        %v3530 = vmax.f32 %v3267, %v3404
        %v3531 = vmax.f32 %v3268, %v3406
        %v3532 = vmax.f32 %v3269, %v3408
        %v3533 = vmax.f32 %v3220, %v3410
        %v3534 = vmax.f32 %v3270, %v3412
        %v3535 = vmax.f32 %v3271, %v3414
        %v3536 = vmax.f32 %v3272, %v3416
        %v3537 = vmax.f32 %v3221, %v3418
        %v3538 = vmax.f32 %v3273, %v3420
        %v3539 = vmax.f32 %v3274, %v3422
        %v3540 = vmax.f32 %v3275, %v3424
        %v3541 = vmax.f32 %v3222, %v3426
        %v3542 = vmax.f32 %v3276, %v3428
        %v3543 = vmax.f32 %v3277, %v3430
        %v3544 = vmax.f32 %v3278, %v3432
        %v3545 = vmax.f32 %v3489, %v3503
        %v3546 = vmax.f32 %v3490, %v3504
        %v3547 = vmax.f32 %v3491, %v3505
        %v3548 = vmax.f32 %v3492, %v3506
        %v3549 = vmax.f32 %v3493, %v3507
        %v3550 = vmax.f32 %v3494, %v3508
        %v3551 = vmax.f32 %v3495, %v3509
        %v3552 = vmax.f32 %v3496, %v3510
        %v3553 = vmax.f32 %v3497, %v3511
        %v3554 = vmax.f32 %v3498, %v3512
        %v3555 = vmax.f32 %v3499, %v3513
        %v3556 = vmax.f32 %v3500, %v3514
        %v3557 = vmax.f32 %v3501, %v3515
        %v3558 = vmax.f32 %v3502, %v3516
        %v3559 = vmax.f32 %v3517, %v3531
        %v3560 = vmax.f32 %v3518, %v3532
        %v3561 = vmax.f32 %v3519, %v3533
        %v3562 = vmax.f32 %v3520, %v3534
        %v3563 = vmax.f32 %v3521, %v3535
        %v3564 = vmax.f32 %v3522, %v3536
        %v3565 = vmax.f32 %v3523, %v3537
        %v3566 = vmax.f32 %v3524, %v3538
        %v3567 = vmax.f32 %v3525, %v3539
        %v3568 = vmax.f32 %v3526, %v3540
        %v3569 = vmax.f32 %v3527, %v3541
        %v3570 = vmax.f32 %v3528, %v3542
        %v3571 = vmax.f32 %v3529, %v3543
        %v3572 = vmax.f32 %v3530, %v3544
        %v3601 = vperm.slane %v3545, 0
        %v3602 = vperm.slane %v3546, 0
        %v3603 = vperm.slane %v3547, 0
        %v3604 = vperm.slane %v3548, 0
        %v3605 = vperm.slane %v3549, 0
        %v3606 = vperm.slane %v3550, 0
        %v3607 = vperm.slane %v3551, 0
        %v3608 = vperm.slane %v3552, 0
        %v3609 = vperm.slane %v3553, 0
        %v3610 = vperm.slane %v3554, 0
        %v3611 = vperm.slane %v3555, 0
        %v3612 = vperm.slane %v3556, 0
        %v3613 = vperm.slane %v3557, 0
        %v3614 = vperm.slane %v3558, 0
        %v3615 = vperm.slane %v3559, 0
        %v3616 = vperm.slane %v3560, 0
        %v3617 = vperm.slane %v3561, 0
        %v3618 = vperm.slane %v3562, 0
        %v3619 = vperm.slane %v3563, 0
        %v3620 = vperm.slane %v3564, 0
        %v3621 = vperm.slane %v3565, 0
        %v3622 = vperm.slane %v3566, 0
        %v3623 = vperm.slane %v3567, 0
        %v3624 = vperm.slane %v3568, 0
        %v3625 = vperm.slane %v3569, 0
        %v3626 = vperm.slane %v3570, 0
        %v3627 = vperm.slane %v3571, 0
        %v3628 = vperm.slane %v3572, 0
        %v3629 = vsel %vm897, %v3602, %v3601
        %v3630 = vsel %vm899, %v3603, %v3629
        %v3631 = vsel %vm901, %v3604, %v3630
        %v3632 = vsel %vm903, %v3605, %v3631
        %v3633 = vsel %vm905, %v3606, %v3632
        %v3634 = vsel %vm907, %v3607, %v3633
        %v3635 = vsel %vm909, %v3608, %v3634
        %v3636 = vsel %vm897, %v3610, %v3609
        %v3637 = vsel %vm899, %v3611, %v3636
        %v3638 = vsel %vm901, %v3612, %v3637
        %v3639 = vsel %vm903, %v3613, %v3638
        %v3640 = vsel %vm905, %v3614, %v3639
        %v3641 = vsel %vm907, %v3615, %v3640
        %v3642 = vsel %vm909, %v3616, %v3641
        %v3643 = vsel %vm897, %v3618, %v3617
        %v3644 = vsel %vm899, %v3619, %v3643
        %v3645 = vsel %vm901, %v3620, %v3644
        %v3646 = vsel %vm903, %v3621, %v3645
        %v3647 = vsel %vm905, %v3622, %v3646
        %v3648 = vsel %vm907, %v3623, %v3647
        %v3649 = vsel %vm909, %v3624, %v3648
        %v3650 = vsel %vm897, %v3626, %v3625
        %v3651 = vsel %vm899, %v3627, %v3650
        %v3652 = vsel %vm901, %v3628, %v3651
        %3657 = vst [vmem:[#allocation2 + $0x8c] sm:$0xff] %v3635
        %3658 = vst [vmem:[#allocation2 + $0x94] sm:$0xff] %v3642
        %3659 = vst [vmem:[#allocation2 + $0x9c] sm:$0xff] %v3649
        %3660 = vst [vmem:[#allocation2 + $0xa4] sm:$0xf] %v3652
        %v3661 = vld [vmem:[%s383 + $0x2a0] sm:$0xff]
        %v3662 = vld [vmem:[%s383 + $0x2a8] sm:$0xff]
        %v3663 = vld [vmem:[%s383 + $0x2b0] sm:$0xff]
        %v3664 = vld [vmem:[%s383 + $0x2b8] sm:$0xff]
        %v3665 = vld [vmem:[%s383 + $0x2c0] sm:$0xff]
        %v3666 = vld [vmem:[%s383 + $0x2c8] sm:$0xff]
        %v3667 = vld [vmem:[%s383 + $0x2d0] sm:$0xff]
        %v3668 = vld [vmem:[%s383 + $0x2d8] sm:$0xff]
        %v3669 = vld [vmem:[%s383 + $0x2e0] sm:$0xff]
        %v3670 = vld [vmem:[%s383 + $0x2e8] sm:$0xff]
        %v3671 = vld [vmem:[%s383 + $0x2f0] sm:$0xff]
        %v3672 = vld [vmem:[%s383 + $0x2f8] sm:$0xff]
        %v3673 = vld [vmem:[%s383 + $0x300] sm:$0xff]
        %v3674 = vld [vmem:[%s383 + $0x308] sm:$0xff]
        %v3675 = vld [vmem:[%s1] sm:$0xff]
        %v3676 = vld [vmem:[%s1 + $0x8] sm:$0xff]
        %v3677 = vld [vmem:[%s1 + $0x10] sm:$0xff]
        %v3678 = vld [vmem:[%s1 + $0x18] sm:$0xff]
        %v3679 = vld [vmem:[%s1 + $0x20] sm:$0xff]
        %v3680 = vld [vmem:[%s1 + $0x28] sm:$0xff]
        %v3681 = vld [vmem:[%s1 + $0x30] sm:$0xff]
        %v3682 = vld [vmem:[%s1 + $0x38] sm:$0xff]
        %v3683 = vld [vmem:[%s1 + $0x40] sm:$0xff]
        %v3684 = vld [vmem:[%s1 + $0x48] sm:$0xff]
        %v3685 = vld [vmem:[%s1 + $0x50] sm:$0xff]
        %v3686 = vld [vmem:[%s1 + $0x58] sm:$0xff]
        %v3687 = vld [vmem:[%s1 + $0x60] sm:$0xff]
        %v3688 = vld [vmem:[%s1 + $0x68] sm:$0xff]
        %v3689 = vld [vmem:[%s1 + $0x70] sm:$0xff]
        %v3690 = vld [vmem:[%s1 + $0x78] sm:$0xff]
        %v3691 = vld [vmem:[%s2] sm:$0x1]
        %v3693 = vperm.slane %v3691, 0
        %3695 = vmatpush.msra.mxu0 %v3690
        %3696 = vmatpush.msra.mxu0 %v3689
        %3697 = vmatpush.msra.mxu0 %v3688
        %3698 = vmatpush.msra.mxu0 %v3687
        %3699 = vmatpush.msra.mxu0 %v3686
        %3700 = vmatpush.msra.mxu0 %v3685
        %3701 = vmatpush.msra.mxu0 %v3684
        %3702 = vmatpush.msra.mxu0 %v3683
        %3703 = vmatpush.msra.mxu0 %v3682
        %3704 = vmatpush.msra.mxu0 %v3681
        %3705 = vmatpush.msra.mxu0 %v3680
        %3706 = vmatpush.msra.mxu0 %v3679
        %3707 = vmatpush.msra.mxu0 %v3678
        %3708 = vmatpush.msra.mxu0 %v3677
        %3709 = vmatpush.msra.mxu0 %v3676
        %3710 = vmatpush.msra.mxu0 %v3675
        %3711 = vmatmul.f32.gmra.mxu0 %v3661
        %v3712 = vpop.f32.mrf.mxu0
        %v3713 = vadd.f32 %v3693, %v3712
        %3714 = vmatmul.f32.gmra.mxu0 %v3662
        %v3715 = vpop.f32.mrf.mxu0
        %v3716 = vadd.f32 %v3693, %v3715
        %3717 = vmatmul.f32.gmra.mxu0 %v3663
        %v3718 = vpop.f32.mrf.mxu0
        %v3719 = vadd.f32 %v3693, %v3718
        %3720 = vmatmul.f32.gmra.mxu0 %v3664
        %v3721 = vpop.f32.mrf.mxu0
        %v3722 = vadd.f32 %v3693, %v3721
        %3723 = vmatmul.f32.gmra.mxu0 %v3665
        %v3724 = vpop.f32.mrf.mxu0
        %v3725 = vadd.f32 %v3693, %v3724
        %3726 = vmatmul.f32.gmra.mxu0 %v3666
        %v3727 = vpop.f32.mrf.mxu0
        %v3728 = vadd.f32 %v3693, %v3727
        %3729 = vmatmul.f32.gmra.mxu0 %v3667
        %v3730 = vpop.f32.mrf.mxu0
        %v3731 = vadd.f32 %v3693, %v3730
        %3732 = vmatmul.f32.gmra.mxu0 %v3668
        %v3733 = vpop.f32.mrf.mxu0
        %v3734 = vadd.f32 %v3693, %v3733
        %3735 = vmatmul.f32.gmra.mxu0 %v3669
        %v3736 = vpop.f32.mrf.mxu0
        %v3737 = vadd.f32 %v3693, %v3736
        %3738 = vmatmul.f32.gmra.mxu0 %v3670
        %v3739 = vpop.f32.mrf.mxu0
        %v3740 = vadd.f32 %v3693, %v3739
        %3741 = vmatmul.f32.gmra.mxu0 %v3671
        %v3742 = vpop.f32.mrf.mxu0
        %v3743 = vadd.f32 %v3693, %v3742
        %3744 = vmatmul.f32.gmra.mxu0 %v3672
        %v3745 = vpop.f32.mrf.mxu0
        %v3746 = vadd.f32 %v3693, %v3745
        %3747 = vmatmul.f32.gmra.mxu0 %v3673
        %v3748 = vpop.f32.mrf.mxu0
        %v3749 = vadd.f32 %v3693, %v3748
        %3750 = vmatmul.f32.gmra.mxu0 %v3674
        %v3751 = vpop.f32.mrf.mxu0
        %v3752 = vadd.f32 %v3693, %v3751
        %3753 = vdwg.mxu0
        %v3754 = vmax.f32 %v3713, 0.0
        %v3755 = vmax.f32 %v3716, 0.0
        %v3756 = vmax.f32 %v3719, 0.0
        %v3757 = vmax.f32 %v3722, 0.0
        %v3758 = vmax.f32 %v3725, 0.0
        %v3759 = vmax.f32 %v3728, 0.0
        %v3760 = vmax.f32 %v3731, 0.0
        %v3761 = vmax.f32 %v3734, 0.0
        %v3762 = vmax.f32 %v3737, 0.0
        %v3763 = vmax.f32 %v3740, 0.0
        %v3764 = vmax.f32 %v3743, 0.0
        %v3765 = vmax.f32 %v3746, 0.0
        %v3766 = vmax.f32 %v3749, 0.0
        %v3767 = vmax.f32 %v3752, 0.0
        %v3782 = vrot.slane %v3754, 2
        %v3783 = vrot.slane %v3754, 4
        %v3784 = vrot.slane %v3754, 6
        %v3785 = vrot.slane %v3755, 2
        %v3786 = vrot.slane %v3755, 4
        %v3787 = vrot.slane %v3755, 6
        %v3788 = vrot.slane %v3756, 2
        %v3789 = vrot.slane %v3756, 4
        %v3790 = vrot.slane %v3756, 6
        %v3791 = vrot.slane %v3757, 2
        %v3792 = vrot.slane %v3757, 4
        %v3793 = vrot.slane %v3757, 6
        %v3794 = vrot.slane %v3758, 2
        %v3795 = vrot.slane %v3758, 4
        %v3796 = vrot.slane %v3758, 6
        %v3797 = vrot.slane %v3759, 2
        %v3798 = vrot.slane %v3759, 4
        %v3799 = vrot.slane %v3759, 6
        %v3800 = vrot.slane %v3760, 2
        %v3801 = vrot.slane %v3760, 4
        %v3802 = vrot.slane %v3760, 6
        %v3803 = vrot.slane %v3761, 2
        %v3804 = vrot.slane %v3761, 4
        %v3805 = vrot.slane %v3761, 6
        %v3806 = vrot.slane %v3762, 2
        %v3807 = vrot.slane %v3762, 4
        %v3808 = vrot.slane %v3762, 6
        %v3809 = vrot.slane %v3763, 2
        %v3810 = vrot.slane %v3763, 4
        %v3811 = vrot.slane %v3763, 6
        %v3812 = vrot.slane %v3764, 2
        %v3813 = vrot.slane %v3764, 4
        %v3814 = vrot.slane %v3764, 6
        %v3815 = vrot.slane %v3765, 2
        %v3816 = vrot.slane %v3765, 4
        %v3817 = vrot.slane %v3765, 6
        %v3818 = vrot.slane %v3766, 2
        %v3819 = vrot.slane %v3766, 4
        %v3820 = vrot.slane %v3766, 6
        %v3821 = vrot.slane %v3767, 2
        %v3822 = vrot.slane %v3767, 4
        %v3823 = vrot.slane %v3767, 6
        %v3866 = vrot.slane %v3754, 7
        %v3867 = vrot.slane %v3866, 2
        %v3868 = vrot.slane %v3782, 7
        %v3869 = vrot.slane %v3868, 2
        %v3870 = vrot.slane %v3783, 7
        %v3871 = vrot.slane %v3870, 2
        %v3872 = vrot.slane %v3784, 7
        %v3873 = vrot.slane %v3872, 2
        %v3874 = vrot.slane %v3755, 7
        %v3875 = vrot.slane %v3874, 2
        %v3876 = vrot.slane %v3785, 7
        %v3877 = vrot.slane %v3876, 2
        %v3878 = vrot.slane %v3786, 7
        %v3879 = vrot.slane %v3878, 2
        %v3880 = vrot.slane %v3787, 7
        %v3881 = vrot.slane %v3880, 2
        %v3882 = vrot.slane %v3756, 7
        %v3883 = vrot.slane %v3882, 2
        %v3884 = vrot.slane %v3788, 7
        %v3885 = vrot.slane %v3884, 2
        %v3886 = vrot.slane %v3789, 7
        %v3887 = vrot.slane %v3886, 2
        %v3888 = vrot.slane %v3790, 7
        %v3889 = vrot.slane %v3888, 2
        %v3890 = vrot.slane %v3757, 7
        %v3891 = vrot.slane %v3890, 2
        %v3892 = vrot.slane %v3791, 7
        %v3893 = vrot.slane %v3892, 2
        %v3894 = vrot.slane %v3792, 7
        %v3895 = vrot.slane %v3894, 2
        %v3896 = vrot.slane %v3793, 7
        %v3897 = vrot.slane %v3896, 2
        %v3898 = vrot.slane %v3758, 7
        %v3899 = vrot.slane %v3898, 2
        %v3900 = vrot.slane %v3794, 7
        %v3901 = vrot.slane %v3900, 2
        %v3902 = vrot.slane %v3795, 7
        %v3903 = vrot.slane %v3902, 2
        %v3904 = vrot.slane %v3796, 7
        %v3905 = vrot.slane %v3904, 2
        %v3906 = vrot.slane %v3759, 7
        %v3907 = vrot.slane %v3906, 2
        %v3908 = vrot.slane %v3797, 7
        %v3909 = vrot.slane %v3908, 2
        %v3910 = vrot.slane %v3798, 7
        %v3911 = vrot.slane %v3910, 2
        %v3912 = vrot.slane %v3799, 7
        %v3913 = vrot.slane %v3912, 2
        %v3914 = vrot.slane %v3760, 7
        %v3915 = vrot.slane %v3914, 2
        %v3916 = vrot.slane %v3800, 7
        %v3917 = vrot.slane %v3916, 2
        %v3918 = vrot.slane %v3801, 7
        %v3919 = vrot.slane %v3918, 2
        %v3920 = vrot.slane %v3802, 7
        %v3921 = vrot.slane %v3920, 2
        %v3922 = vrot.slane %v3761, 7
        %v3923 = vrot.slane %v3922, 2
        %v3924 = vrot.slane %v3803, 7
        %v3925 = vrot.slane %v3924, 2
        %v3926 = vrot.slane %v3804, 7
        %v3927 = vrot.slane %v3926, 2
        %v3928 = vrot.slane %v3805, 7
        %v3929 = vrot.slane %v3928, 2
        %v3930 = vrot.slane %v3762, 7
        %v3931 = vrot.slane %v3930, 2
        %v3932 = vrot.slane %v3806, 7
        %v3933 = vrot.slane %v3932, 2
        %v3934 = vrot.slane %v3807, 7
        %v3935 = vrot.slane %v3934, 2
        %v3936 = vrot.slane %v3808, 7
        %v3937 = vrot.slane %v3936, 2
        %v3938 = vrot.slane %v3763, 7
        %v3939 = vrot.slane %v3938, 2
        %v3940 = vrot.slane %v3809, 7
        %v3941 = vrot.slane %v3940, 2
        %v3942 = vrot.slane %v3810, 7
        %v3943 = vrot.slane %v3942, 2
        %v3944 = vrot.slane %v3811, 7
        %v3945 = vrot.slane %v3944, 2
        %v3946 = vrot.slane %v3764, 7
        %v3947 = vrot.slane %v3946, 2
        %v3948 = vrot.slane %v3812, 7
        %v3949 = vrot.slane %v3948, 2
        %v3950 = vrot.slane %v3813, 7
        %v3951 = vrot.slane %v3950, 2
        %v3952 = vrot.slane %v3814, 7
        %v3953 = vrot.slane %v3952, 2
        %v3954 = vrot.slane %v3765, 7
        %v3955 = vrot.slane %v3954, 2
        %v3956 = vrot.slane %v3815, 7
        %v3957 = vrot.slane %v3956, 2
        %v3958 = vrot.slane %v3816, 7
        %v3959 = vrot.slane %v3958, 2
        %v3960 = vrot.slane %v3817, 7
        %v3961 = vrot.slane %v3960, 2
        %v3962 = vrot.slane %v3766, 7
        %v3963 = vrot.slane %v3962, 2
        %v3964 = vrot.slane %v3818, 7
        %v3965 = vrot.slane %v3964, 2
        %v3966 = vrot.slane %v3819, 7
        %v3967 = vrot.slane %v3966, 2
        %v3968 = vrot.slane %v3820, 7
        %v3969 = vrot.slane %v3968, 2
        %v3970 = vrot.slane %v3767, 7
        %v3971 = vrot.slane %v3970, 2
        %v3972 = vrot.slane %v3821, 7
        %v3973 = vrot.slane %v3972, 2
        %v3974 = vrot.slane %v3822, 7
        %v3975 = vrot.slane %v3974, 2
        %v3976 = vrot.slane %v3823, 7
        %v3977 = vrot.slane %v3976, 2
        %v4034 = vmax.f32 %v3754, %v3867
        %v4035 = vmax.f32 %v3782, %v3869
        %v4036 = vmax.f32 %v3783, %v3871
        %v4037 = vmax.f32 %v3784, %v3873
        %v4038 = vmax.f32 %v3755, %v3875
        %v4039 = vmax.f32 %v3785, %v3877
        %v4040 = vmax.f32 %v3786, %v3879
        %v4041 = vmax.f32 %v3787, %v3881
        %v4042 = vmax.f32 %v3756, %v3883
        %v4043 = vmax.f32 %v3788, %v3885
        %v4044 = vmax.f32 %v3789, %v3887
        %v4045 = vmax.f32 %v3790, %v3889
        %v4046 = vmax.f32 %v3757, %v3891
        %v4047 = vmax.f32 %v3791, %v3893
        %v4048 = vmax.f32 %v3792, %v3895
        %v4049 = vmax.f32 %v3793, %v3897
        %v4050 = vmax.f32 %v3758, %v3899
        %v4051 = vmax.f32 %v3794, %v3901
        %v4052 = vmax.f32 %v3795, %v3903
        %v4053 = vmax.f32 %v3796, %v3905
        %v4054 = vmax.f32 %v3759, %v3907
        %v4055 = vmax.f32 %v3797, %v3909
        %v4056 = vmax.f32 %v3798, %v3911
        %v4057 = vmax.f32 %v3799, %v3913
        %v4058 = vmax.f32 %v3760, %v3915
        %v4059 = vmax.f32 %v3800, %v3917
        %v4060 = vmax.f32 %v3801, %v3919
        %v4061 = vmax.f32 %v3802, %v3921
        %v4062 = vmax.f32 %v3761, %v3923
        %v4063 = vmax.f32 %v3803, %v3925
        %v4064 = vmax.f32 %v3804, %v3927
        %v4065 = vmax.f32 %v3805, %v3929
        %v4066 = vmax.f32 %v3762, %v3931
        %v4067 = vmax.f32 %v3806, %v3933
        %v4068 = vmax.f32 %v3807, %v3935
        %v4069 = vmax.f32 %v3808, %v3937
        %v4070 = vmax.f32 %v3763, %v3939
        %v4071 = vmax.f32 %v3809, %v3941
        %v4072 = vmax.f32 %v3810, %v3943
        %v4073 = vmax.f32 %v3811, %v3945
        %v4074 = vmax.f32 %v3764, %v3947
        %v4075 = vmax.f32 %v3812, %v3949
        %v4076 = vmax.f32 %v3813, %v3951
        %v4077 = vmax.f32 %v3814, %v3953
        %v4078 = vmax.f32 %v3765, %v3955
        %v4079 = vmax.f32 %v3815, %v3957
        %v4080 = vmax.f32 %v3816, %v3959
        %v4081 = vmax.f32 %v3817, %v3961
        %v4082 = vmax.f32 %v3766, %v3963
        %v4083 = vmax.f32 %v3818, %v3965
        %v4084 = vmax.f32 %v3819, %v3967
        %v4085 = vmax.f32 %v3820, %v3969
        %v4086 = vmax.f32 %v3767, %v3971
        %v4087 = vmax.f32 %v3821, %v3973
        %v4088 = vmax.f32 %v3822, %v3975
        %v4089 = vmax.f32 %v3823, %v3977
        %v4090 = vmax.f32 %v4034, %v4048
        %v4091 = vmax.f32 %v4035, %v4049
        %v4092 = vmax.f32 %v4036, %v4050
        %v4093 = vmax.f32 %v4037, %v4051
        %v4094 = vmax.f32 %v4038, %v4052
        %v4095 = vmax.f32 %v4039, %v4053
        %v4096 = vmax.f32 %v4040, %v4054
        %v4097 = vmax.f32 %v4041, %v4055
        %v4098 = vmax.f32 %v4042, %v4056
        %v4099 = vmax.f32 %v4043, %v4057
        %v4100 = vmax.f32 %v4044, %v4058
        %v4101 = vmax.f32 %v4045, %v4059
        %v4102 = vmax.f32 %v4046, %v4060
        %v4103 = vmax.f32 %v4047, %v4061
        %v4104 = vmax.f32 %v4062, %v4076
        %v4105 = vmax.f32 %v4063, %v4077
        %v4106 = vmax.f32 %v4064, %v4078
        %v4107 = vmax.f32 %v4065, %v4079
        %v4108 = vmax.f32 %v4066, %v4080
        %v4109 = vmax.f32 %v4067, %v4081
        %v4110 = vmax.f32 %v4068, %v4082
        %v4111 = vmax.f32 %v4069, %v4083
        %v4112 = vmax.f32 %v4070, %v4084
        %v4113 = vmax.f32 %v4071, %v4085
        %v4114 = vmax.f32 %v4072, %v4086
        %v4115 = vmax.f32 %v4073, %v4087
        %v4116 = vmax.f32 %v4074, %v4088
        %v4117 = vmax.f32 %v4075, %v4089
        %v4146 = vperm.slane %v4090, 0
        %v4147 = vperm.slane %v4091, 0
        %v4148 = vperm.slane %v4092, 0
        %v4149 = vperm.slane %v4093, 0
        %v4150 = vperm.slane %v4094, 0
        %v4151 = vperm.slane %v4095, 0
        %v4152 = vperm.slane %v4096, 0
        %v4153 = vperm.slane %v4097, 0
        %v4154 = vperm.slane %v4098, 0
        %v4155 = vperm.slane %v4099, 0
        %v4156 = vperm.slane %v4100, 0
        %v4157 = vperm.slane %v4101, 0
        %v4158 = vperm.slane %v4102, 0
        %v4159 = vperm.slane %v4103, 0
        %v4160 = vperm.slane %v4104, 0
        %v4161 = vperm.slane %v4105, 0
        %v4162 = vperm.slane %v4106, 0
        %v4163 = vperm.slane %v4107, 0
        %v4164 = vperm.slane %v4108, 0
        %v4165 = vperm.slane %v4109, 0
        %v4166 = vperm.slane %v4110, 0
        %v4167 = vperm.slane %v4111, 0
        %v4168 = vperm.slane %v4112, 0
        %v4169 = vperm.slane %v4113, 0
        %v4170 = vperm.slane %v4114, 0
        %v4171 = vperm.slane %v4115, 0
        %v4172 = vperm.slane %v4116, 0
        %v4173 = vperm.slane %v4117, 0
        %v4174 = vsel %vm897, %v4147, %v4146
        %v4175 = vsel %vm899, %v4148, %v4174
        %v4176 = vsel %vm901, %v4149, %v4175
        %v4177 = vsel %vm903, %v4150, %v4176
        %v4178 = vsel %vm905, %v4151, %v4177
        %v4179 = vsel %vm907, %v4152, %v4178
        %v4180 = vsel %vm909, %v4153, %v4179
        %v4181 = vsel %vm897, %v4155, %v4154
        %v4182 = vsel %vm899, %v4156, %v4181
        %v4183 = vsel %vm901, %v4157, %v4182
        %v4184 = vsel %vm903, %v4158, %v4183
        %v4185 = vsel %vm905, %v4159, %v4184
        %v4186 = vsel %vm907, %v4160, %v4185
        %v4187 = vsel %vm909, %v4161, %v4186
        %v4188 = vsel %vm897, %v4163, %v4162
        %v4189 = vsel %vm899, %v4164, %v4188
        %v4190 = vsel %vm901, %v4165, %v4189
        %v4191 = vsel %vm903, %v4166, %v4190
        %v4192 = vsel %vm905, %v4167, %v4191
        %v4193 = vsel %vm907, %v4168, %v4192
        %v4194 = vsel %vm909, %v4169, %v4193
        %v4195 = vsel %vm897, %v4171, %v4170
        %v4196 = vsel %vm899, %v4172, %v4195
        %v4197 = vsel %vm901, %v4173, %v4196
        %4202 = vst [vmem:[#allocation2 + $0xa8] sm:$0xff] %v4180
        %4203 = vst [vmem:[#allocation2 + $0xb0] sm:$0xff] %v4187
        %4204 = vst [vmem:[#allocation2 + $0xb8] sm:$0xff] %v4194
        %4205 = vst [vmem:[#allocation2 + $0xc0] sm:$0xf] %v4197
        %4206 = vst [vmem:[#allocation2 + $0xc4] sm:$0xf] 0.0
        %v4207 = vld [vmem:[#allocation2] sm:$0xff]
        %v4208 = vld [vmem:[#allocation2 + $0x8] sm:$0xff]
        %v4209 = vld [vmem:[#allocation2 + $0x10] sm:$0xff]
        %v4210 = vld [vmem:[#allocation2 + $0x18] sm:$0xff]
        %v4211 = vld [vmem:[#allocation2 + $0x20] sm:$0xff]
        %v4212 = vld [vmem:[#allocation2 + $0x28] sm:$0xff]
        %v4213 = vld [vmem:[#allocation2 + $0x30] sm:$0xff]
        %v4214 = vld [vmem:[#allocation2 + $0x38] sm:$0xff]
        %v4215 = vld [vmem:[#allocation2 + $0x40] sm:$0xff]
        %v4216 = vld [vmem:[#allocation2 + $0x48] sm:$0xff]
        %v4217 = vld [vmem:[#allocation2 + $0x50] sm:$0xff]
        %v4218 = vld [vmem:[#allocation2 + $0x58] sm:$0xff]
        %v4219 = vld [vmem:[#allocation2 + $0x60] sm:$0xff]
        %v4220 = vld [vmem:[#allocation2 + $0x68] sm:$0xff]
        %v4221 = vld [vmem:[#allocation2 + $0x70] sm:$0xff]
        %v4222 = vld [vmem:[#allocation2 + $0x78] sm:$0xff]
        %v4223 = vld [vmem:[#allocation2 + $0x80] sm:$0xff]
        %v4224 = vld [vmem:[#allocation2 + $0x88] sm:$0xf]
        %v4225 = vld [vmem:[%s3] sm:$0xff]
        %v4226 = vld [vmem:[%s3 + $0x8] sm:$0xff]
        %v4227 = vld [vmem:[%s3 + $0x10] sm:$0xff]
        %v4228 = vld [vmem:[%s3 + $0x18] sm:$0xff]
        %v4229 = vld [vmem:[%s3 + $0x20] sm:$0xff]
        %v4230 = vld [vmem:[%s3 + $0x28] sm:$0xff]
        %v4231 = vld [vmem:[%s3 + $0x30] sm:$0xff]
        %v4232 = vld [vmem:[%s3 + $0x38] sm:$0xff]
        %v4233 = vld [vmem:[%s3 + $0x40] sm:$0xff]
        %v4234 = vld [vmem:[%s3 + $0x48] sm:$0xff]
        %v4235 = vld [vmem:[%s3 + $0x50] sm:$0xff]
        %v4236 = vld [vmem:[%s3 + $0x58] sm:$0xff]
        %v4237 = vld [vmem:[%s3 + $0x60] sm:$0xff]
        %v4238 = vld [vmem:[%s3 + $0x68] sm:$0xff]
        %v4239 = vld [vmem:[%s3 + $0x70] sm:$0xff]
        %v4240 = vld [vmem:[%s3 + $0x78] sm:$0xff]
        %v4241 = vld [vmem:[#allocation2 + $0x1] sm:$0xff]
        %v4242 = vld [vmem:[#allocation2 + $0x9] sm:$0xff]
        %v4243 = vld [vmem:[#allocation2 + $0x11] sm:$0xff]
        %v4244 = vld [vmem:[#allocation2 + $0x19] sm:$0xff]
        %v4245 = vld [vmem:[#allocation2 + $0x21] sm:$0xff]
        %v4246 = vld [vmem:[#allocation2 + $0x29] sm:$0xff]
        %v4247 = vld [vmem:[#allocation2 + $0x31] sm:$0xff]
        %v4248 = vld [vmem:[#allocation2 + $0x39] sm:$0xff]
        %v4249 = vld [vmem:[#allocation2 + $0x41] sm:$0xff]
        %v4250 = vld [vmem:[#allocation2 + $0x49] sm:$0xff]
        %v4251 = vld [vmem:[#allocation2 + $0x51] sm:$0xff]
        %v4252 = vld [vmem:[#allocation2 + $0x59] sm:$0xff]
        %v4253 = vld [vmem:[#allocation2 + $0x61] sm:$0xff]
        %v4254 = vld [vmem:[#allocation2 + $0x69] sm:$0xff]
        %v4255 = vld [vmem:[#allocation2 + $0x71] sm:$0xff]
        %v4256 = vld [vmem:[#allocation2 + $0x79] sm:$0xff]
        %v4257 = vld [vmem:[#allocation2 + $0x81] sm:$0xff]
        %v4258 = vld [vmem:[#allocation2 + $0x89] sm:$0xf]
        %s4259 = scalar_lea.vmem %s3, 128
        %v4260 = vld [vmem:[%s4259] sm:$0xff]
        %v4261 = vld [vmem:[%s4259 + $0x8] sm:$0xff]
        %v4262 = vld [vmem:[%s4259 + $0x10] sm:$0xff]
        %v4263 = vld [vmem:[%s4259 + $0x18] sm:$0xff]
        %v4264 = vld [vmem:[%s4259 + $0x20] sm:$0xff]
        %v4265 = vld [vmem:[%s4259 + $0x28] sm:$0xff]
        %v4266 = vld [vmem:[%s4259 + $0x30] sm:$0xff]
        %v4267 = vld [vmem:[%s4259 + $0x38] sm:$0xff]
        %v4268 = vld [vmem:[%s4259 + $0x40] sm:$0xff]
        %v4269 = vld [vmem:[%s4259 + $0x48] sm:$0xff]
        %v4270 = vld [vmem:[%s4259 + $0x50] sm:$0xff]
        %v4271 = vld [vmem:[%s4259 + $0x58] sm:$0xff]
        %v4272 = vld [vmem:[%s4259 + $0x60] sm:$0xff]
        %v4273 = vld [vmem:[%s4259 + $0x68] sm:$0xff]
        %v4274 = vld [vmem:[%s4259 + $0x70] sm:$0xff]
        %v4275 = vld [vmem:[%s4259 + $0x78] sm:$0xff]
        %4276 = vmatpush.msra.mxu0 %v4275
        %4277 = vmatpush.msra.mxu0 %v4274
        %4278 = vmatpush.msra.mxu0 %v4273
        %4279 = vmatpush.msra.mxu0 %v4272
        %4280 = vmatpush.msra.mxu0 %v4271
        %4281 = vmatpush.msra.mxu0 %v4270
        %4282 = vmatpush.msra.mxu0 %v4269
        %4283 = vmatpush.msra.mxu0 %v4268
        %4284 = vmatpush.msra.mxu0 %v4267
        %4285 = vmatpush.msra.mxu0 %v4266
        %4286 = vmatpush.msra.mxu0 %v4265
        %4287 = vmatpush.msra.mxu0 %v4264
        %4288 = vmatpush.msra.mxu0 %v4263
        %4289 = vmatpush.msra.mxu0 %v4262
        %4290 = vmatpush.msra.mxu0 %v4261
        %4291 = vmatpush.msra.mxu0 %v4260
        %4292 = vmatmul.f32.gmra.mxu0 %v4241
        %v4293 = vpop.f32.mrf.mxu0
        %v4294 = vadd.f32 0.0, %v4293
        %4295 = vmatmul.f32.gmra.mxu0 %v4242
        %v4296 = vpop.f32.mrf.mxu0
        %v4297 = vadd.f32 0.0, %v4296
        %4298 = vmatmul.f32.gmra.mxu0 %v4243
        %v4299 = vpop.f32.mrf.mxu0
        %v4300 = vadd.f32 0.0, %v4299
        %4301 = vmatmul.f32.gmra.mxu0 %v4244
        %v4302 = vpop.f32.mrf.mxu0
        %v4303 = vadd.f32 0.0, %v4302
        %4304 = vmatmul.f32.gmra.mxu0 %v4245
        %v4305 = vpop.f32.mrf.mxu0
        %v4306 = vadd.f32 0.0, %v4305
        %4307 = vmatmul.f32.gmra.mxu0 %v4246
        %v4308 = vpop.f32.mrf.mxu0
        %v4309 = vadd.f32 0.0, %v4308
        %4310 = vmatmul.f32.gmra.mxu0 %v4247
        %v4311 = vpop.f32.mrf.mxu0
        %v4312 = vadd.f32 0.0, %v4311
        %4313 = vmatmul.f32.gmra.mxu0 %v4248
        %v4314 = vpop.f32.mrf.mxu0
        %v4315 = vadd.f32 0.0, %v4314
        %4316 = vmatmul.f32.gmra.mxu0 %v4249
        %v4317 = vpop.f32.mrf.mxu0
        %v4318 = vadd.f32 0.0, %v4317
        %4319 = vmatmul.f32.gmra.mxu0 %v4250
        %v4320 = vpop.f32.mrf.mxu0
        %v4321 = vadd.f32 0.0, %v4320
        %4322 = vmatmul.f32.gmra.mxu0 %v4251
        %v4323 = vpop.f32.mrf.mxu0
        %v4324 = vadd.f32 0.0, %v4323
        %4325 = vmatmul.f32.gmra.mxu0 %v4252
        %v4326 = vpop.f32.mrf.mxu0
        %v4327 = vadd.f32 0.0, %v4326
        %4328 = vmatmul.f32.gmra.mxu0 %v4253
        %v4329 = vpop.f32.mrf.mxu0
        %v4330 = vadd.f32 0.0, %v4329
        %4331 = vmatmul.f32.gmra.mxu0 %v4254
        %v4332 = vpop.f32.mrf.mxu0
        %v4333 = vadd.f32 0.0, %v4332
        %4334 = vmatmul.f32.gmra.mxu0 %v4255
        %v4335 = vpop.f32.mrf.mxu0
        %v4336 = vadd.f32 0.0, %v4335
        %4337 = vmatmul.f32.gmra.mxu0 %v4256
        %v4338 = vpop.f32.mrf.mxu0
        %v4339 = vadd.f32 0.0, %v4338
        %4340 = vmatmul.f32.gmra.mxu0 %v4257
        %v4341 = vpop.f32.mrf.mxu0
        %v4342 = vadd.f32 0.0, %v4341
        %4343 = vmatmul.f32.gmra.mxu0 %v4258
        %v4344 = vpop.f32.mrf.mxu0
        %4345 = vdwg.mxu0
        %4346 = vmatpush.msra.mxu0 %v4240
        %4347 = vmatpush.msra.mxu0 %v4239
        %4348 = vmatpush.msra.mxu0 %v4238
        %4349 = vmatpush.msra.mxu0 %v4237
        %4350 = vmatpush.msra.mxu0 %v4236
        %4351 = vmatpush.msra.mxu0 %v4235
        %4352 = vmatpush.msra.mxu0 %v4234
        %4353 = vmatpush.msra.mxu0 %v4233
        %4354 = vmatpush.msra.mxu0 %v4232
        %4355 = vmatpush.msra.mxu0 %v4231
        %4356 = vmatpush.msra.mxu0 %v4230
        %4357 = vmatpush.msra.mxu0 %v4229
        %4358 = vmatpush.msra.mxu0 %v4228
        %4359 = vmatpush.msra.mxu0 %v4227
        %4360 = vmatpush.msra.mxu0 %v4226
        %4361 = vmatpush.msra.mxu0 %v4225
        %4362 = vmatmul.f32.gmra.mxu0 %v4207
        %v4363 = vpop.f32.mrf.mxu0
        %v4364 = vadd.f32 %v4294, %v4363
        %4365 = vmatmul.f32.gmra.mxu0 %v4208
        %v4366 = vpop.f32.mrf.mxu0
        %v4367 = vadd.f32 %v4297, %v4366
        %4368 = vmatmul.f32.gmra.mxu0 %v4209
        %v4369 = vpop.f32.mrf.mxu0
        %v4370 = vadd.f32 %v4300, %v4369
        %4371 = vmatmul.f32.gmra.mxu0 %v4210
        %v4372 = vpop.f32.mrf.mxu0
        %v4373 = vadd.f32 %v4303, %v4372
        %4374 = vmatmul.f32.gmra.mxu0 %v4211
        %v4375 = vpop.f32.mrf.mxu0
        %v4376 = vadd.f32 %v4306, %v4375
        %4377 = vmatmul.f32.gmra.mxu0 %v4212
        %v4378 = vpop.f32.mrf.mxu0
        %v4379 = vadd.f32 %v4309, %v4378
        %4380 = vmatmul.f32.gmra.mxu0 %v4213
        %v4381 = vpop.f32.mrf.mxu0
        %v4382 = vadd.f32 %v4312, %v4381
        %4383 = vmatmul.f32.gmra.mxu0 %v4214
        %v4384 = vpop.f32.mrf.mxu0
        %v4385 = vadd.f32 %v4315, %v4384
        %4386 = vmatmul.f32.gmra.mxu0 %v4215
        %v4387 = vpop.f32.mrf.mxu0
        %v4388 = vadd.f32 %v4318, %v4387
        %4389 = vmatmul.f32.gmra.mxu0 %v4216
        %v4390 = vpop.f32.mrf.mxu0
        %v4391 = vadd.f32 %v4321, %v4390
        %4392 = vmatmul.f32.gmra.mxu0 %v4217
        %v4393 = vpop.f32.mrf.mxu0
        %v4394 = vadd.f32 %v4324, %v4393
        %4395 = vmatmul.f32.gmra.mxu0 %v4218
        %v4396 = vpop.f32.mrf.mxu0
        %v4397 = vadd.f32 %v4327, %v4396
        %4398 = vmatmul.f32.gmra.mxu0 %v4219
        %v4399 = vpop.f32.mrf.mxu0
        %v4400 = vadd.f32 %v4330, %v4399
        %4401 = vmatmul.f32.gmra.mxu0 %v4220
        %v4402 = vpop.f32.mrf.mxu0
        %v4403 = vadd.f32 %v4333, %v4402
        %4404 = vmatmul.f32.gmra.mxu0 %v4221
        %v4405 = vpop.f32.mrf.mxu0
        %v4406 = vadd.f32 %v4336, %v4405
        %4407 = vmatmul.f32.gmra.mxu0 %v4222
        %v4408 = vpop.f32.mrf.mxu0
        %v4409 = vadd.f32 %v4339, %v4408
        %4410 = vmatmul.f32.gmra.mxu0 %v4223
        %v4411 = vpop.f32.mrf.mxu0
        %v4412 = vadd.f32 %v4342, %v4411
        %4413 = vmatmul.f32.gmra.mxu0 %v4224
        %v4414 = vpop.f32.mrf.mxu0
        %4415 = vdwg.mxu0
        %v4416 = vld [vmem:[#allocation2 + $0x2] sm:$0xff]
        %v4417 = vld [vmem:[#allocation2 + $0xa] sm:$0xff]
        %v4418 = vld [vmem:[#allocation2 + $0x12] sm:$0xff]
        %v4419 = vld [vmem:[#allocation2 + $0x1a] sm:$0xff]
        %v4420 = vld [vmem:[#allocation2 + $0x22] sm:$0xff]
        %v4421 = vld [vmem:[#allocation2 + $0x2a] sm:$0xff]
        %v4422 = vld [vmem:[#allocation2 + $0x32] sm:$0xff]
        %v4423 = vld [vmem:[#allocation2 + $0x3a] sm:$0xff]
        %v4424 = vld [vmem:[#allocation2 + $0x42] sm:$0xff]
        %v4425 = vld [vmem:[#allocation2 + $0x4a] sm:$0xff]
        %v4426 = vld [vmem:[#allocation2 + $0x52] sm:$0xff]
        %v4427 = vld [vmem:[#allocation2 + $0x5a] sm:$0xff]
        %v4428 = vld [vmem:[#allocation2 + $0x62] sm:$0xff]
        %v4429 = vld [vmem:[#allocation2 + $0x6a] sm:$0xff]
        %v4430 = vld [vmem:[#allocation2 + $0x72] sm:$0xff]
        %v4431 = vld [vmem:[#allocation2 + $0x7a] sm:$0xff]
        %v4432 = vld [vmem:[#allocation2 + $0x82] sm:$0xff]
        %v4433 = vld [vmem:[#allocation2 + $0x8a] sm:$0xf]
        %s4434 = scalar_lea.vmem %s3, 256
        %v4435 = vld [vmem:[%s4434] sm:$0xff]
        %v4436 = vld [vmem:[%s4434 + $0x8] sm:$0xff]
        %v4437 = vld [vmem:[%s4434 + $0x10] sm:$0xff]
        %v4438 = vld [vmem:[%s4434 + $0x18] sm:$0xff]
        %v4439 = vld [vmem:[%s4434 + $0x20] sm:$0xff]
        %v4440 = vld [vmem:[%s4434 + $0x28] sm:$0xff]
        %v4441 = vld [vmem:[%s4434 + $0x30] sm:$0xff]
        %v4442 = vld [vmem:[%s4434 + $0x38] sm:$0xff]
        %v4443 = vld [vmem:[%s4434 + $0x40] sm:$0xff]
        %v4444 = vld [vmem:[%s4434 + $0x48] sm:$0xff]
        %v4445 = vld [vmem:[%s4434 + $0x50] sm:$0xff]
        %v4446 = vld [vmem:[%s4434 + $0x58] sm:$0xff]
        %v4447 = vld [vmem:[%s4434 + $0x60] sm:$0xff]
        %v4448 = vld [vmem:[%s4434 + $0x68] sm:$0xff]
        %v4449 = vld [vmem:[%s4434 + $0x70] sm:$0xff]
        %v4450 = vld [vmem:[%s4434 + $0x78] sm:$0xff]
        %4451 = vmatpush.msra.mxu0 %v4450
        %4452 = vmatpush.msra.mxu0 %v4449
        %4453 = vmatpush.msra.mxu0 %v4448
        %4454 = vmatpush.msra.mxu0 %v4447
        %4455 = vmatpush.msra.mxu0 %v4446
        %4456 = vmatpush.msra.mxu0 %v4445
        %4457 = vmatpush.msra.mxu0 %v4444
        %4458 = vmatpush.msra.mxu0 %v4443
        %4459 = vmatpush.msra.mxu0 %v4442
        %4460 = vmatpush.msra.mxu0 %v4441
        %4461 = vmatpush.msra.mxu0 %v4440
        %4462 = vmatpush.msra.mxu0 %v4439
        %4463 = vmatpush.msra.mxu0 %v4438
        %4464 = vmatpush.msra.mxu0 %v4437
        %4465 = vmatpush.msra.mxu0 %v4436
        %4466 = vmatpush.msra.mxu0 %v4435
        %4467 = vmatmul.f32.gmra.mxu0 %v4416
        %v4468 = vpop.f32.mrf.mxu0
        %v4469 = vadd.f32 0.0, %v4468
        %4470 = vmatmul.f32.gmra.mxu0 %v4417
        %v4471 = vpop.f32.mrf.mxu0
        %v4472 = vadd.f32 0.0, %v4471
        %4473 = vmatmul.f32.gmra.mxu0 %v4418
        %v4474 = vpop.f32.mrf.mxu0
        %v4475 = vadd.f32 0.0, %v4474
        %4476 = vmatmul.f32.gmra.mxu0 %v4419
        %v4477 = vpop.f32.mrf.mxu0
        %v4478 = vadd.f32 0.0, %v4477
        %4479 = vmatmul.f32.gmra.mxu0 %v4420
        %v4480 = vpop.f32.mrf.mxu0
        %v4481 = vadd.f32 0.0, %v4480
        %4482 = vmatmul.f32.gmra.mxu0 %v4421
        %v4483 = vpop.f32.mrf.mxu0
        %v4484 = vadd.f32 0.0, %v4483
        %4485 = vmatmul.f32.gmra.mxu0 %v4422
        %v4486 = vpop.f32.mrf.mxu0
        %v4487 = vadd.f32 0.0, %v4486
        %4488 = vmatmul.f32.gmra.mxu0 %v4423
        %v4489 = vpop.f32.mrf.mxu0
        %v4490 = vadd.f32 0.0, %v4489
        %4491 = vmatmul.f32.gmra.mxu0 %v4424
        %v4492 = vpop.f32.mrf.mxu0
        %v4493 = vadd.f32 0.0, %v4492
        %4494 = vmatmul.f32.gmra.mxu0 %v4425
        %v4495 = vpop.f32.mrf.mxu0
        %v4496 = vadd.f32 0.0, %v4495
        %4497 = vmatmul.f32.gmra.mxu0 %v4426
        %v4498 = vpop.f32.mrf.mxu0
        %v4499 = vadd.f32 0.0, %v4498
        %4500 = vmatmul.f32.gmra.mxu0 %v4427
        %v4501 = vpop.f32.mrf.mxu0
        %v4502 = vadd.f32 0.0, %v4501
        %4503 = vmatmul.f32.gmra.mxu0 %v4428
        %v4504 = vpop.f32.mrf.mxu0
        %v4505 = vadd.f32 0.0, %v4504
        %4506 = vmatmul.f32.gmra.mxu0 %v4429
        %v4507 = vpop.f32.mrf.mxu0
        %v4508 = vadd.f32 0.0, %v4507
        %4509 = vmatmul.f32.gmra.mxu0 %v4430
        %v4510 = vpop.f32.mrf.mxu0
        %v4511 = vadd.f32 0.0, %v4510
        %4512 = vmatmul.f32.gmra.mxu0 %v4431
        %v4513 = vpop.f32.mrf.mxu0
        %v4514 = vadd.f32 0.0, %v4513
        %4515 = vmatmul.f32.gmra.mxu0 %v4432
        %v4516 = vpop.f32.mrf.mxu0
        %v4517 = vadd.f32 0.0, %v4516
        %4518 = vmatmul.f32.gmra.mxu0 %v4433
        %v4519 = vpop.f32.mrf.mxu0
        %4520 = vdwg.mxu0
        %v4521 = vadd.f32 %v4364, %v4469
        %v4522 = vadd.f32 %v4367, %v4472
        %v4523 = vadd.f32 %v4370, %v4475
        %v4524 = vadd.f32 %v4373, %v4478
        %v4525 = vadd.f32 %v4376, %v4481
        %v4526 = vadd.f32 %v4379, %v4484
        %v4527 = vadd.f32 %v4382, %v4487
        %v4528 = vadd.f32 %v4385, %v4490
        %v4529 = vadd.f32 %v4388, %v4493
        %v4530 = vadd.f32 %v4391, %v4496
        %v4531 = vadd.f32 %v4394, %v4499
        %v4532 = vadd.f32 %v4397, %v4502
        %v4533 = vadd.f32 %v4400, %v4505
        %v4534 = vadd.f32 %v4403, %v4508
        %v4535 = vadd.f32 %v4406, %v4511
        %v4536 = vadd.f32 %v4409, %v4514
        %v4537 = vadd.f32 %v4412, %v4517
        %v4538 = vld [vmem:[#allocation2 + $0x3] sm:$0xff]
        %v4539 = vld [vmem:[#allocation2 + $0xb] sm:$0xff]
        %v4540 = vld [vmem:[#allocation2 + $0x13] sm:$0xff]
        %v4541 = vld [vmem:[#allocation2 + $0x1b] sm:$0xff]
        %v4542 = vld [vmem:[#allocation2 + $0x23] sm:$0xff]
        %v4543 = vld [vmem:[#allocation2 + $0x2b] sm:$0xff]
        %v4544 = vld [vmem:[#allocation2 + $0x33] sm:$0xff]
        %v4545 = vld [vmem:[#allocation2 + $0x3b] sm:$0xff]
        %v4546 = vld [vmem:[#allocation2 + $0x43] sm:$0xff]
        %v4547 = vld [vmem:[#allocation2 + $0x4b] sm:$0xff]
        %v4548 = vld [vmem:[#allocation2 + $0x53] sm:$0xff]
        %v4549 = vld [vmem:[#allocation2 + $0x5b] sm:$0xff]
        %v4550 = vld [vmem:[#allocation2 + $0x63] sm:$0xff]
        %v4551 = vld [vmem:[#allocation2 + $0x6b] sm:$0xff]
        %v4552 = vld [vmem:[#allocation2 + $0x73] sm:$0xff]
        %v4553 = vld [vmem:[#allocation2 + $0x7b] sm:$0xff]
        %v4554 = vld [vmem:[#allocation2 + $0x83] sm:$0xff]
        %v4555 = vld [vmem:[#allocation2 + $0x8b] sm:$0xf]
        %s4556 = scalar_lea.vmem %s3, 384
        %v4557 = vld [vmem:[%s4556] sm:$0xff]
        %v4558 = vld [vmem:[%s4556 + $0x8] sm:$0xff]
        %v4559 = vld [vmem:[%s4556 + $0x10] sm:$0xff]
        %v4560 = vld [vmem:[%s4556 + $0x18] sm:$0xff]
        %v4561 = vld [vmem:[%s4556 + $0x20] sm:$0xff]
        %v4562 = vld [vmem:[%s4556 + $0x28] sm:$0xff]
        %v4563 = vld [vmem:[%s4556 + $0x30] sm:$0xff]
        %v4564 = vld [vmem:[%s4556 + $0x38] sm:$0xff]
        %v4565 = vld [vmem:[%s4556 + $0x40] sm:$0xff]
        %v4566 = vld [vmem:[%s4556 + $0x48] sm:$0xff]
        %v4567 = vld [vmem:[%s4556 + $0x50] sm:$0xff]
        %v4568 = vld [vmem:[%s4556 + $0x58] sm:$0xff]
        %v4569 = vld [vmem:[%s4556 + $0x60] sm:$0xff]
        %v4570 = vld [vmem:[%s4556 + $0x68] sm:$0xff]
        %v4571 = vld [vmem:[%s4556 + $0x70] sm:$0xff]
        %v4572 = vld [vmem:[%s4556 + $0x78] sm:$0xff]
        %4573 = vmatpush.msra.mxu0 %v4572
        %4574 = vmatpush.msra.mxu0 %v4571
        %4575 = vmatpush.msra.mxu0 %v4570
        %4576 = vmatpush.msra.mxu0 %v4569
        %4577 = vmatpush.msra.mxu0 %v4568
        %4578 = vmatpush.msra.mxu0 %v4567
        %4579 = vmatpush.msra.mxu0 %v4566
        %4580 = vmatpush.msra.mxu0 %v4565
        %4581 = vmatpush.msra.mxu0 %v4564
        %4582 = vmatpush.msra.mxu0 %v4563
        %4583 = vmatpush.msra.mxu0 %v4562
        %4584 = vmatpush.msra.mxu0 %v4561
        %4585 = vmatpush.msra.mxu0 %v4560
        %4586 = vmatpush.msra.mxu0 %v4559
        %4587 = vmatpush.msra.mxu0 %v4558
        %4588 = vmatpush.msra.mxu0 %v4557
        %4589 = vmatmul.f32.gmra.mxu0 %v4538
        %v4590 = vpop.f32.mrf.mxu0
        %v4591 = vadd.f32 0.0, %v4590
        %4592 = vmatmul.f32.gmra.mxu0 %v4539
        %v4593 = vpop.f32.mrf.mxu0
        %v4594 = vadd.f32 0.0, %v4593
        %4595 = vmatmul.f32.gmra.mxu0 %v4540
        %v4596 = vpop.f32.mrf.mxu0
        %v4597 = vadd.f32 0.0, %v4596
        %4598 = vmatmul.f32.gmra.mxu0 %v4541
        %v4599 = vpop.f32.mrf.mxu0
        %v4600 = vadd.f32 0.0, %v4599
        %4601 = vmatmul.f32.gmra.mxu0 %v4542
        %v4602 = vpop.f32.mrf.mxu0
        %v4603 = vadd.f32 0.0, %v4602
        %4604 = vmatmul.f32.gmra.mxu0 %v4543
        %v4605 = vpop.f32.mrf.mxu0
        %v4606 = vadd.f32 0.0, %v4605
        %4607 = vmatmul.f32.gmra.mxu0 %v4544
        %v4608 = vpop.f32.mrf.mxu0
        %v4609 = vadd.f32 0.0, %v4608
        %4610 = vmatmul.f32.gmra.mxu0 %v4545
        %v4611 = vpop.f32.mrf.mxu0
        %v4612 = vadd.f32 0.0, %v4611
        %4613 = vmatmul.f32.gmra.mxu0 %v4546
        %v4614 = vpop.f32.mrf.mxu0
        %v4615 = vadd.f32 0.0, %v4614
        %4616 = vmatmul.f32.gmra.mxu0 %v4547
        %v4617 = vpop.f32.mrf.mxu0
        %v4618 = vadd.f32 0.0, %v4617
        %4619 = vmatmul.f32.gmra.mxu0 %v4548
        %v4620 = vpop.f32.mrf.mxu0
        %v4621 = vadd.f32 0.0, %v4620
        %4622 = vmatmul.f32.gmra.mxu0 %v4549
        %v4623 = vpop.f32.mrf.mxu0
        %v4624 = vadd.f32 0.0, %v4623
        %4625 = vmatmul.f32.gmra.mxu0 %v4550
        %v4626 = vpop.f32.mrf.mxu0
        %v4627 = vadd.f32 0.0, %v4626
        %4628 = vmatmul.f32.gmra.mxu0 %v4551
        %v4629 = vpop.f32.mrf.mxu0
        %v4630 = vadd.f32 0.0, %v4629
        %4631 = vmatmul.f32.gmra.mxu0 %v4552
        %v4632 = vpop.f32.mrf.mxu0
        %v4633 = vadd.f32 0.0, %v4632
        %4634 = vmatmul.f32.gmra.mxu0 %v4553
        %v4635 = vpop.f32.mrf.mxu0
        %v4636 = vadd.f32 0.0, %v4635
        %4637 = vmatmul.f32.gmra.mxu0 %v4554
        %v4638 = vpop.f32.mrf.mxu0
        %v4639 = vadd.f32 0.0, %v4638
        %4640 = vmatmul.f32.gmra.mxu0 %v4555
        %v4641 = vpop.f32.mrf.mxu0
        %4642 = vdwg.mxu0
        %v4643 = vadd.f32 %v4521, %v4591
        %v4644 = vadd.f32 %v4522, %v4594
        %v4645 = vadd.f32 %v4523, %v4597
        %v4646 = vadd.f32 %v4524, %v4600
        %v4647 = vadd.f32 %v4525, %v4603
        %v4648 = vadd.f32 %v4526, %v4606
        %v4649 = vadd.f32 %v4527, %v4609
        %v4650 = vadd.f32 %v4528, %v4612
        %v4651 = vadd.f32 %v4529, %v4615
        %v4652 = vadd.f32 %v4530, %v4618
        %v4653 = vadd.f32 %v4531, %v4621
        %v4654 = vadd.f32 %v4532, %v4624
        %v4655 = vadd.f32 %v4533, %v4627
        %v4656 = vadd.f32 %v4534, %v4630
        %v4657 = vadd.f32 %v4535, %v4633
        %v4658 = vadd.f32 %v4536, %v4636
        %v4659 = vadd.f32 %v4537, %v4639
        %v4660 = vld [vmem:[#allocation2 + $0x4] sm:$0xff]
        %v4661 = vld [vmem:[#allocation2 + $0xc] sm:$0xff]
        %v4662 = vld [vmem:[#allocation2 + $0x14] sm:$0xff]
        %v4663 = vld [vmem:[#allocation2 + $0x1c] sm:$0xff]
        %v4664 = vld [vmem:[#allocation2 + $0x24] sm:$0xff]
        %v4665 = vld [vmem:[#allocation2 + $0x2c] sm:$0xff]
        %v4666 = vld [vmem:[#allocation2 + $0x34] sm:$0xff]
        %v4667 = vld [vmem:[#allocation2 + $0x3c] sm:$0xff]
        %v4668 = vld [vmem:[#allocation2 + $0x44] sm:$0xff]
        %v4669 = vld [vmem:[#allocation2 + $0x4c] sm:$0xff]
        %v4670 = vld [vmem:[#allocation2 + $0x54] sm:$0xff]
        %v4671 = vld [vmem:[#allocation2 + $0x5c] sm:$0xff]
        %v4672 = vld [vmem:[#allocation2 + $0x64] sm:$0xff]
        %v4673 = vld [vmem:[#allocation2 + $0x6c] sm:$0xff]
        %v4674 = vld [vmem:[#allocation2 + $0x74] sm:$0xff]
        %v4675 = vld [vmem:[#allocation2 + $0x7c] sm:$0xff]
        %v4676 = vld [vmem:[#allocation2 + $0x84] sm:$0xff]
        %v4677 = vld [vmem:[#allocation2 + $0x8c] sm:$0xf]
        %s4678 = scalar_lea.vmem %s3, 512
        %v4679 = vld [vmem:[%s4678] sm:$0xff]
        %v4680 = vld [vmem:[%s4678 + $0x8] sm:$0xff]
        %v4681 = vld [vmem:[%s4678 + $0x10] sm:$0xff]
        %v4682 = vld [vmem:[%s4678 + $0x18] sm:$0xff]
        %v4683 = vld [vmem:[%s4678 + $0x20] sm:$0xff]
        %v4684 = vld [vmem:[%s4678 + $0x28] sm:$0xff]
        %v4685 = vld [vmem:[%s4678 + $0x30] sm:$0xff]
        %v4686 = vld [vmem:[%s4678 + $0x38] sm:$0xff]
        %v4687 = vld [vmem:[%s4678 + $0x40] sm:$0xff]
        %v4688 = vld [vmem:[%s4678 + $0x48] sm:$0xff]
        %v4689 = vld [vmem:[%s4678 + $0x50] sm:$0xff]
        %v4690 = vld [vmem:[%s4678 + $0x58] sm:$0xff]
        %v4691 = vld [vmem:[%s4678 + $0x60] sm:$0xff]
        %v4692 = vld [vmem:[%s4678 + $0x68] sm:$0xff]
        %v4693 = vld [vmem:[%s4678 + $0x70] sm:$0xff]
        %v4694 = vld [vmem:[%s4678 + $0x78] sm:$0xff]
        %4695 = vmatpush.msra.mxu0 %v4694
        %4696 = vmatpush.msra.mxu0 %v4693
        %4697 = vmatpush.msra.mxu0 %v4692
        %4698 = vmatpush.msra.mxu0 %v4691
        %4699 = vmatpush.msra.mxu0 %v4690
        %4700 = vmatpush.msra.mxu0 %v4689
        %4701 = vmatpush.msra.mxu0 %v4688
        %4702 = vmatpush.msra.mxu0 %v4687
        %4703 = vmatpush.msra.mxu0 %v4686
        %4704 = vmatpush.msra.mxu0 %v4685
        %4705 = vmatpush.msra.mxu0 %v4684
        %4706 = vmatpush.msra.mxu0 %v4683
        %4707 = vmatpush.msra.mxu0 %v4682
        %4708 = vmatpush.msra.mxu0 %v4681
        %4709 = vmatpush.msra.mxu0 %v4680
        %4710 = vmatpush.msra.mxu0 %v4679
        %4711 = vmatmul.f32.gmra.mxu0 %v4660
        %v4712 = vpop.f32.mrf.mxu0
        %v4713 = vadd.f32 0.0, %v4712
        %4714 = vmatmul.f32.gmra.mxu0 %v4661
        %v4715 = vpop.f32.mrf.mxu0
        %v4716 = vadd.f32 0.0, %v4715
        %4717 = vmatmul.f32.gmra.mxu0 %v4662
        %v4718 = vpop.f32.mrf.mxu0
        %v4719 = vadd.f32 0.0, %v4718
        %4720 = vmatmul.f32.gmra.mxu0 %v4663
        %v4721 = vpop.f32.mrf.mxu0
        %v4722 = vadd.f32 0.0, %v4721
        %4723 = vmatmul.f32.gmra.mxu0 %v4664
        %v4724 = vpop.f32.mrf.mxu0
        %v4725 = vadd.f32 0.0, %v4724
        %4726 = vmatmul.f32.gmra.mxu0 %v4665
        %v4727 = vpop.f32.mrf.mxu0
        %v4728 = vadd.f32 0.0, %v4727
        %4729 = vmatmul.f32.gmra.mxu0 %v4666
        %v4730 = vpop.f32.mrf.mxu0
        %v4731 = vadd.f32 0.0, %v4730
        %4732 = vmatmul.f32.gmra.mxu0 %v4667
        %v4733 = vpop.f32.mrf.mxu0
        %v4734 = vadd.f32 0.0, %v4733
        %4735 = vmatmul.f32.gmra.mxu0 %v4668
        %v4736 = vpop.f32.mrf.mxu0
        %v4737 = vadd.f32 0.0, %v4736
        %4738 = vmatmul.f32.gmra.mxu0 %v4669
        %v4739 = vpop.f32.mrf.mxu0
        %v4740 = vadd.f32 0.0, %v4739
        %4741 = vmatmul.f32.gmra.mxu0 %v4670
        %v4742 = vpop.f32.mrf.mxu0
        %v4743 = vadd.f32 0.0, %v4742
        %4744 = vmatmul.f32.gmra.mxu0 %v4671
        %v4745 = vpop.f32.mrf.mxu0
        %v4746 = vadd.f32 0.0, %v4745
        %4747 = vmatmul.f32.gmra.mxu0 %v4672
        %v4748 = vpop.f32.mrf.mxu0
        %v4749 = vadd.f32 0.0, %v4748
        %4750 = vmatmul.f32.gmra.mxu0 %v4673
        %v4751 = vpop.f32.mrf.mxu0
        %v4752 = vadd.f32 0.0, %v4751
        %4753 = vmatmul.f32.gmra.mxu0 %v4674
        %v4754 = vpop.f32.mrf.mxu0
        %v4755 = vadd.f32 0.0, %v4754
        %4756 = vmatmul.f32.gmra.mxu0 %v4675
        %v4757 = vpop.f32.mrf.mxu0
        %v4758 = vadd.f32 0.0, %v4757
        %4759 = vmatmul.f32.gmra.mxu0 %v4676
        %v4760 = vpop.f32.mrf.mxu0
        %v4761 = vadd.f32 0.0, %v4760
        %4762 = vmatmul.f32.gmra.mxu0 %v4677
        %v4763 = vpop.f32.mrf.mxu0
        %4764 = vdwg.mxu0
        %v4765 = vadd.f32 %v4643, %v4713
        %v4766 = vadd.f32 %v4644, %v4716
        %v4767 = vadd.f32 %v4645, %v4719
        %v4768 = vadd.f32 %v4646, %v4722
        %v4769 = vadd.f32 %v4647, %v4725
        %v4770 = vadd.f32 %v4648, %v4728
        %v4771 = vadd.f32 %v4649, %v4731
        %v4772 = vadd.f32 %v4650, %v4734
        %v4773 = vadd.f32 %v4651, %v4737
        %v4774 = vadd.f32 %v4652, %v4740
        %v4775 = vadd.f32 %v4653, %v4743
        %v4776 = vadd.f32 %v4654, %v4746
        %v4777 = vadd.f32 %v4655, %v4749
        %v4778 = vadd.f32 %v4656, %v4752
        %v4779 = vadd.f32 %v4657, %v4755
        %v4780 = vadd.f32 %v4658, %v4758
        %v4781 = vadd.f32 %v4659, %v4761
        %v4782 = vld [vmem:[#allocation2 + $0xe] sm:$0xff]
        %v4783 = vld [vmem:[#allocation2 + $0x16] sm:$0xff]
        %v4784 = vld [vmem:[#allocation2 + $0x1e] sm:$0xff]
        %v4785 = vld [vmem:[#allocation2 + $0x26] sm:$0xff]
        %v4786 = vld [vmem:[#allocation2 + $0x2e] sm:$0xff]
        %v4787 = vld [vmem:[#allocation2 + $0x36] sm:$0xff]
        %v4788 = vld [vmem:[#allocation2 + $0x3e] sm:$0xff]
        %v4789 = vld [vmem:[#allocation2 + $0x46] sm:$0xff]
        %v4790 = vld [vmem:[#allocation2 + $0x4e] sm:$0xff]
        %v4791 = vld [vmem:[#allocation2 + $0x56] sm:$0xff]
        %v4792 = vld [vmem:[#allocation2 + $0x5e] sm:$0xff]
        %v4793 = vld [vmem:[#allocation2 + $0x66] sm:$0xff]
        %v4794 = vld [vmem:[#allocation2 + $0x6e] sm:$0xff]
        %v4795 = vld [vmem:[#allocation2 + $0x76] sm:$0xff]
        %v4796 = vld [vmem:[#allocation2 + $0x7e] sm:$0xff]
        %v4797 = vld [vmem:[#allocation2 + $0x86] sm:$0xff]
        %v4798 = vld [vmem:[#allocation2 + $0x8e] sm:$0xff]
        %v4799 = vld [vmem:[#allocation2 + $0x96] sm:$0xf]
        %s4800 = scalar_lea.vmem %s3, 640
        %v4801 = vld [vmem:[%s4800] sm:$0xff]
        %v4802 = vld [vmem:[%s4800 + $0x8] sm:$0xff]
        %v4803 = vld [vmem:[%s4800 + $0x10] sm:$0xff]
        %v4804 = vld [vmem:[%s4800 + $0x18] sm:$0xff]
        %v4805 = vld [vmem:[%s4800 + $0x20] sm:$0xff]
        %v4806 = vld [vmem:[%s4800 + $0x28] sm:$0xff]
        %v4807 = vld [vmem:[%s4800 + $0x30] sm:$0xff]
        %v4808 = vld [vmem:[%s4800 + $0x38] sm:$0xff]
        %v4809 = vld [vmem:[%s4800 + $0x40] sm:$0xff]
        %v4810 = vld [vmem:[%s4800 + $0x48] sm:$0xff]
        %v4811 = vld [vmem:[%s4800 + $0x50] sm:$0xff]
        %v4812 = vld [vmem:[%s4800 + $0x58] sm:$0xff]
        %v4813 = vld [vmem:[%s4800 + $0x60] sm:$0xff]
        %v4814 = vld [vmem:[%s4800 + $0x68] sm:$0xff]
        %v4815 = vld [vmem:[%s4800 + $0x70] sm:$0xff]
        %v4816 = vld [vmem:[%s4800 + $0x78] sm:$0xff]
        %4817 = vmatpush.msra.mxu0 %v4816
        %4818 = vmatpush.msra.mxu0 %v4815
        %4819 = vmatpush.msra.mxu0 %v4814
        %4820 = vmatpush.msra.mxu0 %v4813
        %4821 = vmatpush.msra.mxu0 %v4812
        %4822 = vmatpush.msra.mxu0 %v4811
        %4823 = vmatpush.msra.mxu0 %v4810
        %4824 = vmatpush.msra.mxu0 %v4809
        %4825 = vmatpush.msra.mxu0 %v4808
        %4826 = vmatpush.msra.mxu0 %v4807
        %4827 = vmatpush.msra.mxu0 %v4806
        %4828 = vmatpush.msra.mxu0 %v4805
        %4829 = vmatpush.msra.mxu0 %v4804
        %4830 = vmatpush.msra.mxu0 %v4803
        %4831 = vmatpush.msra.mxu0 %v4802
        %4832 = vmatpush.msra.mxu0 %v4801
        %4833 = vmatmul.f32.gmra.mxu0 %v4782
        %v4834 = vpop.f32.mrf.mxu0
        %v4835 = vadd.f32 0.0, %v4834
        %4836 = vmatmul.f32.gmra.mxu0 %v4783
        %v4837 = vpop.f32.mrf.mxu0
        %v4838 = vadd.f32 0.0, %v4837
        %4839 = vmatmul.f32.gmra.mxu0 %v4784
        %v4840 = vpop.f32.mrf.mxu0
        %v4841 = vadd.f32 0.0, %v4840
        %4842 = vmatmul.f32.gmra.mxu0 %v4785
        %v4843 = vpop.f32.mrf.mxu0
        %v4844 = vadd.f32 0.0, %v4843
        %4845 = vmatmul.f32.gmra.mxu0 %v4786
        %v4846 = vpop.f32.mrf.mxu0
        %v4847 = vadd.f32 0.0, %v4846
        %4848 = vmatmul.f32.gmra.mxu0 %v4787
        %v4849 = vpop.f32.mrf.mxu0
        %v4850 = vadd.f32 0.0, %v4849
        %4851 = vmatmul.f32.gmra.mxu0 %v4788
        %v4852 = vpop.f32.mrf.mxu0
        %v4853 = vadd.f32 0.0, %v4852
        %4854 = vmatmul.f32.gmra.mxu0 %v4789
        %v4855 = vpop.f32.mrf.mxu0
        %v4856 = vadd.f32 0.0, %v4855
        %4857 = vmatmul.f32.gmra.mxu0 %v4790
        %v4858 = vpop.f32.mrf.mxu0
        %v4859 = vadd.f32 0.0, %v4858
        %4860 = vmatmul.f32.gmra.mxu0 %v4791
        %v4861 = vpop.f32.mrf.mxu0
        %v4862 = vadd.f32 0.0, %v4861
        %4863 = vmatmul.f32.gmra.mxu0 %v4792
        %v4864 = vpop.f32.mrf.mxu0
        %v4865 = vadd.f32 0.0, %v4864
        %4866 = vmatmul.f32.gmra.mxu0 %v4793
        %v4867 = vpop.f32.mrf.mxu0
        %v4868 = vadd.f32 0.0, %v4867
        %4869 = vmatmul.f32.gmra.mxu0 %v4794
        %v4870 = vpop.f32.mrf.mxu0
        %v4871 = vadd.f32 0.0, %v4870
        %4872 = vmatmul.f32.gmra.mxu0 %v4795
        %v4873 = vpop.f32.mrf.mxu0
        %v4874 = vadd.f32 0.0, %v4873
        %4875 = vmatmul.f32.gmra.mxu0 %v4796
        %v4876 = vpop.f32.mrf.mxu0
        %v4877 = vadd.f32 0.0, %v4876
        %4878 = vmatmul.f32.gmra.mxu0 %v4797
        %v4879 = vpop.f32.mrf.mxu0
        %v4880 = vadd.f32 0.0, %v4879
        %4881 = vmatmul.f32.gmra.mxu0 %v4798
        %v4882 = vpop.f32.mrf.mxu0
        %v4883 = vadd.f32 0.0, %v4882
        %4884 = vmatmul.f32.gmra.mxu0 %v4799
        %v4885 = vpop.f32.mrf.mxu0
        %4886 = vdwg.mxu0
        %v4887 = vadd.f32 %v4765, %v4835
        %v4888 = vadd.f32 %v4766, %v4838
        %v4889 = vadd.f32 %v4767, %v4841
        %v4890 = vadd.f32 %v4768, %v4844
        %v4891 = vadd.f32 %v4769, %v4847
        %v4892 = vadd.f32 %v4770, %v4850
        %v4893 = vadd.f32 %v4771, %v4853
        %v4894 = vadd.f32 %v4772, %v4856
        %v4895 = vadd.f32 %v4773, %v4859
        %v4896 = vadd.f32 %v4774, %v4862
        %v4897 = vadd.f32 %v4775, %v4865
        %v4898 = vadd.f32 %v4776, %v4868
        %v4899 = vadd.f32 %v4777, %v4871
        %v4900 = vadd.f32 %v4778, %v4874
        %v4901 = vadd.f32 %v4779, %v4877
        %v4902 = vadd.f32 %v4780, %v4880
        %v4903 = vadd.f32 %v4781, %v4883
        %v4904 = vld [vmem:[#allocation2 + $0xf] sm:$0xff]
        %v4905 = vld [vmem:[#allocation2 + $0x17] sm:$0xff]
        %v4906 = vld [vmem:[#allocation2 + $0x1f] sm:$0xff]
        %v4907 = vld [vmem:[#allocation2 + $0x27] sm:$0xff]
        %v4908 = vld [vmem:[#allocation2 + $0x2f] sm:$0xff]
        %v4909 = vld [vmem:[#allocation2 + $0x37] sm:$0xff]
        %v4910 = vld [vmem:[#allocation2 + $0x3f] sm:$0xff]
        %v4911 = vld [vmem:[#allocation2 + $0x47] sm:$0xff]
        %v4912 = vld [vmem:[#allocation2 + $0x4f] sm:$0xff]
        %v4913 = vld [vmem:[#allocation2 + $0x57] sm:$0xff]
        %v4914 = vld [vmem:[#allocation2 + $0x5f] sm:$0xff]
        %v4915 = vld [vmem:[#allocation2 + $0x67] sm:$0xff]
        %v4916 = vld [vmem:[#allocation2 + $0x6f] sm:$0xff]
        %v4917 = vld [vmem:[#allocation2 + $0x77] sm:$0xff]
        %v4918 = vld [vmem:[#allocation2 + $0x7f] sm:$0xff]
        %v4919 = vld [vmem:[#allocation2 + $0x87] sm:$0xff]
        %v4920 = vld [vmem:[#allocation2 + $0x8f] sm:$0xff]
        %v4921 = vld [vmem:[#allocation2 + $0x97] sm:$0xf]
        %s4922 = scalar_lea.vmem %s3, 768
        %v4923 = vld [vmem:[%s4922] sm:$0xff]
        %v4924 = vld [vmem:[%s4922 + $0x8] sm:$0xff]
        %v4925 = vld [vmem:[%s4922 + $0x10] sm:$0xff]
        %v4926 = vld [vmem:[%s4922 + $0x18] sm:$0xff]
        %v4927 = vld [vmem:[%s4922 + $0x20] sm:$0xff]
        %v4928 = vld [vmem:[%s4922 + $0x28] sm:$0xff]
        %v4929 = vld [vmem:[%s4922 + $0x30] sm:$0xff]
        %v4930 = vld [vmem:[%s4922 + $0x38] sm:$0xff]
        %v4931 = vld [vmem:[%s4922 + $0x40] sm:$0xff]
        %v4932 = vld [vmem:[%s4922 + $0x48] sm:$0xff]
        %v4933 = vld [vmem:[%s4922 + $0x50] sm:$0xff]
        %v4934 = vld [vmem:[%s4922 + $0x58] sm:$0xff]
        %v4935 = vld [vmem:[%s4922 + $0x60] sm:$0xff]
        %v4936 = vld [vmem:[%s4922 + $0x68] sm:$0xff]
        %v4937 = vld [vmem:[%s4922 + $0x70] sm:$0xff]
        %v4938 = vld [vmem:[%s4922 + $0x78] sm:$0xff]
        %4939 = vmatpush.msra.mxu0 %v4938
        %4940 = vmatpush.msra.mxu0 %v4937
        %4941 = vmatpush.msra.mxu0 %v4936
        %4942 = vmatpush.msra.mxu0 %v4935
        %4943 = vmatpush.msra.mxu0 %v4934
        %4944 = vmatpush.msra.mxu0 %v4933
        %4945 = vmatpush.msra.mxu0 %v4932
        %4946 = vmatpush.msra.mxu0 %v4931
        %4947 = vmatpush.msra.mxu0 %v4930
        %4948 = vmatpush.msra.mxu0 %v4929
        %4949 = vmatpush.msra.mxu0 %v4928
        %4950 = vmatpush.msra.mxu0 %v4927
        %4951 = vmatpush.msra.mxu0 %v4926
        %4952 = vmatpush.msra.mxu0 %v4925
        %4953 = vmatpush.msra.mxu0 %v4924
        %4954 = vmatpush.msra.mxu0 %v4923
        %4955 = vmatmul.f32.gmra.mxu0 %v4904
        %v4956 = vpop.f32.mrf.mxu0
        %v4957 = vadd.f32 0.0, %v4956
        %4958 = vmatmul.f32.gmra.mxu0 %v4905
        %v4959 = vpop.f32.mrf.mxu0
        %v4960 = vadd.f32 0.0, %v4959
        %4961 = vmatmul.f32.gmra.mxu0 %v4906
        %v4962 = vpop.f32.mrf.mxu0
        %v4963 = vadd.f32 0.0, %v4962
        %4964 = vmatmul.f32.gmra.mxu0 %v4907
        %v4965 = vpop.f32.mrf.mxu0
        %v4966 = vadd.f32 0.0, %v4965
        %4967 = vmatmul.f32.gmra.mxu0 %v4908
        %v4968 = vpop.f32.mrf.mxu0
        %v4969 = vadd.f32 0.0, %v4968
        %4970 = vmatmul.f32.gmra.mxu0 %v4909
        %v4971 = vpop.f32.mrf.mxu0
        %v4972 = vadd.f32 0.0, %v4971
        %4973 = vmatmul.f32.gmra.mxu0 %v4910
        %v4974 = vpop.f32.mrf.mxu0
        %v4975 = vadd.f32 0.0, %v4974
        %4976 = vmatmul.f32.gmra.mxu0 %v4911
        %v4977 = vpop.f32.mrf.mxu0
        %v4978 = vadd.f32 0.0, %v4977
        %4979 = vmatmul.f32.gmra.mxu0 %v4912
        %v4980 = vpop.f32.mrf.mxu0
        %v4981 = vadd.f32 0.0, %v4980
        %4982 = vmatmul.f32.gmra.mxu0 %v4913
        %v4983 = vpop.f32.mrf.mxu0
        %v4984 = vadd.f32 0.0, %v4983
        %4985 = vmatmul.f32.gmra.mxu0 %v4914
        %v4986 = vpop.f32.mrf.mxu0
        %v4987 = vadd.f32 0.0, %v4986
        %4988 = vmatmul.f32.gmra.mxu0 %v4915
        %v4989 = vpop.f32.mrf.mxu0
        %v4990 = vadd.f32 0.0, %v4989
        %4991 = vmatmul.f32.gmra.mxu0 %v4916
        %v4992 = vpop.f32.mrf.mxu0
        %v4993 = vadd.f32 0.0, %v4992
        %4994 = vmatmul.f32.gmra.mxu0 %v4917
        %v4995 = vpop.f32.mrf.mxu0
        %v4996 = vadd.f32 0.0, %v4995
        %4997 = vmatmul.f32.gmra.mxu0 %v4918
        %v4998 = vpop.f32.mrf.mxu0
        %v4999 = vadd.f32 0.0, %v4998
        %5000 = vmatmul.f32.gmra.mxu0 %v4919
        %v5001 = vpop.f32.mrf.mxu0
        %v5002 = vadd.f32 0.0, %v5001
        %5003 = vmatmul.f32.gmra.mxu0 %v4920
        %v5004 = vpop.f32.mrf.mxu0
        %v5005 = vadd.f32 0.0, %v5004
        %5006 = vmatmul.f32.gmra.mxu0 %v4921
        %v5007 = vpop.f32.mrf.mxu0
        %5008 = vdwg.mxu0
        %v5009 = vadd.f32 %v4887, %v4957
        %v5010 = vadd.f32 %v4888, %v4960
        %v5011 = vadd.f32 %v4889, %v4963
        %v5012 = vadd.f32 %v4890, %v4966
        %v5013 = vadd.f32 %v4891, %v4969
        %v5014 = vadd.f32 %v4892, %v4972
        %v5015 = vadd.f32 %v4893, %v4975
        %v5016 = vadd.f32 %v4894, %v4978
        %v5017 = vadd.f32 %v4895, %v4981
        %v5018 = vadd.f32 %v4896, %v4984
        %v5019 = vadd.f32 %v4897, %v4987
        %v5020 = vadd.f32 %v4898, %v4990
        %v5021 = vadd.f32 %v4899, %v4993
        %v5022 = vadd.f32 %v4900, %v4996
        %v5023 = vadd.f32 %v4901, %v4999
        %v5024 = vadd.f32 %v4902, %v5002
        %v5025 = vadd.f32 %v4903, %v5005
        %v5026 = vld [vmem:[#allocation2 + $0x10] sm:$0xff]
        %v5027 = vld [vmem:[#allocation2 + $0x18] sm:$0xff]
        %v5028 = vld [vmem:[#allocation2 + $0x20] sm:$0xff]
        %v5029 = vld [vmem:[#allocation2 + $0x28] sm:$0xff]
        %v5030 = vld [vmem:[#allocation2 + $0x30] sm:$0xff]
        %v5031 = vld [vmem:[#allocation2 + $0x38] sm:$0xff]
        %v5032 = vld [vmem:[#allocation2 + $0x40] sm:$0xff]
        %v5033 = vld [vmem:[#allocation2 + $0x48] sm:$0xff]
        %v5034 = vld [vmem:[#allocation2 + $0x50] sm:$0xff]
        %v5035 = vld [vmem:[#allocation2 + $0x58] sm:$0xff]
        %v5036 = vld [vmem:[#allocation2 + $0x60] sm:$0xff]
        %v5037 = vld [vmem:[#allocation2 + $0x68] sm:$0xff]
        %v5038 = vld [vmem:[#allocation2 + $0x70] sm:$0xff]
        %v5039 = vld [vmem:[#allocation2 + $0x78] sm:$0xff]
        %v5040 = vld [vmem:[#allocation2 + $0x80] sm:$0xff]
        %v5041 = vld [vmem:[#allocation2 + $0x88] sm:$0xff]
        %v5042 = vld [vmem:[#allocation2 + $0x90] sm:$0xff]
        %v5043 = vld [vmem:[#allocation2 + $0x98] sm:$0xf]
        %s5044 = scalar_lea.vmem %s3, 896
        %v5045 = vld [vmem:[%s5044] sm:$0xff]
        %v5046 = vld [vmem:[%s5044 + $0x8] sm:$0xff]
        %v5047 = vld [vmem:[%s5044 + $0x10] sm:$0xff]
        %v5048 = vld [vmem:[%s5044 + $0x18] sm:$0xff]
        %v5049 = vld [vmem:[%s5044 + $0x20] sm:$0xff]
        %v5050 = vld [vmem:[%s5044 + $0x28] sm:$0xff]
        %v5051 = vld [vmem:[%s5044 + $0x30] sm:$0xff]
        %v5052 = vld [vmem:[%s5044 + $0x38] sm:$0xff]
        %v5053 = vld [vmem:[%s5044 + $0x40] sm:$0xff]
        %v5054 = vld [vmem:[%s5044 + $0x48] sm:$0xff]
        %v5055 = vld [vmem:[%s5044 + $0x50] sm:$0xff]
        %v5056 = vld [vmem:[%s5044 + $0x58] sm:$0xff]
        %v5057 = vld [vmem:[%s5044 + $0x60] sm:$0xff]
        %v5058 = vld [vmem:[%s5044 + $0x68] sm:$0xff]
        %v5059 = vld [vmem:[%s5044 + $0x70] sm:$0xff]
        %v5060 = vld [vmem:[%s5044 + $0x78] sm:$0xff]
        %5061 = vmatpush.msra.mxu0 %v5060
        %5062 = vmatpush.msra.mxu0 %v5059
        %5063 = vmatpush.msra.mxu0 %v5058
        %5064 = vmatpush.msra.mxu0 %v5057
        %5065 = vmatpush.msra.mxu0 %v5056
        %5066 = vmatpush.msra.mxu0 %v5055
        %5067 = vmatpush.msra.mxu0 %v5054
        %5068 = vmatpush.msra.mxu0 %v5053
        %5069 = vmatpush.msra.mxu0 %v5052
        %5070 = vmatpush.msra.mxu0 %v5051
        %5071 = vmatpush.msra.mxu0 %v5050
        %5072 = vmatpush.msra.mxu0 %v5049
        %5073 = vmatpush.msra.mxu0 %v5048
        %5074 = vmatpush.msra.mxu0 %v5047
        %5075 = vmatpush.msra.mxu0 %v5046
        %5076 = vmatpush.msra.mxu0 %v5045
        %5077 = vmatmul.f32.gmra.mxu0 %v5026
        %v5078 = vpop.f32.mrf.mxu0
        %v5079 = vadd.f32 0.0, %v5078
        %5080 = vmatmul.f32.gmra.mxu0 %v5027
        %v5081 = vpop.f32.mrf.mxu0
        %v5082 = vadd.f32 0.0, %v5081
        %5083 = vmatmul.f32.gmra.mxu0 %v5028
        %v5084 = vpop.f32.mrf.mxu0
        %v5085 = vadd.f32 0.0, %v5084
        %5086 = vmatmul.f32.gmra.mxu0 %v5029
        %v5087 = vpop.f32.mrf.mxu0
        %v5088 = vadd.f32 0.0, %v5087
        %5089 = vmatmul.f32.gmra.mxu0 %v5030
        %v5090 = vpop.f32.mrf.mxu0
        %v5091 = vadd.f32 0.0, %v5090
        %5092 = vmatmul.f32.gmra.mxu0 %v5031
        %v5093 = vpop.f32.mrf.mxu0
        %v5094 = vadd.f32 0.0, %v5093
        %5095 = vmatmul.f32.gmra.mxu0 %v5032
        %v5096 = vpop.f32.mrf.mxu0
        %v5097 = vadd.f32 0.0, %v5096
        %5098 = vmatmul.f32.gmra.mxu0 %v5033
        %v5099 = vpop.f32.mrf.mxu0
        %v5100 = vadd.f32 0.0, %v5099
        %5101 = vmatmul.f32.gmra.mxu0 %v5034
        %v5102 = vpop.f32.mrf.mxu0
        %v5103 = vadd.f32 0.0, %v5102
        %5104 = vmatmul.f32.gmra.mxu0 %v5035
        %v5105 = vpop.f32.mrf.mxu0
        %v5106 = vadd.f32 0.0, %v5105
        %5107 = vmatmul.f32.gmra.mxu0 %v5036
        %v5108 = vpop.f32.mrf.mxu0
        %v5109 = vadd.f32 0.0, %v5108
        %5110 = vmatmul.f32.gmra.mxu0 %v5037
        %v5111 = vpop.f32.mrf.mxu0
        %v5112 = vadd.f32 0.0, %v5111
        %5113 = vmatmul.f32.gmra.mxu0 %v5038
        %v5114 = vpop.f32.mrf.mxu0
        %v5115 = vadd.f32 0.0, %v5114
        %5116 = vmatmul.f32.gmra.mxu0 %v5039
        %v5117 = vpop.f32.mrf.mxu0
        %v5118 = vadd.f32 0.0, %v5117
        %5119 = vmatmul.f32.gmra.mxu0 %v5040
        %v5120 = vpop.f32.mrf.mxu0
        %v5121 = vadd.f32 0.0, %v5120
        %5122 = vmatmul.f32.gmra.mxu0 %v5041
        %v5123 = vpop.f32.mrf.mxu0
        %v5124 = vadd.f32 0.0, %v5123
        %5125 = vmatmul.f32.gmra.mxu0 %v5042
        %v5126 = vpop.f32.mrf.mxu0
        %v5127 = vadd.f32 0.0, %v5126
        %5128 = vmatmul.f32.gmra.mxu0 %v5043
        %v5129 = vpop.f32.mrf.mxu0
        %5130 = vdwg.mxu0
        %v5131 = vadd.f32 %v5009, %v5079
        %v5132 = vadd.f32 %v5010, %v5082
        %v5133 = vadd.f32 %v5011, %v5085
        %v5134 = vadd.f32 %v5012, %v5088
        %v5135 = vadd.f32 %v5013, %v5091
        %v5136 = vadd.f32 %v5014, %v5094
        %v5137 = vadd.f32 %v5015, %v5097
        %v5138 = vadd.f32 %v5016, %v5100
        %v5139 = vadd.f32 %v5017, %v5103
        %v5140 = vadd.f32 %v5018, %v5106
        %v5141 = vadd.f32 %v5019, %v5109
        %v5142 = vadd.f32 %v5020, %v5112
        %v5143 = vadd.f32 %v5021, %v5115
        %v5144 = vadd.f32 %v5022, %v5118
        %v5145 = vadd.f32 %v5023, %v5121
        %v5146 = vadd.f32 %v5024, %v5124
        %v5147 = vadd.f32 %v5025, %v5127
        %v5148 = vld [vmem:[#allocation2 + $0x11] sm:$0xff]
        %v5149 = vld [vmem:[#allocation2 + $0x19] sm:$0xff]
        %v5150 = vld [vmem:[#allocation2 + $0x21] sm:$0xff]
        %v5151 = vld [vmem:[#allocation2 + $0x29] sm:$0xff]
        %v5152 = vld [vmem:[#allocation2 + $0x31] sm:$0xff]
        %v5153 = vld [vmem:[#allocation2 + $0x39] sm:$0xff]
        %v5154 = vld [vmem:[#allocation2 + $0x41] sm:$0xff]
        %v5155 = vld [vmem:[#allocation2 + $0x49] sm:$0xff]
        %v5156 = vld [vmem:[#allocation2 + $0x51] sm:$0xff]
        %v5157 = vld [vmem:[#allocation2 + $0x59] sm:$0xff]
        %v5158 = vld [vmem:[#allocation2 + $0x61] sm:$0xff]
        %v5159 = vld [vmem:[#allocation2 + $0x69] sm:$0xff]
        %v5160 = vld [vmem:[#allocation2 + $0x71] sm:$0xff]
        %v5161 = vld [vmem:[#allocation2 + $0x79] sm:$0xff]
        %v5162 = vld [vmem:[#allocation2 + $0x81] sm:$0xff]
        %v5163 = vld [vmem:[#allocation2 + $0x89] sm:$0xff]
        %v5164 = vld [vmem:[#allocation2 + $0x91] sm:$0xff]
        %v5165 = vld [vmem:[#allocation2 + $0x99] sm:$0xf]
        %s5166 = scalar_lea.vmem %s3, 1024
        %v5167 = vld [vmem:[%s5166] sm:$0xff]
        %v5168 = vld [vmem:[%s5166 + $0x8] sm:$0xff]
        %v5169 = vld [vmem:[%s5166 + $0x10] sm:$0xff]
        %v5170 = vld [vmem:[%s5166 + $0x18] sm:$0xff]
        %v5171 = vld [vmem:[%s5166 + $0x20] sm:$0xff]
        %v5172 = vld [vmem:[%s5166 + $0x28] sm:$0xff]
        %v5173 = vld [vmem:[%s5166 + $0x30] sm:$0xff]
        %v5174 = vld [vmem:[%s5166 + $0x38] sm:$0xff]
        %v5175 = vld [vmem:[%s5166 + $0x40] sm:$0xff]
        %v5176 = vld [vmem:[%s5166 + $0x48] sm:$0xff]
        %v5177 = vld [vmem:[%s5166 + $0x50] sm:$0xff]
        %v5178 = vld [vmem:[%s5166 + $0x58] sm:$0xff]
        %v5179 = vld [vmem:[%s5166 + $0x60] sm:$0xff]
        %v5180 = vld [vmem:[%s5166 + $0x68] sm:$0xff]
        %v5181 = vld [vmem:[%s5166 + $0x70] sm:$0xff]
        %v5182 = vld [vmem:[%s5166 + $0x78] sm:$0xff]
        %5183 = vmatpush.msra.mxu0 %v5182
        %5184 = vmatpush.msra.mxu0 %v5181
        %5185 = vmatpush.msra.mxu0 %v5180
        %5186 = vmatpush.msra.mxu0 %v5179
        %5187 = vmatpush.msra.mxu0 %v5178
        %5188 = vmatpush.msra.mxu0 %v5177
        %5189 = vmatpush.msra.mxu0 %v5176
        %5190 = vmatpush.msra.mxu0 %v5175
        %5191 = vmatpush.msra.mxu0 %v5174
        %5192 = vmatpush.msra.mxu0 %v5173
        %5193 = vmatpush.msra.mxu0 %v5172
        %5194 = vmatpush.msra.mxu0 %v5171
        %5195 = vmatpush.msra.mxu0 %v5170
        %5196 = vmatpush.msra.mxu0 %v5169
        %5197 = vmatpush.msra.mxu0 %v5168
        %5198 = vmatpush.msra.mxu0 %v5167
        %5199 = vmatmul.f32.gmra.mxu0 %v5148
        %v5200 = vpop.f32.mrf.mxu0
        %v5201 = vadd.f32 0.0, %v5200
        %5202 = vmatmul.f32.gmra.mxu0 %v5149
        %v5203 = vpop.f32.mrf.mxu0
        %v5204 = vadd.f32 0.0, %v5203
        %5205 = vmatmul.f32.gmra.mxu0 %v5150
        %v5206 = vpop.f32.mrf.mxu0
        %v5207 = vadd.f32 0.0, %v5206
        %5208 = vmatmul.f32.gmra.mxu0 %v5151
        %v5209 = vpop.f32.mrf.mxu0
        %v5210 = vadd.f32 0.0, %v5209
        %5211 = vmatmul.f32.gmra.mxu0 %v5152
        %v5212 = vpop.f32.mrf.mxu0
        %v5213 = vadd.f32 0.0, %v5212
        %5214 = vmatmul.f32.gmra.mxu0 %v5153
        %v5215 = vpop.f32.mrf.mxu0
        %v5216 = vadd.f32 0.0, %v5215
        %5217 = vmatmul.f32.gmra.mxu0 %v5154
        %v5218 = vpop.f32.mrf.mxu0
        %v5219 = vadd.f32 0.0, %v5218
        %5220 = vmatmul.f32.gmra.mxu0 %v5155
        %v5221 = vpop.f32.mrf.mxu0
        %v5222 = vadd.f32 0.0, %v5221
        %5223 = vmatmul.f32.gmra.mxu0 %v5156
        %v5224 = vpop.f32.mrf.mxu0
        %v5225 = vadd.f32 0.0, %v5224
        %5226 = vmatmul.f32.gmra.mxu0 %v5157
        %v5227 = vpop.f32.mrf.mxu0
        %v5228 = vadd.f32 0.0, %v5227
        %5229 = vmatmul.f32.gmra.mxu0 %v5158
        %v5230 = vpop.f32.mrf.mxu0
        %v5231 = vadd.f32 0.0, %v5230
        %5232 = vmatmul.f32.gmra.mxu0 %v5159
        %v5233 = vpop.f32.mrf.mxu0
        %v5234 = vadd.f32 0.0, %v5233
        %5235 = vmatmul.f32.gmra.mxu0 %v5160
        %v5236 = vpop.f32.mrf.mxu0
        %v5237 = vadd.f32 0.0, %v5236
        %5238 = vmatmul.f32.gmra.mxu0 %v5161
        %v5239 = vpop.f32.mrf.mxu0
        %v5240 = vadd.f32 0.0, %v5239
        %5241 = vmatmul.f32.gmra.mxu0 %v5162
        %v5242 = vpop.f32.mrf.mxu0
        %v5243 = vadd.f32 0.0, %v5242
        %5244 = vmatmul.f32.gmra.mxu0 %v5163
        %v5245 = vpop.f32.mrf.mxu0
        %v5246 = vadd.f32 0.0, %v5245
        %5247 = vmatmul.f32.gmra.mxu0 %v5164
        %v5248 = vpop.f32.mrf.mxu0
        %v5249 = vadd.f32 0.0, %v5248
        %5250 = vmatmul.f32.gmra.mxu0 %v5165
        %v5251 = vpop.f32.mrf.mxu0
        %5252 = vdwg.mxu0
        %v5253 = vadd.f32 %v5131, %v5201
        %v5254 = vadd.f32 %v5132, %v5204
        %v5255 = vadd.f32 %v5133, %v5207
        %v5256 = vadd.f32 %v5134, %v5210
        %v5257 = vadd.f32 %v5135, %v5213
        %v5258 = vadd.f32 %v5136, %v5216
        %v5259 = vadd.f32 %v5137, %v5219
        %v5260 = vadd.f32 %v5138, %v5222
        %v5261 = vadd.f32 %v5139, %v5225
        %v5262 = vadd.f32 %v5140, %v5228
        %v5263 = vadd.f32 %v5141, %v5231
        %v5264 = vadd.f32 %v5142, %v5234
        %v5265 = vadd.f32 %v5143, %v5237
        %v5266 = vadd.f32 %v5144, %v5240
        %v5267 = vadd.f32 %v5145, %v5243
        %v5268 = vadd.f32 %v5146, %v5246
        %v5269 = vadd.f32 %v5147, %v5249
        %v5270 = vld [vmem:[#allocation2 + $0x12] sm:$0xff]
        %v5271 = vld [vmem:[#allocation2 + $0x1a] sm:$0xff]
        %v5272 = vld [vmem:[#allocation2 + $0x22] sm:$0xff]
        %v5273 = vld [vmem:[#allocation2 + $0x2a] sm:$0xff]
        %v5274 = vld [vmem:[#allocation2 + $0x32] sm:$0xff]
        %v5275 = vld [vmem:[#allocation2 + $0x3a] sm:$0xff]
        %v5276 = vld [vmem:[#allocation2 + $0x42] sm:$0xff]
        %v5277 = vld [vmem:[#allocation2 + $0x4a] sm:$0xff]
        %v5278 = vld [vmem:[#allocation2 + $0x52] sm:$0xff]
        %v5279 = vld [vmem:[#allocation2 + $0x5a] sm:$0xff]
        %v5280 = vld [vmem:[#allocation2 + $0x62] sm:$0xff]
        %v5281 = vld [vmem:[#allocation2 + $0x6a] sm:$0xff]
        %v5282 = vld [vmem:[#allocation2 + $0x72] sm:$0xff]
        %v5283 = vld [vmem:[#allocation2 + $0x7a] sm:$0xff]
        %v5284 = vld [vmem:[#allocation2 + $0x82] sm:$0xff]
        %v5285 = vld [vmem:[#allocation2 + $0x8a] sm:$0xff]
        %v5286 = vld [vmem:[#allocation2 + $0x92] sm:$0xff]
        %v5287 = vld [vmem:[#allocation2 + $0x9a] sm:$0xf]
        %s5288 = scalar_lea.vmem %s3, 1152
        %v5289 = vld [vmem:[%s5288] sm:$0xff]
        %v5290 = vld [vmem:[%s5288 + $0x8] sm:$0xff]
        %v5291 = vld [vmem:[%s5288 + $0x10] sm:$0xff]
        %v5292 = vld [vmem:[%s5288 + $0x18] sm:$0xff]
        %v5293 = vld [vmem:[%s5288 + $0x20] sm:$0xff]
        %v5294 = vld [vmem:[%s5288 + $0x28] sm:$0xff]
        %v5295 = vld [vmem:[%s5288 + $0x30] sm:$0xff]
        %v5296 = vld [vmem:[%s5288 + $0x38] sm:$0xff]
        %v5297 = vld [vmem:[%s5288 + $0x40] sm:$0xff]
        %v5298 = vld [vmem:[%s5288 + $0x48] sm:$0xff]
        %v5299 = vld [vmem:[%s5288 + $0x50] sm:$0xff]
        %v5300 = vld [vmem:[%s5288 + $0x58] sm:$0xff]
        %v5301 = vld [vmem:[%s5288 + $0x60] sm:$0xff]
        %v5302 = vld [vmem:[%s5288 + $0x68] sm:$0xff]
        %v5303 = vld [vmem:[%s5288 + $0x70] sm:$0xff]
        %v5304 = vld [vmem:[%s5288 + $0x78] sm:$0xff]
        %5305 = vmatpush.msra.mxu0 %v5304
        %5306 = vmatpush.msra.mxu0 %v5303
        %5307 = vmatpush.msra.mxu0 %v5302
        %5308 = vmatpush.msra.mxu0 %v5301
        %5309 = vmatpush.msra.mxu0 %v5300
        %5310 = vmatpush.msra.mxu0 %v5299
        %5311 = vmatpush.msra.mxu0 %v5298
        %5312 = vmatpush.msra.mxu0 %v5297
        %5313 = vmatpush.msra.mxu0 %v5296
        %5314 = vmatpush.msra.mxu0 %v5295
        %5315 = vmatpush.msra.mxu0 %v5294
        %5316 = vmatpush.msra.mxu0 %v5293
        %5317 = vmatpush.msra.mxu0 %v5292
        %5318 = vmatpush.msra.mxu0 %v5291
        %5319 = vmatpush.msra.mxu0 %v5290
        %5320 = vmatpush.msra.mxu0 %v5289
        %5321 = vmatmul.f32.gmra.mxu0 %v5270
        %v5322 = vpop.f32.mrf.mxu0
        %v5323 = vadd.f32 0.0, %v5322
        %5324 = vmatmul.f32.gmra.mxu0 %v5271
        %v5325 = vpop.f32.mrf.mxu0
        %v5326 = vadd.f32 0.0, %v5325
        %5327 = vmatmul.f32.gmra.mxu0 %v5272
        %v5328 = vpop.f32.mrf.mxu0
        %v5329 = vadd.f32 0.0, %v5328
        %5330 = vmatmul.f32.gmra.mxu0 %v5273
        %v5331 = vpop.f32.mrf.mxu0
        %v5332 = vadd.f32 0.0, %v5331
        %5333 = vmatmul.f32.gmra.mxu0 %v5274
        %v5334 = vpop.f32.mrf.mxu0
        %v5335 = vadd.f32 0.0, %v5334
        %5336 = vmatmul.f32.gmra.mxu0 %v5275
        %v5337 = vpop.f32.mrf.mxu0
        %v5338 = vadd.f32 0.0, %v5337
        %5339 = vmatmul.f32.gmra.mxu0 %v5276
        %v5340 = vpop.f32.mrf.mxu0
        %v5341 = vadd.f32 0.0, %v5340
        %5342 = vmatmul.f32.gmra.mxu0 %v5277
        %v5343 = vpop.f32.mrf.mxu0
        %v5344 = vadd.f32 0.0, %v5343
        %5345 = vmatmul.f32.gmra.mxu0 %v5278
        %v5346 = vpop.f32.mrf.mxu0
        %v5347 = vadd.f32 0.0, %v5346
        %5348 = vmatmul.f32.gmra.mxu0 %v5279
        %v5349 = vpop.f32.mrf.mxu0
        %v5350 = vadd.f32 0.0, %v5349
        %5351 = vmatmul.f32.gmra.mxu0 %v5280
        %v5352 = vpop.f32.mrf.mxu0
        %v5353 = vadd.f32 0.0, %v5352
        %5354 = vmatmul.f32.gmra.mxu0 %v5281
        %v5355 = vpop.f32.mrf.mxu0
        %v5356 = vadd.f32 0.0, %v5355
        %5357 = vmatmul.f32.gmra.mxu0 %v5282
        %v5358 = vpop.f32.mrf.mxu0
        %v5359 = vadd.f32 0.0, %v5358
        %5360 = vmatmul.f32.gmra.mxu0 %v5283
        %v5361 = vpop.f32.mrf.mxu0
        %v5362 = vadd.f32 0.0, %v5361
        %5363 = vmatmul.f32.gmra.mxu0 %v5284
        %v5364 = vpop.f32.mrf.mxu0
        %v5365 = vadd.f32 0.0, %v5364
        %5366 = vmatmul.f32.gmra.mxu0 %v5285
        %v5367 = vpop.f32.mrf.mxu0
        %v5368 = vadd.f32 0.0, %v5367
        %5369 = vmatmul.f32.gmra.mxu0 %v5286
        %v5370 = vpop.f32.mrf.mxu0
        %v5371 = vadd.f32 0.0, %v5370
        %5372 = vmatmul.f32.gmra.mxu0 %v5287
        %v5373 = vpop.f32.mrf.mxu0
        %5374 = vdwg.mxu0
        %v5375 = vadd.f32 %v5253, %v5323
        %v5376 = vadd.f32 %v5254, %v5326
        %v5377 = vadd.f32 %v5255, %v5329
        %v5378 = vadd.f32 %v5256, %v5332
        %v5379 = vadd.f32 %v5257, %v5335
        %v5380 = vadd.f32 %v5258, %v5338
        %v5381 = vadd.f32 %v5259, %v5341
        %v5382 = vadd.f32 %v5260, %v5344
        %v5383 = vadd.f32 %v5261, %v5347
        %v5384 = vadd.f32 %v5262, %v5350
        %v5385 = vadd.f32 %v5263, %v5353
        %v5386 = vadd.f32 %v5264, %v5356
        %v5387 = vadd.f32 %v5265, %v5359
        %v5388 = vadd.f32 %v5266, %v5362
        %v5389 = vadd.f32 %v5267, %v5365
        %v5390 = vadd.f32 %v5268, %v5368
        %v5391 = vadd.f32 %v5269, %v5371
        %v5392 = vld [vmem:[#allocation2 + $0x1c] sm:$0xff]
        %v5393 = vld [vmem:[#allocation2 + $0x24] sm:$0xff]
        %v5394 = vld [vmem:[#allocation2 + $0x2c] sm:$0xff]
        %v5395 = vld [vmem:[#allocation2 + $0x34] sm:$0xff]
        %v5396 = vld [vmem:[#allocation2 + $0x3c] sm:$0xff]
        %v5397 = vld [vmem:[#allocation2 + $0x44] sm:$0xff]
        %v5398 = vld [vmem:[#allocation2 + $0x4c] sm:$0xff]
        %v5399 = vld [vmem:[#allocation2 + $0x54] sm:$0xff]
        %v5400 = vld [vmem:[#allocation2 + $0x5c] sm:$0xff]
        %v5401 = vld [vmem:[#allocation2 + $0x64] sm:$0xff]
        %v5402 = vld [vmem:[#allocation2 + $0x6c] sm:$0xff]
        %v5403 = vld [vmem:[#allocation2 + $0x74] sm:$0xff]
        %v5404 = vld [vmem:[#allocation2 + $0x7c] sm:$0xff]
        %v5405 = vld [vmem:[#allocation2 + $0x84] sm:$0xff]
        %v5406 = vld [vmem:[#allocation2 + $0x8c] sm:$0xff]
        %v5407 = vld [vmem:[#allocation2 + $0x94] sm:$0xff]
        %v5408 = vld [vmem:[#allocation2 + $0x9c] sm:$0xff]
        %v5409 = vld [vmem:[#allocation2 + $0xa4] sm:$0xf]
        %s5410 = scalar_lea.vmem %s3, 1280
        %v5411 = vld [vmem:[%s5410] sm:$0xff]
        %v5412 = vld [vmem:[%s5410 + $0x8] sm:$0xff]
        %v5413 = vld [vmem:[%s5410 + $0x10] sm:$0xff]
        %v5414 = vld [vmem:[%s5410 + $0x18] sm:$0xff]
        %v5415 = vld [vmem:[%s5410 + $0x20] sm:$0xff]
        %v5416 = vld [vmem:[%s5410 + $0x28] sm:$0xff]
        %v5417 = vld [vmem:[%s5410 + $0x30] sm:$0xff]
        %v5418 = vld [vmem:[%s5410 + $0x38] sm:$0xff]
        %v5419 = vld [vmem:[%s5410 + $0x40] sm:$0xff]
        %v5420 = vld [vmem:[%s5410 + $0x48] sm:$0xff]
        %v5421 = vld [vmem:[%s5410 + $0x50] sm:$0xff]
        %v5422 = vld [vmem:[%s5410 + $0x58] sm:$0xff]
        %v5423 = vld [vmem:[%s5410 + $0x60] sm:$0xff]
        %v5424 = vld [vmem:[%s5410 + $0x68] sm:$0xff]
        %v5425 = vld [vmem:[%s5410 + $0x70] sm:$0xff]
        %v5426 = vld [vmem:[%s5410 + $0x78] sm:$0xff]
        %5427 = vmatpush.msra.mxu0 %v5426
        %5428 = vmatpush.msra.mxu0 %v5425
        %5429 = vmatpush.msra.mxu0 %v5424
        %5430 = vmatpush.msra.mxu0 %v5423
        %5431 = vmatpush.msra.mxu0 %v5422
        %5432 = vmatpush.msra.mxu0 %v5421
        %5433 = vmatpush.msra.mxu0 %v5420
        %5434 = vmatpush.msra.mxu0 %v5419
        %5435 = vmatpush.msra.mxu0 %v5418
        %5436 = vmatpush.msra.mxu0 %v5417
        %5437 = vmatpush.msra.mxu0 %v5416
        %5438 = vmatpush.msra.mxu0 %v5415
        %5439 = vmatpush.msra.mxu0 %v5414
        %5440 = vmatpush.msra.mxu0 %v5413
        %5441 = vmatpush.msra.mxu0 %v5412
        %5442 = vmatpush.msra.mxu0 %v5411
        %5443 = vmatmul.f32.gmra.mxu0 %v5392
        %v5444 = vpop.f32.mrf.mxu0
        %v5445 = vadd.f32 0.0, %v5444
        %5446 = vmatmul.f32.gmra.mxu0 %v5393
        %v5447 = vpop.f32.mrf.mxu0
        %v5448 = vadd.f32 0.0, %v5447
        %5449 = vmatmul.f32.gmra.mxu0 %v5394
        %v5450 = vpop.f32.mrf.mxu0
        %v5451 = vadd.f32 0.0, %v5450
        %5452 = vmatmul.f32.gmra.mxu0 %v5395
        %v5453 = vpop.f32.mrf.mxu0
        %v5454 = vadd.f32 0.0, %v5453
        %5455 = vmatmul.f32.gmra.mxu0 %v5396
        %v5456 = vpop.f32.mrf.mxu0
        %v5457 = vadd.f32 0.0, %v5456
        %5458 = vmatmul.f32.gmra.mxu0 %v5397
        %v5459 = vpop.f32.mrf.mxu0
        %v5460 = vadd.f32 0.0, %v5459
        %5461 = vmatmul.f32.gmra.mxu0 %v5398
        %v5462 = vpop.f32.mrf.mxu0
        %v5463 = vadd.f32 0.0, %v5462
        %5464 = vmatmul.f32.gmra.mxu0 %v5399
        %v5465 = vpop.f32.mrf.mxu0
        %v5466 = vadd.f32 0.0, %v5465
        %5467 = vmatmul.f32.gmra.mxu0 %v5400
        %v5468 = vpop.f32.mrf.mxu0
        %v5469 = vadd.f32 0.0, %v5468
        %5470 = vmatmul.f32.gmra.mxu0 %v5401
        %v5471 = vpop.f32.mrf.mxu0
        %v5472 = vadd.f32 0.0, %v5471
        %5473 = vmatmul.f32.gmra.mxu0 %v5402
        %v5474 = vpop.f32.mrf.mxu0
        %v5475 = vadd.f32 0.0, %v5474
        %5476 = vmatmul.f32.gmra.mxu0 %v5403
        %v5477 = vpop.f32.mrf.mxu0
        %v5478 = vadd.f32 0.0, %v5477
        %5479 = vmatmul.f32.gmra.mxu0 %v5404
        %v5480 = vpop.f32.mrf.mxu0
        %v5481 = vadd.f32 0.0, %v5480
        %5482 = vmatmul.f32.gmra.mxu0 %v5405
        %v5483 = vpop.f32.mrf.mxu0
        %v5484 = vadd.f32 0.0, %v5483
        %5485 = vmatmul.f32.gmra.mxu0 %v5406
        %v5486 = vpop.f32.mrf.mxu0
        %v5487 = vadd.f32 0.0, %v5486
        %5488 = vmatmul.f32.gmra.mxu0 %v5407
        %v5489 = vpop.f32.mrf.mxu0
        %v5490 = vadd.f32 0.0, %v5489
        %5491 = vmatmul.f32.gmra.mxu0 %v5408
        %v5492 = vpop.f32.mrf.mxu0
        %v5493 = vadd.f32 0.0, %v5492
        %5494 = vmatmul.f32.gmra.mxu0 %v5409
        %v5495 = vpop.f32.mrf.mxu0
        %5496 = vdwg.mxu0
        %v5497 = vadd.f32 %v5375, %v5445
        %v5498 = vadd.f32 %v5376, %v5448
        %v5499 = vadd.f32 %v5377, %v5451
        %v5500 = vadd.f32 %v5378, %v5454
        %v5501 = vadd.f32 %v5379, %v5457
        %v5502 = vadd.f32 %v5380, %v5460
        %v5503 = vadd.f32 %v5381, %v5463
        %v5504 = vadd.f32 %v5382, %v5466
        %v5505 = vadd.f32 %v5383, %v5469
        %v5506 = vadd.f32 %v5384, %v5472
        %v5507 = vadd.f32 %v5385, %v5475
        %v5508 = vadd.f32 %v5386, %v5478
        %v5509 = vadd.f32 %v5387, %v5481
        %v5510 = vadd.f32 %v5388, %v5484
        %v5511 = vadd.f32 %v5389, %v5487
        %v5512 = vadd.f32 %v5390, %v5490
        %v5513 = vadd.f32 %v5391, %v5493
        %v5514 = vld [vmem:[#allocation2 + $0x1d] sm:$0xff]
        %v5515 = vld [vmem:[#allocation2 + $0x25] sm:$0xff]
        %v5516 = vld [vmem:[#allocation2 + $0x2d] sm:$0xff]
        %v5517 = vld [vmem:[#allocation2 + $0x35] sm:$0xff]
        %v5518 = vld [vmem:[#allocation2 + $0x3d] sm:$0xff]
        %v5519 = vld [vmem:[#allocation2 + $0x45] sm:$0xff]
        %v5520 = vld [vmem:[#allocation2 + $0x4d] sm:$0xff]
        %v5521 = vld [vmem:[#allocation2 + $0x55] sm:$0xff]
        %v5522 = vld [vmem:[#allocation2 + $0x5d] sm:$0xff]
        %v5523 = vld [vmem:[#allocation2 + $0x65] sm:$0xff]
        %v5524 = vld [vmem:[#allocation2 + $0x6d] sm:$0xff]
        %v5525 = vld [vmem:[#allocation2 + $0x75] sm:$0xff]
        %v5526 = vld [vmem:[#allocation2 + $0x7d] sm:$0xff]
        %v5527 = vld [vmem:[#allocation2 + $0x85] sm:$0xff]
        %v5528 = vld [vmem:[#allocation2 + $0x8d] sm:$0xff]
        %v5529 = vld [vmem:[#allocation2 + $0x95] sm:$0xff]
        %v5530 = vld [vmem:[#allocation2 + $0x9d] sm:$0xff]
        %v5531 = vld [vmem:[#allocation2 + $0xa5] sm:$0xf]
        %s5532 = scalar_lea.vmem %s3, 1408
        %v5533 = vld [vmem:[%s5532] sm:$0xff]
        %v5534 = vld [vmem:[%s5532 + $0x8] sm:$0xff]
        %v5535 = vld [vmem:[%s5532 + $0x10] sm:$0xff]
        %v5536 = vld [vmem:[%s5532 + $0x18] sm:$0xff]
        %v5537 = vld [vmem:[%s5532 + $0x20] sm:$0xff]
        %v5538 = vld [vmem:[%s5532 + $0x28] sm:$0xff]
        %v5539 = vld [vmem:[%s5532 + $0x30] sm:$0xff]
        %v5540 = vld [vmem:[%s5532 + $0x38] sm:$0xff]
        %v5541 = vld [vmem:[%s5532 + $0x40] sm:$0xff]
        %v5542 = vld [vmem:[%s5532 + $0x48] sm:$0xff]
        %v5543 = vld [vmem:[%s5532 + $0x50] sm:$0xff]
        %v5544 = vld [vmem:[%s5532 + $0x58] sm:$0xff]
        %v5545 = vld [vmem:[%s5532 + $0x60] sm:$0xff]
        %v5546 = vld [vmem:[%s5532 + $0x68] sm:$0xff]
        %v5547 = vld [vmem:[%s5532 + $0x70] sm:$0xff]
        %v5548 = vld [vmem:[%s5532 + $0x78] sm:$0xff]
        %5549 = vmatpush.msra.mxu0 %v5548
        %5550 = vmatpush.msra.mxu0 %v5547
        %5551 = vmatpush.msra.mxu0 %v5546
        %5552 = vmatpush.msra.mxu0 %v5545
        %5553 = vmatpush.msra.mxu0 %v5544
        %5554 = vmatpush.msra.mxu0 %v5543
        %5555 = vmatpush.msra.mxu0 %v5542
        %5556 = vmatpush.msra.mxu0 %v5541
        %5557 = vmatpush.msra.mxu0 %v5540
        %5558 = vmatpush.msra.mxu0 %v5539
        %5559 = vmatpush.msra.mxu0 %v5538
        %5560 = vmatpush.msra.mxu0 %v5537
        %5561 = vmatpush.msra.mxu0 %v5536
        %5562 = vmatpush.msra.mxu0 %v5535
        %5563 = vmatpush.msra.mxu0 %v5534
        %5564 = vmatpush.msra.mxu0 %v5533
        %5565 = vmatmul.f32.gmra.mxu0 %v5514
        %v5566 = vpop.f32.mrf.mxu0
        %v5567 = vadd.f32 0.0, %v5566
        %5568 = vmatmul.f32.gmra.mxu0 %v5515
        %v5569 = vpop.f32.mrf.mxu0
        %v5570 = vadd.f32 0.0, %v5569
        %5571 = vmatmul.f32.gmra.mxu0 %v5516
        %v5572 = vpop.f32.mrf.mxu0
        %v5573 = vadd.f32 0.0, %v5572
        %5574 = vmatmul.f32.gmra.mxu0 %v5517
        %v5575 = vpop.f32.mrf.mxu0
        %v5576 = vadd.f32 0.0, %v5575
        %5577 = vmatmul.f32.gmra.mxu0 %v5518
        %v5578 = vpop.f32.mrf.mxu0
        %v5579 = vadd.f32 0.0, %v5578
        %5580 = vmatmul.f32.gmra.mxu0 %v5519
        %v5581 = vpop.f32.mrf.mxu0
        %v5582 = vadd.f32 0.0, %v5581
        %5583 = vmatmul.f32.gmra.mxu0 %v5520
        %v5584 = vpop.f32.mrf.mxu0
        %v5585 = vadd.f32 0.0, %v5584
        %5586 = vmatmul.f32.gmra.mxu0 %v5521
        %v5587 = vpop.f32.mrf.mxu0
        %v5588 = vadd.f32 0.0, %v5587
        %5589 = vmatmul.f32.gmra.mxu0 %v5522
        %v5590 = vpop.f32.mrf.mxu0
        %v5591 = vadd.f32 0.0, %v5590
        %5592 = vmatmul.f32.gmra.mxu0 %v5523
        %v5593 = vpop.f32.mrf.mxu0
        %v5594 = vadd.f32 0.0, %v5593
        %5595 = vmatmul.f32.gmra.mxu0 %v5524
        %v5596 = vpop.f32.mrf.mxu0
        %v5597 = vadd.f32 0.0, %v5596
        %5598 = vmatmul.f32.gmra.mxu0 %v5525
        %v5599 = vpop.f32.mrf.mxu0
        %v5600 = vadd.f32 0.0, %v5599
        %5601 = vmatmul.f32.gmra.mxu0 %v5526
        %v5602 = vpop.f32.mrf.mxu0
        %v5603 = vadd.f32 0.0, %v5602
        %5604 = vmatmul.f32.gmra.mxu0 %v5527
        %v5605 = vpop.f32.mrf.mxu0
        %v5606 = vadd.f32 0.0, %v5605
        %5607 = vmatmul.f32.gmra.mxu0 %v5528
        %v5608 = vpop.f32.mrf.mxu0
        %v5609 = vadd.f32 0.0, %v5608
        %5610 = vmatmul.f32.gmra.mxu0 %v5529
        %v5611 = vpop.f32.mrf.mxu0
        %v5612 = vadd.f32 0.0, %v5611
        %5613 = vmatmul.f32.gmra.mxu0 %v5530
        %v5614 = vpop.f32.mrf.mxu0
        %v5615 = vadd.f32 0.0, %v5614
        %5616 = vmatmul.f32.gmra.mxu0 %v5531
        %v5617 = vpop.f32.mrf.mxu0
        %5618 = vdwg.mxu0
        %v5619 = vadd.f32 %v5497, %v5567
        %v5620 = vadd.f32 %v5498, %v5570
        %v5621 = vadd.f32 %v5499, %v5573
        %v5622 = vadd.f32 %v5500, %v5576
        %v5623 = vadd.f32 %v5501, %v5579
        %v5624 = vadd.f32 %v5502, %v5582
        %v5625 = vadd.f32 %v5503, %v5585
        %v5626 = vadd.f32 %v5504, %v5588
        %v5627 = vadd.f32 %v5505, %v5591
        %v5628 = vadd.f32 %v5506, %v5594
        %v5629 = vadd.f32 %v5507, %v5597
        %v5630 = vadd.f32 %v5508, %v5600
        %v5631 = vadd.f32 %v5509, %v5603
        %v5632 = vadd.f32 %v5510, %v5606
        %v5633 = vadd.f32 %v5511, %v5609
        %v5634 = vadd.f32 %v5512, %v5612
        %v5635 = vadd.f32 %v5513, %v5615
        %v5636 = vld [vmem:[#allocation2 + $0x1e] sm:$0xff]
        %v5637 = vld [vmem:[#allocation2 + $0x26] sm:$0xff]
        %v5638 = vld [vmem:[#allocation2 + $0x2e] sm:$0xff]
        %v5639 = vld [vmem:[#allocation2 + $0x36] sm:$0xff]
        %v5640 = vld [vmem:[#allocation2 + $0x3e] sm:$0xff]
        %v5641 = vld [vmem:[#allocation2 + $0x46] sm:$0xff]
        %v5642 = vld [vmem:[#allocation2 + $0x4e] sm:$0xff]
        %v5643 = vld [vmem:[#allocation2 + $0x56] sm:$0xff]
        %v5644 = vld [vmem:[#allocation2 + $0x5e] sm:$0xff]
        %v5645 = vld [vmem:[#allocation2 + $0x66] sm:$0xff]
        %v5646 = vld [vmem:[#allocation2 + $0x6e] sm:$0xff]
        %v5647 = vld [vmem:[#allocation2 + $0x76] sm:$0xff]
        %v5648 = vld [vmem:[#allocation2 + $0x7e] sm:$0xff]
        %v5649 = vld [vmem:[#allocation2 + $0x86] sm:$0xff]
        %v5650 = vld [vmem:[#allocation2 + $0x8e] sm:$0xff]
        %v5651 = vld [vmem:[#allocation2 + $0x96] sm:$0xff]
        %v5652 = vld [vmem:[#allocation2 + $0x9e] sm:$0xff]
        %v5653 = vld [vmem:[#allocation2 + $0xa6] sm:$0xf]
        %s5654 = scalar_lea.vmem %s3, 1536
        %v5655 = vld [vmem:[%s5654] sm:$0xff]
        %v5656 = vld [vmem:[%s5654 + $0x8] sm:$0xff]
        %v5657 = vld [vmem:[%s5654 + $0x10] sm:$0xff]
        %v5658 = vld [vmem:[%s5654 + $0x18] sm:$0xff]
        %v5659 = vld [vmem:[%s5654 + $0x20] sm:$0xff]
        %v5660 = vld [vmem:[%s5654 + $0x28] sm:$0xff]
        %v5661 = vld [vmem:[%s5654 + $0x30] sm:$0xff]
        %v5662 = vld [vmem:[%s5654 + $0x38] sm:$0xff]
        %v5663 = vld [vmem:[%s5654 + $0x40] sm:$0xff]
        %v5664 = vld [vmem:[%s5654 + $0x48] sm:$0xff]
        %v5665 = vld [vmem:[%s5654 + $0x50] sm:$0xff]
        %v5666 = vld [vmem:[%s5654 + $0x58] sm:$0xff]
        %v5667 = vld [vmem:[%s5654 + $0x60] sm:$0xff]
        %v5668 = vld [vmem:[%s5654 + $0x68] sm:$0xff]
        %v5669 = vld [vmem:[%s5654 + $0x70] sm:$0xff]
        %v5670 = vld [vmem:[%s5654 + $0x78] sm:$0xff]
        %5671 = vmatpush.msra.mxu0 %v5670
        %5672 = vmatpush.msra.mxu0 %v5669
        %5673 = vmatpush.msra.mxu0 %v5668
        %5674 = vmatpush.msra.mxu0 %v5667
        %5675 = vmatpush.msra.mxu0 %v5666
        %5676 = vmatpush.msra.mxu0 %v5665
        %5677 = vmatpush.msra.mxu0 %v5664
        %5678 = vmatpush.msra.mxu0 %v5663
        %5679 = vmatpush.msra.mxu0 %v5662
        %5680 = vmatpush.msra.mxu0 %v5661
        %5681 = vmatpush.msra.mxu0 %v5660
        %5682 = vmatpush.msra.mxu0 %v5659
        %5683 = vmatpush.msra.mxu0 %v5658
        %5684 = vmatpush.msra.mxu0 %v5657
        %5685 = vmatpush.msra.mxu0 %v5656
        %5686 = vmatpush.msra.mxu0 %v5655
        %5687 = vmatmul.f32.gmra.mxu0 %v5636
        %v5688 = vpop.f32.mrf.mxu0
        %v5689 = vadd.f32 0.0, %v5688
        %5690 = vmatmul.f32.gmra.mxu0 %v5637
        %v5691 = vpop.f32.mrf.mxu0
        %v5692 = vadd.f32 0.0, %v5691
        %5693 = vmatmul.f32.gmra.mxu0 %v5638
        %v5694 = vpop.f32.mrf.mxu0
        %v5695 = vadd.f32 0.0, %v5694
        %5696 = vmatmul.f32.gmra.mxu0 %v5639
        %v5697 = vpop.f32.mrf.mxu0
        %v5698 = vadd.f32 0.0, %v5697
        %5699 = vmatmul.f32.gmra.mxu0 %v5640
        %v5700 = vpop.f32.mrf.mxu0
        %v5701 = vadd.f32 0.0, %v5700
        %5702 = vmatmul.f32.gmra.mxu0 %v5641
        %v5703 = vpop.f32.mrf.mxu0
        %v5704 = vadd.f32 0.0, %v5703
        %5705 = vmatmul.f32.gmra.mxu0 %v5642
        %v5706 = vpop.f32.mrf.mxu0
        %v5707 = vadd.f32 0.0, %v5706
        %5708 = vmatmul.f32.gmra.mxu0 %v5643
        %v5709 = vpop.f32.mrf.mxu0
        %v5710 = vadd.f32 0.0, %v5709
        %5711 = vmatmul.f32.gmra.mxu0 %v5644
        %v5712 = vpop.f32.mrf.mxu0
        %v5713 = vadd.f32 0.0, %v5712
        %5714 = vmatmul.f32.gmra.mxu0 %v5645
        %v5715 = vpop.f32.mrf.mxu0
        %v5716 = vadd.f32 0.0, %v5715
        %5717 = vmatmul.f32.gmra.mxu0 %v5646
        %v5718 = vpop.f32.mrf.mxu0
        %v5719 = vadd.f32 0.0, %v5718
        %5720 = vmatmul.f32.gmra.mxu0 %v5647
        %v5721 = vpop.f32.mrf.mxu0
        %v5722 = vadd.f32 0.0, %v5721
        %5723 = vmatmul.f32.gmra.mxu0 %v5648
        %v5724 = vpop.f32.mrf.mxu0
        %v5725 = vadd.f32 0.0, %v5724
        %5726 = vmatmul.f32.gmra.mxu0 %v5649
        %v5727 = vpop.f32.mrf.mxu0
        %v5728 = vadd.f32 0.0, %v5727
        %5729 = vmatmul.f32.gmra.mxu0 %v5650
        %v5730 = vpop.f32.mrf.mxu0
        %v5731 = vadd.f32 0.0, %v5730
        %5732 = vmatmul.f32.gmra.mxu0 %v5651
        %v5733 = vpop.f32.mrf.mxu0
        %v5734 = vadd.f32 0.0, %v5733
        %5735 = vmatmul.f32.gmra.mxu0 %v5652
        %v5736 = vpop.f32.mrf.mxu0
        %v5737 = vadd.f32 0.0, %v5736
        %5738 = vmatmul.f32.gmra.mxu0 %v5653
        %v5739 = vpop.f32.mrf.mxu0
        %5740 = vdwg.mxu0
        %v5741 = vadd.f32 %v5619, %v5689
        %v5742 = vadd.f32 %v5620, %v5692
        %v5743 = vadd.f32 %v5621, %v5695
        %v5744 = vadd.f32 %v5622, %v5698
        %v5745 = vadd.f32 %v5623, %v5701
        %v5746 = vadd.f32 %v5624, %v5704
        %v5747 = vadd.f32 %v5625, %v5707
        %v5748 = vadd.f32 %v5626, %v5710
        %v5749 = vadd.f32 %v5627, %v5713
        %v5750 = vadd.f32 %v5628, %v5716
        %v5751 = vadd.f32 %v5629, %v5719
        %v5752 = vadd.f32 %v5630, %v5722
        %v5753 = vadd.f32 %v5631, %v5725
        %v5754 = vadd.f32 %v5632, %v5728
        %v5755 = vadd.f32 %v5633, %v5731
        %v5756 = vadd.f32 %v5634, %v5734
        %v5757 = vadd.f32 %v5635, %v5737
        %v5758 = vld [vmem:[#allocation2 + $0x1f] sm:$0xff]
        %v5759 = vld [vmem:[#allocation2 + $0x27] sm:$0xff]
        %v5760 = vld [vmem:[#allocation2 + $0x2f] sm:$0xff]
        %v5761 = vld [vmem:[#allocation2 + $0x37] sm:$0xff]
        %v5762 = vld [vmem:[#allocation2 + $0x3f] sm:$0xff]
        %v5763 = vld [vmem:[#allocation2 + $0x47] sm:$0xff]
        %v5764 = vld [vmem:[#allocation2 + $0x4f] sm:$0xff]
        %v5765 = vld [vmem:[#allocation2 + $0x57] sm:$0xff]
        %v5766 = vld [vmem:[#allocation2 + $0x5f] sm:$0xff]
        %v5767 = vld [vmem:[#allocation2 + $0x67] sm:$0xff]
        %v5768 = vld [vmem:[#allocation2 + $0x6f] sm:$0xff]
        %v5769 = vld [vmem:[#allocation2 + $0x77] sm:$0xff]
        %v5770 = vld [vmem:[#allocation2 + $0x7f] sm:$0xff]
        %v5771 = vld [vmem:[#allocation2 + $0x87] sm:$0xff]
        %v5772 = vld [vmem:[#allocation2 + $0x8f] sm:$0xff]
        %v5773 = vld [vmem:[#allocation2 + $0x97] sm:$0xff]
        %v5774 = vld [vmem:[#allocation2 + $0x9f] sm:$0xff]
        %v5775 = vld [vmem:[#allocation2 + $0xa7] sm:$0xf]
        %s5776 = scalar_lea.vmem %s3, 1664
        %v5777 = vld [vmem:[%s5776] sm:$0xff]
        %v5778 = vld [vmem:[%s5776 + $0x8] sm:$0xff]
        %v5779 = vld [vmem:[%s5776 + $0x10] sm:$0xff]
        %v5780 = vld [vmem:[%s5776 + $0x18] sm:$0xff]
        %v5781 = vld [vmem:[%s5776 + $0x20] sm:$0xff]
        %v5782 = vld [vmem:[%s5776 + $0x28] sm:$0xff]
        %v5783 = vld [vmem:[%s5776 + $0x30] sm:$0xff]
        %v5784 = vld [vmem:[%s5776 + $0x38] sm:$0xff]
        %v5785 = vld [vmem:[%s5776 + $0x40] sm:$0xff]
        %v5786 = vld [vmem:[%s5776 + $0x48] sm:$0xff]
        %v5787 = vld [vmem:[%s5776 + $0x50] sm:$0xff]
        %v5788 = vld [vmem:[%s5776 + $0x58] sm:$0xff]
        %v5789 = vld [vmem:[%s5776 + $0x60] sm:$0xff]
        %v5790 = vld [vmem:[%s5776 + $0x68] sm:$0xff]
        %v5791 = vld [vmem:[%s5776 + $0x70] sm:$0xff]
        %v5792 = vld [vmem:[%s5776 + $0x78] sm:$0xff]
        %5793 = vmatpush.msra.mxu0 %v5792
        %5794 = vmatpush.msra.mxu0 %v5791
        %5795 = vmatpush.msra.mxu0 %v5790
        %5796 = vmatpush.msra.mxu0 %v5789
        %5797 = vmatpush.msra.mxu0 %v5788
        %5798 = vmatpush.msra.mxu0 %v5787
        %5799 = vmatpush.msra.mxu0 %v5786
        %5800 = vmatpush.msra.mxu0 %v5785
        %5801 = vmatpush.msra.mxu0 %v5784
        %5802 = vmatpush.msra.mxu0 %v5783
        %5803 = vmatpush.msra.mxu0 %v5782
        %5804 = vmatpush.msra.mxu0 %v5781
        %5805 = vmatpush.msra.mxu0 %v5780
        %5806 = vmatpush.msra.mxu0 %v5779
        %5807 = vmatpush.msra.mxu0 %v5778
        %5808 = vmatpush.msra.mxu0 %v5777
        %5809 = vmatmul.f32.gmra.mxu0 %v5758
        %v5810 = vpop.f32.mrf.mxu0
        %v5811 = vadd.f32 0.0, %v5810
        %5812 = vmatmul.f32.gmra.mxu0 %v5759
        %v5813 = vpop.f32.mrf.mxu0
        %v5814 = vadd.f32 0.0, %v5813
        %5815 = vmatmul.f32.gmra.mxu0 %v5760
        %v5816 = vpop.f32.mrf.mxu0
        %v5817 = vadd.f32 0.0, %v5816
        %5818 = vmatmul.f32.gmra.mxu0 %v5761
        %v5819 = vpop.f32.mrf.mxu0
        %v5820 = vadd.f32 0.0, %v5819
        %5821 = vmatmul.f32.gmra.mxu0 %v5762
        %v5822 = vpop.f32.mrf.mxu0
        %v5823 = vadd.f32 0.0, %v5822
        %5824 = vmatmul.f32.gmra.mxu0 %v5763
        %v5825 = vpop.f32.mrf.mxu0
        %v5826 = vadd.f32 0.0, %v5825
        %5827 = vmatmul.f32.gmra.mxu0 %v5764
        %v5828 = vpop.f32.mrf.mxu0
        %v5829 = vadd.f32 0.0, %v5828
        %5830 = vmatmul.f32.gmra.mxu0 %v5765
        %v5831 = vpop.f32.mrf.mxu0
        %v5832 = vadd.f32 0.0, %v5831
        %5833 = vmatmul.f32.gmra.mxu0 %v5766
        %v5834 = vpop.f32.mrf.mxu0
        %v5835 = vadd.f32 0.0, %v5834
        %5836 = vmatmul.f32.gmra.mxu0 %v5767
        %v5837 = vpop.f32.mrf.mxu0
        %v5838 = vadd.f32 0.0, %v5837
        %5839 = vmatmul.f32.gmra.mxu0 %v5768
        %v5840 = vpop.f32.mrf.mxu0
        %v5841 = vadd.f32 0.0, %v5840
        %5842 = vmatmul.f32.gmra.mxu0 %v5769
        %v5843 = vpop.f32.mrf.mxu0
        %v5844 = vadd.f32 0.0, %v5843
        %5845 = vmatmul.f32.gmra.mxu0 %v5770
        %v5846 = vpop.f32.mrf.mxu0
        %v5847 = vadd.f32 0.0, %v5846
        %5848 = vmatmul.f32.gmra.mxu0 %v5771
        %v5849 = vpop.f32.mrf.mxu0
        %v5850 = vadd.f32 0.0, %v5849
        %5851 = vmatmul.f32.gmra.mxu0 %v5772
        %v5852 = vpop.f32.mrf.mxu0
        %v5853 = vadd.f32 0.0, %v5852
        %5854 = vmatmul.f32.gmra.mxu0 %v5773
        %v5855 = vpop.f32.mrf.mxu0
        %v5856 = vadd.f32 0.0, %v5855
        %5857 = vmatmul.f32.gmra.mxu0 %v5774
        %v5858 = vpop.f32.mrf.mxu0
        %v5859 = vadd.f32 0.0, %v5858
        %5860 = vmatmul.f32.gmra.mxu0 %v5775
        %v5861 = vpop.f32.mrf.mxu0
        %5862 = vdwg.mxu0
        %v5863 = vadd.f32 %v5741, %v5811
        %v5864 = vadd.f32 %v5742, %v5814
        %v5865 = vadd.f32 %v5743, %v5817
        %v5866 = vadd.f32 %v5744, %v5820
        %v5867 = vadd.f32 %v5745, %v5823
        %v5868 = vadd.f32 %v5746, %v5826
        %v5869 = vadd.f32 %v5747, %v5829
        %v5870 = vadd.f32 %v5748, %v5832
        %v5871 = vadd.f32 %v5749, %v5835
        %v5872 = vadd.f32 %v5750, %v5838
        %v5873 = vadd.f32 %v5751, %v5841
        %v5874 = vadd.f32 %v5752, %v5844
        %v5875 = vadd.f32 %v5753, %v5847
        %v5876 = vadd.f32 %v5754, %v5850
        %v5877 = vadd.f32 %v5755, %v5853
        %v5878 = vadd.f32 %v5756, %v5856
        %v5879 = vadd.f32 %v5757, %v5859
        %v5880 = vld [vmem:[#allocation2 + $0x20] sm:$0xff]
        %v5881 = vld [vmem:[#allocation2 + $0x28] sm:$0xff]
        %v5882 = vld [vmem:[#allocation2 + $0x30] sm:$0xff]
        %v5883 = vld [vmem:[#allocation2 + $0x38] sm:$0xff]
        %v5884 = vld [vmem:[#allocation2 + $0x40] sm:$0xff]
        %v5885 = vld [vmem:[#allocation2 + $0x48] sm:$0xff]
        %v5886 = vld [vmem:[#allocation2 + $0x50] sm:$0xff]
        %v5887 = vld [vmem:[#allocation2 + $0x58] sm:$0xff]
        %v5888 = vld [vmem:[#allocation2 + $0x60] sm:$0xff]
        %v5889 = vld [vmem:[#allocation2 + $0x68] sm:$0xff]
        %v5890 = vld [vmem:[#allocation2 + $0x70] sm:$0xff]
        %v5891 = vld [vmem:[#allocation2 + $0x78] sm:$0xff]
        %v5892 = vld [vmem:[#allocation2 + $0x80] sm:$0xff]
        %v5893 = vld [vmem:[#allocation2 + $0x88] sm:$0xff]
        %v5894 = vld [vmem:[#allocation2 + $0x90] sm:$0xff]
        %v5895 = vld [vmem:[#allocation2 + $0x98] sm:$0xff]
        %v5896 = vld [vmem:[#allocation2 + $0xa0] sm:$0xff]
        %v5897 = vld [vmem:[#allocation2 + $0xa8] sm:$0xf]
        %s5898 = scalar_lea.vmem %s3, 1792
        %v5899 = vld [vmem:[%s5898] sm:$0xff]
        %v5900 = vld [vmem:[%s5898 + $0x8] sm:$0xff]
        %v5901 = vld [vmem:[%s5898 + $0x10] sm:$0xff]
        %v5902 = vld [vmem:[%s5898 + $0x18] sm:$0xff]
        %v5903 = vld [vmem:[%s5898 + $0x20] sm:$0xff]
        %v5904 = vld [vmem:[%s5898 + $0x28] sm:$0xff]
        %v5905 = vld [vmem:[%s5898 + $0x30] sm:$0xff]
        %v5906 = vld [vmem:[%s5898 + $0x38] sm:$0xff]
        %v5907 = vld [vmem:[%s5898 + $0x40] sm:$0xff]
        %v5908 = vld [vmem:[%s5898 + $0x48] sm:$0xff]
        %v5909 = vld [vmem:[%s5898 + $0x50] sm:$0xff]
        %v5910 = vld [vmem:[%s5898 + $0x58] sm:$0xff]
        %v5911 = vld [vmem:[%s5898 + $0x60] sm:$0xff]
        %v5912 = vld [vmem:[%s5898 + $0x68] sm:$0xff]
        %v5913 = vld [vmem:[%s5898 + $0x70] sm:$0xff]
        %v5914 = vld [vmem:[%s5898 + $0x78] sm:$0xff]
        %5915 = vmatpush.msra.mxu0 %v5914
        %5916 = vmatpush.msra.mxu0 %v5913
        %5917 = vmatpush.msra.mxu0 %v5912
        %5918 = vmatpush.msra.mxu0 %v5911
        %5919 = vmatpush.msra.mxu0 %v5910
        %5920 = vmatpush.msra.mxu0 %v5909
        %5921 = vmatpush.msra.mxu0 %v5908
        %5922 = vmatpush.msra.mxu0 %v5907
        %5923 = vmatpush.msra.mxu0 %v5906
        %5924 = vmatpush.msra.mxu0 %v5905
        %5925 = vmatpush.msra.mxu0 %v5904
        %5926 = vmatpush.msra.mxu0 %v5903
        %5927 = vmatpush.msra.mxu0 %v5902
        %5928 = vmatpush.msra.mxu0 %v5901
        %5929 = vmatpush.msra.mxu0 %v5900
        %5930 = vmatpush.msra.mxu0 %v5899
        %5931 = vmatmul.f32.gmra.mxu0 %v5880
        %v5932 = vpop.f32.mrf.mxu0
        %v5933 = vadd.f32 0.0, %v5932
        %5934 = vmatmul.f32.gmra.mxu0 %v5881
        %v5935 = vpop.f32.mrf.mxu0
        %v5936 = vadd.f32 0.0, %v5935
        %5937 = vmatmul.f32.gmra.mxu0 %v5882
        %v5938 = vpop.f32.mrf.mxu0
        %v5939 = vadd.f32 0.0, %v5938
        %5940 = vmatmul.f32.gmra.mxu0 %v5883
        %v5941 = vpop.f32.mrf.mxu0
        %v5942 = vadd.f32 0.0, %v5941
        %5943 = vmatmul.f32.gmra.mxu0 %v5884
        %v5944 = vpop.f32.mrf.mxu0
        %v5945 = vadd.f32 0.0, %v5944
        %5946 = vmatmul.f32.gmra.mxu0 %v5885
        %v5947 = vpop.f32.mrf.mxu0
        %v5948 = vadd.f32 0.0, %v5947
        %5949 = vmatmul.f32.gmra.mxu0 %v5886
        %v5950 = vpop.f32.mrf.mxu0
        %v5951 = vadd.f32 0.0, %v5950
        %5952 = vmatmul.f32.gmra.mxu0 %v5887
        %v5953 = vpop.f32.mrf.mxu0
        %v5954 = vadd.f32 0.0, %v5953
        %5955 = vmatmul.f32.gmra.mxu0 %v5888
        %v5956 = vpop.f32.mrf.mxu0
        %v5957 = vadd.f32 0.0, %v5956
        %5958 = vmatmul.f32.gmra.mxu0 %v5889
        %v5959 = vpop.f32.mrf.mxu0
        %v5960 = vadd.f32 0.0, %v5959
        %5961 = vmatmul.f32.gmra.mxu0 %v5890
        %v5962 = vpop.f32.mrf.mxu0
        %v5963 = vadd.f32 0.0, %v5962
        %5964 = vmatmul.f32.gmra.mxu0 %v5891
        %v5965 = vpop.f32.mrf.mxu0
        %v5966 = vadd.f32 0.0, %v5965
        %5967 = vmatmul.f32.gmra.mxu0 %v5892
        %v5968 = vpop.f32.mrf.mxu0
        %v5969 = vadd.f32 0.0, %v5968
        %5970 = vmatmul.f32.gmra.mxu0 %v5893
        %v5971 = vpop.f32.mrf.mxu0
        %v5972 = vadd.f32 0.0, %v5971
        %5973 = vmatmul.f32.gmra.mxu0 %v5894
        %v5974 = vpop.f32.mrf.mxu0
        %v5975 = vadd.f32 0.0, %v5974
        %5976 = vmatmul.f32.gmra.mxu0 %v5895
        %v5977 = vpop.f32.mrf.mxu0
        %v5978 = vadd.f32 0.0, %v5977
        %5979 = vmatmul.f32.gmra.mxu0 %v5896
        %v5980 = vpop.f32.mrf.mxu0
        %v5981 = vadd.f32 0.0, %v5980
        %5982 = vmatmul.f32.gmra.mxu0 %v5897
        %v5983 = vpop.f32.mrf.mxu0
        %5984 = vdwg.mxu0
        %v5985 = vadd.f32 %v5863, %v5933
        %v5986 = vadd.f32 %v5864, %v5936
        %v5987 = vadd.f32 %v5865, %v5939
        %v5988 = vadd.f32 %v5866, %v5942
        %v5989 = vadd.f32 %v5867, %v5945
        %v5990 = vadd.f32 %v5868, %v5948
        %v5991 = vadd.f32 %v5869, %v5951
        %v5992 = vadd.f32 %v5870, %v5954
        %v5993 = vadd.f32 %v5871, %v5957
        %v5994 = vadd.f32 %v5872, %v5960
        %v5995 = vadd.f32 %v5873, %v5963
        %v5996 = vadd.f32 %v5874, %v5966
        %v5997 = vadd.f32 %v5875, %v5969
        %v5998 = vadd.f32 %v5876, %v5972
        %v5999 = vadd.f32 %v5877, %v5975
        %v6000 = vadd.f32 %v5878, %v5978
        %v6001 = vadd.f32 %v5879, %v5981
        %v6002 = vld [vmem:[#allocation2 + $0x2a] sm:$0xff]
        %v6003 = vld [vmem:[#allocation2 + $0x32] sm:$0xff]
        %v6004 = vld [vmem:[#allocation2 + $0x3a] sm:$0xff]
        %v6005 = vld [vmem:[#allocation2 + $0x42] sm:$0xff]
        %v6006 = vld [vmem:[#allocation2 + $0x4a] sm:$0xff]
        %v6007 = vld [vmem:[#allocation2 + $0x52] sm:$0xff]
        %v6008 = vld [vmem:[#allocation2 + $0x5a] sm:$0xff]
        %v6009 = vld [vmem:[#allocation2 + $0x62] sm:$0xff]
        %v6010 = vld [vmem:[#allocation2 + $0x6a] sm:$0xff]
        %v6011 = vld [vmem:[#allocation2 + $0x72] sm:$0xff]
        %v6012 = vld [vmem:[#allocation2 + $0x7a] sm:$0xff]
        %v6013 = vld [vmem:[#allocation2 + $0x82] sm:$0xff]
        %v6014 = vld [vmem:[#allocation2 + $0x8a] sm:$0xff]
        %v6015 = vld [vmem:[#allocation2 + $0x92] sm:$0xff]
        %v6016 = vld [vmem:[#allocation2 + $0x9a] sm:$0xff]
        %v6017 = vld [vmem:[#allocation2 + $0xa2] sm:$0xff]
        %v6018 = vld [vmem:[#allocation2 + $0xaa] sm:$0xff]
        %v6019 = vld [vmem:[#allocation2 + $0xb2] sm:$0xf]
        %s6020 = scalar_lea.vmem %s3, 1920
        %v6021 = vld [vmem:[%s6020] sm:$0xff]
        %v6022 = vld [vmem:[%s6020 + $0x8] sm:$0xff]
        %v6023 = vld [vmem:[%s6020 + $0x10] sm:$0xff]
        %v6024 = vld [vmem:[%s6020 + $0x18] sm:$0xff]
        %v6025 = vld [vmem:[%s6020 + $0x20] sm:$0xff]
        %v6026 = vld [vmem:[%s6020 + $0x28] sm:$0xff]
        %v6027 = vld [vmem:[%s6020 + $0x30] sm:$0xff]
        %v6028 = vld [vmem:[%s6020 + $0x38] sm:$0xff]
        %v6029 = vld [vmem:[%s6020 + $0x40] sm:$0xff]
        %v6030 = vld [vmem:[%s6020 + $0x48] sm:$0xff]
        %v6031 = vld [vmem:[%s6020 + $0x50] sm:$0xff]
        %v6032 = vld [vmem:[%s6020 + $0x58] sm:$0xff]
        %v6033 = vld [vmem:[%s6020 + $0x60] sm:$0xff]
        %v6034 = vld [vmem:[%s6020 + $0x68] sm:$0xff]
        %v6035 = vld [vmem:[%s6020 + $0x70] sm:$0xff]
        %v6036 = vld [vmem:[%s6020 + $0x78] sm:$0xff]
        %6037 = vmatpush.msra.mxu0 %v6036
        %6038 = vmatpush.msra.mxu0 %v6035
        %6039 = vmatpush.msra.mxu0 %v6034
        %6040 = vmatpush.msra.mxu0 %v6033
        %6041 = vmatpush.msra.mxu0 %v6032
        %6042 = vmatpush.msra.mxu0 %v6031
        %6043 = vmatpush.msra.mxu0 %v6030
        %6044 = vmatpush.msra.mxu0 %v6029
        %6045 = vmatpush.msra.mxu0 %v6028
        %6046 = vmatpush.msra.mxu0 %v6027
        %6047 = vmatpush.msra.mxu0 %v6026
        %6048 = vmatpush.msra.mxu0 %v6025
        %6049 = vmatpush.msra.mxu0 %v6024
        %6050 = vmatpush.msra.mxu0 %v6023
        %6051 = vmatpush.msra.mxu0 %v6022
        %6052 = vmatpush.msra.mxu0 %v6021
        %6053 = vmatmul.f32.gmra.mxu0 %v6002
        %v6054 = vpop.f32.mrf.mxu0
        %v6055 = vadd.f32 0.0, %v6054
        %6056 = vmatmul.f32.gmra.mxu0 %v6003
        %v6057 = vpop.f32.mrf.mxu0
        %v6058 = vadd.f32 0.0, %v6057
        %6059 = vmatmul.f32.gmra.mxu0 %v6004
        %v6060 = vpop.f32.mrf.mxu0
        %v6061 = vadd.f32 0.0, %v6060
        %6062 = vmatmul.f32.gmra.mxu0 %v6005
        %v6063 = vpop.f32.mrf.mxu0
        %v6064 = vadd.f32 0.0, %v6063
        %6065 = vmatmul.f32.gmra.mxu0 %v6006
        %v6066 = vpop.f32.mrf.mxu0
        %v6067 = vadd.f32 0.0, %v6066
        %6068 = vmatmul.f32.gmra.mxu0 %v6007
        %v6069 = vpop.f32.mrf.mxu0
        %v6070 = vadd.f32 0.0, %v6069
        %6071 = vmatmul.f32.gmra.mxu0 %v6008
        %v6072 = vpop.f32.mrf.mxu0
        %v6073 = vadd.f32 0.0, %v6072
        %6074 = vmatmul.f32.gmra.mxu0 %v6009
        %v6075 = vpop.f32.mrf.mxu0
        %v6076 = vadd.f32 0.0, %v6075
        %6077 = vmatmul.f32.gmra.mxu0 %v6010
        %v6078 = vpop.f32.mrf.mxu0
        %v6079 = vadd.f32 0.0, %v6078
        %6080 = vmatmul.f32.gmra.mxu0 %v6011
        %v6081 = vpop.f32.mrf.mxu0
        %v6082 = vadd.f32 0.0, %v6081
        %6083 = vmatmul.f32.gmra.mxu0 %v6012
        %v6084 = vpop.f32.mrf.mxu0
        %v6085 = vadd.f32 0.0, %v6084
        %6086 = vmatmul.f32.gmra.mxu0 %v6013
        %v6087 = vpop.f32.mrf.mxu0
        %v6088 = vadd.f32 0.0, %v6087
        %6089 = vmatmul.f32.gmra.mxu0 %v6014
        %v6090 = vpop.f32.mrf.mxu0
        %v6091 = vadd.f32 0.0, %v6090
        %6092 = vmatmul.f32.gmra.mxu0 %v6015
        %v6093 = vpop.f32.mrf.mxu0
        %v6094 = vadd.f32 0.0, %v6093
        %6095 = vmatmul.f32.gmra.mxu0 %v6016
        %v6096 = vpop.f32.mrf.mxu0
        %v6097 = vadd.f32 0.0, %v6096
        %6098 = vmatmul.f32.gmra.mxu0 %v6017
        %v6099 = vpop.f32.mrf.mxu0
        %v6100 = vadd.f32 0.0, %v6099
        %6101 = vmatmul.f32.gmra.mxu0 %v6018
        %v6102 = vpop.f32.mrf.mxu0
        %v6103 = vadd.f32 0.0, %v6102
        %6104 = vmatmul.f32.gmra.mxu0 %v6019
        %v6105 = vpop.f32.mrf.mxu0
        %6106 = vdwg.mxu0
        %v6107 = vadd.f32 %v5985, %v6055
        %v6108 = vadd.f32 %v5986, %v6058
        %v6109 = vadd.f32 %v5987, %v6061
        %v6110 = vadd.f32 %v5988, %v6064
        %v6111 = vadd.f32 %v5989, %v6067
        %v6112 = vadd.f32 %v5990, %v6070
        %v6113 = vadd.f32 %v5991, %v6073
        %v6114 = vadd.f32 %v5992, %v6076
        %v6115 = vadd.f32 %v5993, %v6079
        %v6116 = vadd.f32 %v5994, %v6082
        %v6117 = vadd.f32 %v5995, %v6085
        %v6118 = vadd.f32 %v5996, %v6088
        %v6119 = vadd.f32 %v5997, %v6091
        %v6120 = vadd.f32 %v5998, %v6094
        %v6121 = vadd.f32 %v5999, %v6097
        %v6122 = vadd.f32 %v6000, %v6100
        %v6123 = vadd.f32 %v6001, %v6103
        %v6124 = vld [vmem:[#allocation2 + $0x2b] sm:$0xff]
        %v6125 = vld [vmem:[#allocation2 + $0x33] sm:$0xff]
        %v6126 = vld [vmem:[#allocation2 + $0x3b] sm:$0xff]
        %v6127 = vld [vmem:[#allocation2 + $0x43] sm:$0xff]
        %v6128 = vld [vmem:[#allocation2 + $0x4b] sm:$0xff]
        %v6129 = vld [vmem:[#allocation2 + $0x53] sm:$0xff]
        %v6130 = vld [vmem:[#allocation2 + $0x5b] sm:$0xff]
        %v6131 = vld [vmem:[#allocation2 + $0x63] sm:$0xff]
        %v6132 = vld [vmem:[#allocation2 + $0x6b] sm:$0xff]
        %v6133 = vld [vmem:[#allocation2 + $0x73] sm:$0xff]
        %v6134 = vld [vmem:[#allocation2 + $0x7b] sm:$0xff]
        %v6135 = vld [vmem:[#allocation2 + $0x83] sm:$0xff]
        %v6136 = vld [vmem:[#allocation2 + $0x8b] sm:$0xff]
        %v6137 = vld [vmem:[#allocation2 + $0x93] sm:$0xff]
        %v6138 = vld [vmem:[#allocation2 + $0x9b] sm:$0xff]
        %v6139 = vld [vmem:[#allocation2 + $0xa3] sm:$0xff]
        %v6140 = vld [vmem:[#allocation2 + $0xab] sm:$0xff]
        %v6141 = vld [vmem:[#allocation2 + $0xb3] sm:$0xf]
        %s6142 = scalar_lea.vmem %s3, 2048
        %v6143 = vld [vmem:[%s6142] sm:$0xff]
        %v6144 = vld [vmem:[%s6142 + $0x8] sm:$0xff]
        %v6145 = vld [vmem:[%s6142 + $0x10] sm:$0xff]
        %v6146 = vld [vmem:[%s6142 + $0x18] sm:$0xff]
        %v6147 = vld [vmem:[%s6142 + $0x20] sm:$0xff]
        %v6148 = vld [vmem:[%s6142 + $0x28] sm:$0xff]
        %v6149 = vld [vmem:[%s6142 + $0x30] sm:$0xff]
        %v6150 = vld [vmem:[%s6142 + $0x38] sm:$0xff]
        %v6151 = vld [vmem:[%s6142 + $0x40] sm:$0xff]
        %v6152 = vld [vmem:[%s6142 + $0x48] sm:$0xff]
        %v6153 = vld [vmem:[%s6142 + $0x50] sm:$0xff]
        %v6154 = vld [vmem:[%s6142 + $0x58] sm:$0xff]
        %v6155 = vld [vmem:[%s6142 + $0x60] sm:$0xff]
        %v6156 = vld [vmem:[%s6142 + $0x68] sm:$0xff]
        %v6157 = vld [vmem:[%s6142 + $0x70] sm:$0xff]
        %v6158 = vld [vmem:[%s6142 + $0x78] sm:$0xff]
        %6159 = vmatpush.msra.mxu0 %v6158
        %6160 = vmatpush.msra.mxu0 %v6157
        %6161 = vmatpush.msra.mxu0 %v6156
        %6162 = vmatpush.msra.mxu0 %v6155
        %6163 = vmatpush.msra.mxu0 %v6154
        %6164 = vmatpush.msra.mxu0 %v6153
        %6165 = vmatpush.msra.mxu0 %v6152
        %6166 = vmatpush.msra.mxu0 %v6151
        %6167 = vmatpush.msra.mxu0 %v6150
        %6168 = vmatpush.msra.mxu0 %v6149
        %6169 = vmatpush.msra.mxu0 %v6148
        %6170 = vmatpush.msra.mxu0 %v6147
        %6171 = vmatpush.msra.mxu0 %v6146
        %6172 = vmatpush.msra.mxu0 %v6145
        %6173 = vmatpush.msra.mxu0 %v6144
        %6174 = vmatpush.msra.mxu0 %v6143
        %6175 = vmatmul.f32.gmra.mxu0 %v6124
        %v6176 = vpop.f32.mrf.mxu0
        %v6177 = vadd.f32 0.0, %v6176
        %6178 = vmatmul.f32.gmra.mxu0 %v6125
        %v6179 = vpop.f32.mrf.mxu0
        %v6180 = vadd.f32 0.0, %v6179
        %6181 = vmatmul.f32.gmra.mxu0 %v6126
        %v6182 = vpop.f32.mrf.mxu0
        %v6183 = vadd.f32 0.0, %v6182
        %6184 = vmatmul.f32.gmra.mxu0 %v6127
        %v6185 = vpop.f32.mrf.mxu0
        %v6186 = vadd.f32 0.0, %v6185
        %6187 = vmatmul.f32.gmra.mxu0 %v6128
        %v6188 = vpop.f32.mrf.mxu0
        %v6189 = vadd.f32 0.0, %v6188
        %6190 = vmatmul.f32.gmra.mxu0 %v6129
        %v6191 = vpop.f32.mrf.mxu0
        %v6192 = vadd.f32 0.0, %v6191
        %6193 = vmatmul.f32.gmra.mxu0 %v6130
        %v6194 = vpop.f32.mrf.mxu0
        %v6195 = vadd.f32 0.0, %v6194
        %6196 = vmatmul.f32.gmra.mxu0 %v6131
        %v6197 = vpop.f32.mrf.mxu0
        %v6198 = vadd.f32 0.0, %v6197
        %6199 = vmatmul.f32.gmra.mxu0 %v6132
        %v6200 = vpop.f32.mrf.mxu0
        %v6201 = vadd.f32 0.0, %v6200
        %6202 = vmatmul.f32.gmra.mxu0 %v6133
        %v6203 = vpop.f32.mrf.mxu0
        %v6204 = vadd.f32 0.0, %v6203
        %6205 = vmatmul.f32.gmra.mxu0 %v6134
        %v6206 = vpop.f32.mrf.mxu0
        %v6207 = vadd.f32 0.0, %v6206
        %6208 = vmatmul.f32.gmra.mxu0 %v6135
        %v6209 = vpop.f32.mrf.mxu0
        %v6210 = vadd.f32 0.0, %v6209
        %6211 = vmatmul.f32.gmra.mxu0 %v6136
        %v6212 = vpop.f32.mrf.mxu0
        %v6213 = vadd.f32 0.0, %v6212
        %6214 = vmatmul.f32.gmra.mxu0 %v6137
        %v6215 = vpop.f32.mrf.mxu0
        %v6216 = vadd.f32 0.0, %v6215
        %6217 = vmatmul.f32.gmra.mxu0 %v6138
        %v6218 = vpop.f32.mrf.mxu0
        %v6219 = vadd.f32 0.0, %v6218
        %6220 = vmatmul.f32.gmra.mxu0 %v6139
        %v6221 = vpop.f32.mrf.mxu0
        %v6222 = vadd.f32 0.0, %v6221
        %6223 = vmatmul.f32.gmra.mxu0 %v6140
        %v6224 = vpop.f32.mrf.mxu0
        %v6225 = vadd.f32 0.0, %v6224
        %6226 = vmatmul.f32.gmra.mxu0 %v6141
        %v6227 = vpop.f32.mrf.mxu0
        %6228 = vdwg.mxu0
        %v6229 = vadd.f32 %v6107, %v6177
        %v6230 = vadd.f32 %v6108, %v6180
        %v6231 = vadd.f32 %v6109, %v6183
        %v6232 = vadd.f32 %v6110, %v6186
        %v6233 = vadd.f32 %v6111, %v6189
        %v6234 = vadd.f32 %v6112, %v6192
        %v6235 = vadd.f32 %v6113, %v6195
        %v6236 = vadd.f32 %v6114, %v6198
        %v6237 = vadd.f32 %v6115, %v6201
        %v6238 = vadd.f32 %v6116, %v6204
        %v6239 = vadd.f32 %v6117, %v6207
        %v6240 = vadd.f32 %v6118, %v6210
        %v6241 = vadd.f32 %v6119, %v6213
        %v6242 = vadd.f32 %v6120, %v6216
        %v6243 = vadd.f32 %v6121, %v6219
        %v6244 = vadd.f32 %v6122, %v6222
        %v6245 = vadd.f32 %v6123, %v6225
        %v6246 = vld [vmem:[#allocation2 + $0x2c] sm:$0xff]
        %v6247 = vld [vmem:[#allocation2 + $0x34] sm:$0xff]
        %v6248 = vld [vmem:[#allocation2 + $0x3c] sm:$0xff]
        %v6249 = vld [vmem:[#allocation2 + $0x44] sm:$0xff]
        %v6250 = vld [vmem:[#allocation2 + $0x4c] sm:$0xff]
        %v6251 = vld [vmem:[#allocation2 + $0x54] sm:$0xff]
        %v6252 = vld [vmem:[#allocation2 + $0x5c] sm:$0xff]
        %v6253 = vld [vmem:[#allocation2 + $0x64] sm:$0xff]
        %v6254 = vld [vmem:[#allocation2 + $0x6c] sm:$0xff]
        %v6255 = vld [vmem:[#allocation2 + $0x74] sm:$0xff]
        %v6256 = vld [vmem:[#allocation2 + $0x7c] sm:$0xff]
        %v6257 = vld [vmem:[#allocation2 + $0x84] sm:$0xff]
        %v6258 = vld [vmem:[#allocation2 + $0x8c] sm:$0xff]
        %v6259 = vld [vmem:[#allocation2 + $0x94] sm:$0xff]
        %v6260 = vld [vmem:[#allocation2 + $0x9c] sm:$0xff]
        %v6261 = vld [vmem:[#allocation2 + $0xa4] sm:$0xff]
        %v6262 = vld [vmem:[#allocation2 + $0xac] sm:$0xff]
        %v6263 = vld [vmem:[#allocation2 + $0xb4] sm:$0xf]
        %s6264 = scalar_lea.vmem %s3, 2176
        %v6265 = vld [vmem:[%s6264] sm:$0xff]
        %v6266 = vld [vmem:[%s6264 + $0x8] sm:$0xff]
        %v6267 = vld [vmem:[%s6264 + $0x10] sm:$0xff]
        %v6268 = vld [vmem:[%s6264 + $0x18] sm:$0xff]
        %v6269 = vld [vmem:[%s6264 + $0x20] sm:$0xff]
        %v6270 = vld [vmem:[%s6264 + $0x28] sm:$0xff]
        %v6271 = vld [vmem:[%s6264 + $0x30] sm:$0xff]
        %v6272 = vld [vmem:[%s6264 + $0x38] sm:$0xff]
        %v6273 = vld [vmem:[%s6264 + $0x40] sm:$0xff]
        %v6274 = vld [vmem:[%s6264 + $0x48] sm:$0xff]
        %v6275 = vld [vmem:[%s6264 + $0x50] sm:$0xff]
        %v6276 = vld [vmem:[%s6264 + $0x58] sm:$0xff]
        %v6277 = vld [vmem:[%s6264 + $0x60] sm:$0xff]
        %v6278 = vld [vmem:[%s6264 + $0x68] sm:$0xff]
        %v6279 = vld [vmem:[%s6264 + $0x70] sm:$0xff]
        %v6280 = vld [vmem:[%s6264 + $0x78] sm:$0xff]
        %6281 = vmatpush.msra.mxu0 %v6280
        %6282 = vmatpush.msra.mxu0 %v6279
        %6283 = vmatpush.msra.mxu0 %v6278
        %6284 = vmatpush.msra.mxu0 %v6277
        %6285 = vmatpush.msra.mxu0 %v6276
        %6286 = vmatpush.msra.mxu0 %v6275
        %6287 = vmatpush.msra.mxu0 %v6274
        %6288 = vmatpush.msra.mxu0 %v6273
        %6289 = vmatpush.msra.mxu0 %v6272
        %6290 = vmatpush.msra.mxu0 %v6271
        %6291 = vmatpush.msra.mxu0 %v6270
        %6292 = vmatpush.msra.mxu0 %v6269
        %6293 = vmatpush.msra.mxu0 %v6268
        %6294 = vmatpush.msra.mxu0 %v6267
        %6295 = vmatpush.msra.mxu0 %v6266
        %6296 = vmatpush.msra.mxu0 %v6265
        %6297 = vmatmul.f32.gmra.mxu0 %v6246
        %v6298 = vpop.f32.mrf.mxu0
        %v6299 = vadd.f32 0.0, %v6298
        %6300 = vmatmul.f32.gmra.mxu0 %v6247
        %v6301 = vpop.f32.mrf.mxu0
        %v6302 = vadd.f32 0.0, %v6301
        %6303 = vmatmul.f32.gmra.mxu0 %v6248
        %v6304 = vpop.f32.mrf.mxu0
        %v6305 = vadd.f32 0.0, %v6304
        %6306 = vmatmul.f32.gmra.mxu0 %v6249
        %v6307 = vpop.f32.mrf.mxu0
        %v6308 = vadd.f32 0.0, %v6307
        %6309 = vmatmul.f32.gmra.mxu0 %v6250
        %v6310 = vpop.f32.mrf.mxu0
        %v6311 = vadd.f32 0.0, %v6310
        %6312 = vmatmul.f32.gmra.mxu0 %v6251
        %v6313 = vpop.f32.mrf.mxu0
        %v6314 = vadd.f32 0.0, %v6313
        %6315 = vmatmul.f32.gmra.mxu0 %v6252
        %v6316 = vpop.f32.mrf.mxu0
        %v6317 = vadd.f32 0.0, %v6316
        %6318 = vmatmul.f32.gmra.mxu0 %v6253
        %v6319 = vpop.f32.mrf.mxu0
        %v6320 = vadd.f32 0.0, %v6319
        %6321 = vmatmul.f32.gmra.mxu0 %v6254
        %v6322 = vpop.f32.mrf.mxu0
        %v6323 = vadd.f32 0.0, %v6322
        %6324 = vmatmul.f32.gmra.mxu0 %v6255
        %v6325 = vpop.f32.mrf.mxu0
        %v6326 = vadd.f32 0.0, %v6325
        %6327 = vmatmul.f32.gmra.mxu0 %v6256
        %v6328 = vpop.f32.mrf.mxu0
        %v6329 = vadd.f32 0.0, %v6328
        %6330 = vmatmul.f32.gmra.mxu0 %v6257
        %v6331 = vpop.f32.mrf.mxu0
        %v6332 = vadd.f32 0.0, %v6331
        %6333 = vmatmul.f32.gmra.mxu0 %v6258
        %v6334 = vpop.f32.mrf.mxu0
        %v6335 = vadd.f32 0.0, %v6334
        %6336 = vmatmul.f32.gmra.mxu0 %v6259
        %v6337 = vpop.f32.mrf.mxu0
        %v6338 = vadd.f32 0.0, %v6337
        %6339 = vmatmul.f32.gmra.mxu0 %v6260
        %v6340 = vpop.f32.mrf.mxu0
        %v6341 = vadd.f32 0.0, %v6340
        %6342 = vmatmul.f32.gmra.mxu0 %v6261
        %v6343 = vpop.f32.mrf.mxu0
        %v6344 = vadd.f32 0.0, %v6343
        %6345 = vmatmul.f32.gmra.mxu0 %v6262
        %v6346 = vpop.f32.mrf.mxu0
        %v6347 = vadd.f32 0.0, %v6346
        %6348 = vmatmul.f32.gmra.mxu0 %v6263
        %v6349 = vpop.f32.mrf.mxu0
        %6350 = vdwg.mxu0
        %v6351 = vadd.f32 %v6229, %v6299
        %v6352 = vadd.f32 %v6230, %v6302
        %v6353 = vadd.f32 %v6231, %v6305
        %v6354 = vadd.f32 %v6232, %v6308
        %v6355 = vadd.f32 %v6233, %v6311
        %v6356 = vadd.f32 %v6234, %v6314
        %v6357 = vadd.f32 %v6235, %v6317
        %v6358 = vadd.f32 %v6236, %v6320
        %v6359 = vadd.f32 %v6237, %v6323
        %v6360 = vadd.f32 %v6238, %v6326
        %v6361 = vadd.f32 %v6239, %v6329
        %v6362 = vadd.f32 %v6240, %v6332
        %v6363 = vadd.f32 %v6241, %v6335
        %v6364 = vadd.f32 %v6242, %v6338
        %v6365 = vadd.f32 %v6243, %v6341
        %v6366 = vadd.f32 %v6244, %v6344
        %v6367 = vadd.f32 %v6245, %v6347
        %v6368 = vld [vmem:[#allocation2 + $0x2d] sm:$0xff]
        %v6369 = vld [vmem:[#allocation2 + $0x35] sm:$0xff]
        %v6370 = vld [vmem:[#allocation2 + $0x3d] sm:$0xff]
        %v6371 = vld [vmem:[#allocation2 + $0x45] sm:$0xff]
        %v6372 = vld [vmem:[#allocation2 + $0x4d] sm:$0xff]
        %v6373 = vld [vmem:[#allocation2 + $0x55] sm:$0xff]
        %v6374 = vld [vmem:[#allocation2 + $0x5d] sm:$0xff]
        %v6375 = vld [vmem:[#allocation2 + $0x65] sm:$0xff]
        %v6376 = vld [vmem:[#allocation2 + $0x6d] sm:$0xff]
        %v6377 = vld [vmem:[#allocation2 + $0x75] sm:$0xff]
        %v6378 = vld [vmem:[#allocation2 + $0x7d] sm:$0xff]
        %v6379 = vld [vmem:[#allocation2 + $0x85] sm:$0xff]
        %v6380 = vld [vmem:[#allocation2 + $0x8d] sm:$0xff]
        %v6381 = vld [vmem:[#allocation2 + $0x95] sm:$0xff]
        %v6382 = vld [vmem:[#allocation2 + $0x9d] sm:$0xff]
        %v6383 = vld [vmem:[#allocation2 + $0xa5] sm:$0xff]
        %v6384 = vld [vmem:[#allocation2 + $0xad] sm:$0xff]
        %v6385 = vld [vmem:[#allocation2 + $0xb5] sm:$0xf]
        %s6386 = scalar_lea.vmem %s3, 2304
        %v6387 = vld [vmem:[%s6386] sm:$0xff]
        %v6388 = vld [vmem:[%s6386 + $0x8] sm:$0xff]
        %v6389 = vld [vmem:[%s6386 + $0x10] sm:$0xff]
        %v6390 = vld [vmem:[%s6386 + $0x18] sm:$0xff]
        %v6391 = vld [vmem:[%s6386 + $0x20] sm:$0xff]
        %v6392 = vld [vmem:[%s6386 + $0x28] sm:$0xff]
        %v6393 = vld [vmem:[%s6386 + $0x30] sm:$0xff]
        %v6394 = vld [vmem:[%s6386 + $0x38] sm:$0xff]
        %v6395 = vld [vmem:[%s6386 + $0x40] sm:$0xff]
        %v6396 = vld [vmem:[%s6386 + $0x48] sm:$0xff]
        %v6397 = vld [vmem:[%s6386 + $0x50] sm:$0xff]
        %v6398 = vld [vmem:[%s6386 + $0x58] sm:$0xff]
        %v6399 = vld [vmem:[%s6386 + $0x60] sm:$0xff]
        %v6400 = vld [vmem:[%s6386 + $0x68] sm:$0xff]
        %v6401 = vld [vmem:[%s6386 + $0x70] sm:$0xff]
        %v6402 = vld [vmem:[%s6386 + $0x78] sm:$0xff]
        %6403 = vmatpush.msra.mxu0 %v6402
        %6404 = vmatpush.msra.mxu0 %v6401
        %6405 = vmatpush.msra.mxu0 %v6400
        %6406 = vmatpush.msra.mxu0 %v6399
        %6407 = vmatpush.msra.mxu0 %v6398
        %6408 = vmatpush.msra.mxu0 %v6397
        %6409 = vmatpush.msra.mxu0 %v6396
        %6410 = vmatpush.msra.mxu0 %v6395
        %6411 = vmatpush.msra.mxu0 %v6394
        %6412 = vmatpush.msra.mxu0 %v6393
        %6413 = vmatpush.msra.mxu0 %v6392
        %6414 = vmatpush.msra.mxu0 %v6391
        %6415 = vmatpush.msra.mxu0 %v6390
        %6416 = vmatpush.msra.mxu0 %v6389
        %6417 = vmatpush.msra.mxu0 %v6388
        %6418 = vmatpush.msra.mxu0 %v6387
        %6419 = vmatmul.f32.gmra.mxu0 %v6368
        %v6420 = vpop.f32.mrf.mxu0
        %v6421 = vadd.f32 0.0, %v6420
        %6422 = vmatmul.f32.gmra.mxu0 %v6369
        %v6423 = vpop.f32.mrf.mxu0
        %v6424 = vadd.f32 0.0, %v6423
        %6425 = vmatmul.f32.gmra.mxu0 %v6370
        %v6426 = vpop.f32.mrf.mxu0
        %v6427 = vadd.f32 0.0, %v6426
        %6428 = vmatmul.f32.gmra.mxu0 %v6371
        %v6429 = vpop.f32.mrf.mxu0
        %v6430 = vadd.f32 0.0, %v6429
        %6431 = vmatmul.f32.gmra.mxu0 %v6372
        %v6432 = vpop.f32.mrf.mxu0
        %v6433 = vadd.f32 0.0, %v6432
        %6434 = vmatmul.f32.gmra.mxu0 %v6373
        %v6435 = vpop.f32.mrf.mxu0
        %v6436 = vadd.f32 0.0, %v6435
        %6437 = vmatmul.f32.gmra.mxu0 %v6374
        %v6438 = vpop.f32.mrf.mxu0
        %v6439 = vadd.f32 0.0, %v6438
        %6440 = vmatmul.f32.gmra.mxu0 %v6375
        %v6441 = vpop.f32.mrf.mxu0
        %v6442 = vadd.f32 0.0, %v6441
        %6443 = vmatmul.f32.gmra.mxu0 %v6376
        %v6444 = vpop.f32.mrf.mxu0
        %v6445 = vadd.f32 0.0, %v6444
        %6446 = vmatmul.f32.gmra.mxu0 %v6377
        %v6447 = vpop.f32.mrf.mxu0
        %v6448 = vadd.f32 0.0, %v6447
        %6449 = vmatmul.f32.gmra.mxu0 %v6378
        %v6450 = vpop.f32.mrf.mxu0
        %v6451 = vadd.f32 0.0, %v6450
        %6452 = vmatmul.f32.gmra.mxu0 %v6379
        %v6453 = vpop.f32.mrf.mxu0
        %v6454 = vadd.f32 0.0, %v6453
        %6455 = vmatmul.f32.gmra.mxu0 %v6380
        %v6456 = vpop.f32.mrf.mxu0
        %v6457 = vadd.f32 0.0, %v6456
        %6458 = vmatmul.f32.gmra.mxu0 %v6381
        %v6459 = vpop.f32.mrf.mxu0
        %v6460 = vadd.f32 0.0, %v6459
        %6461 = vmatmul.f32.gmra.mxu0 %v6382
        %v6462 = vpop.f32.mrf.mxu0
        %v6463 = vadd.f32 0.0, %v6462
        %6464 = vmatmul.f32.gmra.mxu0 %v6383
        %v6465 = vpop.f32.mrf.mxu0
        %v6466 = vadd.f32 0.0, %v6465
        %6467 = vmatmul.f32.gmra.mxu0 %v6384
        %v6468 = vpop.f32.mrf.mxu0
        %v6469 = vadd.f32 0.0, %v6468
        %6470 = vmatmul.f32.gmra.mxu0 %v6385
        %v6471 = vpop.f32.mrf.mxu0
        %6472 = vdwg.mxu0
        %v6473 = vadd.f32 %v6351, %v6421
        %v6474 = vadd.f32 %v6352, %v6424
        %v6475 = vadd.f32 %v6353, %v6427
        %v6476 = vadd.f32 %v6354, %v6430
        %v6477 = vadd.f32 %v6355, %v6433
        %v6478 = vadd.f32 %v6356, %v6436
        %v6479 = vadd.f32 %v6357, %v6439
        %v6480 = vadd.f32 %v6358, %v6442
        %v6481 = vadd.f32 %v6359, %v6445
        %v6482 = vadd.f32 %v6360, %v6448
        %v6483 = vadd.f32 %v6361, %v6451
        %v6484 = vadd.f32 %v6362, %v6454
        %v6485 = vadd.f32 %v6363, %v6457
        %v6486 = vadd.f32 %v6364, %v6460
        %v6487 = vadd.f32 %v6365, %v6463
        %v6488 = vadd.f32 %v6366, %v6466
        %v6489 = vadd.f32 %v6367, %v6469
        %v6490 = vld [vmem:[#allocation2 + $0x2e] sm:$0xff]
        %v6491 = vld [vmem:[#allocation2 + $0x36] sm:$0xff]
        %v6492 = vld [vmem:[#allocation2 + $0x3e] sm:$0xff]
        %v6493 = vld [vmem:[#allocation2 + $0x46] sm:$0xff]
        %v6494 = vld [vmem:[#allocation2 + $0x4e] sm:$0xff]
        %v6495 = vld [vmem:[#allocation2 + $0x56] sm:$0xff]
        %v6496 = vld [vmem:[#allocation2 + $0x5e] sm:$0xff]
        %v6497 = vld [vmem:[#allocation2 + $0x66] sm:$0xff]
        %v6498 = vld [vmem:[#allocation2 + $0x6e] sm:$0xff]
        %v6499 = vld [vmem:[#allocation2 + $0x76] sm:$0xff]
        %v6500 = vld [vmem:[#allocation2 + $0x7e] sm:$0xff]
        %v6501 = vld [vmem:[#allocation2 + $0x86] sm:$0xff]
        %v6502 = vld [vmem:[#allocation2 + $0x8e] sm:$0xff]
        %v6503 = vld [vmem:[#allocation2 + $0x96] sm:$0xff]
        %v6504 = vld [vmem:[#allocation2 + $0x9e] sm:$0xff]
        %v6505 = vld [vmem:[#allocation2 + $0xa6] sm:$0xff]
        %v6506 = vld [vmem:[#allocation2 + $0xae] sm:$0xff]
        %v6507 = vld [vmem:[#allocation2 + $0xb6] sm:$0xf]
        %s6508 = scalar_lea.vmem %s3, 2432
        %v6509 = vld [vmem:[%s6508] sm:$0xff]
        %v6510 = vld [vmem:[%s6508 + $0x8] sm:$0xff]
        %v6511 = vld [vmem:[%s6508 + $0x10] sm:$0xff]
        %v6512 = vld [vmem:[%s6508 + $0x18] sm:$0xff]
        %v6513 = vld [vmem:[%s6508 + $0x20] sm:$0xff]
        %v6514 = vld [vmem:[%s6508 + $0x28] sm:$0xff]
        %v6515 = vld [vmem:[%s6508 + $0x30] sm:$0xff]
        %v6516 = vld [vmem:[%s6508 + $0x38] sm:$0xff]
        %v6517 = vld [vmem:[%s6508 + $0x40] sm:$0xff]
        %v6518 = vld [vmem:[%s6508 + $0x48] sm:$0xff]
        %v6519 = vld [vmem:[%s6508 + $0x50] sm:$0xff]
        %v6520 = vld [vmem:[%s6508 + $0x58] sm:$0xff]
        %v6521 = vld [vmem:[%s6508 + $0x60] sm:$0xff]
        %v6522 = vld [vmem:[%s6508 + $0x68] sm:$0xff]
        %v6523 = vld [vmem:[%s6508 + $0x70] sm:$0xff]
        %v6524 = vld [vmem:[%s6508 + $0x78] sm:$0xff]
        %6525 = vmatpush.msra.mxu0 %v6524
        %6526 = vmatpush.msra.mxu0 %v6523
        %6527 = vmatpush.msra.mxu0 %v6522
        %6528 = vmatpush.msra.mxu0 %v6521
        %6529 = vmatpush.msra.mxu0 %v6520
        %6530 = vmatpush.msra.mxu0 %v6519
        %6531 = vmatpush.msra.mxu0 %v6518
        %6532 = vmatpush.msra.mxu0 %v6517
        %6533 = vmatpush.msra.mxu0 %v6516
        %6534 = vmatpush.msra.mxu0 %v6515
        %6535 = vmatpush.msra.mxu0 %v6514
        %6536 = vmatpush.msra.mxu0 %v6513
        %6537 = vmatpush.msra.mxu0 %v6512
        %6538 = vmatpush.msra.mxu0 %v6511
        %6539 = vmatpush.msra.mxu0 %v6510
        %6540 = vmatpush.msra.mxu0 %v6509
        %6541 = vmatmul.f32.gmra.mxu0 %v6490
        %v6542 = vpop.f32.mrf.mxu0
        %v6543 = vadd.f32 0.0, %v6542
        %6544 = vmatmul.f32.gmra.mxu0 %v6491
        %v6545 = vpop.f32.mrf.mxu0
        %v6546 = vadd.f32 0.0, %v6545
        %6547 = vmatmul.f32.gmra.mxu0 %v6492
        %v6548 = vpop.f32.mrf.mxu0
        %v6549 = vadd.f32 0.0, %v6548
        %6550 = vmatmul.f32.gmra.mxu0 %v6493
        %v6551 = vpop.f32.mrf.mxu0
        %v6552 = vadd.f32 0.0, %v6551
        %6553 = vmatmul.f32.gmra.mxu0 %v6494
        %v6554 = vpop.f32.mrf.mxu0
        %v6555 = vadd.f32 0.0, %v6554
        %6556 = vmatmul.f32.gmra.mxu0 %v6495
        %v6557 = vpop.f32.mrf.mxu0
        %v6558 = vadd.f32 0.0, %v6557
        %6559 = vmatmul.f32.gmra.mxu0 %v6496
        %v6560 = vpop.f32.mrf.mxu0
        %v6561 = vadd.f32 0.0, %v6560
        %6562 = vmatmul.f32.gmra.mxu0 %v6497
        %v6563 = vpop.f32.mrf.mxu0
        %v6564 = vadd.f32 0.0, %v6563
        %6565 = vmatmul.f32.gmra.mxu0 %v6498
        %v6566 = vpop.f32.mrf.mxu0
        %v6567 = vadd.f32 0.0, %v6566
        %6568 = vmatmul.f32.gmra.mxu0 %v6499
        %v6569 = vpop.f32.mrf.mxu0
        %v6570 = vadd.f32 0.0, %v6569
        %6571 = vmatmul.f32.gmra.mxu0 %v6500
        %v6572 = vpop.f32.mrf.mxu0
        %v6573 = vadd.f32 0.0, %v6572
        %6574 = vmatmul.f32.gmra.mxu0 %v6501
        %v6575 = vpop.f32.mrf.mxu0
        %v6576 = vadd.f32 0.0, %v6575
        %6577 = vmatmul.f32.gmra.mxu0 %v6502
        %v6578 = vpop.f32.mrf.mxu0
        %v6579 = vadd.f32 0.0, %v6578
        %6580 = vmatmul.f32.gmra.mxu0 %v6503
        %v6581 = vpop.f32.mrf.mxu0
        %v6582 = vadd.f32 0.0, %v6581
        %6583 = vmatmul.f32.gmra.mxu0 %v6504
        %v6584 = vpop.f32.mrf.mxu0
        %v6585 = vadd.f32 0.0, %v6584
        %6586 = vmatmul.f32.gmra.mxu0 %v6505
        %v6587 = vpop.f32.mrf.mxu0
        %v6588 = vadd.f32 0.0, %v6587
        %6589 = vmatmul.f32.gmra.mxu0 %v6506
        %v6590 = vpop.f32.mrf.mxu0
        %v6591 = vadd.f32 0.0, %v6590
        %6592 = vmatmul.f32.gmra.mxu0 %v6507
        %v6593 = vpop.f32.mrf.mxu0
        %6594 = vdwg.mxu0
        %v6595 = vadd.f32 %v6473, %v6543
        %v6596 = vadd.f32 %v6474, %v6546
        %v6597 = vadd.f32 %v6475, %v6549
        %v6598 = vadd.f32 %v6476, %v6552
        %v6599 = vadd.f32 %v6477, %v6555
        %v6600 = vadd.f32 %v6478, %v6558
        %v6601 = vadd.f32 %v6479, %v6561
        %v6602 = vadd.f32 %v6480, %v6564
        %v6603 = vadd.f32 %v6481, %v6567
        %v6604 = vadd.f32 %v6482, %v6570
        %v6605 = vadd.f32 %v6483, %v6573
        %v6606 = vadd.f32 %v6484, %v6576
        %v6607 = vadd.f32 %v6485, %v6579
        %v6608 = vadd.f32 %v6486, %v6582
        %v6609 = vadd.f32 %v6487, %v6585
        %v6610 = vadd.f32 %v6488, %v6588
        %v6611 = vadd.f32 %v6489, %v6591
        %v6612 = vld [vmem:[#allocation2 + $0x38] sm:$0xff]
        %v6613 = vld [vmem:[#allocation2 + $0x40] sm:$0xff]
        %v6614 = vld [vmem:[#allocation2 + $0x48] sm:$0xff]
        %v6615 = vld [vmem:[#allocation2 + $0x50] sm:$0xff]
        %v6616 = vld [vmem:[#allocation2 + $0x58] sm:$0xff]
        %v6617 = vld [vmem:[#allocation2 + $0x60] sm:$0xff]
        %v6618 = vld [vmem:[#allocation2 + $0x68] sm:$0xff]
        %v6619 = vld [vmem:[#allocation2 + $0x70] sm:$0xff]
        %v6620 = vld [vmem:[#allocation2 + $0x78] sm:$0xff]
        %v6621 = vld [vmem:[#allocation2 + $0x80] sm:$0xff]
        %v6622 = vld [vmem:[#allocation2 + $0x88] sm:$0xff]
        %v6623 = vld [vmem:[#allocation2 + $0x90] sm:$0xff]
        %v6624 = vld [vmem:[#allocation2 + $0x98] sm:$0xff]
        %v6625 = vld [vmem:[#allocation2 + $0xa0] sm:$0xff]
        %v6626 = vld [vmem:[#allocation2 + $0xa8] sm:$0xff]
        %v6627 = vld [vmem:[#allocation2 + $0xb0] sm:$0xff]
        %v6628 = vld [vmem:[#allocation2 + $0xb8] sm:$0xff]
        %v6629 = vld [vmem:[#allocation2 + $0xc0] sm:$0xf]
        %s6630 = scalar_lea.vmem %s3, 2560
        %v6631 = vld [vmem:[%s6630] sm:$0xff]
        %v6632 = vld [vmem:[%s6630 + $0x8] sm:$0xff]
        %v6633 = vld [vmem:[%s6630 + $0x10] sm:$0xff]
        %v6634 = vld [vmem:[%s6630 + $0x18] sm:$0xff]
        %v6635 = vld [vmem:[%s6630 + $0x20] sm:$0xff]
        %v6636 = vld [vmem:[%s6630 + $0x28] sm:$0xff]
        %v6637 = vld [vmem:[%s6630 + $0x30] sm:$0xff]
        %v6638 = vld [vmem:[%s6630 + $0x38] sm:$0xff]
        %v6639 = vld [vmem:[%s6630 + $0x40] sm:$0xff]
        %v6640 = vld [vmem:[%s6630 + $0x48] sm:$0xff]
        %v6641 = vld [vmem:[%s6630 + $0x50] sm:$0xff]
        %v6642 = vld [vmem:[%s6630 + $0x58] sm:$0xff]
        %v6643 = vld [vmem:[%s6630 + $0x60] sm:$0xff]
        %v6644 = vld [vmem:[%s6630 + $0x68] sm:$0xff]
        %v6645 = vld [vmem:[%s6630 + $0x70] sm:$0xff]
        %v6646 = vld [vmem:[%s6630 + $0x78] sm:$0xff]
        %6647 = vmatpush.msra.mxu0 %v6646
        %6648 = vmatpush.msra.mxu0 %v6645
        %6649 = vmatpush.msra.mxu0 %v6644
        %6650 = vmatpush.msra.mxu0 %v6643
        %6651 = vmatpush.msra.mxu0 %v6642
        %6652 = vmatpush.msra.mxu0 %v6641
        %6653 = vmatpush.msra.mxu0 %v6640
        %6654 = vmatpush.msra.mxu0 %v6639
        %6655 = vmatpush.msra.mxu0 %v6638
        %6656 = vmatpush.msra.mxu0 %v6637
        %6657 = vmatpush.msra.mxu0 %v6636
        %6658 = vmatpush.msra.mxu0 %v6635
        %6659 = vmatpush.msra.mxu0 %v6634
        %6660 = vmatpush.msra.mxu0 %v6633
        %6661 = vmatpush.msra.mxu0 %v6632
        %6662 = vmatpush.msra.mxu0 %v6631
        %6663 = vmatmul.f32.gmra.mxu0 %v6612
        %v6664 = vpop.f32.mrf.mxu0
        %v6665 = vadd.f32 0.0, %v6664
        %6666 = vmatmul.f32.gmra.mxu0 %v6613
        %v6667 = vpop.f32.mrf.mxu0
        %v6668 = vadd.f32 0.0, %v6667
        %6669 = vmatmul.f32.gmra.mxu0 %v6614
        %v6670 = vpop.f32.mrf.mxu0
        %v6671 = vadd.f32 0.0, %v6670
        %6672 = vmatmul.f32.gmra.mxu0 %v6615
        %v6673 = vpop.f32.mrf.mxu0
        %v6674 = vadd.f32 0.0, %v6673
        %6675 = vmatmul.f32.gmra.mxu0 %v6616
        %v6676 = vpop.f32.mrf.mxu0
        %v6677 = vadd.f32 0.0, %v6676
        %6678 = vmatmul.f32.gmra.mxu0 %v6617
        %v6679 = vpop.f32.mrf.mxu0
        %v6680 = vadd.f32 0.0, %v6679
        %6681 = vmatmul.f32.gmra.mxu0 %v6618
        %v6682 = vpop.f32.mrf.mxu0
        %v6683 = vadd.f32 0.0, %v6682
        %6684 = vmatmul.f32.gmra.mxu0 %v6619
        %v6685 = vpop.f32.mrf.mxu0
        %v6686 = vadd.f32 0.0, %v6685
        %6687 = vmatmul.f32.gmra.mxu0 %v6620
        %v6688 = vpop.f32.mrf.mxu0
        %v6689 = vadd.f32 0.0, %v6688
        %6690 = vmatmul.f32.gmra.mxu0 %v6621
        %v6691 = vpop.f32.mrf.mxu0
        %v6692 = vadd.f32 0.0, %v6691
        %6693 = vmatmul.f32.gmra.mxu0 %v6622
        %v6694 = vpop.f32.mrf.mxu0
        %v6695 = vadd.f32 0.0, %v6694
        %6696 = vmatmul.f32.gmra.mxu0 %v6623
        %v6697 = vpop.f32.mrf.mxu0
        %v6698 = vadd.f32 0.0, %v6697
        %6699 = vmatmul.f32.gmra.mxu0 %v6624
        %v6700 = vpop.f32.mrf.mxu0
        %v6701 = vadd.f32 0.0, %v6700
        %6702 = vmatmul.f32.gmra.mxu0 %v6625
        %v6703 = vpop.f32.mrf.mxu0
        %v6704 = vadd.f32 0.0, %v6703
        %6705 = vmatmul.f32.gmra.mxu0 %v6626
        %v6706 = vpop.f32.mrf.mxu0
        %v6707 = vadd.f32 0.0, %v6706
        %6708 = vmatmul.f32.gmra.mxu0 %v6627
        %v6709 = vpop.f32.mrf.mxu0
        %v6710 = vadd.f32 0.0, %v6709
        %6711 = vmatmul.f32.gmra.mxu0 %v6628
        %v6712 = vpop.f32.mrf.mxu0
        %v6713 = vadd.f32 0.0, %v6712
        %6714 = vmatmul.f32.gmra.mxu0 %v6629
        %v6715 = vpop.f32.mrf.mxu0
        %6716 = vdwg.mxu0
        %v6717 = vadd.f32 %v6595, %v6665
        %v6718 = vadd.f32 %v6596, %v6668
        %v6719 = vadd.f32 %v6597, %v6671
        %v6720 = vadd.f32 %v6598, %v6674
        %v6721 = vadd.f32 %v6599, %v6677
        %v6722 = vadd.f32 %v6600, %v6680
        %v6723 = vadd.f32 %v6601, %v6683
        %v6724 = vadd.f32 %v6602, %v6686
        %v6725 = vadd.f32 %v6603, %v6689
        %v6726 = vadd.f32 %v6604, %v6692
        %v6727 = vadd.f32 %v6605, %v6695
        %v6728 = vadd.f32 %v6606, %v6698
        %v6729 = vadd.f32 %v6607, %v6701
        %v6730 = vadd.f32 %v6608, %v6704
        %v6731 = vadd.f32 %v6609, %v6707
        %v6732 = vadd.f32 %v6610, %v6710
        %v6733 = vadd.f32 %v6611, %v6713
        %v6734 = vld [vmem:[#allocation2 + $0x39] sm:$0xff]
        %v6735 = vld [vmem:[#allocation2 + $0x41] sm:$0xff]
        %v6736 = vld [vmem:[#allocation2 + $0x49] sm:$0xff]
        %v6737 = vld [vmem:[#allocation2 + $0x51] sm:$0xff]
        %v6738 = vld [vmem:[#allocation2 + $0x59] sm:$0xff]
        %v6739 = vld [vmem:[#allocation2 + $0x61] sm:$0xff]
        %v6740 = vld [vmem:[#allocation2 + $0x69] sm:$0xff]
        %v6741 = vld [vmem:[#allocation2 + $0x71] sm:$0xff]
        %v6742 = vld [vmem:[#allocation2 + $0x79] sm:$0xff]
        %v6743 = vld [vmem:[#allocation2 + $0x81] sm:$0xff]
        %v6744 = vld [vmem:[#allocation2 + $0x89] sm:$0xff]
        %v6745 = vld [vmem:[#allocation2 + $0x91] sm:$0xff]
        %v6746 = vld [vmem:[#allocation2 + $0x99] sm:$0xff]
        %v6747 = vld [vmem:[#allocation2 + $0xa1] sm:$0xff]
        %v6748 = vld [vmem:[#allocation2 + $0xa9] sm:$0xff]
        %v6749 = vld [vmem:[#allocation2 + $0xb1] sm:$0xff]
        %v6750 = vld [vmem:[#allocation2 + $0xb9] sm:$0xff]
        %v6751 = vld [vmem:[#allocation2 + $0xc1] sm:$0xf]
        %s6752 = scalar_lea.vmem %s3, 2688
        %v6753 = vld [vmem:[%s6752] sm:$0xff]
        %v6754 = vld [vmem:[%s6752 + $0x8] sm:$0xff]
        %v6755 = vld [vmem:[%s6752 + $0x10] sm:$0xff]
        %v6756 = vld [vmem:[%s6752 + $0x18] sm:$0xff]
        %v6757 = vld [vmem:[%s6752 + $0x20] sm:$0xff]
        %v6758 = vld [vmem:[%s6752 + $0x28] sm:$0xff]
        %v6759 = vld [vmem:[%s6752 + $0x30] sm:$0xff]
        %v6760 = vld [vmem:[%s6752 + $0x38] sm:$0xff]
        %v6761 = vld [vmem:[%s6752 + $0x40] sm:$0xff]
        %v6762 = vld [vmem:[%s6752 + $0x48] sm:$0xff]
        %v6763 = vld [vmem:[%s6752 + $0x50] sm:$0xff]
        %v6764 = vld [vmem:[%s6752 + $0x58] sm:$0xff]
        %v6765 = vld [vmem:[%s6752 + $0x60] sm:$0xff]
        %v6766 = vld [vmem:[%s6752 + $0x68] sm:$0xff]
        %v6767 = vld [vmem:[%s6752 + $0x70] sm:$0xff]
        %v6768 = vld [vmem:[%s6752 + $0x78] sm:$0xff]
        %6769 = vmatpush.msra.mxu0 %v6768
        %6770 = vmatpush.msra.mxu0 %v6767
        %6771 = vmatpush.msra.mxu0 %v6766
        %6772 = vmatpush.msra.mxu0 %v6765
        %6773 = vmatpush.msra.mxu0 %v6764
        %6774 = vmatpush.msra.mxu0 %v6763
        %6775 = vmatpush.msra.mxu0 %v6762
        %6776 = vmatpush.msra.mxu0 %v6761
        %6777 = vmatpush.msra.mxu0 %v6760
        %6778 = vmatpush.msra.mxu0 %v6759
        %6779 = vmatpush.msra.mxu0 %v6758
        %6780 = vmatpush.msra.mxu0 %v6757
        %6781 = vmatpush.msra.mxu0 %v6756
        %6782 = vmatpush.msra.mxu0 %v6755
        %6783 = vmatpush.msra.mxu0 %v6754
        %6784 = vmatpush.msra.mxu0 %v6753
        %6785 = vmatmul.f32.gmra.mxu0 %v6734
        %v6786 = vpop.f32.mrf.mxu0
        %v6787 = vadd.f32 0.0, %v6786
        %6788 = vmatmul.f32.gmra.mxu0 %v6735
        %v6789 = vpop.f32.mrf.mxu0
        %v6790 = vadd.f32 0.0, %v6789
        %6791 = vmatmul.f32.gmra.mxu0 %v6736
        %v6792 = vpop.f32.mrf.mxu0
        %v6793 = vadd.f32 0.0, %v6792
        %6794 = vmatmul.f32.gmra.mxu0 %v6737
        %v6795 = vpop.f32.mrf.mxu0
        %v6796 = vadd.f32 0.0, %v6795
        %6797 = vmatmul.f32.gmra.mxu0 %v6738
        %v6798 = vpop.f32.mrf.mxu0
        %v6799 = vadd.f32 0.0, %v6798
        %6800 = vmatmul.f32.gmra.mxu0 %v6739
        %v6801 = vpop.f32.mrf.mxu0
        %v6802 = vadd.f32 0.0, %v6801
        %6803 = vmatmul.f32.gmra.mxu0 %v6740
        %v6804 = vpop.f32.mrf.mxu0
        %v6805 = vadd.f32 0.0, %v6804
        %6806 = vmatmul.f32.gmra.mxu0 %v6741
        %v6807 = vpop.f32.mrf.mxu0
        %v6808 = vadd.f32 0.0, %v6807
        %6809 = vmatmul.f32.gmra.mxu0 %v6742
        %v6810 = vpop.f32.mrf.mxu0
        %v6811 = vadd.f32 0.0, %v6810
        %6812 = vmatmul.f32.gmra.mxu0 %v6743
        %v6813 = vpop.f32.mrf.mxu0
        %v6814 = vadd.f32 0.0, %v6813
        %6815 = vmatmul.f32.gmra.mxu0 %v6744
        %v6816 = vpop.f32.mrf.mxu0
        %v6817 = vadd.f32 0.0, %v6816
        %6818 = vmatmul.f32.gmra.mxu0 %v6745
        %v6819 = vpop.f32.mrf.mxu0
        %v6820 = vadd.f32 0.0, %v6819
        %6821 = vmatmul.f32.gmra.mxu0 %v6746
        %v6822 = vpop.f32.mrf.mxu0
        %v6823 = vadd.f32 0.0, %v6822
        %6824 = vmatmul.f32.gmra.mxu0 %v6747
        %v6825 = vpop.f32.mrf.mxu0
        %v6826 = vadd.f32 0.0, %v6825
        %6827 = vmatmul.f32.gmra.mxu0 %v6748
        %v6828 = vpop.f32.mrf.mxu0
        %v6829 = vadd.f32 0.0, %v6828
        %6830 = vmatmul.f32.gmra.mxu0 %v6749
        %v6831 = vpop.f32.mrf.mxu0
        %v6832 = vadd.f32 0.0, %v6831
        %6833 = vmatmul.f32.gmra.mxu0 %v6750
        %v6834 = vpop.f32.mrf.mxu0
        %v6835 = vadd.f32 0.0, %v6834
        %6836 = vmatmul.f32.gmra.mxu0 %v6751
        %v6837 = vpop.f32.mrf.mxu0
        %6838 = vdwg.mxu0
        %v6839 = vadd.f32 %v6717, %v6787
        %v6840 = vadd.f32 %v6718, %v6790
        %v6841 = vadd.f32 %v6719, %v6793
        %v6842 = vadd.f32 %v6720, %v6796
        %v6843 = vadd.f32 %v6721, %v6799
        %v6844 = vadd.f32 %v6722, %v6802
        %v6845 = vadd.f32 %v6723, %v6805
        %v6846 = vadd.f32 %v6724, %v6808
        %v6847 = vadd.f32 %v6725, %v6811
        %v6848 = vadd.f32 %v6726, %v6814
        %v6849 = vadd.f32 %v6727, %v6817
        %v6850 = vadd.f32 %v6728, %v6820
        %v6851 = vadd.f32 %v6729, %v6823
        %v6852 = vadd.f32 %v6730, %v6826
        %v6853 = vadd.f32 %v6731, %v6829
        %v6854 = vadd.f32 %v6732, %v6832
        %v6855 = vadd.f32 %v6733, %v6835
        %v6856 = vld [vmem:[#allocation2 + $0x3a] sm:$0xff]
        %v6857 = vld [vmem:[#allocation2 + $0x42] sm:$0xff]
        %v6858 = vld [vmem:[#allocation2 + $0x4a] sm:$0xff]
        %v6859 = vld [vmem:[#allocation2 + $0x52] sm:$0xff]
        %v6860 = vld [vmem:[#allocation2 + $0x5a] sm:$0xff]
        %v6861 = vld [vmem:[#allocation2 + $0x62] sm:$0xff]
        %v6862 = vld [vmem:[#allocation2 + $0x6a] sm:$0xff]
        %v6863 = vld [vmem:[#allocation2 + $0x72] sm:$0xff]
        %v6864 = vld [vmem:[#allocation2 + $0x7a] sm:$0xff]
        %v6865 = vld [vmem:[#allocation2 + $0x82] sm:$0xff]
        %v6866 = vld [vmem:[#allocation2 + $0x8a] sm:$0xff]
        %v6867 = vld [vmem:[#allocation2 + $0x92] sm:$0xff]
        %v6868 = vld [vmem:[#allocation2 + $0x9a] sm:$0xff]
        %v6869 = vld [vmem:[#allocation2 + $0xa2] sm:$0xff]
        %v6870 = vld [vmem:[#allocation2 + $0xaa] sm:$0xff]
        %v6871 = vld [vmem:[#allocation2 + $0xb2] sm:$0xff]
        %v6872 = vld [vmem:[#allocation2 + $0xba] sm:$0xff]
        %v6873 = vld [vmem:[#allocation2 + $0xc2] sm:$0xf]
        %s6874 = scalar_lea.vmem %s3, 2816
        %v6875 = vld [vmem:[%s6874] sm:$0xff]
        %v6876 = vld [vmem:[%s6874 + $0x8] sm:$0xff]
        %v6877 = vld [vmem:[%s6874 + $0x10] sm:$0xff]
        %v6878 = vld [vmem:[%s6874 + $0x18] sm:$0xff]
        %v6879 = vld [vmem:[%s6874 + $0x20] sm:$0xff]
        %v6880 = vld [vmem:[%s6874 + $0x28] sm:$0xff]
        %v6881 = vld [vmem:[%s6874 + $0x30] sm:$0xff]
        %v6882 = vld [vmem:[%s6874 + $0x38] sm:$0xff]
        %v6883 = vld [vmem:[%s6874 + $0x40] sm:$0xff]
        %v6884 = vld [vmem:[%s6874 + $0x48] sm:$0xff]
        %v6885 = vld [vmem:[%s6874 + $0x50] sm:$0xff]
        %v6886 = vld [vmem:[%s6874 + $0x58] sm:$0xff]
        %v6887 = vld [vmem:[%s6874 + $0x60] sm:$0xff]
        %v6888 = vld [vmem:[%s6874 + $0x68] sm:$0xff]
        %v6889 = vld [vmem:[%s6874 + $0x70] sm:$0xff]
        %v6890 = vld [vmem:[%s6874 + $0x78] sm:$0xff]
        %6891 = vmatpush.msra.mxu0 %v6890
        %6892 = vmatpush.msra.mxu0 %v6889
        %6893 = vmatpush.msra.mxu0 %v6888
        %6894 = vmatpush.msra.mxu0 %v6887
        %6895 = vmatpush.msra.mxu0 %v6886
        %6896 = vmatpush.msra.mxu0 %v6885
        %6897 = vmatpush.msra.mxu0 %v6884
        %6898 = vmatpush.msra.mxu0 %v6883
        %6899 = vmatpush.msra.mxu0 %v6882
        %6900 = vmatpush.msra.mxu0 %v6881
        %6901 = vmatpush.msra.mxu0 %v6880
        %6902 = vmatpush.msra.mxu0 %v6879
        %6903 = vmatpush.msra.mxu0 %v6878
        %6904 = vmatpush.msra.mxu0 %v6877
        %6905 = vmatpush.msra.mxu0 %v6876
        %6906 = vmatpush.msra.mxu0 %v6875
        %6907 = vmatmul.f32.gmra.mxu0 %v6856
        %v6908 = vpop.f32.mrf.mxu0
        %v6909 = vadd.f32 0.0, %v6908
        %6910 = vmatmul.f32.gmra.mxu0 %v6857
        %v6911 = vpop.f32.mrf.mxu0
        %v6912 = vadd.f32 0.0, %v6911
        %6913 = vmatmul.f32.gmra.mxu0 %v6858
        %v6914 = vpop.f32.mrf.mxu0
        %v6915 = vadd.f32 0.0, %v6914
        %6916 = vmatmul.f32.gmra.mxu0 %v6859
        %v6917 = vpop.f32.mrf.mxu0
        %v6918 = vadd.f32 0.0, %v6917
        %6919 = vmatmul.f32.gmra.mxu0 %v6860
        %v6920 = vpop.f32.mrf.mxu0
        %v6921 = vadd.f32 0.0, %v6920
        %6922 = vmatmul.f32.gmra.mxu0 %v6861
        %v6923 = vpop.f32.mrf.mxu0
        %v6924 = vadd.f32 0.0, %v6923
        %6925 = vmatmul.f32.gmra.mxu0 %v6862
        %v6926 = vpop.f32.mrf.mxu0
        %v6927 = vadd.f32 0.0, %v6926
        %6928 = vmatmul.f32.gmra.mxu0 %v6863
        %v6929 = vpop.f32.mrf.mxu0
        %v6930 = vadd.f32 0.0, %v6929
        %6931 = vmatmul.f32.gmra.mxu0 %v6864
        %v6932 = vpop.f32.mrf.mxu0
        %v6933 = vadd.f32 0.0, %v6932
        %6934 = vmatmul.f32.gmra.mxu0 %v6865
        %v6935 = vpop.f32.mrf.mxu0
        %v6936 = vadd.f32 0.0, %v6935
        %6937 = vmatmul.f32.gmra.mxu0 %v6866
        %v6938 = vpop.f32.mrf.mxu0
        %v6939 = vadd.f32 0.0, %v6938
        %6940 = vmatmul.f32.gmra.mxu0 %v6867
        %v6941 = vpop.f32.mrf.mxu0
        %v6942 = vadd.f32 0.0, %v6941
        %6943 = vmatmul.f32.gmra.mxu0 %v6868
        %v6944 = vpop.f32.mrf.mxu0
        %v6945 = vadd.f32 0.0, %v6944
        %6946 = vmatmul.f32.gmra.mxu0 %v6869
        %v6947 = vpop.f32.mrf.mxu0
        %v6948 = vadd.f32 0.0, %v6947
        %6949 = vmatmul.f32.gmra.mxu0 %v6870
        %v6950 = vpop.f32.mrf.mxu0
        %v6951 = vadd.f32 0.0, %v6950
        %6952 = vmatmul.f32.gmra.mxu0 %v6871
        %v6953 = vpop.f32.mrf.mxu0
        %v6954 = vadd.f32 0.0, %v6953
        %6955 = vmatmul.f32.gmra.mxu0 %v6872
        %v6956 = vpop.f32.mrf.mxu0
        %v6957 = vadd.f32 0.0, %v6956
        %6958 = vmatmul.f32.gmra.mxu0 %v6873
        %v6959 = vpop.f32.mrf.mxu0
        %6960 = vdwg.mxu0
        %v6961 = vadd.f32 %v6839, %v6909
        %v6962 = vadd.f32 %v6840, %v6912
        %v6963 = vadd.f32 %v6841, %v6915
        %v6964 = vadd.f32 %v6842, %v6918
        %v6965 = vadd.f32 %v6843, %v6921
        %v6966 = vadd.f32 %v6844, %v6924
        %v6967 = vadd.f32 %v6845, %v6927
        %v6968 = vadd.f32 %v6846, %v6930
        %v6969 = vadd.f32 %v6847, %v6933
        %v6970 = vadd.f32 %v6848, %v6936
        %v6971 = vadd.f32 %v6849, %v6939
        %v6972 = vadd.f32 %v6850, %v6942
        %v6973 = vadd.f32 %v6851, %v6945
        %v6974 = vadd.f32 %v6852, %v6948
        %v6975 = vadd.f32 %v6853, %v6951
        %v6976 = vadd.f32 %v6854, %v6954
        %v6977 = vadd.f32 %v6855, %v6957
        %v6978 = vld [vmem:[#allocation2 + $0x3b] sm:$0xff]
        %v6979 = vld [vmem:[#allocation2 + $0x43] sm:$0xff]
        %v6980 = vld [vmem:[#allocation2 + $0x4b] sm:$0xff]
        %v6981 = vld [vmem:[#allocation2 + $0x53] sm:$0xff]
        %v6982 = vld [vmem:[#allocation2 + $0x5b] sm:$0xff]
        %v6983 = vld [vmem:[#allocation2 + $0x63] sm:$0xff]
        %v6984 = vld [vmem:[#allocation2 + $0x6b] sm:$0xff]
        %v6985 = vld [vmem:[#allocation2 + $0x73] sm:$0xff]
        %v6986 = vld [vmem:[#allocation2 + $0x7b] sm:$0xff]
        %v6987 = vld [vmem:[#allocation2 + $0x83] sm:$0xff]
        %v6988 = vld [vmem:[#allocation2 + $0x8b] sm:$0xff]
        %v6989 = vld [vmem:[#allocation2 + $0x93] sm:$0xff]
        %v6990 = vld [vmem:[#allocation2 + $0x9b] sm:$0xff]
        %v6991 = vld [vmem:[#allocation2 + $0xa3] sm:$0xff]
        %v6992 = vld [vmem:[#allocation2 + $0xab] sm:$0xff]
        %v6993 = vld [vmem:[#allocation2 + $0xb3] sm:$0xff]
        %v6994 = vld [vmem:[#allocation2 + $0xbb] sm:$0xff]
        %v6995 = vld [vmem:[#allocation2 + $0xc3] sm:$0xf]
        %s6996 = scalar_lea.vmem %s3, 2944
        %v6997 = vld [vmem:[%s6996] sm:$0xff]
        %v6998 = vld [vmem:[%s6996 + $0x8] sm:$0xff]
        %v6999 = vld [vmem:[%s6996 + $0x10] sm:$0xff]
        %v7000 = vld [vmem:[%s6996 + $0x18] sm:$0xff]
        %v7001 = vld [vmem:[%s6996 + $0x20] sm:$0xff]
        %v7002 = vld [vmem:[%s6996 + $0x28] sm:$0xff]
        %v7003 = vld [vmem:[%s6996 + $0x30] sm:$0xff]
        %v7004 = vld [vmem:[%s6996 + $0x38] sm:$0xff]
        %v7005 = vld [vmem:[%s6996 + $0x40] sm:$0xff]
        %v7006 = vld [vmem:[%s6996 + $0x48] sm:$0xff]
        %v7007 = vld [vmem:[%s6996 + $0x50] sm:$0xff]
        %v7008 = vld [vmem:[%s6996 + $0x58] sm:$0xff]
        %v7009 = vld [vmem:[%s6996 + $0x60] sm:$0xff]
        %v7010 = vld [vmem:[%s6996 + $0x68] sm:$0xff]
        %v7011 = vld [vmem:[%s6996 + $0x70] sm:$0xff]
        %v7012 = vld [vmem:[%s6996 + $0x78] sm:$0xff]
        %7013 = vmatpush.msra.mxu0 %v7012
        %7014 = vmatpush.msra.mxu0 %v7011
        %7015 = vmatpush.msra.mxu0 %v7010
        %7016 = vmatpush.msra.mxu0 %v7009
        %7017 = vmatpush.msra.mxu0 %v7008
        %7018 = vmatpush.msra.mxu0 %v7007
        %7019 = vmatpush.msra.mxu0 %v7006
        %7020 = vmatpush.msra.mxu0 %v7005
        %7021 = vmatpush.msra.mxu0 %v7004
        %7022 = vmatpush.msra.mxu0 %v7003
        %7023 = vmatpush.msra.mxu0 %v7002
        %7024 = vmatpush.msra.mxu0 %v7001
        %7025 = vmatpush.msra.mxu0 %v7000
        %7026 = vmatpush.msra.mxu0 %v6999
        %7027 = vmatpush.msra.mxu0 %v6998
        %7028 = vmatpush.msra.mxu0 %v6997
        %7029 = vmatmul.f32.gmra.mxu0 %v6978
        %v7030 = vpop.f32.mrf.mxu0
        %v7031 = vadd.f32 0.0, %v7030
        %7032 = vmatmul.f32.gmra.mxu0 %v6979
        %v7033 = vpop.f32.mrf.mxu0
        %v7034 = vadd.f32 0.0, %v7033
        %7035 = vmatmul.f32.gmra.mxu0 %v6980
        %v7036 = vpop.f32.mrf.mxu0
        %v7037 = vadd.f32 0.0, %v7036
        %7038 = vmatmul.f32.gmra.mxu0 %v6981
        %v7039 = vpop.f32.mrf.mxu0
        %v7040 = vadd.f32 0.0, %v7039
        %7041 = vmatmul.f32.gmra.mxu0 %v6982
        %v7042 = vpop.f32.mrf.mxu0
        %v7043 = vadd.f32 0.0, %v7042
        %7044 = vmatmul.f32.gmra.mxu0 %v6983
        %v7045 = vpop.f32.mrf.mxu0
        %v7046 = vadd.f32 0.0, %v7045
        %7047 = vmatmul.f32.gmra.mxu0 %v6984
        %v7048 = vpop.f32.mrf.mxu0
        %v7049 = vadd.f32 0.0, %v7048
        %7050 = vmatmul.f32.gmra.mxu0 %v6985
        %v7051 = vpop.f32.mrf.mxu0
        %v7052 = vadd.f32 0.0, %v7051
        %7053 = vmatmul.f32.gmra.mxu0 %v6986
        %v7054 = vpop.f32.mrf.mxu0
        %v7055 = vadd.f32 0.0, %v7054
        %7056 = vmatmul.f32.gmra.mxu0 %v6987
        %v7057 = vpop.f32.mrf.mxu0
        %v7058 = vadd.f32 0.0, %v7057
        %7059 = vmatmul.f32.gmra.mxu0 %v6988
        %v7060 = vpop.f32.mrf.mxu0
        %v7061 = vadd.f32 0.0, %v7060
        %7062 = vmatmul.f32.gmra.mxu0 %v6989
        %v7063 = vpop.f32.mrf.mxu0
        %v7064 = vadd.f32 0.0, %v7063
        %7065 = vmatmul.f32.gmra.mxu0 %v6990
        %v7066 = vpop.f32.mrf.mxu0
        %v7067 = vadd.f32 0.0, %v7066
        %7068 = vmatmul.f32.gmra.mxu0 %v6991
        %v7069 = vpop.f32.mrf.mxu0
        %v7070 = vadd.f32 0.0, %v7069
        %7071 = vmatmul.f32.gmra.mxu0 %v6992
        %v7072 = vpop.f32.mrf.mxu0
        %v7073 = vadd.f32 0.0, %v7072
        %7074 = vmatmul.f32.gmra.mxu0 %v6993
        %v7075 = vpop.f32.mrf.mxu0
        %v7076 = vadd.f32 0.0, %v7075
        %7077 = vmatmul.f32.gmra.mxu0 %v6994
        %v7078 = vpop.f32.mrf.mxu0
        %v7079 = vadd.f32 0.0, %v7078
        %7080 = vmatmul.f32.gmra.mxu0 %v6995
        %v7081 = vpop.f32.mrf.mxu0
        %7082 = vdwg.mxu0
        %v7083 = vadd.f32 %v6961, %v7031
        %v7084 = vadd.f32 %v6962, %v7034
        %v7085 = vadd.f32 %v6963, %v7037
        %v7086 = vadd.f32 %v6964, %v7040
        %v7087 = vadd.f32 %v6965, %v7043
        %v7088 = vadd.f32 %v6966, %v7046
        %v7089 = vadd.f32 %v6967, %v7049
        %v7090 = vadd.f32 %v6968, %v7052
        %v7091 = vadd.f32 %v6969, %v7055
        %v7092 = vadd.f32 %v6970, %v7058
        %v7093 = vadd.f32 %v6971, %v7061
        %v7094 = vadd.f32 %v6972, %v7064
        %v7095 = vadd.f32 %v6973, %v7067
        %v7096 = vadd.f32 %v6974, %v7070
        %v7097 = vadd.f32 %v6975, %v7073
        %v7098 = vadd.f32 %v6976, %v7076
        %v7099 = vadd.f32 %v6977, %v7079
        %v7100 = vld [vmem:[#allocation2 + $0x3c] sm:$0xff]
        %v7101 = vld [vmem:[#allocation2 + $0x44] sm:$0xff]
        %v7102 = vld [vmem:[#allocation2 + $0x4c] sm:$0xff]
        %v7103 = vld [vmem:[#allocation2 + $0x54] sm:$0xff]
        %v7104 = vld [vmem:[#allocation2 + $0x5c] sm:$0xff]
        %v7105 = vld [vmem:[#allocation2 + $0x64] sm:$0xff]
        %v7106 = vld [vmem:[#allocation2 + $0x6c] sm:$0xff]
        %v7107 = vld [vmem:[#allocation2 + $0x74] sm:$0xff]
        %v7108 = vld [vmem:[#allocation2 + $0x7c] sm:$0xff]
        %v7109 = vld [vmem:[#allocation2 + $0x84] sm:$0xff]
        %v7110 = vld [vmem:[#allocation2 + $0x8c] sm:$0xff]
        %v7111 = vld [vmem:[#allocation2 + $0x94] sm:$0xff]
        %v7112 = vld [vmem:[#allocation2 + $0x9c] sm:$0xff]
        %v7113 = vld [vmem:[#allocation2 + $0xa4] sm:$0xff]
        %v7114 = vld [vmem:[#allocation2 + $0xac] sm:$0xff]
        %v7115 = vld [vmem:[#allocation2 + $0xb4] sm:$0xff]
        %v7116 = vld [vmem:[#allocation2 + $0xbc] sm:$0xff]
        %v7117 = vld [vmem:[#allocation2 + $0xc4] sm:$0xf]
        %s7118 = scalar_lea.vmem %s3, 3072
        %v7119 = vld [vmem:[%s7118] sm:$0xff]
        %v7120 = vld [vmem:[%s7118 + $0x8] sm:$0xff]
        %v7121 = vld [vmem:[%s7118 + $0x10] sm:$0xff]
        %v7122 = vld [vmem:[%s7118 + $0x18] sm:$0xff]
        %v7123 = vld [vmem:[%s7118 + $0x20] sm:$0xff]
        %v7124 = vld [vmem:[%s7118 + $0x28] sm:$0xff]
        %v7125 = vld [vmem:[%s7118 + $0x30] sm:$0xff]
        %v7126 = vld [vmem:[%s7118 + $0x38] sm:$0xff]
        %v7127 = vld [vmem:[%s7118 + $0x40] sm:$0xff]
        %v7128 = vld [vmem:[%s7118 + $0x48] sm:$0xff]
        %v7129 = vld [vmem:[%s7118 + $0x50] sm:$0xff]
        %v7130 = vld [vmem:[%s7118 + $0x58] sm:$0xff]
        %v7131 = vld [vmem:[%s7118 + $0x60] sm:$0xff]
        %v7132 = vld [vmem:[%s7118 + $0x68] sm:$0xff]
        %v7133 = vld [vmem:[%s7118 + $0x70] sm:$0xff]
        %v7134 = vld [vmem:[%s7118 + $0x78] sm:$0xff]
        %7135 = vmatpush.msra.mxu0 %v7134
        %7136 = vmatpush.msra.mxu0 %v7133
        %7137 = vmatpush.msra.mxu0 %v7132
        %7138 = vmatpush.msra.mxu0 %v7131
        %7139 = vmatpush.msra.mxu0 %v7130
        %7140 = vmatpush.msra.mxu0 %v7129
        %7141 = vmatpush.msra.mxu0 %v7128
        %7142 = vmatpush.msra.mxu0 %v7127
        %7143 = vmatpush.msra.mxu0 %v7126
        %7144 = vmatpush.msra.mxu0 %v7125
        %7145 = vmatpush.msra.mxu0 %v7124
        %7146 = vmatpush.msra.mxu0 %v7123
        %7147 = vmatpush.msra.mxu0 %v7122
        %7148 = vmatpush.msra.mxu0 %v7121
        %7149 = vmatpush.msra.mxu0 %v7120
        %7150 = vmatpush.msra.mxu0 %v7119
        %7151 = vmatmul.f32.gmra.mxu0 %v7100
        %v7152 = vpop.f32.mrf.mxu0
        %v7153 = vadd.f32 0.0, %v7152
        %7154 = vmatmul.f32.gmra.mxu0 %v7101
        %v7155 = vpop.f32.mrf.mxu0
        %v7156 = vadd.f32 0.0, %v7155
        %7157 = vmatmul.f32.gmra.mxu0 %v7102
        %v7158 = vpop.f32.mrf.mxu0
        %v7159 = vadd.f32 0.0, %v7158
        %7160 = vmatmul.f32.gmra.mxu0 %v7103
        %v7161 = vpop.f32.mrf.mxu0
        %v7162 = vadd.f32 0.0, %v7161
        %7163 = vmatmul.f32.gmra.mxu0 %v7104
        %v7164 = vpop.f32.mrf.mxu0
        %v7165 = vadd.f32 0.0, %v7164
        %7166 = vmatmul.f32.gmra.mxu0 %v7105
        %v7167 = vpop.f32.mrf.mxu0
        %v7168 = vadd.f32 0.0, %v7167
        %7169 = vmatmul.f32.gmra.mxu0 %v7106
        %v7170 = vpop.f32.mrf.mxu0
        %v7171 = vadd.f32 0.0, %v7170
        %7172 = vmatmul.f32.gmra.mxu0 %v7107
        %v7173 = vpop.f32.mrf.mxu0
        %v7174 = vadd.f32 0.0, %v7173
        %7175 = vmatmul.f32.gmra.mxu0 %v7108
        %v7176 = vpop.f32.mrf.mxu0
        %v7177 = vadd.f32 0.0, %v7176
        %7178 = vmatmul.f32.gmra.mxu0 %v7109
        %v7179 = vpop.f32.mrf.mxu0
        %v7180 = vadd.f32 0.0, %v7179
        %7181 = vmatmul.f32.gmra.mxu0 %v7110
        %v7182 = vpop.f32.mrf.mxu0
        %v7183 = vadd.f32 0.0, %v7182
        %7184 = vmatmul.f32.gmra.mxu0 %v7111
        %v7185 = vpop.f32.mrf.mxu0
        %v7186 = vadd.f32 0.0, %v7185
        %7187 = vmatmul.f32.gmra.mxu0 %v7112
        %v7188 = vpop.f32.mrf.mxu0
        %v7189 = vadd.f32 0.0, %v7188
        %7190 = vmatmul.f32.gmra.mxu0 %v7113
        %v7191 = vpop.f32.mrf.mxu0
        %v7192 = vadd.f32 0.0, %v7191
        %7193 = vmatmul.f32.gmra.mxu0 %v7114
        %v7194 = vpop.f32.mrf.mxu0
        %v7195 = vadd.f32 0.0, %v7194
        %7196 = vmatmul.f32.gmra.mxu0 %v7115
        %v7197 = vpop.f32.mrf.mxu0
        %v7198 = vadd.f32 0.0, %v7197
        %7199 = vmatmul.f32.gmra.mxu0 %v7116
        %v7200 = vpop.f32.mrf.mxu0
        %v7201 = vadd.f32 0.0, %v7200
        %7202 = vmatmul.f32.gmra.mxu0 %v7117
        %v7203 = vpop.f32.mrf.mxu0
        %7204 = vdwg.mxu0
        %v7205 = vadd.f32 %v7083, %v7153
        %v7206 = vadd.f32 %v7084, %v7156
        %v7207 = vadd.f32 %v7085, %v7159
        %v7208 = vadd.f32 %v7086, %v7162
        %v7209 = vadd.f32 %v7087, %v7165
        %v7210 = vadd.f32 %v7088, %v7168
        %v7211 = vadd.f32 %v7089, %v7171
        %v7212 = vadd.f32 %v7090, %v7174
        %v7213 = vadd.f32 %v7091, %v7177
        %v7214 = vadd.f32 %v7092, %v7180
        %v7215 = vadd.f32 %v7093, %v7183
        %v7216 = vadd.f32 %v7094, %v7186
        %v7217 = vadd.f32 %v7095, %v7189
        %v7218 = vadd.f32 %v7096, %v7192
        %v7219 = vadd.f32 %v7097, %v7195
        %v7220 = vadd.f32 %v7098, %v7198
        %v7221 = vadd.f32 %v7099, %v7201
        %v7222 = vld [vmem:[%s4] sm:$0x1]
        %v7224 = vperm.slane %v7222, 0
        %v7226 = vadd.f32 %v7205, %v7224
        %v7227 = vadd.f32 %v7206, %v7224
        %v7228 = vadd.f32 %v7207, %v7224
        %v7229 = vadd.f32 %v7208, %v7224
        %v7230 = vadd.f32 %v7209, %v7224
        %v7231 = vadd.f32 %v7210, %v7224
        %v7232 = vadd.f32 %v7211, %v7224
        %v7233 = vadd.f32 %v7212, %v7224
        %v7234 = vadd.f32 %v7213, %v7224
        %v7235 = vadd.f32 %v7214, %v7224
        %v7236 = vadd.f32 %v7215, %v7224
        %v7237 = vadd.f32 %v7216, %v7224
        %v7238 = vadd.f32 %v7217, %v7224
        %v7239 = vadd.f32 %v7218, %v7224
        %v7240 = vadd.f32 %v7219, %v7224
        %v7241 = vadd.f32 %v7220, %v7224
        %v7242 = vadd.f32 %v7221, %v7224
        %v7243 = vmax.f32 %v7226, 0.0
        %v7244 = vmax.f32 %v7227, 0.0
        %v7245 = vmax.f32 %v7228, 0.0
        %v7246 = vmax.f32 %v7229, 0.0
        %v7247 = vmax.f32 %v7230, 0.0
        %v7248 = vmax.f32 %v7231, 0.0
        %v7249 = vmax.f32 %v7232, 0.0
        %v7250 = vmax.f32 %v7233, 0.0
        %v7251 = vmax.f32 %v7234, 0.0
        %v7252 = vmax.f32 %v7235, 0.0
        %v7253 = vmax.f32 %v7236, 0.0
        %v7254 = vmax.f32 %v7237, 0.0
        %v7255 = vmax.f32 %v7238, 0.0
        %v7256 = vmax.f32 %v7239, 0.0
        %v7257 = vmax.f32 %v7240, 0.0
        %v7258 = vmax.f32 %v7241, 0.0
        %v7259 = vmax.f32 %v7242, 0.0
        %v7277 = vrot.slane %v7243, 2
        %v7278 = vrot.slane %v7243, 4
        %v7279 = vrot.slane %v7243, 6
        %v7280 = vrot.slane %v7244, 6
        %v7281 = vrot.slane %v7245, 2
        %v7282 = vrot.slane %v7245, 4
        %v7283 = vrot.slane %v7245, 6
        %v7284 = vrot.slane %v7246, 4
        %v7285 = vrot.slane %v7246, 6
        %v7286 = vrot.slane %v7247, 2
        %v7287 = vrot.slane %v7247, 4
        %v7288 = vrot.slane %v7248, 2
        %v7289 = vrot.slane %v7248, 4
        %v7290 = vrot.slane %v7248, 6
        %v7291 = vrot.slane %v7249, 2
        %v7292 = vrot.slane %v7250, 2
        %v7293 = vrot.slane %v7250, 4
        %v7294 = vrot.slane %v7250, 6
        %v7295 = vrot.slane %v7251, 6
        %v7296 = vrot.slane %v7252, 2
        %v7297 = vrot.slane %v7252, 4
        %v7298 = vrot.slane %v7252, 6
        %v7299 = vrot.slane %v7253, 4
        %v7300 = vrot.slane %v7253, 6
        %v7301 = vrot.slane %v7254, 2
        %v7302 = vrot.slane %v7254, 4
        %v7303 = vrot.slane %v7255, 2
        %v7304 = vrot.slane %v7255, 4
        %v7305 = vrot.slane %v7255, 6
        %v7306 = vrot.slane %v7256, 2
        %v7307 = vrot.slane %v7257, 2
        %v7308 = vrot.slane %v7257, 4
        %v7309 = vrot.slane %v7257, 6
        %v7310 = vrot.slane %v7258, 6
        %v7311 = vrot.slane %v7259, 2
        %v7312 = vrot.slane %v7259, 4
        %v7313 = vrot.slane %v7259, 6
        %v7351 = vrot.slane %v7243, 7
        %v7352 = vrot.slane %v7351, 2
        %v7353 = vrot.slane %v7277, 7
        %v7354 = vrot.slane %v7353, 2
        %v7355 = vrot.slane %v7278, 7
        %v7356 = vrot.slane %v7355, 2
        %v7357 = vrot.slane %v7279, 7
        %v7358 = vrot.slane %v7357, 2
        %v7359 = vrot.slane %v7244, 7
        %v7360 = vrot.slane %v7359, 2
        %v7361 = vrot.slane %v7280, 7
        %v7362 = vrot.slane %v7361, 2
        %v7363 = vrot.slane %v7245, 7
        %v7364 = vrot.slane %v7363, 2
        %v7365 = vrot.slane %v7281, 7
        %v7366 = vrot.slane %v7365, 2
        %v7367 = vrot.slane %v7282, 7
        %v7368 = vrot.slane %v7367, 2
        %v7369 = vrot.slane %v7283, 7
        %v7370 = vrot.slane %v7369, 2
        %v7371 = vrot.slane %v7284, 7
        %v7372 = vrot.slane %v7371, 2
        %v7373 = vrot.slane %v7285, 7
        %v7374 = vrot.slane %v7373, 2
        %v7375 = vrot.slane %v7247, 7
        %v7376 = vrot.slane %v7375, 2
        %v7377 = vrot.slane %v7286, 7
        %v7378 = vrot.slane %v7377, 2
        %v7379 = vrot.slane %v7287, 7
        %v7380 = vrot.slane %v7379, 2
        %v7381 = vrot.slane %v7288, 7
        %v7382 = vrot.slane %v7381, 2
        %v7383 = vrot.slane %v7289, 7
        %v7384 = vrot.slane %v7383, 2
        %v7385 = vrot.slane %v7290, 7
        %v7386 = vrot.slane %v7385, 2
        %v7387 = vrot.slane %v7249, 7
        %v7388 = vrot.slane %v7387, 2
        %v7389 = vrot.slane %v7291, 7
        %v7390 = vrot.slane %v7389, 2
        %v7391 = vrot.slane %v7250, 7
        %v7392 = vrot.slane %v7391, 2
        %v7393 = vrot.slane %v7292, 7
        %v7394 = vrot.slane %v7393, 2
        %v7395 = vrot.slane %v7293, 7
        %v7396 = vrot.slane %v7395, 2
        %v7397 = vrot.slane %v7294, 7
        %v7398 = vrot.slane %v7397, 2
        %v7399 = vrot.slane %v7251, 7
        %v7400 = vrot.slane %v7399, 2
        %v7401 = vrot.slane %v7295, 7
        %v7402 = vrot.slane %v7401, 2
        %v7403 = vrot.slane %v7252, 7
        %v7404 = vrot.slane %v7403, 2
        %v7405 = vrot.slane %v7296, 7
        %v7406 = vrot.slane %v7405, 2
        %v7407 = vrot.slane %v7297, 7
        %v7408 = vrot.slane %v7407, 2
        %v7409 = vrot.slane %v7298, 7
        %v7410 = vrot.slane %v7409, 2
        %v7411 = vrot.slane %v7299, 7
        %v7412 = vrot.slane %v7411, 2
        %v7413 = vrot.slane %v7300, 7
        %v7414 = vrot.slane %v7413, 2
        %v7415 = vrot.slane %v7254, 7
        %v7416 = vrot.slane %v7415, 2
        %v7417 = vrot.slane %v7301, 7
        %v7418 = vrot.slane %v7417, 2
        %v7419 = vrot.slane %v7302, 7
        %v7420 = vrot.slane %v7419, 2
        %v7421 = vrot.slane %v7303, 7
        %v7422 = vrot.slane %v7421, 2
        %v7423 = vrot.slane %v7304, 7
        %v7424 = vrot.slane %v7423, 2
        %v7425 = vrot.slane %v7305, 7
        %v7426 = vrot.slane %v7425, 2
        %v7427 = vrot.slane %v7256, 7
        %v7428 = vrot.slane %v7427, 2
        %v7429 = vrot.slane %v7306, 7
        %v7430 = vrot.slane %v7429, 2
        %v7431 = vrot.slane %v7257, 7
        %v7432 = vrot.slane %v7431, 2
        %v7433 = vrot.slane %v7307, 7
        %v7434 = vrot.slane %v7433, 2
        %v7435 = vrot.slane %v7308, 7
        %v7436 = vrot.slane %v7435, 2
        %v7437 = vrot.slane %v7309, 7
        %v7438 = vrot.slane %v7437, 2
        %v7439 = vrot.slane %v7258, 7
        %v7440 = vrot.slane %v7439, 2
        %v7441 = vrot.slane %v7310, 7
        %v7442 = vrot.slane %v7441, 2
        %v7443 = vrot.slane %v7259, 7
        %v7444 = vrot.slane %v7443, 2
        %v7445 = vrot.slane %v7311, 7
        %v7446 = vrot.slane %v7445, 2
        %v7447 = vrot.slane %v7312, 7
        %v7448 = vrot.slane %v7447, 2
        %v7449 = vrot.slane %v7313, 7
        %v7450 = vrot.slane %v7449, 2
        %v7501 = vmax.f32 %v7243, %v7352
        %v7502 = vmax.f32 %v7277, %v7354
        %v7503 = vmax.f32 %v7278, %v7356
        %v7504 = vmax.f32 %v7279, %v7358
        %v7505 = vmax.f32 %v7244, %v7360
        %v7506 = vmax.f32 %v7280, %v7362
        %v7507 = vmax.f32 %v7245, %v7364
        %v7508 = vmax.f32 %v7281, %v7366
        %v7509 = vmax.f32 %v7282, %v7368
        %v7510 = vmax.f32 %v7283, %v7370
        %v7511 = vmax.f32 %v7284, %v7372
        %v7512 = vmax.f32 %v7285, %v7374
        %v7513 = vmax.f32 %v7247, %v7376
        %v7514 = vmax.f32 %v7286, %v7378
        %v7515 = vmax.f32 %v7287, %v7380
        %v7516 = vmax.f32 %v7288, %v7382
        %v7517 = vmax.f32 %v7289, %v7384
        %v7518 = vmax.f32 %v7290, %v7386
        %v7519 = vmax.f32 %v7249, %v7388
        %v7520 = vmax.f32 %v7291, %v7390
        %v7521 = vmax.f32 %v7250, %v7392
        %v7522 = vmax.f32 %v7292, %v7394
        %v7523 = vmax.f32 %v7293, %v7396
        %v7524 = vmax.f32 %v7294, %v7398
        %v7525 = vmax.f32 %v7251, %v7400
        %v7526 = vmax.f32 %v7295, %v7402
        %v7527 = vmax.f32 %v7252, %v7404
        %v7528 = vmax.f32 %v7296, %v7406
        %v7529 = vmax.f32 %v7297, %v7408
        %v7530 = vmax.f32 %v7298, %v7410
        %v7531 = vmax.f32 %v7299, %v7412
        %v7532 = vmax.f32 %v7300, %v7414
        %v7533 = vmax.f32 %v7254, %v7416
        %v7534 = vmax.f32 %v7301, %v7418
        %v7535 = vmax.f32 %v7302, %v7420
        %v7536 = vmax.f32 %v7303, %v7422
        %v7537 = vmax.f32 %v7304, %v7424
        %v7538 = vmax.f32 %v7305, %v7426
        %v7539 = vmax.f32 %v7256, %v7428
        %v7540 = vmax.f32 %v7306, %v7430
        %v7541 = vmax.f32 %v7257, %v7432
        %v7542 = vmax.f32 %v7307, %v7434
        %v7543 = vmax.f32 %v7308, %v7436
        %v7544 = vmax.f32 %v7309, %v7438
        %v7545 = vmax.f32 %v7258, %v7440
        %v7546 = vmax.f32 %v7310, %v7442
        %v7547 = vmax.f32 %v7259, %v7444
        %v7548 = vmax.f32 %v7311, %v7446
        %v7549 = vmax.f32 %v7312, %v7448
        %v7550 = vmax.f32 %v7313, %v7450
        %v7551 = vmax.f32 %v7501, %v7506
        %v7552 = vmax.f32 %v7502, %v7507
        %v7553 = vmax.f32 %v7503, %v7508
        %v7554 = vmax.f32 %v7504, %v7509
        %v7555 = vmax.f32 %v7505, %v7510
        %v7556 = vmax.f32 %v7511, %v7516
        %v7557 = vmax.f32 %v7512, %v7517
        %v7558 = vmax.f32 %v7513, %v7518
        %v7559 = vmax.f32 %v7514, %v7519
        %v7560 = vmax.f32 %v7515, %v7520
        %v7561 = vmax.f32 %v7521, %v7526
        %v7562 = vmax.f32 %v7522, %v7527
        %v7563 = vmax.f32 %v7523, %v7528
        %v7564 = vmax.f32 %v7524, %v7529
        %v7565 = vmax.f32 %v7525, %v7530
        %v7566 = vmax.f32 %v7531, %v7536
        %v7567 = vmax.f32 %v7532, %v7537
        %v7568 = vmax.f32 %v7533, %v7538
        %v7569 = vmax.f32 %v7534, %v7539
        %v7570 = vmax.f32 %v7535, %v7540
        %v7571 = vmax.f32 %v7541, %v7546
        %v7572 = vmax.f32 %v7542, %v7547
        %v7573 = vmax.f32 %v7543, %v7548
        %v7574 = vmax.f32 %v7544, %v7549
        %v7575 = vmax.f32 %v7545, %v7550
        %v7576 = vld [vmem:[%s6] sm:$0x1]
        %v7577 = vld [vmem:[%s5] sm:$0xff]
        %v7578 = vld [vmem:[%s5 + $0x8] sm:$0xff]
        %v7579 = vld [vmem:[%s5 + $0x10] sm:$0xff]
        %v7580 = vld [vmem:[%s5 + $0x18] sm:$0xff]
        %v7581 = vld [vmem:[%s5 + $0x20] sm:$0xff]
        %v7582 = vld [vmem:[%s5 + $0x28] sm:$0xff]
        %v7583 = vld [vmem:[%s5 + $0x30] sm:$0xff]
        %v7584 = vld [vmem:[%s5 + $0x38] sm:$0xff]
        %v7585 = vld [vmem:[%s5 + $0x40] sm:$0xff]
        %v7586 = vld [vmem:[%s5 + $0x48] sm:$0xff]
        %v7587 = vld [vmem:[%s5 + $0x50] sm:$0xff]
        %v7588 = vld [vmem:[%s5 + $0x58] sm:$0xff]
        %v7589 = vld [vmem:[%s5 + $0x60] sm:$0xff]
        %v7590 = vld [vmem:[%s5 + $0x68] sm:$0xff]
        %v7591 = vld [vmem:[%s5 + $0x70] sm:$0xff]
        %v7592 = vld [vmem:[%s5 + $0x78] sm:$0xff]
        %7593 = vmatpush.msra.mxu0 %v7592
        %7594 = vmatpush.msra.mxu0 %v7591
        %7595 = vmatpush.msra.mxu0 %v7590
        %7596 = vmatpush.msra.mxu0 %v7589
        %7597 = vmatpush.msra.mxu0 %v7588
        %7598 = vmatpush.msra.mxu0 %v7587
        %7599 = vmatpush.msra.mxu0 %v7586
        %7600 = vmatpush.msra.mxu0 %v7585
        %7601 = vmatpush.msra.mxu0 %v7584
        %7602 = vmatpush.msra.mxu0 %v7583
        %7603 = vmatpush.msra.mxu0 %v7582
        %7604 = vmatpush.msra.mxu0 %v7581
        %7605 = vmatpush.msra.mxu0 %v7580
        %7606 = vmatpush.msra.mxu0 %v7579
        %7607 = vmatpush.msra.mxu0 %v7578
        %7608 = vmatpush.msra.mxu0 %v7577
        %7609 = vmatmul.f32.gmra.mxu0 %v7551
        %v7610 = vpop.f32.mrf.mxu0
        %v7611 = vadd.f32 0.0, %v7610
        %7612 = vdwg.mxu0
        %v7613 = vadd.f32 %v7576, %v7611
        %s7614 = scalar_lea.vmem %s5, 128
        %v7615 = vld [vmem:[%s7614] sm:$0xff]
        %v7616 = vld [vmem:[%s7614 + $0x8] sm:$0xff]
        %v7617 = vld [vmem:[%s7614 + $0x10] sm:$0xff]
        %v7618 = vld [vmem:[%s7614 + $0x18] sm:$0xff]
        %v7619 = vld [vmem:[%s7614 + $0x20] sm:$0xff]
        %v7620 = vld [vmem:[%s7614 + $0x28] sm:$0xff]
        %v7621 = vld [vmem:[%s7614 + $0x30] sm:$0xff]
        %v7622 = vld [vmem:[%s7614 + $0x38] sm:$0xff]
        %v7623 = vld [vmem:[%s7614 + $0x40] sm:$0xff]
        %v7624 = vld [vmem:[%s7614 + $0x48] sm:$0xff]
        %v7625 = vld [vmem:[%s7614 + $0x50] sm:$0xff]
        %v7626 = vld [vmem:[%s7614 + $0x58] sm:$0xff]
        %v7627 = vld [vmem:[%s7614 + $0x60] sm:$0xff]
        %v7628 = vld [vmem:[%s7614 + $0x68] sm:$0xff]
        %v7629 = vld [vmem:[%s7614 + $0x70] sm:$0xff]
        %v7630 = vld [vmem:[%s7614 + $0x78] sm:$0xff]
        %7631 = vmatpush.msra.mxu0 %v7630
        %7632 = vmatpush.msra.mxu0 %v7629
        %7633 = vmatpush.msra.mxu0 %v7628
        %7634 = vmatpush.msra.mxu0 %v7627
        %7635 = vmatpush.msra.mxu0 %v7626
        %7636 = vmatpush.msra.mxu0 %v7625
        %7637 = vmatpush.msra.mxu0 %v7624
        %7638 = vmatpush.msra.mxu0 %v7623
        %7639 = vmatpush.msra.mxu0 %v7622
        %7640 = vmatpush.msra.mxu0 %v7621
        %7641 = vmatpush.msra.mxu0 %v7620
        %7642 = vmatpush.msra.mxu0 %v7619
        %7643 = vmatpush.msra.mxu0 %v7618
        %7644 = vmatpush.msra.mxu0 %v7617
        %7645 = vmatpush.msra.mxu0 %v7616
        %7646 = vmatpush.msra.mxu0 %v7615
        %7647 = vmatmul.f32.gmra.mxu0 %v7552
        %v7648 = vpop.f32.mrf.mxu0
        %v7649 = vadd.f32 0.0, %v7648
        %7650 = vdwg.mxu0
        %v7651 = vadd.f32 %v7613, %v7649
        %s7652 = scalar_lea.vmem %s5, 256
        %v7653 = vld [vmem:[%s7652] sm:$0xff]
        %v7654 = vld [vmem:[%s7652 + $0x8] sm:$0xff]
        %v7655 = vld [vmem:[%s7652 + $0x10] sm:$0xff]
        %v7656 = vld [vmem:[%s7652 + $0x18] sm:$0xff]
        %v7657 = vld [vmem:[%s7652 + $0x20] sm:$0xff]
        %v7658 = vld [vmem:[%s7652 + $0x28] sm:$0xff]
        %v7659 = vld [vmem:[%s7652 + $0x30] sm:$0xff]
        %v7660 = vld [vmem:[%s7652 + $0x38] sm:$0xff]
        %v7661 = vld [vmem:[%s7652 + $0x40] sm:$0xff]
        %v7662 = vld [vmem:[%s7652 + $0x48] sm:$0xff]
        %v7663 = vld [vmem:[%s7652 + $0x50] sm:$0xff]
        %v7664 = vld [vmem:[%s7652 + $0x58] sm:$0xff]
        %v7665 = vld [vmem:[%s7652 + $0x60] sm:$0xff]
        %v7666 = vld [vmem:[%s7652 + $0x68] sm:$0xff]
        %v7667 = vld [vmem:[%s7652 + $0x70] sm:$0xff]
        %v7668 = vld [vmem:[%s7652 + $0x78] sm:$0xff]
        %7669 = vmatpush.msra.mxu0 %v7668
        %7670 = vmatpush.msra.mxu0 %v7667
        %7671 = vmatpush.msra.mxu0 %v7666
        %7672 = vmatpush.msra.mxu0 %v7665
        %7673 = vmatpush.msra.mxu0 %v7664
        %7674 = vmatpush.msra.mxu0 %v7663
        %7675 = vmatpush.msra.mxu0 %v7662
        %7676 = vmatpush.msra.mxu0 %v7661
        %7677 = vmatpush.msra.mxu0 %v7660
        %7678 = vmatpush.msra.mxu0 %v7659
        %7679 = vmatpush.msra.mxu0 %v7658
        %7680 = vmatpush.msra.mxu0 %v7657
        %7681 = vmatpush.msra.mxu0 %v7656
        %7682 = vmatpush.msra.mxu0 %v7655
        %7683 = vmatpush.msra.mxu0 %v7654
        %7684 = vmatpush.msra.mxu0 %v7653
        %7685 = vmatmul.f32.gmra.mxu0 %v7553
        %v7686 = vpop.f32.mrf.mxu0
        %v7687 = vadd.f32 0.0, %v7686
        %7688 = vdwg.mxu0
        %v7689 = vadd.f32 %v7651, %v7687
        %s7690 = scalar_lea.vmem %s5, 384
        %v7691 = vld [vmem:[%s7690] sm:$0xff]
        %v7692 = vld [vmem:[%s7690 + $0x8] sm:$0xff]
        %v7693 = vld [vmem:[%s7690 + $0x10] sm:$0xff]
        %v7694 = vld [vmem:[%s7690 + $0x18] sm:$0xff]
        %v7695 = vld [vmem:[%s7690 + $0x20] sm:$0xff]
        %v7696 = vld [vmem:[%s7690 + $0x28] sm:$0xff]
        %v7697 = vld [vmem:[%s7690 + $0x30] sm:$0xff]
        %v7698 = vld [vmem:[%s7690 + $0x38] sm:$0xff]
        %v7699 = vld [vmem:[%s7690 + $0x40] sm:$0xff]
        %v7700 = vld [vmem:[%s7690 + $0x48] sm:$0xff]
        %v7701 = vld [vmem:[%s7690 + $0x50] sm:$0xff]
        %v7702 = vld [vmem:[%s7690 + $0x58] sm:$0xff]
        %v7703 = vld [vmem:[%s7690 + $0x60] sm:$0xff]
        %v7704 = vld [vmem:[%s7690 + $0x68] sm:$0xff]
        %v7705 = vld [vmem:[%s7690 + $0x70] sm:$0xff]
        %v7706 = vld [vmem:[%s7690 + $0x78] sm:$0xff]
        %7707 = vmatpush.msra.mxu0 %v7706
        %7708 = vmatpush.msra.mxu0 %v7705
        %7709 = vmatpush.msra.mxu0 %v7704
        %7710 = vmatpush.msra.mxu0 %v7703
        %7711 = vmatpush.msra.mxu0 %v7702
        %7712 = vmatpush.msra.mxu0 %v7701
        %7713 = vmatpush.msra.mxu0 %v7700
        %7714 = vmatpush.msra.mxu0 %v7699
        %7715 = vmatpush.msra.mxu0 %v7698
        %7716 = vmatpush.msra.mxu0 %v7697
        %7717 = vmatpush.msra.mxu0 %v7696
        %7718 = vmatpush.msra.mxu0 %v7695
        %7719 = vmatpush.msra.mxu0 %v7694
        %7720 = vmatpush.msra.mxu0 %v7693
        %7721 = vmatpush.msra.mxu0 %v7692
        %7722 = vmatpush.msra.mxu0 %v7691
        %7723 = vmatmul.f32.gmra.mxu0 %v7554
        %v7724 = vpop.f32.mrf.mxu0
        %v7725 = vadd.f32 0.0, %v7724
        %7726 = vdwg.mxu0
        %v7727 = vadd.f32 %v7689, %v7725
        %s7728 = scalar_lea.vmem %s5, 512
        %v7729 = vld [vmem:[%s7728] sm:$0xff]
        %v7730 = vld [vmem:[%s7728 + $0x8] sm:$0xff]
        %v7731 = vld [vmem:[%s7728 + $0x10] sm:$0xff]
        %v7732 = vld [vmem:[%s7728 + $0x18] sm:$0xff]
        %v7733 = vld [vmem:[%s7728 + $0x20] sm:$0xff]
        %v7734 = vld [vmem:[%s7728 + $0x28] sm:$0xff]
        %v7735 = vld [vmem:[%s7728 + $0x30] sm:$0xff]
        %v7736 = vld [vmem:[%s7728 + $0x38] sm:$0xff]
        %v7737 = vld [vmem:[%s7728 + $0x40] sm:$0xff]
        %v7738 = vld [vmem:[%s7728 + $0x48] sm:$0xff]
        %v7739 = vld [vmem:[%s7728 + $0x50] sm:$0xff]
        %v7740 = vld [vmem:[%s7728 + $0x58] sm:$0xff]
        %v7741 = vld [vmem:[%s7728 + $0x60] sm:$0xff]
        %v7742 = vld [vmem:[%s7728 + $0x68] sm:$0xff]
        %v7743 = vld [vmem:[%s7728 + $0x70] sm:$0xff]
        %v7744 = vld [vmem:[%s7728 + $0x78] sm:$0xff]
        %7745 = vmatpush.msra.mxu0 %v7744
        %7746 = vmatpush.msra.mxu0 %v7743
        %7747 = vmatpush.msra.mxu0 %v7742
        %7748 = vmatpush.msra.mxu0 %v7741
        %7749 = vmatpush.msra.mxu0 %v7740
        %7750 = vmatpush.msra.mxu0 %v7739
        %7751 = vmatpush.msra.mxu0 %v7738
        %7752 = vmatpush.msra.mxu0 %v7737
        %7753 = vmatpush.msra.mxu0 %v7736
        %7754 = vmatpush.msra.mxu0 %v7735
        %7755 = vmatpush.msra.mxu0 %v7734
        %7756 = vmatpush.msra.mxu0 %v7733
        %7757 = vmatpush.msra.mxu0 %v7732
        %7758 = vmatpush.msra.mxu0 %v7731
        %7759 = vmatpush.msra.mxu0 %v7730
        %7760 = vmatpush.msra.mxu0 %v7729
        %7761 = vmatmul.f32.gmra.mxu0 %v7555
        %v7762 = vpop.f32.mrf.mxu0
        %v7763 = vadd.f32 0.0, %v7762
        %7764 = vdwg.mxu0
        %v7765 = vadd.f32 %v7727, %v7763
        %s7766 = scalar_lea.vmem %s5, 640
        %v7767 = vld [vmem:[%s7766] sm:$0xff]
        %v7768 = vld [vmem:[%s7766 + $0x8] sm:$0xff]
        %v7769 = vld [vmem:[%s7766 + $0x10] sm:$0xff]
        %v7770 = vld [vmem:[%s7766 + $0x18] sm:$0xff]
        %v7771 = vld [vmem:[%s7766 + $0x20] sm:$0xff]
        %v7772 = vld [vmem:[%s7766 + $0x28] sm:$0xff]
        %v7773 = vld [vmem:[%s7766 + $0x30] sm:$0xff]
        %v7774 = vld [vmem:[%s7766 + $0x38] sm:$0xff]
        %v7775 = vld [vmem:[%s7766 + $0x40] sm:$0xff]
        %v7776 = vld [vmem:[%s7766 + $0x48] sm:$0xff]
        %v7777 = vld [vmem:[%s7766 + $0x50] sm:$0xff]
        %v7778 = vld [vmem:[%s7766 + $0x58] sm:$0xff]
        %v7779 = vld [vmem:[%s7766 + $0x60] sm:$0xff]
        %v7780 = vld [vmem:[%s7766 + $0x68] sm:$0xff]
        %v7781 = vld [vmem:[%s7766 + $0x70] sm:$0xff]
        %v7782 = vld [vmem:[%s7766 + $0x78] sm:$0xff]
        %7783 = vmatpush.msra.mxu0 %v7782
        %7784 = vmatpush.msra.mxu0 %v7781
        %7785 = vmatpush.msra.mxu0 %v7780
        %7786 = vmatpush.msra.mxu0 %v7779
        %7787 = vmatpush.msra.mxu0 %v7778
        %7788 = vmatpush.msra.mxu0 %v7777
        %7789 = vmatpush.msra.mxu0 %v7776
        %7790 = vmatpush.msra.mxu0 %v7775
        %7791 = vmatpush.msra.mxu0 %v7774
        %7792 = vmatpush.msra.mxu0 %v7773
        %7793 = vmatpush.msra.mxu0 %v7772
        %7794 = vmatpush.msra.mxu0 %v7771
        %7795 = vmatpush.msra.mxu0 %v7770
        %7796 = vmatpush.msra.mxu0 %v7769
        %7797 = vmatpush.msra.mxu0 %v7768
        %7798 = vmatpush.msra.mxu0 %v7767
        %7799 = vmatmul.f32.gmra.mxu0 %v7556
        %v7800 = vpop.f32.mrf.mxu0
        %v7801 = vadd.f32 0.0, %v7800
        %7802 = vdwg.mxu0
        %v7803 = vadd.f32 %v7765, %v7801
        %s7804 = scalar_lea.vmem %s5, 768
        %v7805 = vld [vmem:[%s7804] sm:$0xff]
        %v7806 = vld [vmem:[%s7804 + $0x8] sm:$0xff]
        %v7807 = vld [vmem:[%s7804 + $0x10] sm:$0xff]
        %v7808 = vld [vmem:[%s7804 + $0x18] sm:$0xff]
        %v7809 = vld [vmem:[%s7804 + $0x20] sm:$0xff]
        %v7810 = vld [vmem:[%s7804 + $0x28] sm:$0xff]
        %v7811 = vld [vmem:[%s7804 + $0x30] sm:$0xff]
        %v7812 = vld [vmem:[%s7804 + $0x38] sm:$0xff]
        %v7813 = vld [vmem:[%s7804 + $0x40] sm:$0xff]
        %v7814 = vld [vmem:[%s7804 + $0x48] sm:$0xff]
        %v7815 = vld [vmem:[%s7804 + $0x50] sm:$0xff]
        %v7816 = vld [vmem:[%s7804 + $0x58] sm:$0xff]
        %v7817 = vld [vmem:[%s7804 + $0x60] sm:$0xff]
        %v7818 = vld [vmem:[%s7804 + $0x68] sm:$0xff]
        %v7819 = vld [vmem:[%s7804 + $0x70] sm:$0xff]
        %v7820 = vld [vmem:[%s7804 + $0x78] sm:$0xff]
        %7821 = vmatpush.msra.mxu0 %v7820
        %7822 = vmatpush.msra.mxu0 %v7819
        %7823 = vmatpush.msra.mxu0 %v7818
        %7824 = vmatpush.msra.mxu0 %v7817
        %7825 = vmatpush.msra.mxu0 %v7816
        %7826 = vmatpush.msra.mxu0 %v7815
        %7827 = vmatpush.msra.mxu0 %v7814
        %7828 = vmatpush.msra.mxu0 %v7813
        %7829 = vmatpush.msra.mxu0 %v7812
        %7830 = vmatpush.msra.mxu0 %v7811
        %7831 = vmatpush.msra.mxu0 %v7810
        %7832 = vmatpush.msra.mxu0 %v7809
        %7833 = vmatpush.msra.mxu0 %v7808
        %7834 = vmatpush.msra.mxu0 %v7807
        %7835 = vmatpush.msra.mxu0 %v7806
        %7836 = vmatpush.msra.mxu0 %v7805
        %7837 = vmatmul.f32.gmra.mxu0 %v7557
        %v7838 = vpop.f32.mrf.mxu0
        %v7839 = vadd.f32 0.0, %v7838
        %7840 = vdwg.mxu0
        %v7841 = vadd.f32 %v7803, %v7839
        %s7842 = scalar_lea.vmem %s5, 896
        %v7843 = vld [vmem:[%s7842] sm:$0xff]
        %v7844 = vld [vmem:[%s7842 + $0x8] sm:$0xff]
        %v7845 = vld [vmem:[%s7842 + $0x10] sm:$0xff]
        %v7846 = vld [vmem:[%s7842 + $0x18] sm:$0xff]
        %v7847 = vld [vmem:[%s7842 + $0x20] sm:$0xff]
        %v7848 = vld [vmem:[%s7842 + $0x28] sm:$0xff]
        %v7849 = vld [vmem:[%s7842 + $0x30] sm:$0xff]
        %v7850 = vld [vmem:[%s7842 + $0x38] sm:$0xff]
        %v7851 = vld [vmem:[%s7842 + $0x40] sm:$0xff]
        %v7852 = vld [vmem:[%s7842 + $0x48] sm:$0xff]
        %v7853 = vld [vmem:[%s7842 + $0x50] sm:$0xff]
        %v7854 = vld [vmem:[%s7842 + $0x58] sm:$0xff]
        %v7855 = vld [vmem:[%s7842 + $0x60] sm:$0xff]
        %v7856 = vld [vmem:[%s7842 + $0x68] sm:$0xff]
        %v7857 = vld [vmem:[%s7842 + $0x70] sm:$0xff]
        %v7858 = vld [vmem:[%s7842 + $0x78] sm:$0xff]
        %7859 = vmatpush.msra.mxu0 %v7858
        %7860 = vmatpush.msra.mxu0 %v7857
        %7861 = vmatpush.msra.mxu0 %v7856
        %7862 = vmatpush.msra.mxu0 %v7855
        %7863 = vmatpush.msra.mxu0 %v7854
        %7864 = vmatpush.msra.mxu0 %v7853
        %7865 = vmatpush.msra.mxu0 %v7852
        %7866 = vmatpush.msra.mxu0 %v7851
        %7867 = vmatpush.msra.mxu0 %v7850
        %7868 = vmatpush.msra.mxu0 %v7849
        %7869 = vmatpush.msra.mxu0 %v7848
        %7870 = vmatpush.msra.mxu0 %v7847
        %7871 = vmatpush.msra.mxu0 %v7846
        %7872 = vmatpush.msra.mxu0 %v7845
        %7873 = vmatpush.msra.mxu0 %v7844
        %7874 = vmatpush.msra.mxu0 %v7843
        %7875 = vmatmul.f32.gmra.mxu0 %v7558
        %v7876 = vpop.f32.mrf.mxu0
        %v7877 = vadd.f32 0.0, %v7876
        %7878 = vdwg.mxu0
        %v7879 = vadd.f32 %v7841, %v7877
        %s7880 = scalar_lea.vmem %s5, 1024
        %v7881 = vld [vmem:[%s7880] sm:$0xff]
        %v7882 = vld [vmem:[%s7880 + $0x8] sm:$0xff]
        %v7883 = vld [vmem:[%s7880 + $0x10] sm:$0xff]
        %v7884 = vld [vmem:[%s7880 + $0x18] sm:$0xff]
        %v7885 = vld [vmem:[%s7880 + $0x20] sm:$0xff]
        %v7886 = vld [vmem:[%s7880 + $0x28] sm:$0xff]
        %v7887 = vld [vmem:[%s7880 + $0x30] sm:$0xff]
        %v7888 = vld [vmem:[%s7880 + $0x38] sm:$0xff]
        %v7889 = vld [vmem:[%s7880 + $0x40] sm:$0xff]
        %v7890 = vld [vmem:[%s7880 + $0x48] sm:$0xff]
        %v7891 = vld [vmem:[%s7880 + $0x50] sm:$0xff]
        %v7892 = vld [vmem:[%s7880 + $0x58] sm:$0xff]
        %v7893 = vld [vmem:[%s7880 + $0x60] sm:$0xff]
        %v7894 = vld [vmem:[%s7880 + $0x68] sm:$0xff]
        %v7895 = vld [vmem:[%s7880 + $0x70] sm:$0xff]
        %v7896 = vld [vmem:[%s7880 + $0x78] sm:$0xff]
        %7897 = vmatpush.msra.mxu0 %v7896
        %7898 = vmatpush.msra.mxu0 %v7895
        %7899 = vmatpush.msra.mxu0 %v7894
        %7900 = vmatpush.msra.mxu0 %v7893
        %7901 = vmatpush.msra.mxu0 %v7892
        %7902 = vmatpush.msra.mxu0 %v7891
        %7903 = vmatpush.msra.mxu0 %v7890
        %7904 = vmatpush.msra.mxu0 %v7889
        %7905 = vmatpush.msra.mxu0 %v7888
        %7906 = vmatpush.msra.mxu0 %v7887
        %7907 = vmatpush.msra.mxu0 %v7886
        %7908 = vmatpush.msra.mxu0 %v7885
        %7909 = vmatpush.msra.mxu0 %v7884
        %7910 = vmatpush.msra.mxu0 %v7883
        %7911 = vmatpush.msra.mxu0 %v7882
        %7912 = vmatpush.msra.mxu0 %v7881
        %7913 = vmatmul.f32.gmra.mxu0 %v7559
        %v7914 = vpop.f32.mrf.mxu0
        %v7915 = vadd.f32 0.0, %v7914
        %7916 = vdwg.mxu0
        %v7917 = vadd.f32 %v7879, %v7915
        %s7918 = scalar_lea.vmem %s5, 1152
        %v7919 = vld [vmem:[%s7918] sm:$0xff]
        %v7920 = vld [vmem:[%s7918 + $0x8] sm:$0xff]
        %v7921 = vld [vmem:[%s7918 + $0x10] sm:$0xff]
        %v7922 = vld [vmem:[%s7918 + $0x18] sm:$0xff]
        %v7923 = vld [vmem:[%s7918 + $0x20] sm:$0xff]
        %v7924 = vld [vmem:[%s7918 + $0x28] sm:$0xff]
        %v7925 = vld [vmem:[%s7918 + $0x30] sm:$0xff]
        %v7926 = vld [vmem:[%s7918 + $0x38] sm:$0xff]
        %v7927 = vld [vmem:[%s7918 + $0x40] sm:$0xff]
        %v7928 = vld [vmem:[%s7918 + $0x48] sm:$0xff]
        %v7929 = vld [vmem:[%s7918 + $0x50] sm:$0xff]
        %v7930 = vld [vmem:[%s7918 + $0x58] sm:$0xff]
        %v7931 = vld [vmem:[%s7918 + $0x60] sm:$0xff]
        %v7932 = vld [vmem:[%s7918 + $0x68] sm:$0xff]
        %v7933 = vld [vmem:[%s7918 + $0x70] sm:$0xff]
        %v7934 = vld [vmem:[%s7918 + $0x78] sm:$0xff]
        %7935 = vmatpush.msra.mxu0 %v7934
        %7936 = vmatpush.msra.mxu0 %v7933
        %7937 = vmatpush.msra.mxu0 %v7932
        %7938 = vmatpush.msra.mxu0 %v7931
        %7939 = vmatpush.msra.mxu0 %v7930
        %7940 = vmatpush.msra.mxu0 %v7929
        %7941 = vmatpush.msra.mxu0 %v7928
        %7942 = vmatpush.msra.mxu0 %v7927
        %7943 = vmatpush.msra.mxu0 %v7926
        %7944 = vmatpush.msra.mxu0 %v7925
        %7945 = vmatpush.msra.mxu0 %v7924
        %7946 = vmatpush.msra.mxu0 %v7923
        %7947 = vmatpush.msra.mxu0 %v7922
        %7948 = vmatpush.msra.mxu0 %v7921
        %7949 = vmatpush.msra.mxu0 %v7920
        %7950 = vmatpush.msra.mxu0 %v7919
        %7951 = vmatmul.f32.gmra.mxu0 %v7560
        %v7952 = vpop.f32.mrf.mxu0
        %v7953 = vadd.f32 0.0, %v7952
        %7954 = vdwg.mxu0
        %v7955 = vadd.f32 %v7917, %v7953
        %s7956 = scalar_lea.vmem %s5, 1280
        %v7957 = vld [vmem:[%s7956] sm:$0xff]
        %v7958 = vld [vmem:[%s7956 + $0x8] sm:$0xff]
        %v7959 = vld [vmem:[%s7956 + $0x10] sm:$0xff]
        %v7960 = vld [vmem:[%s7956 + $0x18] sm:$0xff]
        %v7961 = vld [vmem:[%s7956 + $0x20] sm:$0xff]
        %v7962 = vld [vmem:[%s7956 + $0x28] sm:$0xff]
        %v7963 = vld [vmem:[%s7956 + $0x30] sm:$0xff]
        %v7964 = vld [vmem:[%s7956 + $0x38] sm:$0xff]
        %v7965 = vld [vmem:[%s7956 + $0x40] sm:$0xff]
        %v7966 = vld [vmem:[%s7956 + $0x48] sm:$0xff]
        %v7967 = vld [vmem:[%s7956 + $0x50] sm:$0xff]
        %v7968 = vld [vmem:[%s7956 + $0x58] sm:$0xff]
        %v7969 = vld [vmem:[%s7956 + $0x60] sm:$0xff]
        %v7970 = vld [vmem:[%s7956 + $0x68] sm:$0xff]
        %v7971 = vld [vmem:[%s7956 + $0x70] sm:$0xff]
        %v7972 = vld [vmem:[%s7956 + $0x78] sm:$0xff]
        %7973 = vmatpush.msra.mxu0 %v7972
        %7974 = vmatpush.msra.mxu0 %v7971
        %7975 = vmatpush.msra.mxu0 %v7970
        %7976 = vmatpush.msra.mxu0 %v7969
        %7977 = vmatpush.msra.mxu0 %v7968
        %7978 = vmatpush.msra.mxu0 %v7967
        %7979 = vmatpush.msra.mxu0 %v7966
        %7980 = vmatpush.msra.mxu0 %v7965
        %7981 = vmatpush.msra.mxu0 %v7964
        %7982 = vmatpush.msra.mxu0 %v7963
        %7983 = vmatpush.msra.mxu0 %v7962
        %7984 = vmatpush.msra.mxu0 %v7961
        %7985 = vmatpush.msra.mxu0 %v7960
        %7986 = vmatpush.msra.mxu0 %v7959
        %7987 = vmatpush.msra.mxu0 %v7958
        %7988 = vmatpush.msra.mxu0 %v7957
        %7989 = vmatmul.f32.gmra.mxu0 %v7561
        %v7990 = vpop.f32.mrf.mxu0
        %v7991 = vadd.f32 0.0, %v7990
        %7992 = vdwg.mxu0
        %v7993 = vadd.f32 %v7955, %v7991
        %s7994 = scalar_lea.vmem %s5, 1408
        %v7995 = vld [vmem:[%s7994] sm:$0xff]
        %v7996 = vld [vmem:[%s7994 + $0x8] sm:$0xff]
        %v7997 = vld [vmem:[%s7994 + $0x10] sm:$0xff]
        %v7998 = vld [vmem:[%s7994 + $0x18] sm:$0xff]
        %v7999 = vld [vmem:[%s7994 + $0x20] sm:$0xff]
        %v8000 = vld [vmem:[%s7994 + $0x28] sm:$0xff]
        %v8001 = vld [vmem:[%s7994 + $0x30] sm:$0xff]
        %v8002 = vld [vmem:[%s7994 + $0x38] sm:$0xff]
        %v8003 = vld [vmem:[%s7994 + $0x40] sm:$0xff]
        %v8004 = vld [vmem:[%s7994 + $0x48] sm:$0xff]
        %v8005 = vld [vmem:[%s7994 + $0x50] sm:$0xff]
        %v8006 = vld [vmem:[%s7994 + $0x58] sm:$0xff]
        %v8007 = vld [vmem:[%s7994 + $0x60] sm:$0xff]
        %v8008 = vld [vmem:[%s7994 + $0x68] sm:$0xff]
        %v8009 = vld [vmem:[%s7994 + $0x70] sm:$0xff]
        %v8010 = vld [vmem:[%s7994 + $0x78] sm:$0xff]
        %8011 = vmatpush.msra.mxu0 %v8010
        %8012 = vmatpush.msra.mxu0 %v8009
        %8013 = vmatpush.msra.mxu0 %v8008
        %8014 = vmatpush.msra.mxu0 %v8007
        %8015 = vmatpush.msra.mxu0 %v8006
        %8016 = vmatpush.msra.mxu0 %v8005
        %8017 = vmatpush.msra.mxu0 %v8004
        %8018 = vmatpush.msra.mxu0 %v8003
        %8019 = vmatpush.msra.mxu0 %v8002
        %8020 = vmatpush.msra.mxu0 %v8001
        %8021 = vmatpush.msra.mxu0 %v8000
        %8022 = vmatpush.msra.mxu0 %v7999
        %8023 = vmatpush.msra.mxu0 %v7998
        %8024 = vmatpush.msra.mxu0 %v7997
        %8025 = vmatpush.msra.mxu0 %v7996
        %8026 = vmatpush.msra.mxu0 %v7995
        %8027 = vmatmul.f32.gmra.mxu0 %v7562
        %v8028 = vpop.f32.mrf.mxu0
        %v8029 = vadd.f32 0.0, %v8028
        %8030 = vdwg.mxu0
        %v8031 = vadd.f32 %v7993, %v8029
        %s8032 = scalar_lea.vmem %s5, 1536
        %v8033 = vld [vmem:[%s8032] sm:$0xff]
        %v8034 = vld [vmem:[%s8032 + $0x8] sm:$0xff]
        %v8035 = vld [vmem:[%s8032 + $0x10] sm:$0xff]
        %v8036 = vld [vmem:[%s8032 + $0x18] sm:$0xff]
        %v8037 = vld [vmem:[%s8032 + $0x20] sm:$0xff]
        %v8038 = vld [vmem:[%s8032 + $0x28] sm:$0xff]
        %v8039 = vld [vmem:[%s8032 + $0x30] sm:$0xff]
        %v8040 = vld [vmem:[%s8032 + $0x38] sm:$0xff]
        %v8041 = vld [vmem:[%s8032 + $0x40] sm:$0xff]
        %v8042 = vld [vmem:[%s8032 + $0x48] sm:$0xff]
        %v8043 = vld [vmem:[%s8032 + $0x50] sm:$0xff]
        %v8044 = vld [vmem:[%s8032 + $0x58] sm:$0xff]
        %v8045 = vld [vmem:[%s8032 + $0x60] sm:$0xff]
        %v8046 = vld [vmem:[%s8032 + $0x68] sm:$0xff]
        %v8047 = vld [vmem:[%s8032 + $0x70] sm:$0xff]
        %v8048 = vld [vmem:[%s8032 + $0x78] sm:$0xff]
        %8049 = vmatpush.msra.mxu0 %v8048
        %8050 = vmatpush.msra.mxu0 %v8047
        %8051 = vmatpush.msra.mxu0 %v8046
        %8052 = vmatpush.msra.mxu0 %v8045
        %8053 = vmatpush.msra.mxu0 %v8044
        %8054 = vmatpush.msra.mxu0 %v8043
        %8055 = vmatpush.msra.mxu0 %v8042
        %8056 = vmatpush.msra.mxu0 %v8041
        %8057 = vmatpush.msra.mxu0 %v8040
        %8058 = vmatpush.msra.mxu0 %v8039
        %8059 = vmatpush.msra.mxu0 %v8038
        %8060 = vmatpush.msra.mxu0 %v8037
        %8061 = vmatpush.msra.mxu0 %v8036
        %8062 = vmatpush.msra.mxu0 %v8035
        %8063 = vmatpush.msra.mxu0 %v8034
        %8064 = vmatpush.msra.mxu0 %v8033
        %8065 = vmatmul.f32.gmra.mxu0 %v7563
        %v8066 = vpop.f32.mrf.mxu0
        %v8067 = vadd.f32 0.0, %v8066
        %8068 = vdwg.mxu0
        %v8069 = vadd.f32 %v8031, %v8067
        %s8070 = scalar_lea.vmem %s5, 1664
        %v8071 = vld [vmem:[%s8070] sm:$0xff]
        %v8072 = vld [vmem:[%s8070 + $0x8] sm:$0xff]
        %v8073 = vld [vmem:[%s8070 + $0x10] sm:$0xff]
        %v8074 = vld [vmem:[%s8070 + $0x18] sm:$0xff]
        %v8075 = vld [vmem:[%s8070 + $0x20] sm:$0xff]
        %v8076 = vld [vmem:[%s8070 + $0x28] sm:$0xff]
        %v8077 = vld [vmem:[%s8070 + $0x30] sm:$0xff]
        %v8078 = vld [vmem:[%s8070 + $0x38] sm:$0xff]
        %v8079 = vld [vmem:[%s8070 + $0x40] sm:$0xff]
        %v8080 = vld [vmem:[%s8070 + $0x48] sm:$0xff]
        %v8081 = vld [vmem:[%s8070 + $0x50] sm:$0xff]
        %v8082 = vld [vmem:[%s8070 + $0x58] sm:$0xff]
        %v8083 = vld [vmem:[%s8070 + $0x60] sm:$0xff]
        %v8084 = vld [vmem:[%s8070 + $0x68] sm:$0xff]
        %v8085 = vld [vmem:[%s8070 + $0x70] sm:$0xff]
        %v8086 = vld [vmem:[%s8070 + $0x78] sm:$0xff]
        %8087 = vmatpush.msra.mxu0 %v8086
        %8088 = vmatpush.msra.mxu0 %v8085
        %8089 = vmatpush.msra.mxu0 %v8084
        %8090 = vmatpush.msra.mxu0 %v8083
        %8091 = vmatpush.msra.mxu0 %v8082
        %8092 = vmatpush.msra.mxu0 %v8081
        %8093 = vmatpush.msra.mxu0 %v8080
        %8094 = vmatpush.msra.mxu0 %v8079
        %8095 = vmatpush.msra.mxu0 %v8078
        %8096 = vmatpush.msra.mxu0 %v8077
        %8097 = vmatpush.msra.mxu0 %v8076
        %8098 = vmatpush.msra.mxu0 %v8075
        %8099 = vmatpush.msra.mxu0 %v8074
        %8100 = vmatpush.msra.mxu0 %v8073
        %8101 = vmatpush.msra.mxu0 %v8072
        %8102 = vmatpush.msra.mxu0 %v8071
        %8103 = vmatmul.f32.gmra.mxu0 %v7564
        %v8104 = vpop.f32.mrf.mxu0
        %v8105 = vadd.f32 0.0, %v8104
        %8106 = vdwg.mxu0
        %v8107 = vadd.f32 %v8069, %v8105
        %s8108 = scalar_lea.vmem %s5, 1792
        %v8109 = vld [vmem:[%s8108] sm:$0xff]
        %v8110 = vld [vmem:[%s8108 + $0x8] sm:$0xff]
        %v8111 = vld [vmem:[%s8108 + $0x10] sm:$0xff]
        %v8112 = vld [vmem:[%s8108 + $0x18] sm:$0xff]
        %v8113 = vld [vmem:[%s8108 + $0x20] sm:$0xff]
        %v8114 = vld [vmem:[%s8108 + $0x28] sm:$0xff]
        %v8115 = vld [vmem:[%s8108 + $0x30] sm:$0xff]
        %v8116 = vld [vmem:[%s8108 + $0x38] sm:$0xff]
        %v8117 = vld [vmem:[%s8108 + $0x40] sm:$0xff]
        %v8118 = vld [vmem:[%s8108 + $0x48] sm:$0xff]
        %v8119 = vld [vmem:[%s8108 + $0x50] sm:$0xff]
        %v8120 = vld [vmem:[%s8108 + $0x58] sm:$0xff]
        %v8121 = vld [vmem:[%s8108 + $0x60] sm:$0xff]
        %v8122 = vld [vmem:[%s8108 + $0x68] sm:$0xff]
        %v8123 = vld [vmem:[%s8108 + $0x70] sm:$0xff]
        %v8124 = vld [vmem:[%s8108 + $0x78] sm:$0xff]
        %8125 = vmatpush.msra.mxu0 %v8124
        %8126 = vmatpush.msra.mxu0 %v8123
        %8127 = vmatpush.msra.mxu0 %v8122
        %8128 = vmatpush.msra.mxu0 %v8121
        %8129 = vmatpush.msra.mxu0 %v8120
        %8130 = vmatpush.msra.mxu0 %v8119
        %8131 = vmatpush.msra.mxu0 %v8118
        %8132 = vmatpush.msra.mxu0 %v8117
        %8133 = vmatpush.msra.mxu0 %v8116
        %8134 = vmatpush.msra.mxu0 %v8115
        %8135 = vmatpush.msra.mxu0 %v8114
        %8136 = vmatpush.msra.mxu0 %v8113
        %8137 = vmatpush.msra.mxu0 %v8112
        %8138 = vmatpush.msra.mxu0 %v8111
        %8139 = vmatpush.msra.mxu0 %v8110
        %8140 = vmatpush.msra.mxu0 %v8109
        %8141 = vmatmul.f32.gmra.mxu0 %v7565
        %v8142 = vpop.f32.mrf.mxu0
        %v8143 = vadd.f32 0.0, %v8142
        %8144 = vdwg.mxu0
        %v8145 = vadd.f32 %v8107, %v8143
        %s8146 = scalar_lea.vmem %s5, 1920
        %v8147 = vld [vmem:[%s8146] sm:$0xff]
        %v8148 = vld [vmem:[%s8146 + $0x8] sm:$0xff]
        %v8149 = vld [vmem:[%s8146 + $0x10] sm:$0xff]
        %v8150 = vld [vmem:[%s8146 + $0x18] sm:$0xff]
        %v8151 = vld [vmem:[%s8146 + $0x20] sm:$0xff]
        %v8152 = vld [vmem:[%s8146 + $0x28] sm:$0xff]
        %v8153 = vld [vmem:[%s8146 + $0x30] sm:$0xff]
        %v8154 = vld [vmem:[%s8146 + $0x38] sm:$0xff]
        %v8155 = vld [vmem:[%s8146 + $0x40] sm:$0xff]
        %v8156 = vld [vmem:[%s8146 + $0x48] sm:$0xff]
        %v8157 = vld [vmem:[%s8146 + $0x50] sm:$0xff]
        %v8158 = vld [vmem:[%s8146 + $0x58] sm:$0xff]
        %v8159 = vld [vmem:[%s8146 + $0x60] sm:$0xff]
        %v8160 = vld [vmem:[%s8146 + $0x68] sm:$0xff]
        %v8161 = vld [vmem:[%s8146 + $0x70] sm:$0xff]
        %v8162 = vld [vmem:[%s8146 + $0x78] sm:$0xff]
        %8163 = vmatpush.msra.mxu0 %v8162
        %8164 = vmatpush.msra.mxu0 %v8161
        %8165 = vmatpush.msra.mxu0 %v8160
        %8166 = vmatpush.msra.mxu0 %v8159
        %8167 = vmatpush.msra.mxu0 %v8158
        %8168 = vmatpush.msra.mxu0 %v8157
        %8169 = vmatpush.msra.mxu0 %v8156
        %8170 = vmatpush.msra.mxu0 %v8155
        %8171 = vmatpush.msra.mxu0 %v8154
        %8172 = vmatpush.msra.mxu0 %v8153
        %8173 = vmatpush.msra.mxu0 %v8152
        %8174 = vmatpush.msra.mxu0 %v8151
        %8175 = vmatpush.msra.mxu0 %v8150
        %8176 = vmatpush.msra.mxu0 %v8149
        %8177 = vmatpush.msra.mxu0 %v8148
        %8178 = vmatpush.msra.mxu0 %v8147
        %8179 = vmatmul.f32.gmra.mxu0 %v7566
        %v8180 = vpop.f32.mrf.mxu0
        %v8181 = vadd.f32 0.0, %v8180
        %8182 = vdwg.mxu0
        %v8183 = vadd.f32 %v8145, %v8181
        %s8184 = scalar_lea.vmem %s5, 2048
        %v8185 = vld [vmem:[%s8184] sm:$0xff]
        %v8186 = vld [vmem:[%s8184 + $0x8] sm:$0xff]
        %v8187 = vld [vmem:[%s8184 + $0x10] sm:$0xff]
        %v8188 = vld [vmem:[%s8184 + $0x18] sm:$0xff]
        %v8189 = vld [vmem:[%s8184 + $0x20] sm:$0xff]
        %v8190 = vld [vmem:[%s8184 + $0x28] sm:$0xff]
        %v8191 = vld [vmem:[%s8184 + $0x30] sm:$0xff]
        %v8192 = vld [vmem:[%s8184 + $0x38] sm:$0xff]
        %v8193 = vld [vmem:[%s8184 + $0x40] sm:$0xff]
        %v8194 = vld [vmem:[%s8184 + $0x48] sm:$0xff]
        %v8195 = vld [vmem:[%s8184 + $0x50] sm:$0xff]
        %v8196 = vld [vmem:[%s8184 + $0x58] sm:$0xff]
        %v8197 = vld [vmem:[%s8184 + $0x60] sm:$0xff]
        %v8198 = vld [vmem:[%s8184 + $0x68] sm:$0xff]
        %v8199 = vld [vmem:[%s8184 + $0x70] sm:$0xff]
        %v8200 = vld [vmem:[%s8184 + $0x78] sm:$0xff]
        %8201 = vmatpush.msra.mxu0 %v8200
        %8202 = vmatpush.msra.mxu0 %v8199
        %8203 = vmatpush.msra.mxu0 %v8198
        %8204 = vmatpush.msra.mxu0 %v8197
        %8205 = vmatpush.msra.mxu0 %v8196
        %8206 = vmatpush.msra.mxu0 %v8195
        %8207 = vmatpush.msra.mxu0 %v8194
        %8208 = vmatpush.msra.mxu0 %v8193
        %8209 = vmatpush.msra.mxu0 %v8192
        %8210 = vmatpush.msra.mxu0 %v8191
        %8211 = vmatpush.msra.mxu0 %v8190
        %8212 = vmatpush.msra.mxu0 %v8189
        %8213 = vmatpush.msra.mxu0 %v8188
        %8214 = vmatpush.msra.mxu0 %v8187
        %8215 = vmatpush.msra.mxu0 %v8186
        %8216 = vmatpush.msra.mxu0 %v8185
        %8217 = vmatmul.f32.gmra.mxu0 %v7567
        %v8218 = vpop.f32.mrf.mxu0
        %v8219 = vadd.f32 0.0, %v8218
        %8220 = vdwg.mxu0
        %v8221 = vadd.f32 %v8183, %v8219
        %s8222 = scalar_lea.vmem %s5, 2176
        %v8223 = vld [vmem:[%s8222] sm:$0xff]
        %v8224 = vld [vmem:[%s8222 + $0x8] sm:$0xff]
        %v8225 = vld [vmem:[%s8222 + $0x10] sm:$0xff]
        %v8226 = vld [vmem:[%s8222 + $0x18] sm:$0xff]
        %v8227 = vld [vmem:[%s8222 + $0x20] sm:$0xff]
        %v8228 = vld [vmem:[%s8222 + $0x28] sm:$0xff]
        %v8229 = vld [vmem:[%s8222 + $0x30] sm:$0xff]
        %v8230 = vld [vmem:[%s8222 + $0x38] sm:$0xff]
        %v8231 = vld [vmem:[%s8222 + $0x40] sm:$0xff]
        %v8232 = vld [vmem:[%s8222 + $0x48] sm:$0xff]
        %v8233 = vld [vmem:[%s8222 + $0x50] sm:$0xff]
        %v8234 = vld [vmem:[%s8222 + $0x58] sm:$0xff]
        %v8235 = vld [vmem:[%s8222 + $0x60] sm:$0xff]
        %v8236 = vld [vmem:[%s8222 + $0x68] sm:$0xff]
        %v8237 = vld [vmem:[%s8222 + $0x70] sm:$0xff]
        %v8238 = vld [vmem:[%s8222 + $0x78] sm:$0xff]
        %8239 = vmatpush.msra.mxu0 %v8238
        %8240 = vmatpush.msra.mxu0 %v8237
        %8241 = vmatpush.msra.mxu0 %v8236
        %8242 = vmatpush.msra.mxu0 %v8235
        %8243 = vmatpush.msra.mxu0 %v8234
        %8244 = vmatpush.msra.mxu0 %v8233
        %8245 = vmatpush.msra.mxu0 %v8232
        %8246 = vmatpush.msra.mxu0 %v8231
        %8247 = vmatpush.msra.mxu0 %v8230
        %8248 = vmatpush.msra.mxu0 %v8229
        %8249 = vmatpush.msra.mxu0 %v8228
        %8250 = vmatpush.msra.mxu0 %v8227
        %8251 = vmatpush.msra.mxu0 %v8226
        %8252 = vmatpush.msra.mxu0 %v8225
        %8253 = vmatpush.msra.mxu0 %v8224
        %8254 = vmatpush.msra.mxu0 %v8223
        %8255 = vmatmul.f32.gmra.mxu0 %v7568
        %v8256 = vpop.f32.mrf.mxu0
        %v8257 = vadd.f32 0.0, %v8256
        %8258 = vdwg.mxu0
        %v8259 = vadd.f32 %v8221, %v8257
        %s8260 = scalar_lea.vmem %s5, 2304
        %v8261 = vld [vmem:[%s8260] sm:$0xff]
        %v8262 = vld [vmem:[%s8260 + $0x8] sm:$0xff]
        %v8263 = vld [vmem:[%s8260 + $0x10] sm:$0xff]
        %v8264 = vld [vmem:[%s8260 + $0x18] sm:$0xff]
        %v8265 = vld [vmem:[%s8260 + $0x20] sm:$0xff]
        %v8266 = vld [vmem:[%s8260 + $0x28] sm:$0xff]
        %v8267 = vld [vmem:[%s8260 + $0x30] sm:$0xff]
        %v8268 = vld [vmem:[%s8260 + $0x38] sm:$0xff]
        %v8269 = vld [vmem:[%s8260 + $0x40] sm:$0xff]
        %v8270 = vld [vmem:[%s8260 + $0x48] sm:$0xff]
        %v8271 = vld [vmem:[%s8260 + $0x50] sm:$0xff]
        %v8272 = vld [vmem:[%s8260 + $0x58] sm:$0xff]
        %v8273 = vld [vmem:[%s8260 + $0x60] sm:$0xff]
        %v8274 = vld [vmem:[%s8260 + $0x68] sm:$0xff]
        %v8275 = vld [vmem:[%s8260 + $0x70] sm:$0xff]
        %v8276 = vld [vmem:[%s8260 + $0x78] sm:$0xff]
        %8277 = vmatpush.msra.mxu0 %v8276
        %8278 = vmatpush.msra.mxu0 %v8275
        %8279 = vmatpush.msra.mxu0 %v8274
        %8280 = vmatpush.msra.mxu0 %v8273
        %8281 = vmatpush.msra.mxu0 %v8272
        %8282 = vmatpush.msra.mxu0 %v8271
        %8283 = vmatpush.msra.mxu0 %v8270
        %8284 = vmatpush.msra.mxu0 %v8269
        %8285 = vmatpush.msra.mxu0 %v8268
        %8286 = vmatpush.msra.mxu0 %v8267
        %8287 = vmatpush.msra.mxu0 %v8266
        %8288 = vmatpush.msra.mxu0 %v8265
        %8289 = vmatpush.msra.mxu0 %v8264
        %8290 = vmatpush.msra.mxu0 %v8263
        %8291 = vmatpush.msra.mxu0 %v8262
        %8292 = vmatpush.msra.mxu0 %v8261
        %8293 = vmatmul.f32.gmra.mxu0 %v7569
        %v8294 = vpop.f32.mrf.mxu0
        %v8295 = vadd.f32 0.0, %v8294
        %8296 = vdwg.mxu0
        %v8297 = vadd.f32 %v8259, %v8295
        %s8298 = scalar_lea.vmem %s5, 2432
        %v8299 = vld [vmem:[%s8298] sm:$0xff]
        %v8300 = vld [vmem:[%s8298 + $0x8] sm:$0xff]
        %v8301 = vld [vmem:[%s8298 + $0x10] sm:$0xff]
        %v8302 = vld [vmem:[%s8298 + $0x18] sm:$0xff]
        %v8303 = vld [vmem:[%s8298 + $0x20] sm:$0xff]
        %v8304 = vld [vmem:[%s8298 + $0x28] sm:$0xff]
        %v8305 = vld [vmem:[%s8298 + $0x30] sm:$0xff]
        %v8306 = vld [vmem:[%s8298 + $0x38] sm:$0xff]
        %v8307 = vld [vmem:[%s8298 + $0x40] sm:$0xff]
        %v8308 = vld [vmem:[%s8298 + $0x48] sm:$0xff]
        %v8309 = vld [vmem:[%s8298 + $0x50] sm:$0xff]
        %v8310 = vld [vmem:[%s8298 + $0x58] sm:$0xff]
        %v8311 = vld [vmem:[%s8298 + $0x60] sm:$0xff]
        %v8312 = vld [vmem:[%s8298 + $0x68] sm:$0xff]
        %v8313 = vld [vmem:[%s8298 + $0x70] sm:$0xff]
        %v8314 = vld [vmem:[%s8298 + $0x78] sm:$0xff]
        %8315 = vmatpush.msra.mxu0 %v8314
        %8316 = vmatpush.msra.mxu0 %v8313
        %8317 = vmatpush.msra.mxu0 %v8312
        %8318 = vmatpush.msra.mxu0 %v8311
        %8319 = vmatpush.msra.mxu0 %v8310
        %8320 = vmatpush.msra.mxu0 %v8309
        %8321 = vmatpush.msra.mxu0 %v8308
        %8322 = vmatpush.msra.mxu0 %v8307
        %8323 = vmatpush.msra.mxu0 %v8306
        %8324 = vmatpush.msra.mxu0 %v8305
        %8325 = vmatpush.msra.mxu0 %v8304
        %8326 = vmatpush.msra.mxu0 %v8303
        %8327 = vmatpush.msra.mxu0 %v8302
        %8328 = vmatpush.msra.mxu0 %v8301
        %8329 = vmatpush.msra.mxu0 %v8300
        %8330 = vmatpush.msra.mxu0 %v8299
        %8331 = vmatmul.f32.gmra.mxu0 %v7570
        %v8332 = vpop.f32.mrf.mxu0
        %v8333 = vadd.f32 0.0, %v8332
        %8334 = vdwg.mxu0
        %v8335 = vadd.f32 %v8297, %v8333
        %s8336 = scalar_lea.vmem %s5, 2560
        %v8337 = vld [vmem:[%s8336] sm:$0xff]
        %v8338 = vld [vmem:[%s8336 + $0x8] sm:$0xff]
        %v8339 = vld [vmem:[%s8336 + $0x10] sm:$0xff]
        %v8340 = vld [vmem:[%s8336 + $0x18] sm:$0xff]
        %v8341 = vld [vmem:[%s8336 + $0x20] sm:$0xff]
        %v8342 = vld [vmem:[%s8336 + $0x28] sm:$0xff]
        %v8343 = vld [vmem:[%s8336 + $0x30] sm:$0xff]
        %v8344 = vld [vmem:[%s8336 + $0x38] sm:$0xff]
        %v8345 = vld [vmem:[%s8336 + $0x40] sm:$0xff]
        %v8346 = vld [vmem:[%s8336 + $0x48] sm:$0xff]
        %v8347 = vld [vmem:[%s8336 + $0x50] sm:$0xff]
        %v8348 = vld [vmem:[%s8336 + $0x58] sm:$0xff]
        %v8349 = vld [vmem:[%s8336 + $0x60] sm:$0xff]
        %v8350 = vld [vmem:[%s8336 + $0x68] sm:$0xff]
        %v8351 = vld [vmem:[%s8336 + $0x70] sm:$0xff]
        %v8352 = vld [vmem:[%s8336 + $0x78] sm:$0xff]
        %8353 = vmatpush.msra.mxu0 %v8352
        %8354 = vmatpush.msra.mxu0 %v8351
        %8355 = vmatpush.msra.mxu0 %v8350
        %8356 = vmatpush.msra.mxu0 %v8349
        %8357 = vmatpush.msra.mxu0 %v8348
        %8358 = vmatpush.msra.mxu0 %v8347
        %8359 = vmatpush.msra.mxu0 %v8346
        %8360 = vmatpush.msra.mxu0 %v8345
        %8361 = vmatpush.msra.mxu0 %v8344
        %8362 = vmatpush.msra.mxu0 %v8343
        %8363 = vmatpush.msra.mxu0 %v8342
        %8364 = vmatpush.msra.mxu0 %v8341
        %8365 = vmatpush.msra.mxu0 %v8340
        %8366 = vmatpush.msra.mxu0 %v8339
        %8367 = vmatpush.msra.mxu0 %v8338
        %8368 = vmatpush.msra.mxu0 %v8337
        %8369 = vmatmul.f32.gmra.mxu0 %v7571
        %v8370 = vpop.f32.mrf.mxu0
        %v8371 = vadd.f32 0.0, %v8370
        %8372 = vdwg.mxu0
        %v8373 = vadd.f32 %v8335, %v8371
        %s8374 = scalar_lea.vmem %s5, 2688
        %v8375 = vld [vmem:[%s8374] sm:$0xff]
        %v8376 = vld [vmem:[%s8374 + $0x8] sm:$0xff]
        %v8377 = vld [vmem:[%s8374 + $0x10] sm:$0xff]
        %v8378 = vld [vmem:[%s8374 + $0x18] sm:$0xff]
        %v8379 = vld [vmem:[%s8374 + $0x20] sm:$0xff]
        %v8380 = vld [vmem:[%s8374 + $0x28] sm:$0xff]
        %v8381 = vld [vmem:[%s8374 + $0x30] sm:$0xff]
        %v8382 = vld [vmem:[%s8374 + $0x38] sm:$0xff]
        %v8383 = vld [vmem:[%s8374 + $0x40] sm:$0xff]
        %v8384 = vld [vmem:[%s8374 + $0x48] sm:$0xff]
        %v8385 = vld [vmem:[%s8374 + $0x50] sm:$0xff]
        %v8386 = vld [vmem:[%s8374 + $0x58] sm:$0xff]
        %v8387 = vld [vmem:[%s8374 + $0x60] sm:$0xff]
        %v8388 = vld [vmem:[%s8374 + $0x68] sm:$0xff]
        %v8389 = vld [vmem:[%s8374 + $0x70] sm:$0xff]
        %v8390 = vld [vmem:[%s8374 + $0x78] sm:$0xff]
        %8391 = vmatpush.msra.mxu0 %v8390
        %8392 = vmatpush.msra.mxu0 %v8389
        %8393 = vmatpush.msra.mxu0 %v8388
        %8394 = vmatpush.msra.mxu0 %v8387
        %8395 = vmatpush.msra.mxu0 %v8386
        %8396 = vmatpush.msra.mxu0 %v8385
        %8397 = vmatpush.msra.mxu0 %v8384
        %8398 = vmatpush.msra.mxu0 %v8383
        %8399 = vmatpush.msra.mxu0 %v8382
        %8400 = vmatpush.msra.mxu0 %v8381
        %8401 = vmatpush.msra.mxu0 %v8380
        %8402 = vmatpush.msra.mxu0 %v8379
        %8403 = vmatpush.msra.mxu0 %v8378
        %8404 = vmatpush.msra.mxu0 %v8377
        %8405 = vmatpush.msra.mxu0 %v8376
        %8406 = vmatpush.msra.mxu0 %v8375
        %8407 = vmatmul.f32.gmra.mxu0 %v7572
        %v8408 = vpop.f32.mrf.mxu0
        %v8409 = vadd.f32 0.0, %v8408
        %8410 = vdwg.mxu0
        %v8411 = vadd.f32 %v8373, %v8409
        %s8412 = scalar_lea.vmem %s5, 2816
        %v8413 = vld [vmem:[%s8412] sm:$0xff]
        %v8414 = vld [vmem:[%s8412 + $0x8] sm:$0xff]
        %v8415 = vld [vmem:[%s8412 + $0x10] sm:$0xff]
        %v8416 = vld [vmem:[%s8412 + $0x18] sm:$0xff]
        %v8417 = vld [vmem:[%s8412 + $0x20] sm:$0xff]
        %v8418 = vld [vmem:[%s8412 + $0x28] sm:$0xff]
        %v8419 = vld [vmem:[%s8412 + $0x30] sm:$0xff]
        %v8420 = vld [vmem:[%s8412 + $0x38] sm:$0xff]
        %v8421 = vld [vmem:[%s8412 + $0x40] sm:$0xff]
        %v8422 = vld [vmem:[%s8412 + $0x48] sm:$0xff]
        %v8423 = vld [vmem:[%s8412 + $0x50] sm:$0xff]
        %v8424 = vld [vmem:[%s8412 + $0x58] sm:$0xff]
        %v8425 = vld [vmem:[%s8412 + $0x60] sm:$0xff]
        %v8426 = vld [vmem:[%s8412 + $0x68] sm:$0xff]
        %v8427 = vld [vmem:[%s8412 + $0x70] sm:$0xff]
        %v8428 = vld [vmem:[%s8412 + $0x78] sm:$0xff]
        %8429 = vmatpush.msra.mxu0 %v8428
        %8430 = vmatpush.msra.mxu0 %v8427
        %8431 = vmatpush.msra.mxu0 %v8426
        %8432 = vmatpush.msra.mxu0 %v8425
        %8433 = vmatpush.msra.mxu0 %v8424
        %8434 = vmatpush.msra.mxu0 %v8423
        %8435 = vmatpush.msra.mxu0 %v8422
        %8436 = vmatpush.msra.mxu0 %v8421
        %8437 = vmatpush.msra.mxu0 %v8420
        %8438 = vmatpush.msra.mxu0 %v8419
        %8439 = vmatpush.msra.mxu0 %v8418
        %8440 = vmatpush.msra.mxu0 %v8417
        %8441 = vmatpush.msra.mxu0 %v8416
        %8442 = vmatpush.msra.mxu0 %v8415
        %8443 = vmatpush.msra.mxu0 %v8414
        %8444 = vmatpush.msra.mxu0 %v8413
        %8445 = vmatmul.f32.gmra.mxu0 %v7573
        %v8446 = vpop.f32.mrf.mxu0
        %v8447 = vadd.f32 0.0, %v8446
        %8448 = vdwg.mxu0
        %v8449 = vadd.f32 %v8411, %v8447
        %s8450 = scalar_lea.vmem %s5, 2944
        %v8451 = vld [vmem:[%s8450] sm:$0xff]
        %v8452 = vld [vmem:[%s8450 + $0x8] sm:$0xff]
        %v8453 = vld [vmem:[%s8450 + $0x10] sm:$0xff]
        %v8454 = vld [vmem:[%s8450 + $0x18] sm:$0xff]
        %v8455 = vld [vmem:[%s8450 + $0x20] sm:$0xff]
        %v8456 = vld [vmem:[%s8450 + $0x28] sm:$0xff]
        %v8457 = vld [vmem:[%s8450 + $0x30] sm:$0xff]
        %v8458 = vld [vmem:[%s8450 + $0x38] sm:$0xff]
        %v8459 = vld [vmem:[%s8450 + $0x40] sm:$0xff]
        %v8460 = vld [vmem:[%s8450 + $0x48] sm:$0xff]
        %v8461 = vld [vmem:[%s8450 + $0x50] sm:$0xff]
        %v8462 = vld [vmem:[%s8450 + $0x58] sm:$0xff]
        %v8463 = vld [vmem:[%s8450 + $0x60] sm:$0xff]
        %v8464 = vld [vmem:[%s8450 + $0x68] sm:$0xff]
        %v8465 = vld [vmem:[%s8450 + $0x70] sm:$0xff]
        %v8466 = vld [vmem:[%s8450 + $0x78] sm:$0xff]
        %8467 = vmatpush.msra.mxu0 %v8466
        %8468 = vmatpush.msra.mxu0 %v8465
        %8469 = vmatpush.msra.mxu0 %v8464
        %8470 = vmatpush.msra.mxu0 %v8463
        %8471 = vmatpush.msra.mxu0 %v8462
        %8472 = vmatpush.msra.mxu0 %v8461
        %8473 = vmatpush.msra.mxu0 %v8460
        %8474 = vmatpush.msra.mxu0 %v8459
        %8475 = vmatpush.msra.mxu0 %v8458
        %8476 = vmatpush.msra.mxu0 %v8457
        %8477 = vmatpush.msra.mxu0 %v8456
        %8478 = vmatpush.msra.mxu0 %v8455
        %8479 = vmatpush.msra.mxu0 %v8454
        %8480 = vmatpush.msra.mxu0 %v8453
        %8481 = vmatpush.msra.mxu0 %v8452
        %8482 = vmatpush.msra.mxu0 %v8451
        %8483 = vmatmul.f32.gmra.mxu0 %v7574
        %v8484 = vpop.f32.mrf.mxu0
        %v8485 = vadd.f32 0.0, %v8484
        %8486 = vdwg.mxu0
        %v8487 = vadd.f32 %v8449, %v8485
        %s8488 = scalar_lea.vmem %s5, 3072
        %v8489 = vld [vmem:[%s8488] sm:$0xff]
        %v8490 = vld [vmem:[%s8488 + $0x8] sm:$0xff]
        %v8491 = vld [vmem:[%s8488 + $0x10] sm:$0xff]
        %v8492 = vld [vmem:[%s8488 + $0x18] sm:$0xff]
        %v8493 = vld [vmem:[%s8488 + $0x20] sm:$0xff]
        %v8494 = vld [vmem:[%s8488 + $0x28] sm:$0xff]
        %v8495 = vld [vmem:[%s8488 + $0x30] sm:$0xff]
        %v8496 = vld [vmem:[%s8488 + $0x38] sm:$0xff]
        %v8497 = vld [vmem:[%s8488 + $0x40] sm:$0xff]
        %v8498 = vld [vmem:[%s8488 + $0x48] sm:$0xff]
        %v8499 = vld [vmem:[%s8488 + $0x50] sm:$0xff]
        %v8500 = vld [vmem:[%s8488 + $0x58] sm:$0xff]
        %v8501 = vld [vmem:[%s8488 + $0x60] sm:$0xff]
        %v8502 = vld [vmem:[%s8488 + $0x68] sm:$0xff]
        %v8503 = vld [vmem:[%s8488 + $0x70] sm:$0xff]
        %v8504 = vld [vmem:[%s8488 + $0x78] sm:$0xff]
        %8505 = vmatpush.msra.mxu0 %v8504
        %8506 = vmatpush.msra.mxu0 %v8503
        %8507 = vmatpush.msra.mxu0 %v8502
        %8508 = vmatpush.msra.mxu0 %v8501
        %8509 = vmatpush.msra.mxu0 %v8500
        %8510 = vmatpush.msra.mxu0 %v8499
        %8511 = vmatpush.msra.mxu0 %v8498
        %8512 = vmatpush.msra.mxu0 %v8497
        %8513 = vmatpush.msra.mxu0 %v8496
        %8514 = vmatpush.msra.mxu0 %v8495
        %8515 = vmatpush.msra.mxu0 %v8494
        %8516 = vmatpush.msra.mxu0 %v8493
        %8517 = vmatpush.msra.mxu0 %v8492
        %8518 = vmatpush.msra.mxu0 %v8491
        %8519 = vmatpush.msra.mxu0 %v8490
        %8520 = vmatpush.msra.mxu0 %v8489
        %8521 = vmatmul.f32.gmra.mxu0 %v7575
        %v8522 = vpop.f32.mrf.mxu0
        %v8523 = vadd.f32 0.0, %v8522
        %8524 = vdwg.mxu0
        %v8525 = vadd.f32 %v8487, %v8523
        %v8526 = vmax.f32 %v8525, 0.0
        %v8527 = vld [vmem:[%s7] sm:$0xff]
        %v8528 = vld [vmem:[%s7 + $0x8] sm:$0xff]
        %v8529 = vld [vmem:[%s7 + $0x10] sm:$0xff]
        %v8530 = vld [vmem:[%s7 + $0x18] sm:$0xff]
        %v8531 = vld [vmem:[%s7 + $0x20] sm:$0xff]
        %v8532 = vld [vmem:[%s7 + $0x28] sm:$0xff]
        %v8533 = vld [vmem:[%s7 + $0x30] sm:$0xff]
        %v8534 = vld [vmem:[%s7 + $0x38] sm:$0xff]
        %v8535 = vld [vmem:[%s7 + $0x40] sm:$0xff]
        %v8536 = vld [vmem:[%s7 + $0x48] sm:$0xff]
        %v8537 = vld [vmem:[%s7 + $0x50] sm:$0xff]
        %v8538 = vld [vmem:[%s7 + $0x58] sm:$0xff]
        %v8539 = vld [vmem:[%s7 + $0x60] sm:$0xff]
        %v8540 = vld [vmem:[%s7 + $0x68] sm:$0xff]
        %v8541 = vld [vmem:[%s7 + $0x70] sm:$0xff]
        %v8542 = vld [vmem:[%s7 + $0x78] sm:$0xff]
        %v8543 = vld [vmem:[%s8] sm:$0x1]
        %8544 = vmatpush.msra.mxu0 %v8542
        %8545 = vmatpush.msra.mxu0 %v8541
        %8546 = vmatpush.msra.mxu0 %v8540
        %8547 = vmatpush.msra.mxu0 %v8539
        %8548 = vmatpush.msra.mxu0 %v8538
        %8549 = vmatpush.msra.mxu0 %v8537
        %8550 = vmatpush.msra.mxu0 %v8536
        %8551 = vmatpush.msra.mxu0 %v8535
        %8552 = vmatpush.msra.mxu0 %v8534
        %8553 = vmatpush.msra.mxu0 %v8533
        %8554 = vmatpush.msra.mxu0 %v8532
        %8555 = vmatpush.msra.mxu0 %v8531
        %8556 = vmatpush.msra.mxu0 %v8530
        %8557 = vmatpush.msra.mxu0 %v8529
        %8558 = vmatpush.msra.mxu0 %v8528
        %8559 = vmatpush.msra.mxu0 %v8527
        %8560 = vmatmul.f32.gmra.mxu0 %v8526
        %v8561 = vpop.f32.mrf.mxu0
        %v8562 = vadd.f32 %v8543, %v8561
        %8563 = vdwg.mxu0
        %v8564 = vmax.f32 %v8562, 0.0
        %v8565 = vld [vmem:[%s9] sm:$0xff]
        %v8566 = vld [vmem:[%s9 + $0x8] sm:$0xff]
        %v8567 = vld [vmem:[%s9 + $0x10] sm:$0xff]
        %v8568 = vld [vmem:[%s9 + $0x18] sm:$0xff]
        %v8569 = vld [vmem:[%s9 + $0x20] sm:$0xff]
        %v8570 = vld [vmem:[%s9 + $0x28] sm:$0xff]
        %v8571 = vld [vmem:[%s9 + $0x30] sm:$0xff]
        %v8572 = vld [vmem:[%s9 + $0x38] sm:$0xff]
        %v8573 = vld [vmem:[%s9 + $0x40] sm:$0xff]
        %v8574 = vld [vmem:[%s9 + $0x48] sm:$0xff]
        %v8575 = vld [vmem:[%s9 + $0x50] sm:$0xff]
        %v8576 = vld [vmem:[%s9 + $0x58] sm:$0xff]
        %v8577 = vld [vmem:[%s9 + $0x60] sm:$0xff]
        %v8578 = vld [vmem:[%s9 + $0x68] sm:$0xff]
        %v8579 = vld [vmem:[%s9 + $0x70] sm:$0xff]
        %v8580 = vld [vmem:[%s9 + $0x78] sm:$0xff]
        %v8581 = vld [vmem:[%s10] sm:$0x1]
        %8582 = vmatpush.msra.mxu0 %v8580
        %8583 = vmatpush.msra.mxu0 %v8579
        %8584 = vmatpush.msra.mxu0 %v8578
        %8585 = vmatpush.msra.mxu0 %v8577
        %8586 = vmatpush.msra.mxu0 %v8576
        %8587 = vmatpush.msra.mxu0 %v8575
        %8588 = vmatpush.msra.mxu0 %v8574
        %8589 = vmatpush.msra.mxu0 %v8573
        %8590 = vmatpush.msra.mxu0 %v8572
        %8591 = vmatpush.msra.mxu0 %v8571
        %8592 = vmatpush.msra.mxu0 %v8570
        %8593 = vmatpush.msra.mxu0 %v8569
        %8594 = vmatpush.msra.mxu0 %v8568
        %8595 = vmatpush.msra.mxu0 %v8567
        %8596 = vmatpush.msra.mxu0 %v8566
        %8597 = vmatpush.msra.mxu0 %v8565
        %8598 = vmatmul.f32.gmra.mxu0 %v8564
        %v8599 = vpop.f32.mrf.mxu0
        %v8600 = vadd.f32 %v8581, %v8599
        %8601 = vdwg.mxu0
        %8602 = vst [vmem:[%s378] sm:$0x1] %v8600
        %s8603 = sand.u32 %s269, 1
        %s8604 = scalar_lea.sflag [#allocation4], %s8603
        %s8605 = sand.u32 %s269, 1
        %s8606 = scalar_lea.vmem [#allocation3], %s8605
        // Predicated region
        $region65: #{net_forward.1} parent=63 // pred_check
          %p8607 = pneg %p279
        $region66: #{net_forward.1} parent=63 // pred_check_branch
          %8609 = sbr.rel (%p8607) target = $region68
        $region67: #{net_forward.1} parent=63 // pred_region
          %8611 = vsyncadd %s8604, 0
          %s8612 = scalar_lea.hbm %s11, %s25
          %s8614 = sshll.u32 %s8606, 4
          %s8615 = int_to_ptr.vmem [resolvable:$true] %s8614
          %s8616 = sshll.u32 %s8612, 4
          %s8617 = int_to_ptr.hbm [resolvable:$true] %s8616
          %8619 = dma.vmem_to_hbm [thread:$0]  %s8615, 16, %s8617, %s8604
        $region68: #{net_forward.1} parent=63 // pred_fallthru
          _
      $region64: #{net_forward.1} parent=5 // pred_fallthru
        _
      %p8620 = scmp.le.s32.totalorder 2, %s20
      // Predicated region
      $region69: #{net_forward.1} parent=5 // pred_check
        %p8621 = pneg %p8620
      $region70: #{net_forward.1} parent=5 // pred_check_branch
        %8623 = sbr.rel (%p8621) target = $region72
      $region71: #{net_forward.1} parent=5 // pred_region
        %s8624 = ssub.s32 %s20, 2
        // Predicated region
        $region73: #{net_forward.1} parent=71 // pred_check
          %p8625 = pneg %p285
        $region74: #{net_forward.1} parent=71 // pred_check_branch
          %8627 = sbr.rel (%p8625) target = $region76
        $region75: #{net_forward.1} parent=71 // pred_region
          %s8628 = sand.u32 %s270, 1
          %s8629 = scalar_lea.sflag [#allocation4], %s8628
          %s8630 = sand.u32 %s270, 1
          %s8631 = scalar_lea.vmem [#allocation3], %s8630
          %8633 = dma.done %s8629, 16
        $region76: #{net_forward.1} parent=71 // pred_fallthru
          _
      $region72: #{net_forward.1} parent=5 // pred_fallthru
        _
    $region6: #{net_forward.1} parent=1 // loop_footer
      %s24 = sadd.s32 1, %s20
    $region7: #{net_forward.1} parent=1 // loop_footer_branch
      %19 = sbr.rel target = $region3
    $region8: #{net_forward.1} parent=1 // loop_exit
      _
    %8634 = vsyncpa [#allocation4], 1
    %s8635 = scalar_lea.sflag [#allocation4], 1
    %8636 = vsyncpa %s8635, 1

</llo_original>
